<compile_context>
chip_gen: v7x
topology: tpu7x:2x2x1
jax: 0.10.0
libtpu: 0.0.40
codegen_flags: <defaults>
</compile_context>

<pallas_src>
import jax
import jax.numpy as jnp
from jax.experimental import pallas as pl
from jax.experimental.pallas import tpu as pltpu


# ---------------------------------------------------------------------------
# In-kernel helpers
# ---------------------------------------------------------------------------
def _dw3x3(pbuf_ref, dw9, H, W):
    """3x3 depthwise conv over a zero-padded (H+2, W+2, C) VMEM scratch ref.

    dw9: (9, C) f32 taps, row k = kh*3 + kw.  Only the 3 W-axis (sublane)
    shifted slabs are materialized; H-axis offsets are leading-dim views.
    Returns (H, W, C) f32."""
    acc = None
    for j in range(3):
        col = pbuf_ref[:, j:j + W, :]            # (H+2, W, C)  sublane shift
        for i in range(3):
            k = i * 3 + j
            t = col[i:i + H] * dw9[k:k + 1, :]
            acc = t if acc is None else acc + t
    return acc


# ---------------------------------------------------------------------------
# Fused ResBlockWithCBAM kernel (one batch element per grid step)
# ---------------------------------------------------------------------------
def _resblock_cbam_kernel(x_ref,
                          dw1_ref, pw1_ref, b1_ref,
                          dw2_ref, pw2_ref, b2_ref,
                          dw3_ref, pw3_ref, b3_ref,
                          caw1_ref, caw2_ref, sw_ref,
                          o_ref,
                          pin_ref, pmid_ref, ca_ref, pstat_ref):
    """x_ref   : (1, H, W, Cin)       block input (residual source)
       dwK_ref : (9, C)               depthwise taps, row k = kh*3 + kw
       pwK_ref : (Cin_k, Cout_k)      pointwise weight (transposed)
       bK_ref  : (1, Cout_k)          fused bias (depthwise bias folded in)
       caw1/2  : (Cin, Hid)/(Hid,Cin) bias-free channel-attention MLP
       sw_ref  : (49, 2)              7x7 taps, col0 -> avg map, col1 -> max
       o_ref   : (1, H, W, Cin)
       scratch : pin (H+2,W+2,Cin), pmid (H+2,W+2,Mid), ca (2,Cin),
                 pstat (H+6,W+6,2)   -- all f32 VMEM"""
    _, H, W, Cin = o_ref.shape
    Mid = pmid_ref.shape[-1]
    inv_hw = 1.0 / (H * W)
    inv_c = 1.0 / Cin

    # ---- conv1: depthwise 3x3 -> pointwise 1x1 (fused bias) -> ReLU --------
    # Zero padding lives in VMEM scratch: zero the buffer, store the interior.
    pin_ref[...] = jnp.zeros_like(pin_ref)
    pin_ref[1:1 + H, 1:1 + W, :] = x_ref[0].astype(jnp.float32)

    acc = _dw3x3(pin_ref, dw1_ref[...], H, W).reshape(H * W, Cin)
    h1 = jnp.maximum(
        jnp.dot(acc, pw1_ref[...], preferred_element_type=jnp.float32)
        + b1_ref[...], 0.0)                                     # (H*W, Mid)

    pmid_ref[...] = jnp.zeros_like(pmid_ref)
    pmid_ref[1:1 + H, 1:1 + W, :] = h1.reshape(H, W, Mid)

    # ---- conv2 --------------------------------------------------------------
    acc = _dw3x3(pmid_ref, dw2_ref[...], H, W).reshape(H * W, Mid)
    h2 = jnp.maximum(
        jnp.dot(acc, pw2_ref[...], preferred_element_type=jnp.float32)
        + b2_ref[...], 0.0)                                     # (H*W, Mid)
    # Border of pmid is still zero; only the interior is rewritten.
    pmid_ref[1:1 + H, 1:1 + W, :] = h2.reshape(H, W, Mid)

    # ---- conv3 --------------------------------------------------------------
    acc = _dw3x3(pmid_ref, dw3_ref[...], H, W).reshape(H * W, Mid)
    out3 = jnp.maximum(
        jnp.dot(acc, pw3_ref[...], preferred_element_type=jnp.float32)
        + b3_ref[...], 0.0)                                     # (H*W, Cin)

    # ---- channel attention (pool while conv3's output is resident) ---------
    ca_ref[0:1, :] = jnp.sum(out3, axis=0, keepdims=True) * inv_hw   # avg pool
    ca_ref[1:2, :] = jnp.max(out3, axis=0, keepdims=True)            # max pool
    hfc = jnp.maximum(
        jnp.dot(ca_ref[...], caw1_ref[...],
                preferred_element_type=jnp.float32), 0.0)            # (2, Hid)
    ofc = jnp.dot(hfc, caw2_ref[...], preferred_element_type=jnp.float32)
    att = jax.nn.sigmoid(ofc[0:1, :] + ofc[1:2, :])                  # (1, Cin)

    y = (out3 * att).reshape(H, W, Cin)                 # channel-gated map

    # ---- spatial attention: 7x7 conv over the [avg; max]-over-C map --------
    # Zero-padding the stat map in scratch == the zero padding F.conv2d
    # applies inside SpatialAttention.
    pstat_ref[...] = jnp.zeros_like(pstat_ref)
    pstat_ref[3:3 + H, 3:3 + W, 0:1] = (
        jnp.sum(y, axis=-1, keepdims=True) * inv_c)
    pstat_ref[3:3 + H, 3:3 + W, 1:2] = jnp.max(y, axis=-1, keepdims=True)

    # TODO(synk): repack the stat planes with the pixel index in the lane dim
    # (>=128 lanes) to lift this loop off a 2/128-lane layout.
    sw = sw_ref[...]                                    # (49, 2)
    s = None
    for j in range(7):
        col = pstat_ref[:, j:j + W, :]                  # (H+6, W, 2) sublane shift
        for i in range(7):
            k = i * 7 + j
            t = col[i:i + H] * sw[k:k + 1, :]
            s = t if s is None else s + t               # (H, W, 2)
    gate = jax.nn.sigmoid(jnp.sum(s, axis=-1, keepdims=True))       # (H, W, 1)

    # ---- apply gates + residual ---------------------------------------------
    res = x_ref[0].astype(jnp.float32)
    o_ref[0] = (y * gate + res).astype(o_ref.dtype)


# ---------------------------------------------------------------------------
# Wrapper
# ---------------------------------------------------------------------------
def _prep_dwconv(dw, db, pw, pb):
    """Reshape DepthWiseConv weights and fold the depthwise bias into the
    pointwise bias:  (acc + db) @ pwT + pb == acc @ pwT + (db @ pwT + pb)."""
    cin = dw.shape[0]
    cout = pw.shape[0]
    dw9 = dw.reshape(cin, 9).T.astype(jnp.float32)               # (9, cin)
    pwT = pw.reshape(cout, cin).T.astype(jnp.float32)            # (cin, cout)
    fb = (jnp.dot(db.reshape(1, cin).astype(jnp.float32), pwT,
                  precision=jax.lax.Precision.HIGHEST)
          + pb.reshape(1, cout).astype(jnp.float32))             # (1, cout)
    return dw9, pwT, fb


def res_block_with_cbam(x_nchw, params):
    """Forward pass of ResBlockWithCBAM.  x_nchw: (B, in_planes, H, W)."""
    # TODO(synk): fold these layout transposes into the kernel (or keep the
    # surrounding model NHWC end-to-end) to save two more HBM passes.
    x_nhwc = jnp.transpose(x_nchw, (0, 2, 3, 1))
    B, H, W, Cin = x_nhwc.shape

    dw1, pw1, b1 = _prep_dwconv(*params["conv1"])
    dw2, pw2, b2 = _prep_dwconv(*params["conv2"])
    dw3, pw3, b3 = _prep_dwconv(*params["conv3"])
    Mid = pw1.shape[1]
    Hid = params["ca_w1"].shape[0]
    caw1t = params["ca_w1"].reshape(Hid, Cin).T.astype(jnp.float32)  # (Cin,Hid)
    caw2t = params["ca_w2"].reshape(Cin, Hid).T.astype(jnp.float32)  # (Hid,Cin)
    sw = params["sa_w"].reshape(2, 49).T.astype(jnp.float32)         # (49, 2)

    # VMEM budget: in/out blocks (double-buffered), padded scratch slabs and a
    # generous allowance for compiler-managed (H*W, Mid) f32 temporaries.
    est = (4 * H * W * Cin * 4
           + (H + 2) * (W + 2) * (Cin + Mid) * 4
           + (H + 6) * (W + 6) * 2 * 4
           + 8 * H * W * Mid * 4
           + (2 << 20))
    vmem_limit = int(min(max(est, 32 << 20), 48 << 20))
    # TODO(synk): for large H*W the single-pass fused kernel must be tiled
    # spatially (halo rows + a second pass after the global channel pooling);
    # not needed at the shapes this model uses.

    out = pl.pallas_call(
        _resblock_cbam_kernel,
        out_shape=jax.ShapeDtypeStruct((B, H, W, Cin), x_nhwc.dtype),
        grid=(B,),
        in_specs=[
            pl.BlockSpec((1, H, W, Cin), lambda b: (b, 0, 0, 0)),
            pl.BlockSpec((9, Cin),   lambda b: (0, 0)),
            pl.BlockSpec((Cin, Mid), lambda b: (0, 0)),
            pl.BlockSpec((1, Mid),   lambda b: (0, 0)),
            pl.BlockSpec((9, Mid),   lambda b: (0, 0)),
            pl.BlockSpec((Mid, Mid), lambda b: (0, 0)),
            pl.BlockSpec((1, Mid),   lambda b: (0, 0)),
            pl.BlockSpec((9, Mid),   lambda b: (0, 0)),
            pl.BlockSpec((Mid, Cin), lambda b: (0, 0)),
            pl.BlockSpec((1, Cin),   lambda b: (0, 0)),
            pl.BlockSpec((Cin, Hid), lambda b: (0, 0)),
            pl.BlockSpec((Hid, Cin), lambda b: (0, 0)),
            pl.BlockSpec((49, 2),    lambda b: (0, 0)),
        ],
        out_specs=pl.BlockSpec((1, H, W, Cin), lambda b: (b, 0, 0, 0)),
        scratch_shapes=[
            pltpu.VMEM((H + 2, W + 2, Cin), jnp.float32),   # padded input
            pltpu.VMEM((H + 2, W + 2, Mid), jnp.float32),   # padded out1/out2
            pltpu.VMEM((2, Cin), jnp.float32),              # avg/max channel pool
            pltpu.VMEM((H + 6, W + 6, 2), jnp.float32),     # padded [avg;max] map
        ],
        compiler_params=pltpu.CompilerParams(
            dimension_semantics=("parallel",),
            vmem_limit_bytes=vmem_limit),
    )(x_nhwc, dw1, pw1, b1, dw2, pw2, b2, dw3, pw3, b3, caw1t, caw2t, sw)
    return jnp.transpose(out, (0, 3, 1, 2))


# ---------------------------------------------------------------------------
# Pure-JAX reference (f32, HIGHEST precision == PyTorch semantics)
# ---------------------------------------------------------------------------
def _reference(x, params):
    hp = jax.lax.Precision.HIGHEST

    def dwconv(v, p):
        dw, db, pw, pb = p
        v = jax.lax.conv_general_dilated(
            v, dw, window_strides=(1, 1), padding=((1, 1), (1, 1)),
            dimension_numbers=("NCHW", "OIHW", "NCHW"),
            feature_group_count=v.shape[1], precision=hp)
        v = v + db[None, :, None, None]
        v = jax.lax.conv_general_dilated(
            v, pw, window_strides=(1, 1), padding="VALID",
            dimension_numbers=("NCHW", "OIHW", "NCHW"), precision=hp)
        return v + pb[None, :, None, None]

    out = jax.nn.relu(dwconv(x, params["conv1"]))
    out = jax.nn.relu(dwconv(out, params["conv2"]))
    out = jax.nn.relu(dwconv(out, params["conv3"]))

    C = out.shape[1]
    hidden = params["ca_w1"].shape[0]
    w1m = params["ca_w1"].reshape(hidden, C)
    w2m = params["ca_w2"].reshape(C, hidden)

    def fc(v):
        h = jnp.maximum(jnp.dot(v, w1m.T, precision=hp), 0.0)
        return jnp.dot(h, w2m.T, precision=hp)

    avg = jnp.mean(out, axis=(2, 3))
    mx = jnp.max(out, axis=(2, 3))
    out = jax.nn.sigmoid(fc(avg) + fc(mx))[:, :, None, None] * out

    sa_in = jnp.concatenate(
        [jnp.mean(out, axis=1, keepdims=True),
         jnp.max(out, axis=1, keepdims=True)], axis=1)
    s = jax.lax.conv_general_dilated(
        sa_in, params["sa_w"], window_strides=(1, 1),
        padding=((3, 3), (3, 3)),
        dimension_numbers=("NCHW", "OIHW", "NCHW"), precision=hp)
    out = jax.nn.sigmoid(s) * out
    return out + x


if __name__ == "__main__":
    # ChannelAttention uses in_planes // 16 hidden channels, so in_planes must
    # be >= 16 for a non-degenerate block: use in_planes=32 (hidden=2),
    # mid_planes = 4 * in_planes = 128, as ResBlockWithCBAM would.
    B, C_in, H, W = 2, 32, 16, 16
    mid = 4 * C_in
    hidden = C_in // 16

    key = jax.random.PRNGKey(0)
    ks = jax.random.split(key, 16)

    def rnd(k, shape, scale=0.1):
        return jax.random.normal(k, shape, dtype=jnp.float32) * scale

    params = {
        "conv1": (rnd(ks[0], (C_in, 1, 3, 3)), rnd(ks[1], (C_in,)),
                  rnd(ks[2], (mid, C_in, 1, 1)), rnd(ks[3], (mid,))),
        "conv2": (rnd(ks[4], (mid, 1, 3, 3)), rnd(ks[5], (mid,)),
                  rnd(ks[6], (mid, mid, 1, 1)), rnd(ks[7], (mid,))),
        "conv3": (rnd(ks[8], (mid, 1, 3, 3)), rnd(ks[9], (mid,)),
                  rnd(ks[10], (C_in, mid, 1, 1)), rnd(ks[11], (C_in,))),
        "ca_w1": rnd(ks[12], (hidden, C_in, 1, 1)),
        "ca_w2": rnd(ks[13], (C_in, hidden, 1, 1)),
        "sa_w": rnd(ks[14], (1, 2, 7, 7)),
    }
    x = jax.random.normal(ks[15], (B, C_in, H, W), dtype=jnp.float32)

    out = jax.block_until_ready(jax.jit(res_block_with_cbam)(x, params))
    ref = _reference(x, params)

    assert out.shape == (B, C_in, H, W)
    err = float(jnp.max(jnp.abs(out - ref)))
    # In-kernel matmuls run at the MXU's default (non-HIGHEST) precision;
    # allow for the resulting small deviation from the full-f32 reference.
    assert jnp.allclose(out, ref, atol=1e-3, rtol=1e-3), err
    print("KERNEL_OK")
</pallas_src>

<mosaic_0001>
module attributes {stable_mosaic.version = 11 : i64} {
  func.func @_resblock_cbam_kernel(%arg0: i32, %arg1: memref<1x16x16x32xf32, #tpu.memory_space<vmem>>, %arg2: memref<9x32xf32, #tpu.memory_space<vmem>>, %arg3: memref<32x128xf32, #tpu.memory_space<vmem>>, %arg4: memref<1x128xf32, #tpu.memory_space<vmem>>, %arg5: memref<9x128xf32, #tpu.memory_space<vmem>>, %arg6: memref<128x128xf32, #tpu.memory_space<vmem>>, %arg7: memref<1x128xf32, #tpu.memory_space<vmem>>, %arg8: memref<9x128xf32, #tpu.memory_space<vmem>>, %arg9: memref<128x32xf32, #tpu.memory_space<vmem>>, %arg10: memref<1x32xf32, #tpu.memory_space<vmem>>, %arg11: memref<32x2xf32, #tpu.memory_space<vmem>>, %arg12: memref<2x32xf32, #tpu.memory_space<vmem>>, %arg13: memref<49x2xf32, #tpu.memory_space<vmem>>, %arg14: memref<1x16x16x32xf32, #tpu.memory_space<vmem>>, %arg15: memref<18x18x32xf32, #tpu.memory_space<vmem>>, %arg16: memref<18x18x128xf32, #tpu.memory_space<vmem>>, %arg17: memref<2x32xf32, #tpu.memory_space<vmem>>, %arg18: memref<22x22x2xf32, #tpu.memory_space<vmem>>) attributes {dimension_semantics = [#tpu.dimension_semantics<parallel>], iteration_bounds = array<i64: 2>, scalar_prefetch = 0 : i64, scratch_operands = 4 : i64, tpu.core_type = #tpu.core_type<tc>, window_params = [{transform_indices = @transform_0, window_bounds = array<i64: 1, 16, 16, 32>}, {pipeline_mode = #tpu.pipeline_mode<synchronous>, transform_indices = @transform_1, window_bounds = array<i64: 9, 32>}, {pipeline_mode = #tpu.pipeline_mode<synchronous>, transform_indices = @transform_2, window_bounds = array<i64: 32, 128>}, {pipeline_mode = #tpu.pipeline_mode<synchronous>, transform_indices = @transform_3, window_bounds = array<i64: 1, 128>}, {pipeline_mode = #tpu.pipeline_mode<synchronous>, transform_indices = @transform_4, window_bounds = array<i64: 9, 128>}, {pipeline_mode = #tpu.pipeline_mode<synchronous>, transform_indices = @transform_5, window_bounds = array<i64: 128, 128>}, {pipeline_mode = #tpu.pipeline_mode<synchronous>, transform_indices = @transform_6, window_bounds = array<i64: 1, 128>}, {pipeline_mode = #tpu.pipeline_mode<synchronous>, transform_indices = @transform_7, window_bounds = array<i64: 9, 128>}, {pipeline_mode = #tpu.pipeline_mode<synchronous>, transform_indices = @transform_8, window_bounds = array<i64: 128, 32>}, {pipeline_mode = #tpu.pipeline_mode<synchronous>, transform_indices = @transform_9, window_bounds = array<i64: 1, 32>}, {pipeline_mode = #tpu.pipeline_mode<synchronous>, transform_indices = @transform_10, window_bounds = array<i64: 32, 2>}, {pipeline_mode = #tpu.pipeline_mode<synchronous>, transform_indices = @transform_11, window_bounds = array<i64: 2, 32>}, {pipeline_mode = #tpu.pipeline_mode<synchronous>, transform_indices = @transform_12, window_bounds = array<i64: 49, 2>}, {transform_indices = @transform_13, window_bounds = array<i64: 1, 16, 16, 32>}]} {
    %cst = arith.constant 0.000000e+00 : f32
    %0 = vector.broadcast %cst : f32 to vector<18x18x32xf32>
    %c0 = arith.constant 0 : index
    %c0_0 = arith.constant 0 : index
    %c0_1 = arith.constant 0 : index
    %1 = vector.load %arg15[%c0, %c0_0, %c0_1] : memref<18x18x32xf32, #tpu.memory_space<vmem>>, vector<18x18x32xf32>
    tpu.vector_store %arg15[%c0, %c0_0, %c0_1], %0 {strides = array<i32>} : memref<18x18x32xf32, #tpu.memory_space<vmem>>, vector<18x18x32xf32>,
    %c0_2 = arith.constant 0 : index
    %c0_3 = arith.constant 0 : index
    %c0_4 = arith.constant 0 : index
    %c0_5 = arith.constant 0 : index
    %2 = vector.load %arg1[%c0_2, %c0_3, %c0_4, %c0_5] : memref<1x16x16x32xf32, #tpu.memory_space<vmem>>, vector<1x16x16x32xf32>
    %3 = vector.shape_cast %2 : vector<1x16x16x32xf32> to vector<16x16x32xf32>
    %c1 = arith.constant 1 : index
    %c1_6 = arith.constant 1 : index
    %c0_7 = arith.constant 0 : index
    %4 = vector.load %arg15[%c1, %c1_6, %c0_7] : memref<18x18x32xf32, #tpu.memory_space<vmem>>, vector<16x16x32xf32>
    tpu.vector_store %arg15[%c1, %c1_6, %c0_7], %3 {strides = array<i32>} : memref<18x18x32xf32, #tpu.memory_space<vmem>>, vector<16x16x32xf32>,
    %c0_8 = arith.constant 0 : index
    %c0_9 = arith.constant 0 : index
    %5 = vector.load %arg2[%c0_8, %c0_9] : memref<9x32xf32, #tpu.memory_space<vmem>>, vector<9x32xf32>
    %c0_10 = arith.constant 0 : index
    %c0_11 = arith.constant 0 : index
    %c0_12 = arith.constant 0 : index
    %6 = vector.load %arg15[%c0_10, %c0_11, %c0_12] : memref<18x18x32xf32, #tpu.memory_space<vmem>>, vector<18x16x32xf32>
    %7 = vector.extract_strided_slice %6 {offsets = [0, 0, 0], sizes = [16, 16, 32], strides = [1, 1, 1]} : vector<18x16x32xf32> to vector<16x16x32xf32>
    %8 = vector.extract_strided_slice %5 {offsets = [0, 0], sizes = [1, 32], strides = [1, 1]} : vector<9x32xf32> to vector<1x32xf32>
    %9 = vector.shape_cast %8 : vector<1x32xf32> to vector<1x1x32xf32>
    %10 = vector.broadcast %9 : vector<1x1x32xf32> to vector<16x16x32xf32>
    %11 = arith.mulf %7, %10 : vector<16x16x32xf32>
    %12 = vector.extract_strided_slice %6 {offsets = [1, 0, 0], sizes = [16, 16, 32], strides = [1, 1, 1]} : vector<18x16x32xf32> to vector<16x16x32xf32>
    %13 = vector.extract_strided_slice %5 {offsets = [3, 0], sizes = [1, 32], strides = [1, 1]} : vector<9x32xf32> to vector<1x32xf32>
    %14 = vector.shape_cast %13 : vector<1x32xf32> to vector<1x1x32xf32>
    %15 = vector.broadcast %14 : vector<1x1x32xf32> to vector<16x16x32xf32>
    %16 = arith.mulf %12, %15 : vector<16x16x32xf32>
    %17 = arith.addf %11, %16 : vector<16x16x32xf32>
    %18 = vector.extract_strided_slice %6 {offsets = [2, 0, 0], sizes = [16, 16, 32], strides = [1, 1, 1]} : vector<18x16x32xf32> to vector<16x16x32xf32>
    %19 = vector.extract_strided_slice %5 {offsets = [6, 0], sizes = [1, 32], strides = [1, 1]} : vector<9x32xf32> to vector<1x32xf32>
    %20 = vector.shape_cast %19 : vector<1x32xf32> to vector<1x1x32xf32>
    %21 = vector.broadcast %20 : vector<1x1x32xf32> to vector<16x16x32xf32>
    %22 = arith.mulf %18, %21 : vector<16x16x32xf32>
    %23 = arith.addf %17, %22 : vector<16x16x32xf32>
    %c0_13 = arith.constant 0 : index
    %c1_14 = arith.constant 1 : index
    %c0_15 = arith.constant 0 : index
    %24 = vector.load %arg15[%c0_13, %c1_14, %c0_15] : memref<18x18x32xf32, #tpu.memory_space<vmem>>, vector<18x16x32xf32>
    %25 = vector.extract_strided_slice %24 {offsets = [0, 0, 0], sizes = [16, 16, 32], strides = [1, 1, 1]} : vector<18x16x32xf32> to vector<16x16x32xf32>
    %26 = vector.extract_strided_slice %5 {offsets = [1, 0], sizes = [1, 32], strides = [1, 1]} : vector<9x32xf32> to vector<1x32xf32>
    %27 = vector.shape_cast %26 : vector<1x32xf32> to vector<1x1x32xf32>
    %28 = vector.broadcast %27 : vector<1x1x32xf32> to vector<16x16x32xf32>
    %29 = arith.mulf %25, %28 : vector<16x16x32xf32>
    %30 = arith.addf %23, %29 : vector<16x16x32xf32>
    %31 = vector.extract_strided_slice %24 {offsets = [1, 0, 0], sizes = [16, 16, 32], strides = [1, 1, 1]} : vector<18x16x32xf32> to vector<16x16x32xf32>
    %32 = vector.extract_strided_slice %5 {offsets = [4, 0], sizes = [1, 32], strides = [1, 1]} : vector<9x32xf32> to vector<1x32xf32>
    %33 = vector.shape_cast %32 : vector<1x32xf32> to vector<1x1x32xf32>
    %34 = vector.broadcast %33 : vector<1x1x32xf32> to vector<16x16x32xf32>
    %35 = arith.mulf %31, %34 : vector<16x16x32xf32>
    %36 = arith.addf %30, %35 : vector<16x16x32xf32>
    %37 = vector.extract_strided_slice %24 {offsets = [2, 0, 0], sizes = [16, 16, 32], strides = [1, 1, 1]} : vector<18x16x32xf32> to vector<16x16x32xf32>
    %38 = vector.extract_strided_slice %5 {offsets = [7, 0], sizes = [1, 32], strides = [1, 1]} : vector<9x32xf32> to vector<1x32xf32>
    %39 = vector.shape_cast %38 : vector<1x32xf32> to vector<1x1x32xf32>
    %40 = vector.broadcast %39 : vector<1x1x32xf32> to vector<16x16x32xf32>
    %41 = arith.mulf %37, %40 : vector<16x16x32xf32>
    %42 = arith.addf %36, %41 : vector<16x16x32xf32>
    %c0_16 = arith.constant 0 : index
    %c2 = arith.constant 2 : index
    %c0_17 = arith.constant 0 : index
    %43 = vector.load %arg15[%c0_16, %c2, %c0_17] : memref<18x18x32xf32, #tpu.memory_space<vmem>>, vector<18x16x32xf32>
    %44 = vector.extract_strided_slice %43 {offsets = [0, 0, 0], sizes = [16, 16, 32], strides = [1, 1, 1]} : vector<18x16x32xf32> to vector<16x16x32xf32>
    %45 = vector.extract_strided_slice %5 {offsets = [2, 0], sizes = [1, 32], strides = [1, 1]} : vector<9x32xf32> to vector<1x32xf32>
    %46 = vector.shape_cast %45 : vector<1x32xf32> to vector<1x1x32xf32>
    %47 = vector.broadcast %46 : vector<1x1x32xf32> to vector<16x16x32xf32>
    %48 = arith.mulf %44, %47 : vector<16x16x32xf32>
    %49 = arith.addf %42, %48 : vector<16x16x32xf32>
    %50 = vector.extract_strided_slice %43 {offsets = [1, 0, 0], sizes = [16, 16, 32], strides = [1, 1, 1]} : vector<18x16x32xf32> to vector<16x16x32xf32>
    %51 = vector.extract_strided_slice %5 {offsets = [5, 0], sizes = [1, 32], strides = [1, 1]} : vector<9x32xf32> to vector<1x32xf32>
    %52 = vector.shape_cast %51 : vector<1x32xf32> to vector<1x1x32xf32>
    %53 = vector.broadcast %52 : vector<1x1x32xf32> to vector<16x16x32xf32>
    %54 = arith.mulf %50, %53 : vector<16x16x32xf32>
    %55 = arith.addf %49, %54 : vector<16x16x32xf32>
    %56 = vector.extract_strided_slice %43 {offsets = [2, 0, 0], sizes = [16, 16, 32], strides = [1, 1, 1]} : vector<18x16x32xf32> to vector<16x16x32xf32>
    %57 = vector.extract_strided_slice %5 {offsets = [8, 0], sizes = [1, 32], strides = [1, 1]} : vector<9x32xf32> to vector<1x32xf32>
    %58 = vector.shape_cast %57 : vector<1x32xf32> to vector<1x1x32xf32>
    %59 = vector.broadcast %58 : vector<1x1x32xf32> to vector<16x16x32xf32>
    %60 = arith.mulf %56, %59 : vector<16x16x32xf32>
    %61 = arith.addf %55, %60 : vector<16x16x32xf32>
    %62 = vector.shape_cast %61 : vector<16x16x32xf32> to vector<256x32xf32>
    %c0_18 = arith.constant 0 : index
    %c0_19 = arith.constant 0 : index
    %63 = vector.load %arg3[%c0_18, %c0_19] : memref<32x128xf32, #tpu.memory_space<vmem>>, vector<32x128xf32>
    %cst_20 = arith.constant dense<0.000000e+00> : vector<256x128xf32>
    %64 = tpu.matmul %62, %63, %cst_20 {dimension_numbers = #tpu.dot_dimension_numbers<[1], [0], [0], [1], [0, 0, 1, 1], [], []>} : vector<256x32xf32>, vector<32x128xf32>, vector<256x128xf32> -> vector<256x128xf32>
    %c0_21 = arith.constant 0 : index
    %c0_22 = arith.constant 0 : index
    %65 = vector.load %arg4[%c0_21, %c0_22] : memref<1x128xf32, #tpu.memory_space<vmem>>, vector<1x128xf32>
    %66 = vector.broadcast %65 : vector<1x128xf32> to vector<256x128xf32>
    %67 = arith.addf %64, %66 : vector<256x128xf32>
    %cst_23 = arith.constant 0.000000e+00 : f32
    %68 = vector.broadcast %cst_23 : f32 to vector<256x128xf32>
    %69 = arith.maximumf %67, %68 : vector<256x128xf32>
    %cst_24 = arith.constant 0.000000e+00 : f32
    %70 = vector.broadcast %cst_24 : f32 to vector<18x18x128xf32>
    %c0_25 = arith.constant 0 : index
    %c0_26 = arith.constant 0 : index
    %c0_27 = arith.constant 0 : index
    %71 = vector.load %arg16[%c0_25, %c0_26, %c0_27] : memref<18x18x128xf32, #tpu.memory_space<vmem>>, vector<18x18x128xf32>
    tpu.vector_store %arg16[%c0_25, %c0_26, %c0_27], %70 {strides = array<i32>} : memref<18x18x128xf32, #tpu.memory_space<vmem>>, vector<18x18x128xf32>,
    %72 = vector.shape_cast %69 : vector<256x128xf32> to vector<16x16x128xf32>
    %c1_28 = arith.constant 1 : index
    %c1_29 = arith.constant 1 : index
    %c0_30 = arith.constant 0 : index
    %73 = vector.load %arg16[%c1_28, %c1_29, %c0_30] : memref<18x18x128xf32, #tpu.memory_space<vmem>>, vector<16x16x128xf32>
    tpu.vector_store %arg16[%c1_28, %c1_29, %c0_30], %72 {strides = array<i32>} : memref<18x18x128xf32, #tpu.memory_space<vmem>>, vector<16x16x128xf32>,
    %c0_31 = arith.constant 0 : index
    %c0_32 = arith.constant 0 : index
    %74 = vector.load %arg5[%c0_31, %c0_32] : memref<9x128xf32, #tpu.memory_space<vmem>>, vector<9x128xf32>
    %c0_33 = arith.constant 0 : index
    %c0_34 = arith.constant 0 : index
    %c0_35 = arith.constant 0 : index
    %75 = vector.load %arg16[%c0_33, %c0_34, %c0_35] : memref<18x18x128xf32, #tpu.memory_space<vmem>>, vector<18x16x128xf32>
    %76 = vector.extract_strided_slice %75 {offsets = [0, 0, 0], sizes = [16, 16, 128], strides = [1, 1, 1]} : vector<18x16x128xf32> to vector<16x16x128xf32>
    %77 = vector.extract_strided_slice %74 {offsets = [0, 0], sizes = [1, 128], strides = [1, 1]} : vector<9x128xf32> to vector<1x128xf32>
    %78 = vector.shape_cast %77 : vector<1x128xf32> to vector<1x1x128xf32>
    %79 = vector.broadcast %78 : vector<1x1x128xf32> to vector<16x16x128xf32>
    %80 = arith.mulf %76, %79 : vector<16x16x128xf32>
    %81 = vector.extract_strided_slice %75 {offsets = [1, 0, 0], sizes = [16, 16, 128], strides = [1, 1, 1]} : vector<18x16x128xf32> to vector<16x16x128xf32>
    %82 = vector.extract_strided_slice %74 {offsets = [3, 0], sizes = [1, 128], strides = [1, 1]} : vector<9x128xf32> to vector<1x128xf32>
    %83 = vector.shape_cast %82 : vector<1x128xf32> to vector<1x1x128xf32>
    %84 = vector.broadcast %83 : vector<1x1x128xf32> to vector<16x16x128xf32>
    %85 = arith.mulf %81, %84 : vector<16x16x128xf32>
    %86 = arith.addf %80, %85 : vector<16x16x128xf32>
    %87 = vector.extract_strided_slice %75 {offsets = [2, 0, 0], sizes = [16, 16, 128], strides = [1, 1, 1]} : vector<18x16x128xf32> to vector<16x16x128xf32>
    %88 = vector.extract_strided_slice %74 {offsets = [6, 0], sizes = [1, 128], strides = [1, 1]} : vector<9x128xf32> to vector<1x128xf32>
    %89 = vector.shape_cast %88 : vector<1x128xf32> to vector<1x1x128xf32>
    %90 = vector.broadcast %89 : vector<1x1x128xf32> to vector<16x16x128xf32>
    %91 = arith.mulf %87, %90 : vector<16x16x128xf32>
    %92 = arith.addf %86, %91 : vector<16x16x128xf32>
    %c0_36 = arith.constant 0 : index
    %c1_37 = arith.constant 1 : index
    %c0_38 = arith.constant 0 : index
    %93 = vector.load %arg16[%c0_36, %c1_37, %c0_38] : memref<18x18x128xf32, #tpu.memory_space<vmem>>, vector<18x16x128xf32>
    %94 = vector.extract_strided_slice %93 {offsets = [0, 0, 0], sizes = [16, 16, 128], strides = [1, 1, 1]} : vector<18x16x128xf32> to vector<16x16x128xf32>
    %95 = vector.extract_strided_slice %74 {offsets = [1, 0], sizes = [1, 128], strides = [1, 1]} : vector<9x128xf32> to vector<1x128xf32>
    %96 = vector.shape_cast %95 : vector<1x128xf32> to vector<1x1x128xf32>
    %97 = vector.broadcast %96 : vector<1x1x128xf32> to vector<16x16x128xf32>
    %98 = arith.mulf %94, %97 : vector<16x16x128xf32>
    %99 = arith.addf %92, %98 : vector<16x16x128xf32>
    %100 = vector.extract_strided_slice %93 {offsets = [1, 0, 0], sizes = [16, 16, 128], strides = [1, 1, 1]} : vector<18x16x128xf32> to vector<16x16x128xf32>
    %101 = vector.extract_strided_slice %74 {offsets = [4, 0], sizes = [1, 128], strides = [1, 1]} : vector<9x128xf32> to vector<1x128xf32>
    %102 = vector.shape_cast %101 : vector<1x128xf32> to vector<1x1x128xf32>
    %103 = vector.broadcast %102 : vector<1x1x128xf32> to vector<16x16x128xf32>
    %104 = arith.mulf %100, %103 : vector<16x16x128xf32>
    %105 = arith.addf %99, %104 : vector<16x16x128xf32>
    %106 = vector.extract_strided_slice %93 {offsets = [2, 0, 0], sizes = [16, 16, 128], strides = [1, 1, 1]} : vector<18x16x128xf32> to vector<16x16x128xf32>
    %107 = vector.extract_strided_slice %74 {offsets = [7, 0], sizes = [1, 128], strides = [1, 1]} : vector<9x128xf32> to vector<1x128xf32>
    %108 = vector.shape_cast %107 : vector<1x128xf32> to vector<1x1x128xf32>
    %109 = vector.broadcast %108 : vector<1x1x128xf32> to vector<16x16x128xf32>
    %110 = arith.mulf %106, %109 : vector<16x16x128xf32>
    %111 = arith.addf %105, %110 : vector<16x16x128xf32>
    %c0_39 = arith.constant 0 : index
    %c2_40 = arith.constant 2 : index
    %c0_41 = arith.constant 0 : index
    %112 = vector.load %arg16[%c0_39, %c2_40, %c0_41] : memref<18x18x128xf32, #tpu.memory_space<vmem>>, vector<18x16x128xf32>
    %113 = vector.extract_strided_slice %112 {offsets = [0, 0, 0], sizes = [16, 16, 128], strides = [1, 1, 1]} : vector<18x16x128xf32> to vector<16x16x128xf32>
    %114 = vector.extract_strided_slice %74 {offsets = [2, 0], sizes = [1, 128], strides = [1, 1]} : vector<9x128xf32> to vector<1x128xf32>
    %115 = vector.shape_cast %114 : vector<1x128xf32> to vector<1x1x128xf32>
    %116 = vector.broadcast %115 : vector<1x1x128xf32> to vector<16x16x128xf32>
    %117 = arith.mulf %113, %116 : vector<16x16x128xf32>
    %118 = arith.addf %111, %117 : vector<16x16x128xf32>
    %119 = vector.extract_strided_slice %112 {offsets = [1, 0, 0], sizes = [16, 16, 128], strides = [1, 1, 1]} : vector<18x16x128xf32> to vector<16x16x128xf32>
    %120 = vector.extract_strided_slice %74 {offsets = [5, 0], sizes = [1, 128], strides = [1, 1]} : vector<9x128xf32> to vector<1x128xf32>
    %121 = vector.shape_cast %120 : vector<1x128xf32> to vector<1x1x128xf32>
    %122 = vector.broadcast %121 : vector<1x1x128xf32> to vector<16x16x128xf32>
    %123 = arith.mulf %119, %122 : vector<16x16x128xf32>
    %124 = arith.addf %118, %123 : vector<16x16x128xf32>
    %125 = vector.extract_strided_slice %112 {offsets = [2, 0, 0], sizes = [16, 16, 128], strides = [1, 1, 1]} : vector<18x16x128xf32> to vector<16x16x128xf32>
    %126 = vector.extract_strided_slice %74 {offsets = [8, 0], sizes = [1, 128], strides = [1, 1]} : vector<9x128xf32> to vector<1x128xf32>
    %127 = vector.shape_cast %126 : vector<1x128xf32> to vector<1x1x128xf32>
    %128 = vector.broadcast %127 : vector<1x1x128xf32> to vector<16x16x128xf32>
    %129 = arith.mulf %125, %128 : vector<16x16x128xf32>
    %130 = arith.addf %124, %129 : vector<16x16x128xf32>
    %131 = vector.shape_cast %130 : vector<16x16x128xf32> to vector<256x128xf32>
    %c0_42 = arith.constant 0 : index
    %c0_43 = arith.constant 0 : index
    %132 = vector.load %arg6[%c0_42, %c0_43] : memref<128x128xf32, #tpu.memory_space<vmem>>, vector<128x128xf32>
    %cst_44 = arith.constant dense<0.000000e+00> : vector<256x128xf32>
    %133 = tpu.matmul %131, %132, %cst_44 {dimension_numbers = #tpu.dot_dimension_numbers<[1], [0], [0], [1], [0, 0, 1, 1], [], []>} : vector<256x128xf32>, vector<128x128xf32>, vector<256x128xf32> -> vector<256x128xf32>
    %c0_45 = arith.constant 0 : index
    %c0_46 = arith.constant 0 : index
    %134 = vector.load %arg7[%c0_45, %c0_46] : memref<1x128xf32, #tpu.memory_space<vmem>>, vector<1x128xf32>
    %135 = vector.broadcast %134 : vector<1x128xf32> to vector<256x128xf32>
    %136 = arith.addf %133, %135 : vector<256x128xf32>
    %cst_47 = arith.constant 0.000000e+00 : f32
    %137 = vector.broadcast %cst_47 : f32 to vector<256x128xf32>
    %138 = arith.maximumf %136, %137 : vector<256x128xf32>
    %139 = vector.shape_cast %138 : vector<256x128xf32> to vector<16x16x128xf32>
    %c1_48 = arith.constant 1 : index
    %c1_49 = arith.constant 1 : index
    %c0_50 = arith.constant 0 : index
    %140 = vector.load %arg16[%c1_48, %c1_49, %c0_50] : memref<18x18x128xf32, #tpu.memory_space<vmem>>, vector<16x16x128xf32>
    tpu.vector_store %arg16[%c1_48, %c1_49, %c0_50], %139 {strides = array<i32>} : memref<18x18x128xf32, #tpu.memory_space<vmem>>, vector<16x16x128xf32>,
    %c0_51 = arith.constant 0 : index
    %c0_52 = arith.constant 0 : index
    %141 = vector.load %arg8[%c0_51, %c0_52] : memref<9x128xf32, #tpu.memory_space<vmem>>, vector<9x128xf32>
    %c0_53 = arith.constant 0 : index
    %c0_54 = arith.constant 0 : index
    %c0_55 = arith.constant 0 : index
    %142 = vector.load %arg16[%c0_53, %c0_54, %c0_55] : memref<18x18x128xf32, #tpu.memory_space<vmem>>, vector<18x16x128xf32>
    %143 = vector.extract_strided_slice %142 {offsets = [0, 0, 0], sizes = [16, 16, 128], strides = [1, 1, 1]} : vector<18x16x128xf32> to vector<16x16x128xf32>
    %144 = vector.extract_strided_slice %141 {offsets = [0, 0], sizes = [1, 128], strides = [1, 1]} : vector<9x128xf32> to vector<1x128xf32>
    %145 = vector.shape_cast %144 : vector<1x128xf32> to vector<1x1x128xf32>
    %146 = vector.broadcast %145 : vector<1x1x128xf32> to vector<16x16x128xf32>
    %147 = arith.mulf %143, %146 : vector<16x16x128xf32>
    %148 = vector.extract_strided_slice %142 {offsets = [1, 0, 0], sizes = [16, 16, 128], strides = [1, 1, 1]} : vector<18x16x128xf32> to vector<16x16x128xf32>
    %149 = vector.extract_strided_slice %141 {offsets = [3, 0], sizes = [1, 128], strides = [1, 1]} : vector<9x128xf32> to vector<1x128xf32>
    %150 = vector.shape_cast %149 : vector<1x128xf32> to vector<1x1x128xf32>
    %151 = vector.broadcast %150 : vector<1x1x128xf32> to vector<16x16x128xf32>
    %152 = arith.mulf %148, %151 : vector<16x16x128xf32>
    %153 = arith.addf %147, %152 : vector<16x16x128xf32>
    %154 = vector.extract_strided_slice %142 {offsets = [2, 0, 0], sizes = [16, 16, 128], strides = [1, 1, 1]} : vector<18x16x128xf32> to vector<16x16x128xf32>
    %155 = vector.extract_strided_slice %141 {offsets = [6, 0], sizes = [1, 128], strides = [1, 1]} : vector<9x128xf32> to vector<1x128xf32>
    %156 = vector.shape_cast %155 : vector<1x128xf32> to vector<1x1x128xf32>
    %157 = vector.broadcast %156 : vector<1x1x128xf32> to vector<16x16x128xf32>
    %158 = arith.mulf %154, %157 : vector<16x16x128xf32>
    %159 = arith.addf %153, %158 : vector<16x16x128xf32>
    %c0_56 = arith.constant 0 : index
    %c1_57 = arith.constant 1 : index
    %c0_58 = arith.constant 0 : index
    %160 = vector.load %arg16[%c0_56, %c1_57, %c0_58] : memref<18x18x128xf32, #tpu.memory_space<vmem>>, vector<18x16x128xf32>
    %161 = vector.extract_strided_slice %160 {offsets = [0, 0, 0], sizes = [16, 16, 128], strides = [1, 1, 1]} : vector<18x16x128xf32> to vector<16x16x128xf32>
    %162 = vector.extract_strided_slice %141 {offsets = [1, 0], sizes = [1, 128], strides = [1, 1]} : vector<9x128xf32> to vector<1x128xf32>
    %163 = vector.shape_cast %162 : vector<1x128xf32> to vector<1x1x128xf32>
    %164 = vector.broadcast %163 : vector<1x1x128xf32> to vector<16x16x128xf32>
    %165 = arith.mulf %161, %164 : vector<16x16x128xf32>
    %166 = arith.addf %159, %165 : vector<16x16x128xf32>
    %167 = vector.extract_strided_slice %160 {offsets = [1, 0, 0], sizes = [16, 16, 128], strides = [1, 1, 1]} : vector<18x16x128xf32> to vector<16x16x128xf32>
    %168 = vector.extract_strided_slice %141 {offsets = [4, 0], sizes = [1, 128], strides = [1, 1]} : vector<9x128xf32> to vector<1x128xf32>
    %169 = vector.shape_cast %168 : vector<1x128xf32> to vector<1x1x128xf32>
    %170 = vector.broadcast %169 : vector<1x1x128xf32> to vector<16x16x128xf32>
    %171 = arith.mulf %167, %170 : vector<16x16x128xf32>
    %172 = arith.addf %166, %171 : vector<16x16x128xf32>
    %173 = vector.extract_strided_slice %160 {offsets = [2, 0, 0], sizes = [16, 16, 128], strides = [1, 1, 1]} : vector<18x16x128xf32> to vector<16x16x128xf32>
    %174 = vector.extract_strided_slice %141 {offsets = [7, 0], sizes = [1, 128], strides = [1, 1]} : vector<9x128xf32> to vector<1x128xf32>
    %175 = vector.shape_cast %174 : vector<1x128xf32> to vector<1x1x128xf32>
    %176 = vector.broadcast %175 : vector<1x1x128xf32> to vector<16x16x128xf32>
    %177 = arith.mulf %173, %176 : vector<16x16x128xf32>
    %178 = arith.addf %172, %177 : vector<16x16x128xf32>
    %c0_59 = arith.constant 0 : index
    %c2_60 = arith.constant 2 : index
    %c0_61 = arith.constant 0 : index
    %179 = vector.load %arg16[%c0_59, %c2_60, %c0_61] : memref<18x18x128xf32, #tpu.memory_space<vmem>>, vector<18x16x128xf32>
    %180 = vector.extract_strided_slice %179 {offsets = [0, 0, 0], sizes = [16, 16, 128], strides = [1, 1, 1]} : vector<18x16x128xf32> to vector<16x16x128xf32>
    %181 = vector.extract_strided_slice %141 {offsets = [2, 0], sizes = [1, 128], strides = [1, 1]} : vector<9x128xf32> to vector<1x128xf32>
    %182 = vector.shape_cast %181 : vector<1x128xf32> to vector<1x1x128xf32>
    %183 = vector.broadcast %182 : vector<1x1x128xf32> to vector<16x16x128xf32>
    %184 = arith.mulf %180, %183 : vector<16x16x128xf32>
    %185 = arith.addf %178, %184 : vector<16x16x128xf32>
    %186 = vector.extract_strided_slice %179 {offsets = [1, 0, 0], sizes = [16, 16, 128], strides = [1, 1, 1]} : vector<18x16x128xf32> to vector<16x16x128xf32>
    %187 = vector.extract_strided_slice %141 {offsets = [5, 0], sizes = [1, 128], strides = [1, 1]} : vector<9x128xf32> to vector<1x128xf32>
    %188 = vector.shape_cast %187 : vector<1x128xf32> to vector<1x1x128xf32>
    %189 = vector.broadcast %188 : vector<1x1x128xf32> to vector<16x16x128xf32>
    %190 = arith.mulf %186, %189 : vector<16x16x128xf32>
    %191 = arith.addf %185, %190 : vector<16x16x128xf32>
    %192 = vector.extract_strided_slice %179 {offsets = [2, 0, 0], sizes = [16, 16, 128], strides = [1, 1, 1]} : vector<18x16x128xf32> to vector<16x16x128xf32>
    %193 = vector.extract_strided_slice %141 {offsets = [8, 0], sizes = [1, 128], strides = [1, 1]} : vector<9x128xf32> to vector<1x128xf32>
    %194 = vector.shape_cast %193 : vector<1x128xf32> to vector<1x1x128xf32>
    %195 = vector.broadcast %194 : vector<1x1x128xf32> to vector<16x16x128xf32>
    %196 = arith.mulf %192, %195 : vector<16x16x128xf32>
    %197 = arith.addf %191, %196 : vector<16x16x128xf32>
    %198 = vector.shape_cast %197 : vector<16x16x128xf32> to vector<256x128xf32>
    %c0_62 = arith.constant 0 : index
    %c0_63 = arith.constant 0 : index
    %199 = vector.load %arg9[%c0_62, %c0_63] : memref<128x32xf32, #tpu.memory_space<vmem>>, vector<128x32xf32>
    %cst_64 = arith.constant dense<0.000000e+00> : vector<256x32xf32>
    %200 = tpu.matmul %198, %199, %cst_64 {dimension_numbers = #tpu.dot_dimension_numbers<[1], [0], [0], [1], [0, 0, 1, 1], [], []>} : vector<256x128xf32>, vector<128x32xf32>, vector<256x32xf32> -> vector<256x32xf32>
    %c0_65 = arith.constant 0 : index
    %c0_66 = arith.constant 0 : index
    %201 = vector.load %arg10[%c0_65, %c0_66] : memref<1x32xf32, #tpu.memory_space<vmem>>, vector<1x32xf32>
    %202 = vector.broadcast %201 : vector<1x32xf32> to vector<256x32xf32>
    %203 = arith.addf %200, %202 : vector<256x32xf32>
    %cst_67 = arith.constant 0.000000e+00 : f32
    %204 = vector.broadcast %cst_67 : f32 to vector<256x32xf32>
    %205 = arith.maximumf %203, %204 : vector<256x32xf32>
    %cst_68 = arith.constant dense<0.000000e+00> : vector<32xf32>
    %206 = vector.multi_reduction <add>, %205, %cst_68 [0] : vector<256x32xf32> to vector<32xf32>
    %207 = vector.shape_cast %206 : vector<32xf32> to vector<1x32xf32>
    %cst_69 = arith.constant 3.906250e-03 : f32
    %208 = vector.broadcast %cst_69 : f32 to vector<1x32xf32>
    %209 = arith.mulf %207, %208 : vector<1x32xf32>
    %c0_70 = arith.constant 0 : index
    %c0_71 = arith.constant 0 : index
    %210 = vector.load %arg17[%c0_70, %c0_71] : memref<2x32xf32, #tpu.memory_space<vmem>>, vector<1x32xf32>
    tpu.vector_store %arg17[%c0_70, %c0_71], %209 {strides = array<i32>} : memref<2x32xf32, #tpu.memory_space<vmem>>, vector<1x32xf32>,
    %cst_72 = arith.constant dense<0xFF800000> : vector<32xf32>
    %211 = vector.multi_reduction <maximumf>, %205, %cst_72 [0] : vector<256x32xf32> to vector<32xf32>
    %212 = vector.shape_cast %211 : vector<32xf32> to vector<1x32xf32>
    %c1_73 = arith.constant 1 : index
    %c0_74 = arith.constant 0 : index
    %213 = vector.load %arg17[%c1_73, %c0_74] : memref<2x32xf32, #tpu.memory_space<vmem>>, vector<1x32xf32>
    tpu.vector_store %arg17[%c1_73, %c0_74], %212 {strides = array<i32>} : memref<2x32xf32, #tpu.memory_space<vmem>>, vector<1x32xf32>,
    %c0_75 = arith.constant 0 : index
    %c0_76 = arith.constant 0 : index
    %214 = vector.load %arg17[%c0_75, %c0_76] : memref<2x32xf32, #tpu.memory_space<vmem>>, vector<2x32xf32>
    %c0_77 = arith.constant 0 : index
    %c0_78 = arith.constant 0 : index
    %215 = vector.load %arg11[%c0_77, %c0_78] : memref<32x2xf32, #tpu.memory_space<vmem>>, vector<32x2xf32>
    %cst_79 = arith.constant dense<0.000000e+00> : vector<2x2xf32>
    %216 = tpu.matmul %214, %215, %cst_79 {dimension_numbers = #tpu.dot_dimension_numbers<[1], [0], [0], [1], [0, 0, 1, 1], [], []>} : vector<2x32xf32>, vector<32x2xf32>, vector<2x2xf32> -> vector<2x2xf32>
    %cst_80 = arith.constant 0.000000e+00 : f32
    %217 = vector.broadcast %cst_80 : f32 to vector<2x2xf32>
    %218 = arith.maximumf %216, %217 : vector<2x2xf32>
    %c0_81 = arith.constant 0 : index
    %c0_82 = arith.constant 0 : index
    %219 = vector.load %arg12[%c0_81, %c0_82] : memref<2x32xf32, #tpu.memory_space<vmem>>, vector<2x32xf32>
    %cst_83 = arith.constant dense<0.000000e+00> : vector<2x32xf32>
    %220 = tpu.matmul %218, %219, %cst_83 {dimension_numbers = #tpu.dot_dimension_numbers<[1], [0], [0], [1], [0, 0, 1, 1], [], []>} : vector<2x2xf32>, vector<2x32xf32>, vector<2x32xf32> -> vector<2x32xf32>
    %221 = vector.extract_strided_slice %220 {offsets = [0, 0], sizes = [1, 32], strides = [1, 1]} : vector<2x32xf32> to vector<1x32xf32>
    %222 = vector.extract_strided_slice %220 {offsets = [1, 0], sizes = [1, 32], strides = [1, 1]} : vector<2x32xf32> to vector<1x32xf32>
    %223 = arith.addf %221, %222 : vector<1x32xf32>
    %224 = arith.negf %223 : vector<1x32xf32>
    %225 = math.exp %224 : vector<1x32xf32>
    %cst_84 = arith.constant 1.000000e+00 : f32
    %226 = vector.broadcast %cst_84 : f32 to vector<1x32xf32>
    %227 = arith.addf %226, %225 : vector<1x32xf32>
    %228 = arith.divf %226, %227 : vector<1x32xf32>
    %229 = vector.broadcast %228 : vector<1x32xf32> to vector<256x32xf32>
    %230 = arith.mulf %205, %229 : vector<256x32xf32>
    %231 = vector.shape_cast %230 : vector<256x32xf32> to vector<16x16x32xf32>
    %cst_85 = arith.constant 0.000000e+00 : f32
    %232 = vector.broadcast %cst_85 : f32 to vector<22x22x2xf32>
    %c0_86 = arith.constant 0 : index
    %c0_87 = arith.constant 0 : index
    %c0_88 = arith.constant 0 : index
    %233 = vector.load %arg18[%c0_86, %c0_87, %c0_88] : memref<22x22x2xf32, #tpu.memory_space<vmem>>, vector<22x22x2xf32>
    tpu.vector_store %arg18[%c0_86, %c0_87, %c0_88], %232 {strides = array<i32>} : memref<22x22x2xf32, #tpu.memory_space<vmem>>, vector<22x22x2xf32>,
    %cst_89 = arith.constant dense<0.000000e+00> : vector<16x16xf32>
    %234 = vector.multi_reduction <add>, %231, %cst_89 [2] : vector<16x16x32xf32> to vector<16x16xf32>
    %235 = vector.shape_cast %234 : vector<16x16xf32> to vector<16x16x1xf32>
    %cst_90 = arith.constant 3.125000e-02 : f32
    %236 = vector.broadcast %cst_90 : f32 to vector<16x16x1xf32>
    %237 = arith.mulf %235, %236 : vector<16x16x1xf32>
    %c3 = arith.constant 3 : index
    %c3_91 = arith.constant 3 : index
    %c0_92 = arith.constant 0 : index
    %238 = vector.load %arg18[%c3, %c3_91, %c0_92] : memref<22x22x2xf32, #tpu.memory_space<vmem>>, vector<16x16x1xf32>
    tpu.vector_store %arg18[%c3, %c3_91, %c0_92], %237 {strides = array<i32>} : memref<22x22x2xf32, #tpu.memory_space<vmem>>, vector<16x16x1xf32>,
    %cst_93 = arith.constant dense<0xFF800000> : vector<16x16xf32>
    %239 = vector.multi_reduction <maximumf>, %231, %cst_93 [2] : vector<16x16x32xf32> to vector<16x16xf32>
    %240 = vector.shape_cast %239 : vector<16x16xf32> to vector<16x16x1xf32>
    %c3_94 = arith.constant 3 : index
    %c3_95 = arith.constant 3 : index
    %c1_96 = arith.constant 1 : index
    %241 = vector.load %arg18[%c3_94, %c3_95, %c1_96] : memref<22x22x2xf32, #tpu.memory_space<vmem>>, vector<16x16x1xf32>
    tpu.vector_store %arg18[%c3_94, %c3_95, %c1_96], %240 {strides = array<i32>} : memref<22x22x2xf32, #tpu.memory_space<vmem>>, vector<16x16x1xf32>,
    %c0_97 = arith.constant 0 : index
    %c0_98 = arith.constant 0 : index
    %242 = vector.load %arg13[%c0_97, %c0_98] : memref<49x2xf32, #tpu.memory_space<vmem>>, vector<49x2xf32>
    %c0_99 = arith.constant 0 : index
    %c0_100 = arith.constant 0 : index
    %c0_101 = arith.constant 0 : index
    %243 = vector.load %arg18[%c0_99, %c0_100, %c0_101] : memref<22x22x2xf32, #tpu.memory_space<vmem>>, vector<22x16x2xf32>
    %244 = vector.extract_strided_slice %243 {offsets = [0, 0, 0], sizes = [16, 16, 2], strides = [1, 1, 1]} : vector<22x16x2xf32> to vector<16x16x2xf32>
    %245 = vector.extract_strided_slice %242 {offsets = [0, 0], sizes = [1, 2], strides = [1, 1]} : vector<49x2xf32> to vector<1x2xf32>
    %246 = vector.shape_cast %245 : vector<1x2xf32> to vector<1x1x2xf32>
    %247 = vector.broadcast %246 : vector<1x1x2xf32> to vector<16x16x2xf32>
    %248 = arith.mulf %244, %247 : vector<16x16x2xf32>
    %249 = vector.extract_strided_slice %243 {offsets = [1, 0, 0], sizes = [16, 16, 2], strides = [1, 1, 1]} : vector<22x16x2xf32> to vector<16x16x2xf32>
    %250 = vector.extract_strided_slice %242 {offsets = [7, 0], sizes = [1, 2], strides = [1, 1]} : vector<49x2xf32> to vector<1x2xf32>
    %251 = vector.shape_cast %250 : vector<1x2xf32> to vector<1x1x2xf32>
    %252 = vector.broadcast %251 : vector<1x1x2xf32> to vector<16x16x2xf32>
    %253 = arith.mulf %249, %252 : vector<16x16x2xf32>
    %254 = arith.addf %248, %253 : vector<16x16x2xf32>
    %255 = vector.extract_strided_slice %243 {offsets = [2, 0, 0], sizes = [16, 16, 2], strides = [1, 1, 1]} : vector<22x16x2xf32> to vector<16x16x2xf32>
    %256 = vector.extract_strided_slice %242 {offsets = [14, 0], sizes = [1, 2], strides = [1, 1]} : vector<49x2xf32> to vector<1x2xf32>
    %257 = vector.shape_cast %256 : vector<1x2xf32> to vector<1x1x2xf32>
    %258 = vector.broadcast %257 : vector<1x1x2xf32> to vector<16x16x2xf32>
    %259 = arith.mulf %255, %258 : vector<16x16x2xf32>
    %260 = arith.addf %254, %259 : vector<16x16x2xf32>
    %261 = vector.extract_strided_slice %243 {offsets = [3, 0, 0], sizes = [16, 16, 2], strides = [1, 1, 1]} : vector<22x16x2xf32> to vector<16x16x2xf32>
    %262 = vector.extract_strided_slice %242 {offsets = [21, 0], sizes = [1, 2], strides = [1, 1]} : vector<49x2xf32> to vector<1x2xf32>
    %263 = vector.shape_cast %262 : vector<1x2xf32> to vector<1x1x2xf32>
    %264 = vector.broadcast %263 : vector<1x1x2xf32> to vector<16x16x2xf32>
    %265 = arith.mulf %261, %264 : vector<16x16x2xf32>
    %266 = arith.addf %260, %265 : vector<16x16x2xf32>
    %267 = vector.extract_strided_slice %243 {offsets = [4, 0, 0], sizes = [16, 16, 2], strides = [1, 1, 1]} : vector<22x16x2xf32> to vector<16x16x2xf32>
    %268 = vector.extract_strided_slice %242 {offsets = [28, 0], sizes = [1, 2], strides = [1, 1]} : vector<49x2xf32> to vector<1x2xf32>
    %269 = vector.shape_cast %268 : vector<1x2xf32> to vector<1x1x2xf32>
    %270 = vector.broadcast %269 : vector<1x1x2xf32> to vector<16x16x2xf32>
    %271 = arith.mulf %267, %270 : vector<16x16x2xf32>
    %272 = arith.addf %266, %271 : vector<16x16x2xf32>
    %273 = vector.extract_strided_slice %243 {offsets = [5, 0, 0], sizes = [16, 16, 2], strides = [1, 1, 1]} : vector<22x16x2xf32> to vector<16x16x2xf32>
    %274 = vector.extract_strided_slice %242 {offsets = [35, 0], sizes = [1, 2], strides = [1, 1]} : vector<49x2xf32> to vector<1x2xf32>
    %275 = vector.shape_cast %274 : vector<1x2xf32> to vector<1x1x2xf32>
    %276 = vector.broadcast %275 : vector<1x1x2xf32> to vector<16x16x2xf32>
    %277 = arith.mulf %273, %276 : vector<16x16x2xf32>
    %278 = arith.addf %272, %277 : vector<16x16x2xf32>
    %279 = vector.extract_strided_slice %243 {offsets = [6, 0, 0], sizes = [16, 16, 2], strides = [1, 1, 1]} : vector<22x16x2xf32> to vector<16x16x2xf32>
    %280 = vector.extract_strided_slice %242 {offsets = [42, 0], sizes = [1, 2], strides = [1, 1]} : vector<49x2xf32> to vector<1x2xf32>
    %281 = vector.shape_cast %280 : vector<1x2xf32> to vector<1x1x2xf32>
    %282 = vector.broadcast %281 : vector<1x1x2xf32> to vector<16x16x2xf32>
    %283 = arith.mulf %279, %282 : vector<16x16x2xf32>
    %284 = arith.addf %278, %283 : vector<16x16x2xf32>
    %c0_102 = arith.constant 0 : index
    %c1_103 = arith.constant 1 : index
    %c0_104 = arith.constant 0 : index
    %285 = vector.load %arg18[%c0_102, %c1_103, %c0_104] : memref<22x22x2xf32, #tpu.memory_space<vmem>>, vector<22x16x2xf32>
    %286 = vector.extract_strided_slice %285 {offsets = [0, 0, 0], sizes = [16, 16, 2], strides = [1, 1, 1]} : vector<22x16x2xf32> to vector<16x16x2xf32>
    %287 = vector.extract_strided_slice %242 {offsets = [1, 0], sizes = [1, 2], strides = [1, 1]} : vector<49x2xf32> to vector<1x2xf32>
    %288 = vector.shape_cast %287 : vector<1x2xf32> to vector<1x1x2xf32>
    %289 = vector.broadcast %288 : vector<1x1x2xf32> to vector<16x16x2xf32>
    %290 = arith.mulf %286, %289 : vector<16x16x2xf32>
    %291 = arith.addf %284, %290 : vector<16x16x2xf32>
    %292 = vector.extract_strided_slice %285 {offsets = [1, 0, 0], sizes = [16, 16, 2], strides = [1, 1, 1]} : vector<22x16x2xf32> to vector<16x16x2xf32>
    %293 = vector.extract_strided_slice %242 {offsets = [8, 0], sizes = [1, 2], strides = [1, 1]} : vector<49x2xf32> to vector<1x2xf32>
    %294 = vector.shape_cast %293 : vector<1x2xf32> to vector<1x1x2xf32>
    %295 = vector.broadcast %294 : vector<1x1x2xf32> to vector<16x16x2xf32>
    %296 = arith.mulf %292, %295 : vector<16x16x2xf32>
    %297 = arith.addf %291, %296 : vector<16x16x2xf32>
    %298 = vector.extract_strided_slice %285 {offsets = [2, 0, 0], sizes = [16, 16, 2], strides = [1, 1, 1]} : vector<22x16x2xf32> to vector<16x16x2xf32>
    %299 = vector.extract_strided_slice %242 {offsets = [15, 0], sizes = [1, 2], strides = [1, 1]} : vector<49x2xf32> to vector<1x2xf32>
    %300 = vector.shape_cast %299 : vector<1x2xf32> to vector<1x1x2xf32>
    %301 = vector.broadcast %300 : vector<1x1x2xf32> to vector<16x16x2xf32>
    %302 = arith.mulf %298, %301 : vector<16x16x2xf32>
    %303 = arith.addf %297, %302 : vector<16x16x2xf32>
    %304 = vector.extract_strided_slice %285 {offsets = [3, 0, 0], sizes = [16, 16, 2], strides = [1, 1, 1]} : vector<22x16x2xf32> to vector<16x16x2xf32>
    %305 = vector.extract_strided_slice %242 {offsets = [22, 0], sizes = [1, 2], strides = [1, 1]} : vector<49x2xf32> to vector<1x2xf32>
    %306 = vector.shape_cast %305 : vector<1x2xf32> to vector<1x1x2xf32>
    %307 = vector.broadcast %306 : vector<1x1x2xf32> to vector<16x16x2xf32>
    %308 = arith.mulf %304, %307 : vector<16x16x2xf32>
    %309 = arith.addf %303, %308 : vector<16x16x2xf32>
    %310 = vector.extract_strided_slice %285 {offsets = [4, 0, 0], sizes = [16, 16, 2], strides = [1, 1, 1]} : vector<22x16x2xf32> to vector<16x16x2xf32>
    %311 = vector.extract_strided_slice %242 {offsets = [29, 0], sizes = [1, 2], strides = [1, 1]} : vector<49x2xf32> to vector<1x2xf32>
    %312 = vector.shape_cast %311 : vector<1x2xf32> to vector<1x1x2xf32>
    %313 = vector.broadcast %312 : vector<1x1x2xf32> to vector<16x16x2xf32>
    %314 = arith.mulf %310, %313 : vector<16x16x2xf32>
    %315 = arith.addf %309, %314 : vector<16x16x2xf32>
    %316 = vector.extract_strided_slice %285 {offsets = [5, 0, 0], sizes = [16, 16, 2], strides = [1, 1, 1]} : vector<22x16x2xf32> to vector<16x16x2xf32>
    %317 = vector.extract_strided_slice %242 {offsets = [36, 0], sizes = [1, 2], strides = [1, 1]} : vector<49x2xf32> to vector<1x2xf32>
    %318 = vector.shape_cast %317 : vector<1x2xf32> to vector<1x1x2xf32>
    %319 = vector.broadcast %318 : vector<1x1x2xf32> to vector<16x16x2xf32>
    %320 = arith.mulf %316, %319 : vector<16x16x2xf32>
    %321 = arith.addf %315, %320 : vector<16x16x2xf32>
    %322 = vector.extract_strided_slice %285 {offsets = [6, 0, 0], sizes = [16, 16, 2], strides = [1, 1, 1]} : vector<22x16x2xf32> to vector<16x16x2xf32>
    %323 = vector.extract_strided_slice %242 {offsets = [43, 0], sizes = [1, 2], strides = [1, 1]} : vector<49x2xf32> to vector<1x2xf32>
    %324 = vector.shape_cast %323 : vector<1x2xf32> to vector<1x1x2xf32>
    %325 = vector.broadcast %324 : vector<1x1x2xf32> to vector<16x16x2xf32>
    %326 = arith.mulf %322, %325 : vector<16x16x2xf32>
    %327 = arith.addf %321, %326 : vector<16x16x2xf32>
    %c0_105 = arith.constant 0 : index
    %c2_106 = arith.constant 2 : index
    %c0_107 = arith.constant 0 : index
    %328 = vector.load %arg18[%c0_105, %c2_106, %c0_107] : memref<22x22x2xf32, #tpu.memory_space<vmem>>, vector<22x16x2xf32>
    %329 = vector.extract_strided_slice %328 {offsets = [0, 0, 0], sizes = [16, 16, 2], strides = [1, 1, 1]} : vector<22x16x2xf32> to vector<16x16x2xf32>
    %330 = vector.extract_strided_slice %242 {offsets = [2, 0], sizes = [1, 2], strides = [1, 1]} : vector<49x2xf32> to vector<1x2xf32>
    %331 = vector.shape_cast %330 : vector<1x2xf32> to vector<1x1x2xf32>
    %332 = vector.broadcast %331 : vector<1x1x2xf32> to vector<16x16x2xf32>
    %333 = arith.mulf %329, %332 : vector<16x16x2xf32>
    %334 = arith.addf %327, %333 : vector<16x16x2xf32>
    %335 = vector.extract_strided_slice %328 {offsets = [1, 0, 0], sizes = [16, 16, 2], strides = [1, 1, 1]} : vector<22x16x2xf32> to vector<16x16x2xf32>
    %336 = vector.extract_strided_slice %242 {offsets = [9, 0], sizes = [1, 2], strides = [1, 1]} : vector<49x2xf32> to vector<1x2xf32>
    %337 = vector.shape_cast %336 : vector<1x2xf32> to vector<1x1x2xf32>
    %338 = vector.broadcast %337 : vector<1x1x2xf32> to vector<16x16x2xf32>
    %339 = arith.mulf %335, %338 : vector<16x16x2xf32>
    %340 = arith.addf %334, %339 : vector<16x16x2xf32>
    %341 = vector.extract_strided_slice %328 {offsets = [2, 0, 0], sizes = [16, 16, 2], strides = [1, 1, 1]} : vector<22x16x2xf32> to vector<16x16x2xf32>
    %342 = vector.extract_strided_slice %242 {offsets = [16, 0], sizes = [1, 2], strides = [1, 1]} : vector<49x2xf32> to vector<1x2xf32>
    %343 = vector.shape_cast %342 : vector<1x2xf32> to vector<1x1x2xf32>
    %344 = vector.broadcast %343 : vector<1x1x2xf32> to vector<16x16x2xf32>
    %345 = arith.mulf %341, %344 : vector<16x16x2xf32>
    %346 = arith.addf %340, %345 : vector<16x16x2xf32>
    %347 = vector.extract_strided_slice %328 {offsets = [3, 0, 0], sizes = [16, 16, 2], strides = [1, 1, 1]} : vector<22x16x2xf32> to vector<16x16x2xf32>
    %348 = vector.extract_strided_slice %242 {offsets = [23, 0], sizes = [1, 2], strides = [1, 1]} : vector<49x2xf32> to vector<1x2xf32>
    %349 = vector.shape_cast %348 : vector<1x2xf32> to vector<1x1x2xf32>
    %350 = vector.broadcast %349 : vector<1x1x2xf32> to vector<16x16x2xf32>
    %351 = arith.mulf %347, %350 : vector<16x16x2xf32>
    %352 = arith.addf %346, %351 : vector<16x16x2xf32>
    %353 = vector.extract_strided_slice %328 {offsets = [4, 0, 0], sizes = [16, 16, 2], strides = [1, 1, 1]} : vector<22x16x2xf32> to vector<16x16x2xf32>
    %354 = vector.extract_strided_slice %242 {offsets = [30, 0], sizes = [1, 2], strides = [1, 1]} : vector<49x2xf32> to vector<1x2xf32>
    %355 = vector.shape_cast %354 : vector<1x2xf32> to vector<1x1x2xf32>
    %356 = vector.broadcast %355 : vector<1x1x2xf32> to vector<16x16x2xf32>
    %357 = arith.mulf %353, %356 : vector<16x16x2xf32>
    %358 = arith.addf %352, %357 : vector<16x16x2xf32>
    %359 = vector.extract_strided_slice %328 {offsets = [5, 0, 0], sizes = [16, 16, 2], strides = [1, 1, 1]} : vector<22x16x2xf32> to vector<16x16x2xf32>
    %360 = vector.extract_strided_slice %242 {offsets = [37, 0], sizes = [1, 2], strides = [1, 1]} : vector<49x2xf32> to vector<1x2xf32>
    %361 = vector.shape_cast %360 : vector<1x2xf32> to vector<1x1x2xf32>
    %362 = vector.broadcast %361 : vector<1x1x2xf32> to vector<16x16x2xf32>
    %363 = arith.mulf %359, %362 : vector<16x16x2xf32>
    %364 = arith.addf %358, %363 : vector<16x16x2xf32>
    %365 = vector.extract_strided_slice %328 {offsets = [6, 0, 0], sizes = [16, 16, 2], strides = [1, 1, 1]} : vector<22x16x2xf32> to vector<16x16x2xf32>
    %366 = vector.extract_strided_slice %242 {offsets = [44, 0], sizes = [1, 2], strides = [1, 1]} : vector<49x2xf32> to vector<1x2xf32>
    %367 = vector.shape_cast %366 : vector<1x2xf32> to vector<1x1x2xf32>
    %368 = vector.broadcast %367 : vector<1x1x2xf32> to vector<16x16x2xf32>
    %369 = arith.mulf %365, %368 : vector<16x16x2xf32>
    %370 = arith.addf %364, %369 : vector<16x16x2xf32>
    %c0_108 = arith.constant 0 : index
    %c3_109 = arith.constant 3 : index
    %c0_110 = arith.constant 0 : index
    %371 = vector.load %arg18[%c0_108, %c3_109, %c0_110] : memref<22x22x2xf32, #tpu.memory_space<vmem>>, vector<22x16x2xf32>
    %372 = vector.extract_strided_slice %371 {offsets = [0, 0, 0], sizes = [16, 16, 2], strides = [1, 1, 1]} : vector<22x16x2xf32> to vector<16x16x2xf32>
    %373 = vector.extract_strided_slice %242 {offsets = [3, 0], sizes = [1, 2], strides = [1, 1]} : vector<49x2xf32> to vector<1x2xf32>
    %374 = vector.shape_cast %373 : vector<1x2xf32> to vector<1x1x2xf32>
    %375 = vector.broadcast %374 : vector<1x1x2xf32> to vector<16x16x2xf32>
    %376 = arith.mulf %372, %375 : vector<16x16x2xf32>
    %377 = arith.addf %370, %376 : vector<16x16x2xf32>
    %378 = vector.extract_strided_slice %371 {offsets = [1, 0, 0], sizes = [16, 16, 2], strides = [1, 1, 1]} : vector<22x16x2xf32> to vector<16x16x2xf32>
    %379 = vector.extract_strided_slice %242 {offsets = [10, 0], sizes = [1, 2], strides = [1, 1]} : vector<49x2xf32> to vector<1x2xf32>
    %380 = vector.shape_cast %379 : vector<1x2xf32> to vector<1x1x2xf32>
    %381 = vector.broadcast %380 : vector<1x1x2xf32> to vector<16x16x2xf32>
    %382 = arith.mulf %378, %381 : vector<16x16x2xf32>
    %383 = arith.addf %377, %382 : vector<16x16x2xf32>
    %384 = vector.extract_strided_slice %371 {offsets = [2, 0, 0], sizes = [16, 16, 2], strides = [1, 1, 1]} : vector<22x16x2xf32> to vector<16x16x2xf32>
    %385 = vector.extract_strided_slice %242 {offsets = [17, 0], sizes = [1, 2], strides = [1, 1]} : vector<49x2xf32> to vector<1x2xf32>
    %386 = vector.shape_cast %385 : vector<1x2xf32> to vector<1x1x2xf32>
    %387 = vector.broadcast %386 : vector<1x1x2xf32> to vector<16x16x2xf32>
    %388 = arith.mulf %384, %387 : vector<16x16x2xf32>
    %389 = arith.addf %383, %388 : vector<16x16x2xf32>
    %390 = vector.extract_strided_slice %371 {offsets = [3, 0, 0], sizes = [16, 16, 2], strides = [1, 1, 1]} : vector<22x16x2xf32> to vector<16x16x2xf32>
    %391 = vector.extract_strided_slice %242 {offsets = [24, 0], sizes = [1, 2], strides = [1, 1]} : vector<49x2xf32> to vector<1x2xf32>
    %392 = vector.shape_cast %391 : vector<1x2xf32> to vector<1x1x2xf32>
    %393 = vector.broadcast %392 : vector<1x1x2xf32> to vector<16x16x2xf32>
    %394 = arith.mulf %390, %393 : vector<16x16x2xf32>
    %395 = arith.addf %389, %394 : vector<16x16x2xf32>
    %396 = vector.extract_strided_slice %371 {offsets = [4, 0, 0], sizes = [16, 16, 2], strides = [1, 1, 1]} : vector<22x16x2xf32> to vector<16x16x2xf32>
    %397 = vector.extract_strided_slice %242 {offsets = [31, 0], sizes = [1, 2], strides = [1, 1]} : vector<49x2xf32> to vector<1x2xf32>
    %398 = vector.shape_cast %397 : vector<1x2xf32> to vector<1x1x2xf32>
    %399 = vector.broadcast %398 : vector<1x1x2xf32> to vector<16x16x2xf32>
    %400 = arith.mulf %396, %399 : vector<16x16x2xf32>
    %401 = arith.addf %395, %400 : vector<16x16x2xf32>
    %402 = vector.extract_strided_slice %371 {offsets = [5, 0, 0], sizes = [16, 16, 2], strides = [1, 1, 1]} : vector<22x16x2xf32> to vector<16x16x2xf32>
    %403 = vector.extract_strided_slice %242 {offsets = [38, 0], sizes = [1, 2], strides = [1, 1]} : vector<49x2xf32> to vector<1x2xf32>
    %404 = vector.shape_cast %403 : vector<1x2xf32> to vector<1x1x2xf32>
    %405 = vector.broadcast %404 : vector<1x1x2xf32> to vector<16x16x2xf32>
    %406 = arith.mulf %402, %405 : vector<16x16x2xf32>
    %407 = arith.addf %401, %406 : vector<16x16x2xf32>
    %408 = vector.extract_strided_slice %371 {offsets = [6, 0, 0], sizes = [16, 16, 2], strides = [1, 1, 1]} : vector<22x16x2xf32> to vector<16x16x2xf32>
    %409 = vector.extract_strided_slice %242 {offsets = [45, 0], sizes = [1, 2], strides = [1, 1]} : vector<49x2xf32> to vector<1x2xf32>
    %410 = vector.shape_cast %409 : vector<1x2xf32> to vector<1x1x2xf32>
    %411 = vector.broadcast %410 : vector<1x1x2xf32> to vector<16x16x2xf32>
    %412 = arith.mulf %408, %411 : vector<16x16x2xf32>
    %413 = arith.addf %407, %412 : vector<16x16x2xf32>
    %c0_111 = arith.constant 0 : index
    %c4 = arith.constant 4 : index
    %c0_112 = arith.constant 0 : index
    %414 = vector.load %arg18[%c0_111, %c4, %c0_112] : memref<22x22x2xf32, #tpu.memory_space<vmem>>, vector<22x16x2xf32>
    %415 = vector.extract_strided_slice %414 {offsets = [0, 0, 0], sizes = [16, 16, 2], strides = [1, 1, 1]} : vector<22x16x2xf32> to vector<16x16x2xf32>
    %416 = vector.extract_strided_slice %242 {offsets = [4, 0], sizes = [1, 2], strides = [1, 1]} : vector<49x2xf32> to vector<1x2xf32>
    %417 = vector.shape_cast %416 : vector<1x2xf32> to vector<1x1x2xf32>
    %418 = vector.broadcast %417 : vector<1x1x2xf32> to vector<16x16x2xf32>
    %419 = arith.mulf %415, %418 : vector<16x16x2xf32>
    %420 = arith.addf %413, %419 : vector<16x16x2xf32>
    %421 = vector.extract_strided_slice %414 {offsets = [1, 0, 0], sizes = [16, 16, 2], strides = [1, 1, 1]} : vector<22x16x2xf32> to vector<16x16x2xf32>
    %422 = vector.extract_strided_slice %242 {offsets = [11, 0], sizes = [1, 2], strides = [1, 1]} : vector<49x2xf32> to vector<1x2xf32>
    %423 = vector.shape_cast %422 : vector<1x2xf32> to vector<1x1x2xf32>
    %424 = vector.broadcast %423 : vector<1x1x2xf32> to vector<16x16x2xf32>
    %425 = arith.mulf %421, %424 : vector<16x16x2xf32>
    %426 = arith.addf %420, %425 : vector<16x16x2xf32>
    %427 = vector.extract_strided_slice %414 {offsets = [2, 0, 0], sizes = [16, 16, 2], strides = [1, 1, 1]} : vector<22x16x2xf32> to vector<16x16x2xf32>
    %428 = vector.extract_strided_slice %242 {offsets = [18, 0], sizes = [1, 2], strides = [1, 1]} : vector<49x2xf32> to vector<1x2xf32>
    %429 = vector.shape_cast %428 : vector<1x2xf32> to vector<1x1x2xf32>
    %430 = vector.broadcast %429 : vector<1x1x2xf32> to vector<16x16x2xf32>
    %431 = arith.mulf %427, %430 : vector<16x16x2xf32>
    %432 = arith.addf %426, %431 : vector<16x16x2xf32>
    %433 = vector.extract_strided_slice %414 {offsets = [3, 0, 0], sizes = [16, 16, 2], strides = [1, 1, 1]} : vector<22x16x2xf32> to vector<16x16x2xf32>
    %434 = vector.extract_strided_slice %242 {offsets = [25, 0], sizes = [1, 2], strides = [1, 1]} : vector<49x2xf32> to vector<1x2xf32>
    %435 = vector.shape_cast %434 : vector<1x2xf32> to vector<1x1x2xf32>
    %436 = vector.broadcast %435 : vector<1x1x2xf32> to vector<16x16x2xf32>
    %437 = arith.mulf %433, %436 : vector<16x16x2xf32>
    %438 = arith.addf %432, %437 : vector<16x16x2xf32>
    %439 = vector.extract_strided_slice %414 {offsets = [4, 0, 0], sizes = [16, 16, 2], strides = [1, 1, 1]} : vector<22x16x2xf32> to vector<16x16x2xf32>
    %440 = vector.extract_strided_slice %242 {offsets = [32, 0], sizes = [1, 2], strides = [1, 1]} : vector<49x2xf32> to vector<1x2xf32>
    %441 = vector.shape_cast %440 : vector<1x2xf32> to vector<1x1x2xf32>
    %442 = vector.broadcast %441 : vector<1x1x2xf32> to vector<16x16x2xf32>
    %443 = arith.mulf %439, %442 : vector<16x16x2xf32>
    %444 = arith.addf %438, %443 : vector<16x16x2xf32>
    %445 = vector.extract_strided_slice %414 {offsets = [5, 0, 0], sizes = [16, 16, 2], strides = [1, 1, 1]} : vector<22x16x2xf32> to vector<16x16x2xf32>
    %446 = vector.extract_strided_slice %242 {offsets = [39, 0], sizes = [1, 2], strides = [1, 1]} : vector<49x2xf32> to vector<1x2xf32>
    %447 = vector.shape_cast %446 : vector<1x2xf32> to vector<1x1x2xf32>
    %448 = vector.broadcast %447 : vector<1x1x2xf32> to vector<16x16x2xf32>
    %449 = arith.mulf %445, %448 : vector<16x16x2xf32>
    %450 = arith.addf %444, %449 : vector<16x16x2xf32>
    %451 = vector.extract_strided_slice %414 {offsets = [6, 0, 0], sizes = [16, 16, 2], strides = [1, 1, 1]} : vector<22x16x2xf32> to vector<16x16x2xf32>
    %452 = vector.extract_strided_slice %242 {offsets = [46, 0], sizes = [1, 2], strides = [1, 1]} : vector<49x2xf32> to vector<1x2xf32>
    %453 = vector.shape_cast %452 : vector<1x2xf32> to vector<1x1x2xf32>
    %454 = vector.broadcast %453 : vector<1x1x2xf32> to vector<16x16x2xf32>
    %455 = arith.mulf %451, %454 : vector<16x16x2xf32>
    %456 = arith.addf %450, %455 : vector<16x16x2xf32>
    %c0_113 = arith.constant 0 : index
    %c5 = arith.constant 5 : index
    %c0_114 = arith.constant 0 : index
    %457 = vector.load %arg18[%c0_113, %c5, %c0_114] : memref<22x22x2xf32, #tpu.memory_space<vmem>>, vector<22x16x2xf32>
    %458 = vector.extract_strided_slice %457 {offsets = [0, 0, 0], sizes = [16, 16, 2], strides = [1, 1, 1]} : vector<22x16x2xf32> to vector<16x16x2xf32>
    %459 = vector.extract_strided_slice %242 {offsets = [5, 0], sizes = [1, 2], strides = [1, 1]} : vector<49x2xf32> to vector<1x2xf32>
    %460 = vector.shape_cast %459 : vector<1x2xf32> to vector<1x1x2xf32>
    %461 = vector.broadcast %460 : vector<1x1x2xf32> to vector<16x16x2xf32>
    %462 = arith.mulf %458, %461 : vector<16x16x2xf32>
    %463 = arith.addf %456, %462 : vector<16x16x2xf32>
    %464 = vector.extract_strided_slice %457 {offsets = [1, 0, 0], sizes = [16, 16, 2], strides = [1, 1, 1]} : vector<22x16x2xf32> to vector<16x16x2xf32>
    %465 = vector.extract_strided_slice %242 {offsets = [12, 0], sizes = [1, 2], strides = [1, 1]} : vector<49x2xf32> to vector<1x2xf32>
    %466 = vector.shape_cast %465 : vector<1x2xf32> to vector<1x1x2xf32>
    %467 = vector.broadcast %466 : vector<1x1x2xf32> to vector<16x16x2xf32>
    %468 = arith.mulf %464, %467 : vector<16x16x2xf32>
    %469 = arith.addf %463, %468 : vector<16x16x2xf32>
    %470 = vector.extract_strided_slice %457 {offsets = [2, 0, 0], sizes = [16, 16, 2], strides = [1, 1, 1]} : vector<22x16x2xf32> to vector<16x16x2xf32>
    %471 = vector.extract_strided_slice %242 {offsets = [19, 0], sizes = [1, 2], strides = [1, 1]} : vector<49x2xf32> to vector<1x2xf32>
    %472 = vector.shape_cast %471 : vector<1x2xf32> to vector<1x1x2xf32>
    %473 = vector.broadcast %472 : vector<1x1x2xf32> to vector<16x16x2xf32>
    %474 = arith.mulf %470, %473 : vector<16x16x2xf32>
    %475 = arith.addf %469, %474 : vector<16x16x2xf32>
    %476 = vector.extract_strided_slice %457 {offsets = [3, 0, 0], sizes = [16, 16, 2], strides = [1, 1, 1]} : vector<22x16x2xf32> to vector<16x16x2xf32>
    %477 = vector.extract_strided_slice %242 {offsets = [26, 0], sizes = [1, 2], strides = [1, 1]} : vector<49x2xf32> to vector<1x2xf32>
    %478 = vector.shape_cast %477 : vector<1x2xf32> to vector<1x1x2xf32>
    %479 = vector.broadcast %478 : vector<1x1x2xf32> to vector<16x16x2xf32>
    %480 = arith.mulf %476, %479 : vector<16x16x2xf32>
    %481 = arith.addf %475, %480 : vector<16x16x2xf32>
    %482 = vector.extract_strided_slice %457 {offsets = [4, 0, 0], sizes = [16, 16, 2], strides = [1, 1, 1]} : vector<22x16x2xf32> to vector<16x16x2xf32>
    %483 = vector.extract_strided_slice %242 {offsets = [33, 0], sizes = [1, 2], strides = [1, 1]} : vector<49x2xf32> to vector<1x2xf32>
    %484 = vector.shape_cast %483 : vector<1x2xf32> to vector<1x1x2xf32>
    %485 = vector.broadcast %484 : vector<1x1x2xf32> to vector<16x16x2xf32>
    %486 = arith.mulf %482, %485 : vector<16x16x2xf32>
    %487 = arith.addf %481, %486 : vector<16x16x2xf32>
    %488 = vector.extract_strided_slice %457 {offsets = [5, 0, 0], sizes = [16, 16, 2], strides = [1, 1, 1]} : vector<22x16x2xf32> to vector<16x16x2xf32>
    %489 = vector.extract_strided_slice %242 {offsets = [40, 0], sizes = [1, 2], strides = [1, 1]} : vector<49x2xf32> to vector<1x2xf32>
    %490 = vector.shape_cast %489 : vector<1x2xf32> to vector<1x1x2xf32>
    %491 = vector.broadcast %490 : vector<1x1x2xf32> to vector<16x16x2xf32>
    %492 = arith.mulf %488, %491 : vector<16x16x2xf32>
    %493 = arith.addf %487, %492 : vector<16x16x2xf32>
    %494 = vector.extract_strided_slice %457 {offsets = [6, 0, 0], sizes = [16, 16, 2], strides = [1, 1, 1]} : vector<22x16x2xf32> to vector<16x16x2xf32>
    %495 = vector.extract_strided_slice %242 {offsets = [47, 0], sizes = [1, 2], strides = [1, 1]} : vector<49x2xf32> to vector<1x2xf32>
    %496 = vector.shape_cast %495 : vector<1x2xf32> to vector<1x1x2xf32>
    %497 = vector.broadcast %496 : vector<1x1x2xf32> to vector<16x16x2xf32>
    %498 = arith.mulf %494, %497 : vector<16x16x2xf32>
    %499 = arith.addf %493, %498 : vector<16x16x2xf32>
    %c0_115 = arith.constant 0 : index
    %c6 = arith.constant 6 : index
    %c0_116 = arith.constant 0 : index
    %500 = vector.load %arg18[%c0_115, %c6, %c0_116] : memref<22x22x2xf32, #tpu.memory_space<vmem>>, vector<22x16x2xf32>
    %501 = vector.extract_strided_slice %500 {offsets = [0, 0, 0], sizes = [16, 16, 2], strides = [1, 1, 1]} : vector<22x16x2xf32> to vector<16x16x2xf32>
    %502 = vector.extract_strided_slice %242 {offsets = [6, 0], sizes = [1, 2], strides = [1, 1]} : vector<49x2xf32> to vector<1x2xf32>
    %503 = vector.shape_cast %502 : vector<1x2xf32> to vector<1x1x2xf32>
    %504 = vector.broadcast %503 : vector<1x1x2xf32> to vector<16x16x2xf32>
    %505 = arith.mulf %501, %504 : vector<16x16x2xf32>
    %506 = arith.addf %499, %505 : vector<16x16x2xf32>
    %507 = vector.extract_strided_slice %500 {offsets = [1, 0, 0], sizes = [16, 16, 2], strides = [1, 1, 1]} : vector<22x16x2xf32> to vector<16x16x2xf32>
    %508 = vector.extract_strided_slice %242 {offsets = [13, 0], sizes = [1, 2], strides = [1, 1]} : vector<49x2xf32> to vector<1x2xf32>
    %509 = vector.shape_cast %508 : vector<1x2xf32> to vector<1x1x2xf32>
    %510 = vector.broadcast %509 : vector<1x1x2xf32> to vector<16x16x2xf32>
    %511 = arith.mulf %507, %510 : vector<16x16x2xf32>
    %512 = arith.addf %506, %511 : vector<16x16x2xf32>
    %513 = vector.extract_strided_slice %500 {offsets = [2, 0, 0], sizes = [16, 16, 2], strides = [1, 1, 1]} : vector<22x16x2xf32> to vector<16x16x2xf32>
    %514 = vector.extract_strided_slice %242 {offsets = [20, 0], sizes = [1, 2], strides = [1, 1]} : vector<49x2xf32> to vector<1x2xf32>
    %515 = vector.shape_cast %514 : vector<1x2xf32> to vector<1x1x2xf32>
    %516 = vector.broadcast %515 : vector<1x1x2xf32> to vector<16x16x2xf32>
    %517 = arith.mulf %513, %516 : vector<16x16x2xf32>
    %518 = arith.addf %512, %517 : vector<16x16x2xf32>
    %519 = vector.extract_strided_slice %500 {offsets = [3, 0, 0], sizes = [16, 16, 2], strides = [1, 1, 1]} : vector<22x16x2xf32> to vector<16x16x2xf32>
    %520 = vector.extract_strided_slice %242 {offsets = [27, 0], sizes = [1, 2], strides = [1, 1]} : vector<49x2xf32> to vector<1x2xf32>
    %521 = vector.shape_cast %520 : vector<1x2xf32> to vector<1x1x2xf32>
    %522 = vector.broadcast %521 : vector<1x1x2xf32> to vector<16x16x2xf32>
    %523 = arith.mulf %519, %522 : vector<16x16x2xf32>
    %524 = arith.addf %518, %523 : vector<16x16x2xf32>
    %525 = vector.extract_strided_slice %500 {offsets = [4, 0, 0], sizes = [16, 16, 2], strides = [1, 1, 1]} : vector<22x16x2xf32> to vector<16x16x2xf32>
    %526 = vector.extract_strided_slice %242 {offsets = [34, 0], sizes = [1, 2], strides = [1, 1]} : vector<49x2xf32> to vector<1x2xf32>
    %527 = vector.shape_cast %526 : vector<1x2xf32> to vector<1x1x2xf32>
    %528 = vector.broadcast %527 : vector<1x1x2xf32> to vector<16x16x2xf32>
    %529 = arith.mulf %525, %528 : vector<16x16x2xf32>
    %530 = arith.addf %524, %529 : vector<16x16x2xf32>
    %531 = vector.extract_strided_slice %500 {offsets = [5, 0, 0], sizes = [16, 16, 2], strides = [1, 1, 1]} : vector<22x16x2xf32> to vector<16x16x2xf32>
    %532 = vector.extract_strided_slice %242 {offsets = [41, 0], sizes = [1, 2], strides = [1, 1]} : vector<49x2xf32> to vector<1x2xf32>
    %533 = vector.shape_cast %532 : vector<1x2xf32> to vector<1x1x2xf32>
    %534 = vector.broadcast %533 : vector<1x1x2xf32> to vector<16x16x2xf32>
    %535 = arith.mulf %531, %534 : vector<16x16x2xf32>
    %536 = arith.addf %530, %535 : vector<16x16x2xf32>
    %537 = vector.extract_strided_slice %500 {offsets = [6, 0, 0], sizes = [16, 16, 2], strides = [1, 1, 1]} : vector<22x16x2xf32> to vector<16x16x2xf32>
    %538 = vector.extract_strided_slice %242 {offsets = [48, 0], sizes = [1, 2], strides = [1, 1]} : vector<49x2xf32> to vector<1x2xf32>
    %539 = vector.shape_cast %538 : vector<1x2xf32> to vector<1x1x2xf32>
    %540 = vector.broadcast %539 : vector<1x1x2xf32> to vector<16x16x2xf32>
    %541 = arith.mulf %537, %540 : vector<16x16x2xf32>
    %542 = arith.addf %536, %541 : vector<16x16x2xf32>
    %cst_117 = arith.constant dense<0.000000e+00> : vector<16x16xf32>
    %543 = vector.multi_reduction <add>, %542, %cst_117 [2] : vector<16x16x2xf32> to vector<16x16xf32>
    %544 = vector.shape_cast %543 : vector<16x16xf32> to vector<16x16x1xf32>
    %545 = arith.negf %544 : vector<16x16x1xf32>
    %546 = math.exp %545 : vector<16x16x1xf32>
    %cst_118 = arith.constant 1.000000e+00 : f32
    %547 = vector.broadcast %cst_118 : f32 to vector<16x16x1xf32>
    %548 = arith.addf %547, %546 : vector<16x16x1xf32>
    %549 = arith.divf %547, %548 : vector<16x16x1xf32>
    %c0_119 = arith.constant 0 : index
    %c0_120 = arith.constant 0 : index
    %c0_121 = arith.constant 0 : index
    %c0_122 = arith.constant 0 : index
    %550 = vector.load %arg1[%c0_119, %c0_120, %c0_121, %c0_122] : memref<1x16x16x32xf32, #tpu.memory_space<vmem>>, vector<1x16x16x32xf32>
    %551 = vector.shape_cast %550 : vector<1x16x16x32xf32> to vector<16x16x32xf32>
    %552 = vector.broadcast %549 : vector<16x16x1xf32> to vector<16x16x32xf32>
    %553 = arith.mulf %231, %552 : vector<16x16x32xf32>
    %554 = arith.addf %553, %551 : vector<16x16x32xf32>
    %c0_123 = arith.constant 0 : index
    %c0_124 = arith.constant 0 : index
    %c0_125 = arith.constant 0 : index
    %c0_126 = arith.constant 0 : index
    %555 = vector.load %arg14[%c0_123, %c0_124, %c0_125, %c0_126] : memref<1x16x16x32xf32, #tpu.memory_space<vmem>>, vector<1x16x16x32xf32>
    %556 = vector.shape_cast %555 : vector<1x16x16x32xf32> to vector<16x16x32xf32>
    %557 = vector.shape_cast %554 : vector<16x16x32xf32> to vector<1x16x16x32xf32>
    tpu.vector_store %arg14[%c0_123, %c0_124, %c0_125, %c0_126], %557 {strides = array<i32>} : memref<1x16x16x32xf32, #tpu.memory_space<vmem>>, vector<1x16x16x32xf32>,
    return
  }
  func.func @transform_0(%arg0: i32) -> (i32, i32, i32, i32) {
    %c0_i32 = arith.constant 0 : i32
    %c0_i32_0 = arith.constant 0 : i32
    %c0_i32_1 = arith.constant 0 : i32
    %c0_i32_2 = arith.constant 0 : i32
    return %arg0, %c0_i32, %c0_i32_0, %c0_i32_1 : i32, i32, i32, i32
  }
  func.func @transform_1(%arg0: i32) -> (i32, i32) {
    %c0_i32 = arith.constant 0 : i32
    %c0_i32_0 = arith.constant 0 : i32
    %c0_i32_1 = arith.constant 0 : i32
    return %c0_i32, %c0_i32_0 : i32, i32
  }
  func.func @transform_2(%arg0: i32) -> (i32, i32) {
    %c0_i32 = arith.constant 0 : i32
    %c0_i32_0 = arith.constant 0 : i32
    %c0_i32_1 = arith.constant 0 : i32
    return %c0_i32, %c0_i32_0 : i32, i32
  }
  func.func @transform_3(%arg0: i32) -> (i32, i32) {
    %c0_i32 = arith.constant 0 : i32
    %c0_i32_0 = arith.constant 0 : i32
    %c0_i32_1 = arith.constant 0 : i32
    return %c0_i32, %c0_i32_0 : i32, i32
  }
  func.func @transform_4(%arg0: i32) -> (i32, i32) {
    %c0_i32 = arith.constant 0 : i32
    %c0_i32_0 = arith.constant 0 : i32
    %c0_i32_1 = arith.constant 0 : i32
    return %c0_i32, %c0_i32_0 : i32, i32
  }
  func.func @transform_5(%arg0: i32) -> (i32, i32) {
    %c0_i32 = arith.constant 0 : i32
    %c0_i32_0 = arith.constant 0 : i32
    %c0_i32_1 = arith.constant 0 : i32
    return %c0_i32, %c0_i32_0 : i32, i32
  }
  func.func @transform_6(%arg0: i32) -> (i32, i32) {
    %c0_i32 = arith.constant 0 : i32
    %c0_i32_0 = arith.constant 0 : i32
    %c0_i32_1 = arith.constant 0 : i32
    return %c0_i32, %c0_i32_0 : i32, i32
  }
  func.func @transform_7(%arg0: i32) -> (i32, i32) {
    %c0_i32 = arith.constant 0 : i32
    %c0_i32_0 = arith.constant 0 : i32
    %c0_i32_1 = arith.constant 0 : i32
    return %c0_i32, %c0_i32_0 : i32, i32
  }
  func.func @transform_8(%arg0: i32) -> (i32, i32) {
    %c0_i32 = arith.constant 0 : i32
    %c0_i32_0 = arith.constant 0 : i32
    %c0_i32_1 = arith.constant 0 : i32
    return %c0_i32, %c0_i32_0 : i32, i32
  }
  func.func @transform_9(%arg0: i32) -> (i32, i32) {
    %c0_i32 = arith.constant 0 : i32
    %c0_i32_0 = arith.constant 0 : i32
    %c0_i32_1 = arith.constant 0 : i32
    return %c0_i32, %c0_i32_0 : i32, i32
  }
  func.func @transform_10(%arg0: i32) -> (i32, i32) {
    %c0_i32 = arith.constant 0 : i32
    %c0_i32_0 = arith.constant 0 : i32
    %c0_i32_1 = arith.constant 0 : i32
    return %c0_i32, %c0_i32_0 : i32, i32
  }
  func.func @transform_11(%arg0: i32) -> (i32, i32) {
    %c0_i32 = arith.constant 0 : i32
    %c0_i32_0 = arith.constant 0 : i32
    %c0_i32_1 = arith.constant 0 : i32
    return %c0_i32, %c0_i32_0 : i32, i32
  }
  func.func @transform_12(%arg0: i32) -> (i32, i32) {
    %c0_i32 = arith.constant 0 : i32
    %c0_i32_0 = arith.constant 0 : i32
    %c0_i32_1 = arith.constant 0 : i32
    return %c0_i32, %c0_i32_0 : i32, i32
  }
  func.func @transform_13(%arg0: i32) -> (i32, i32, i32, i32) {
    %c0_i32 = arith.constant 0 : i32
    %c0_i32_0 = arith.constant 0 : i32
    %c0_i32_1 = arith.constant 0 : i32
    %c0_i32_2 = arith.constant 0 : i32
    return %arg0, %c0_i32, %c0_i32_0, %c0_i32_1 : i32, i32, i32, i32
  }
}

</mosaic_0001>

<llo_original>
// kernel: res_block_with_cbam.1
$region0: #{res_block_with_cbam.1}
  #allocation0 [shape = 'u32[]', space=smem, size = 0x4, offset = 0x4, fixed_abs, tag = 'smem constant byte address 0x4 - core index']
  #allocation1 [shape = 'u32[144,128]{1,0:T(1,128)}', space=vmem, size = 0x12000, scoped, tag = 'internal scratch']
  #allocation2 [shape = 'f32[18,18,32]{2,1,0:T(8,128)}', space=vmem, size = 0x36000, scoped, tag = 'scratch operand']
  #allocation3 [shape = 'f32[18,18,128]{2,1,0:T(8,128)}', space=vmem, size = 0x36000, scoped, tag = 'scratch operand']
  #allocation4 [shape = 'f32[2,32]{1,0:T(2,128)}', space=vmem, size = 0x400, scoped, tag = 'scratch operand']
  #allocation5 [shape = 'f32[22,22,2]{2,1,0:T(8,128)}', space=vmem, size = 0x42000, scoped, tag = 'scratch operand']
  %s0 = inlined_call_operand.vmem [shape: f32[2,16,16,32], index: 0, kind: input, shape index: {}]
  %s1 = inlined_call_operand.vmem [shape: f32[9,32], index: 1, kind: input, shape index: {}]
  %s2 = inlined_call_operand.vmem [shape: f32[32,128], index: 2, kind: input, shape index: {}]
  %s3 = inlined_call_operand.vmem [shape: f32[1,128], index: 3, kind: input, shape index: {}]
  %s4 = inlined_call_operand.vmem [shape: f32[9,128], index: 4, kind: input, shape index: {}]
  %s5 = inlined_call_operand.vmem [shape: f32[128,128], index: 5, kind: input, shape index: {}]
  %s6 = inlined_call_operand.vmem [shape: f32[1,128], index: 6, kind: input, shape index: {}]
  %s7 = inlined_call_operand.vmem [shape: f32[9,128], index: 7, kind: input, shape index: {}]
  %s8 = inlined_call_operand.vmem [shape: f32[128,32], index: 8, kind: input, shape index: {}]
  %s9 = inlined_call_operand.vmem [shape: f32[1,32], index: 9, kind: input, shape index: {}]
  %s10 = inlined_call_operand.vmem [shape: f32[32,2], index: 10, kind: input, shape index: {}]
  %s11 = inlined_call_operand.vmem [shape: f32[2,32], index: 11, kind: input, shape index: {}]
  %s12 = inlined_call_operand.vmem [shape: f32[49,2], index: 12, kind: input, shape index: {}]
  %s13 = inlined_call_operand.hbm [shape: f32[2,16,16,32], index: 13, kind: output, shape index: {}]
  %s14 = sld [smem:[#allocation0]]
  $region85: #{res_block_with_cbam.1} parent=0
    _
  %s16 = ssub.s32 1, %s14
  %s17 = scalar_select 0, %s16, %s14
  $region1: #{res_block_with_cbam.1} parent=0
    #allocation6 [shape = 'u8[262144]{0}', space=vmem, size = 0x40000, scoped, tag = 'output window, operand 0']
    #allocation7 [shape = 's32[2]{0}', space=sflag, size = 0x8, scoped, tag = 'scoped memory for res_block_with_cbam.1']
    %18 = vsyncpa [#allocation7], 0
    %s19 = scalar_lea.sflag [#allocation7], 1
    %20 = vsyncpa %s19, 0
    loop: start=0, step=1, limit=4
    $region2: #{res_block_with_cbam.1} parent=1 // loop_pre_header
      _
    $region3: #{res_block_with_cbam.1} parent=1 // loop_header
      %s22 = sphi 0, %s26
      %p23 = scmp.ge.s32.totalorder %s22, 4
      %s32 = sphi 0, %s34
      %s35 = sphi 0, %s32
      %s36 = sphi 0, %s35
      %s52 = sphi 0, %s36
      %s56 = sphi 0, %s56
      %s58 = sphi 0, %s56
      %s59 = sphi 0, %s58
      %s73 = sphi 0, %s59
      %s77 = sphi 0, %s77
      %s79 = sphi 0, %s77
      %s80 = sphi 0, %s79
      %s94 = sphi 0, %s80
      %s98 = sphi 0, %s98
      %s100 = sphi 0, %s98
      %s101 = sphi 0, %s100
      %s115 = sphi 0, %s101
      %s119 = sphi 0, %s119
      %s121 = sphi 0, %s119
      %s122 = sphi 0, %s121
      %s136 = sphi 0, %s122
      %s140 = sphi 0, %s140
      %s142 = sphi 0, %s140
      %s143 = sphi 0, %s142
      %s157 = sphi 0, %s143
      %s161 = sphi 0, %s161
      %s163 = sphi 0, %s161
      %s164 = sphi 0, %s163
      %s178 = sphi 0, %s164
      %s182 = sphi 0, %s182
      %s184 = sphi 0, %s182
      %s185 = sphi 0, %s184
      %s199 = sphi 0, %s185
      %s203 = sphi 0, %s203
      %s205 = sphi 0, %s203
      %s206 = sphi 0, %s205
      %s220 = sphi 0, %s206
      %s224 = sphi 0, %s224
      %s226 = sphi 0, %s224
      %s227 = sphi 0, %s226
      %s241 = sphi 0, %s227
      %s245 = sphi 0, %s245
      %s247 = sphi 0, %s245
      %s248 = sphi 0, %s247
      %s262 = sphi 0, %s248
      %s266 = sphi 0, %s266
      %s268 = sphi 0, %s266
      %s269 = sphi 0, %s268
      %s283 = sphi 0, %s269
      %s287 = sphi 0, %s287
      %s289 = sphi 0, %s287
      %s290 = sphi 0, %s289
      %s304 = sphi 0, %s290
      %s310 = sphi 0, %s312
      %s313 = sphi 0, %s310
      %s314 = sphi 0, %s313
      %s330 = sphi 0, %s314
    $region4: #{res_block_with_cbam.1} parent=1 // loop_header_branch
      %25 = sbr.rel (%p23) target = $region8
    $region5: #{res_block_with_cbam.1} parent=1 // loop_body
      %s27 = ssub.s32 %s22, 1
      %s28 = ssub.s32 %s22, 2
      %s29 = sadd.s32 %s22, 1
      %s30 = ssub.s32 %s22, %s29
      %p31 = scmp.eq.s32.totalorder %s30, 0
      %s33 = sadd.s32 %s32, 1
      %s34 = scalar_select %p31, %s32, %s33
      %p37 = pneg %p31
      %p38 = scmp.eq.s32.totalorder %s22, 1
      %p39 = por %p37, %p38
      %p40 = scmp.ne.s32.totalorder %s32, %s35
      %p41 = scmp.eq.s32.totalorder %s22, 0
      %p42 = por %p40, %p41
      %p43 = scmp.ne.s32.totalorder %s32, %s35
      %p44 = scmp.eq.s32.totalorder %s27, 1
      %p45 = por %p43, %p44
      %p46 = scmp.ne.s32.totalorder %s35, %s36
      %p47 = scmp.eq.s32.totalorder %s27, 0
      %p48 = por %p46, %p47
      %p49 = scmp.ne.s32.totalorder %s35, %s36
      %p50 = scmp.eq.s32.totalorder %s28, 1
      %p51 = por %p49, %p50
      %p53 = scmp.ne.s32.totalorder %s36, %s52
      %p54 = scmp.eq.s32.totalorder %s28, 0
      %p55 = por %p53, %p54
      %s57 = sadd.s32 %s56, 1
      %p60 = scmp.eq.s32.totalorder %s22, 1
      %p61 = scmp.ne.s32.totalorder %s56, %s58
      %p62 = scmp.eq.s32.totalorder %s22, 0
      %p63 = por %p61, %p62
      %p64 = scmp.ne.s32.totalorder %s56, %s58
      %p65 = scmp.eq.s32.totalorder %s27, 1
      %p66 = por %p64, %p65
      %p67 = scmp.ne.s32.totalorder %s58, %s59
      %p68 = scmp.eq.s32.totalorder %s27, 0
      %p69 = por %p67, %p68
      %p70 = scmp.ne.s32.totalorder %s58, %s59
      %p71 = scmp.eq.s32.totalorder %s28, 1
      %p72 = por %p70, %p71
      %p74 = scmp.ne.s32.totalorder %s59, %s73
      %p75 = scmp.eq.s32.totalorder %s28, 0
      %p76 = por %p74, %p75
      %s78 = sadd.s32 %s77, 1
      %p81 = scmp.eq.s32.totalorder %s22, 1
      %p82 = scmp.ne.s32.totalorder %s77, %s79
      %p83 = scmp.eq.s32.totalorder %s22, 0
      %p84 = por %p82, %p83
      %p85 = scmp.ne.s32.totalorder %s77, %s79
      %p86 = scmp.eq.s32.totalorder %s27, 1
      %p87 = por %p85, %p86
      %p88 = scmp.ne.s32.totalorder %s79, %s80
      %p89 = scmp.eq.s32.totalorder %s27, 0
      %p90 = por %p88, %p89
      %p91 = scmp.ne.s32.totalorder %s79, %s80
      %p92 = scmp.eq.s32.totalorder %s28, 1
      %p93 = por %p91, %p92
      %p95 = scmp.ne.s32.totalorder %s80, %s94
      %p96 = scmp.eq.s32.totalorder %s28, 0
      %p97 = por %p95, %p96
      %s99 = sadd.s32 %s98, 1
      %p102 = scmp.eq.s32.totalorder %s22, 1
      %p103 = scmp.ne.s32.totalorder %s98, %s100
      %p104 = scmp.eq.s32.totalorder %s22, 0
      %p105 = por %p103, %p104
      %p106 = scmp.ne.s32.totalorder %s98, %s100
      %p107 = scmp.eq.s32.totalorder %s27, 1
      %p108 = por %p106, %p107
      %p109 = scmp.ne.s32.totalorder %s100, %s101
      %p110 = scmp.eq.s32.totalorder %s27, 0
      %p111 = por %p109, %p110
      %p112 = scmp.ne.s32.totalorder %s100, %s101
      %p113 = scmp.eq.s32.totalorder %s28, 1
      %p114 = por %p112, %p113
      %p116 = scmp.ne.s32.totalorder %s101, %s115
      %p117 = scmp.eq.s32.totalorder %s28, 0
      %p118 = por %p116, %p117
      %s120 = sadd.s32 %s119, 1
      %p123 = scmp.eq.s32.totalorder %s22, 1
      %p124 = scmp.ne.s32.totalorder %s119, %s121
      %p125 = scmp.eq.s32.totalorder %s22, 0
      %p126 = por %p124, %p125
      %p127 = scmp.ne.s32.totalorder %s119, %s121
      %p128 = scmp.eq.s32.totalorder %s27, 1
      %p129 = por %p127, %p128
      %p130 = scmp.ne.s32.totalorder %s121, %s122
      %p131 = scmp.eq.s32.totalorder %s27, 0
      %p132 = por %p130, %p131
      %p133 = scmp.ne.s32.totalorder %s121, %s122
      %p134 = scmp.eq.s32.totalorder %s28, 1
      %p135 = por %p133, %p134
      %p137 = scmp.ne.s32.totalorder %s122, %s136
      %p138 = scmp.eq.s32.totalorder %s28, 0
      %p139 = por %p137, %p138
      %s141 = sadd.s32 %s140, 1
      %p144 = scmp.eq.s32.totalorder %s22, 1
      %p145 = scmp.ne.s32.totalorder %s140, %s142
      %p146 = scmp.eq.s32.totalorder %s22, 0
      %p147 = por %p145, %p146
      %p148 = scmp.ne.s32.totalorder %s140, %s142
      %p149 = scmp.eq.s32.totalorder %s27, 1
      %p150 = por %p148, %p149
      %p151 = scmp.ne.s32.totalorder %s142, %s143
      %p152 = scmp.eq.s32.totalorder %s27, 0
      %p153 = por %p151, %p152
      %p154 = scmp.ne.s32.totalorder %s142, %s143
      %p155 = scmp.eq.s32.totalorder %s28, 1
      %p156 = por %p154, %p155
      %p158 = scmp.ne.s32.totalorder %s143, %s157
      %p159 = scmp.eq.s32.totalorder %s28, 0
      %p160 = por %p158, %p159
      %s162 = sadd.s32 %s161, 1
      %p165 = scmp.eq.s32.totalorder %s22, 1
      %p166 = scmp.ne.s32.totalorder %s161, %s163
      %p167 = scmp.eq.s32.totalorder %s22, 0
      %p168 = por %p166, %p167
      %p169 = scmp.ne.s32.totalorder %s161, %s163
      %p170 = scmp.eq.s32.totalorder %s27, 1
      %p171 = por %p169, %p170
      %p172 = scmp.ne.s32.totalorder %s163, %s164
      %p173 = scmp.eq.s32.totalorder %s27, 0
      %p174 = por %p172, %p173
      %p175 = scmp.ne.s32.totalorder %s163, %s164
      %p176 = scmp.eq.s32.totalorder %s28, 1
      %p177 = por %p175, %p176
      %p179 = scmp.ne.s32.totalorder %s164, %s178
      %p180 = scmp.eq.s32.totalorder %s28, 0
      %p181 = por %p179, %p180
      %s183 = sadd.s32 %s182, 1
      %p186 = scmp.eq.s32.totalorder %s22, 1
      %p187 = scmp.ne.s32.totalorder %s182, %s184
      %p188 = scmp.eq.s32.totalorder %s22, 0
      %p189 = por %p187, %p188
      %p190 = scmp.ne.s32.totalorder %s182, %s184
      %p191 = scmp.eq.s32.totalorder %s27, 1
      %p192 = por %p190, %p191
      %p193 = scmp.ne.s32.totalorder %s184, %s185
      %p194 = scmp.eq.s32.totalorder %s27, 0
      %p195 = por %p193, %p194
      %p196 = scmp.ne.s32.totalorder %s184, %s185
      %p197 = scmp.eq.s32.totalorder %s28, 1
      %p198 = por %p196, %p197
      %p200 = scmp.ne.s32.totalorder %s185, %s199
      %p201 = scmp.eq.s32.totalorder %s28, 0
      %p202 = por %p200, %p201
      %s204 = sadd.s32 %s203, 1
      %p207 = scmp.eq.s32.totalorder %s22, 1
      %p208 = scmp.ne.s32.totalorder %s203, %s205
      %p209 = scmp.eq.s32.totalorder %s22, 0
      %p210 = por %p208, %p209
      %p211 = scmp.ne.s32.totalorder %s203, %s205
      %p212 = scmp.eq.s32.totalorder %s27, 1
      %p213 = por %p211, %p212
      %p214 = scmp.ne.s32.totalorder %s205, %s206
      %p215 = scmp.eq.s32.totalorder %s27, 0
      %p216 = por %p214, %p215
      %p217 = scmp.ne.s32.totalorder %s205, %s206
      %p218 = scmp.eq.s32.totalorder %s28, 1
      %p219 = por %p217, %p218
      %p221 = scmp.ne.s32.totalorder %s206, %s220
      %p222 = scmp.eq.s32.totalorder %s28, 0
      %p223 = por %p221, %p222
      %s225 = sadd.s32 %s224, 1
      %p228 = scmp.eq.s32.totalorder %s22, 1
      %p229 = scmp.ne.s32.totalorder %s224, %s226
      %p230 = scmp.eq.s32.totalorder %s22, 0
      %p231 = por %p229, %p230
      %p232 = scmp.ne.s32.totalorder %s224, %s226
      %p233 = scmp.eq.s32.totalorder %s27, 1
      %p234 = por %p232, %p233
      %p235 = scmp.ne.s32.totalorder %s226, %s227
      %p236 = scmp.eq.s32.totalorder %s27, 0
      %p237 = por %p235, %p236
      %p238 = scmp.ne.s32.totalorder %s226, %s227
      %p239 = scmp.eq.s32.totalorder %s28, 1
      %p240 = por %p238, %p239
      %p242 = scmp.ne.s32.totalorder %s227, %s241
      %p243 = scmp.eq.s32.totalorder %s28, 0
      %p244 = por %p242, %p243
      %s246 = sadd.s32 %s245, 1
      %p249 = scmp.eq.s32.totalorder %s22, 1
      %p250 = scmp.ne.s32.totalorder %s245, %s247
      %p251 = scmp.eq.s32.totalorder %s22, 0
      %p252 = por %p250, %p251
      %p253 = scmp.ne.s32.totalorder %s245, %s247
      %p254 = scmp.eq.s32.totalorder %s27, 1
      %p255 = por %p253, %p254
      %p256 = scmp.ne.s32.totalorder %s247, %s248
      %p257 = scmp.eq.s32.totalorder %s27, 0
      %p258 = por %p256, %p257
      %p259 = scmp.ne.s32.totalorder %s247, %s248
      %p260 = scmp.eq.s32.totalorder %s28, 1
      %p261 = por %p259, %p260
      %p263 = scmp.ne.s32.totalorder %s248, %s262
      %p264 = scmp.eq.s32.totalorder %s28, 0
      %p265 = por %p263, %p264
      %s267 = sadd.s32 %s266, 1
      %p270 = scmp.eq.s32.totalorder %s22, 1
      %p271 = scmp.ne.s32.totalorder %s266, %s268
      %p272 = scmp.eq.s32.totalorder %s22, 0
      %p273 = por %p271, %p272
      %p274 = scmp.ne.s32.totalorder %s266, %s268
      %p275 = scmp.eq.s32.totalorder %s27, 1
      %p276 = por %p274, %p275
      %p277 = scmp.ne.s32.totalorder %s268, %s269
      %p278 = scmp.eq.s32.totalorder %s27, 0
      %p279 = por %p277, %p278
      %p280 = scmp.ne.s32.totalorder %s268, %s269
      %p281 = scmp.eq.s32.totalorder %s28, 1
      %p282 = por %p280, %p281
      %p284 = scmp.ne.s32.totalorder %s269, %s283
      %p285 = scmp.eq.s32.totalorder %s28, 0
      %p286 = por %p284, %p285
      %s288 = sadd.s32 %s287, 1
      %p291 = scmp.eq.s32.totalorder %s22, 1
      %p292 = scmp.ne.s32.totalorder %s287, %s289
      %p293 = scmp.eq.s32.totalorder %s22, 0
      %p294 = por %p292, %p293
      %p295 = scmp.ne.s32.totalorder %s287, %s289
      %p296 = scmp.eq.s32.totalorder %s27, 1
      %p297 = por %p295, %p296
      %p298 = scmp.ne.s32.totalorder %s289, %s290
      %p299 = scmp.eq.s32.totalorder %s27, 0
      %p300 = por %p298, %p299
      %p301 = scmp.ne.s32.totalorder %s289, %s290
      %p302 = scmp.eq.s32.totalorder %s28, 1
      %p303 = por %p301, %p302
      %p305 = scmp.ne.s32.totalorder %s290, %s304
      %p306 = scmp.eq.s32.totalorder %s28, 0
      %p307 = por %p305, %p306
      %s308 = ssub.s32 %s22, %s29
      %p309 = scmp.eq.s32.totalorder %s308, 0
      %s311 = sadd.s32 %s310, 1
      %s312 = scalar_select %p309, %s310, %s311
      %p315 = pneg %p309
      %p316 = scmp.eq.s32.totalorder %s22, 1
      %p317 = por %p315, %p316
      %p318 = scmp.ne.s32.totalorder %s310, %s313
      %p319 = scmp.eq.s32.totalorder %s22, 0
      %p320 = por %p318, %p319
      %p321 = scmp.ne.s32.totalorder %s310, %s313
      %p322 = scmp.eq.s32.totalorder %s27, 1
      %p323 = por %p321, %p322
      %p324 = scmp.ne.s32.totalorder %s313, %s314
      %p325 = scmp.eq.s32.totalorder %s27, 0
      %p326 = por %p324, %p325
      %p327 = scmp.ne.s32.totalorder %s313, %s314
      %p328 = scmp.eq.s32.totalorder %s28, 1
      %p329 = por %p327, %p328
      %p331 = scmp.ne.s32.totalorder %s314, %s330
      %p332 = scmp.eq.s32.totalorder %s28, 0
      %p333 = por %p331, %p332
      %p334 = scmp.le.s32.totalorder 1, %s22
      %p335 = scmp.lt.s32.totalorder %s22, 3
      %p336 = pnand %p334, %p335
      %p337 = pneg %p336
      // Predicated region
      $region9: #{res_block_with_cbam.1} parent=5 // pred_check
        _
      $region10: #{res_block_with_cbam.1} parent=5 // pred_check_branch
        %339 = sbr.rel (%p336) target = $region12
      $region11: #{res_block_with_cbam.1} parent=5 // pred_region
        %s340 = ssub.s32 %s22, 1
        // Predicated region
        $region13: #{res_block_with_cbam.1} parent=11 // pred_check
          %p341 = pneg %p69
        $region14: #{res_block_with_cbam.1} parent=11 // pred_check_branch
          %343 = sbr.rel (%p341) target = $region16
        $region15: #{res_block_with_cbam.1} parent=11 // pred_region
          _
        $region16: #{res_block_with_cbam.1} parent=11 // pred_fallthru
          _
        // Predicated region
        $region17: #{res_block_with_cbam.1} parent=11 // pred_check
          %p344 = pneg %p90
        $region18: #{res_block_with_cbam.1} parent=11 // pred_check_branch
          %346 = sbr.rel (%p344) target = $region20
        $region19: #{res_block_with_cbam.1} parent=11 // pred_region
          _
        $region20: #{res_block_with_cbam.1} parent=11 // pred_fallthru
          _
        // Predicated region
        $region21: #{res_block_with_cbam.1} parent=11 // pred_check
          %p347 = pneg %p111
        $region22: #{res_block_with_cbam.1} parent=11 // pred_check_branch
          %349 = sbr.rel (%p347) target = $region24
        $region23: #{res_block_with_cbam.1} parent=11 // pred_region
          _
        $region24: #{res_block_with_cbam.1} parent=11 // pred_fallthru
          _
        // Predicated region
        $region25: #{res_block_with_cbam.1} parent=11 // pred_check
          %p350 = pneg %p132
        $region26: #{res_block_with_cbam.1} parent=11 // pred_check_branch
          %352 = sbr.rel (%p350) target = $region28
        $region27: #{res_block_with_cbam.1} parent=11 // pred_region
          _
        $region28: #{res_block_with_cbam.1} parent=11 // pred_fallthru
          _
        // Predicated region
        $region29: #{res_block_with_cbam.1} parent=11 // pred_check
          %p353 = pneg %p153
        $region30: #{res_block_with_cbam.1} parent=11 // pred_check_branch
          %355 = sbr.rel (%p353) target = $region32
        $region31: #{res_block_with_cbam.1} parent=11 // pred_region
          _
        $region32: #{res_block_with_cbam.1} parent=11 // pred_fallthru
          _
        // Predicated region
        $region33: #{res_block_with_cbam.1} parent=11 // pred_check
          %p356 = pneg %p174
        $region34: #{res_block_with_cbam.1} parent=11 // pred_check_branch
          %358 = sbr.rel (%p356) target = $region36
        $region35: #{res_block_with_cbam.1} parent=11 // pred_region
          _
        $region36: #{res_block_with_cbam.1} parent=11 // pred_fallthru
          _
        // Predicated region
        $region37: #{res_block_with_cbam.1} parent=11 // pred_check
          %p359 = pneg %p195
        $region38: #{res_block_with_cbam.1} parent=11 // pred_check_branch
          %361 = sbr.rel (%p359) target = $region40
        $region39: #{res_block_with_cbam.1} parent=11 // pred_region
          _
        $region40: #{res_block_with_cbam.1} parent=11 // pred_fallthru
          _
        // Predicated region
        $region41: #{res_block_with_cbam.1} parent=11 // pred_check
          %p362 = pneg %p216
        $region42: #{res_block_with_cbam.1} parent=11 // pred_check_branch
          %364 = sbr.rel (%p362) target = $region44
        $region43: #{res_block_with_cbam.1} parent=11 // pred_region
          _
        $region44: #{res_block_with_cbam.1} parent=11 // pred_fallthru
          _
        // Predicated region
        $region45: #{res_block_with_cbam.1} parent=11 // pred_check
          %p365 = pneg %p237
        $region46: #{res_block_with_cbam.1} parent=11 // pred_check_branch
          %367 = sbr.rel (%p365) target = $region48
        $region47: #{res_block_with_cbam.1} parent=11 // pred_region
          _
        $region48: #{res_block_with_cbam.1} parent=11 // pred_fallthru
          _
        // Predicated region
        $region49: #{res_block_with_cbam.1} parent=11 // pred_check
          %p368 = pneg %p258
        $region50: #{res_block_with_cbam.1} parent=11 // pred_check_branch
          %370 = sbr.rel (%p368) target = $region52
        $region51: #{res_block_with_cbam.1} parent=11 // pred_region
          _
        $region52: #{res_block_with_cbam.1} parent=11 // pred_fallthru
          _
        // Predicated region
        $region53: #{res_block_with_cbam.1} parent=11 // pred_check
          %p371 = pneg %p279
        $region54: #{res_block_with_cbam.1} parent=11 // pred_check_branch
          %373 = sbr.rel (%p371) target = $region56
        $region55: #{res_block_with_cbam.1} parent=11 // pred_region
          _
        $region56: #{res_block_with_cbam.1} parent=11 // pred_fallthru
          _
        // Predicated region
        $region57: #{res_block_with_cbam.1} parent=11 // pred_check
          %p374 = pneg %p300
        $region58: #{res_block_with_cbam.1} parent=11 // pred_check_branch
          %376 = sbr.rel (%p374) target = $region60
        $region59: #{res_block_with_cbam.1} parent=11 // pred_region
          _
        $region60: #{res_block_with_cbam.1} parent=11 // pred_fallthru
          _
      $region12: #{res_block_with_cbam.1} parent=5 // pred_fallthru
        _
      %p377 = scmp.lt.s32.totalorder %s22, 2
      // Predicated region
      $region61: #{res_block_with_cbam.1} parent=5 // pred_check
        %p378 = pneg %p377
      $region62: #{res_block_with_cbam.1} parent=5 // pred_check_branch
        %380 = sbr.rel (%p378) target = $region64
      $region63: #{res_block_with_cbam.1} parent=5 // pred_region
        // Predicated region
        $region65: #{res_block_with_cbam.1} parent=63 // pred_check
          %p381 = pneg %p42
        $region66: #{res_block_with_cbam.1} parent=63 // pred_check_branch
          %383 = sbr.rel (%p381) target = $region68
        $region67: #{res_block_with_cbam.1} parent=63 // pred_region
          %p384 = scmp.lt.s32.totalorder %s22, 1
          %s385 = scalar_select %p384, %s22, 1
          %s386 = smul.addr %s385, 32
          %s387 = smul.addr %s386, 8
          %s388 = scalar_lea.vmem %s0, %s387
        $region68: #{res_block_with_cbam.1} parent=63 // pred_fallthru
          _
      $region64: #{res_block_with_cbam.1} parent=5 // pred_fallthru
        _
      %p389 = scmp.le.s32.totalorder 1, %s22
      %p390 = scmp.lt.s32.totalorder %s22, 3
      %p391 = pnand %p389, %p390
      %p392 = pneg %p391
      // Predicated region
      $region69: #{res_block_with_cbam.1} parent=5 // pred_check
        _
      $region70: #{res_block_with_cbam.1} parent=5 // pred_check_branch
        %394 = sbr.rel (%p391) target = $region72
      $region71: #{res_block_with_cbam.1} parent=5 // pred_region
        %s395 = ssub.s32 %s22, 1
        %p396 = scmp.lt.s32.totalorder %s27, 1
        %s397 = scalar_select %p396, %s27, 1
        %s398 = smul.addr %s397, 32
        %s399 = smul.addr %s398, 8
        %s400 = scalar_lea.vmem %s0, %s399
        %p401 = pneg %p48
        %p402 = pneg %p45
        %p403 = pneg %p69
        %p404 = pneg %p66
        %p405 = pneg %p90
        %p406 = pneg %p87
        %p407 = pneg %p111
        %p408 = pneg %p108
        %p409 = pneg %p132
        %p410 = pneg %p129
        %p411 = pneg %p153
        %p412 = pneg %p150
        %p413 = pneg %p174
        %p414 = pneg %p171
        %p415 = pneg %p195
        %p416 = pneg %p192
        %p417 = pneg %p216
        %p418 = pneg %p213
        %p419 = pneg %p237
        %p420 = pneg %p234
        %p421 = pneg %p258
        %p422 = pneg %p255
        %p423 = pneg %p279
        %p424 = pneg %p276
        %p425 = pneg %p300
        %p426 = pneg %p297
        %p427 = pneg %p326
        %p428 = pneg %p323
        %s429 = sand.u32 %s313, 1
        %s430 = scalar_lea.sflag [#allocation7], %s429
        %s431 = sand.u32 %s313, 1
        %s432 = smul.addr %s431, 256
        %s433 = scalar_lea.vmem [#allocation6], %s432
        %p434 = scmp.lt.s32.totalorder %s27, 1
        %s435 = scalar_select %p434, %s27, 1
        %s436 = smul.addr %s435, 32
        %s437 = smul.addr %s436, 8
        %s438 = scalar_lea.vmem %s0, %s437
        %vm439 = vcmask 261120
        %440 = vst.msk [vmem:[#allocation2] sm:$0xff] %vm439, 0.0
        %441 = vst.msk [vmem:[#allocation2 + $0x8] sm:$0xff] %vm439, 0.0
        %vm442 = vcmask 254976
        %443 = vst.msk [vmem:[#allocation2 + $0x10] sm:$0x3] %vm442, 0.0
        %444 = vst.msk [vmem:[#allocation2 + $0x18] sm:$0xff] %vm439, 0.0
        %445 = vst.msk [vmem:[#allocation2 + $0x20] sm:$0xff] %vm439, 0.0
        %446 = vst.msk [vmem:[#allocation2 + $0x28] sm:$0x3] %vm442, 0.0
        %447 = vst.msk [vmem:[#allocation2 + $0x30] sm:$0xff] %vm439, 0.0
        %448 = vst.msk [vmem:[#allocation2 + $0x38] sm:$0xff] %vm439, 0.0
        %449 = vst.msk [vmem:[#allocation2 + $0x40] sm:$0x3] %vm442, 0.0
        %450 = vst.msk [vmem:[#allocation2 + $0x48] sm:$0xff] %vm439, 0.0
        %451 = vst.msk [vmem:[#allocation2 + $0x50] sm:$0xff] %vm439, 0.0
        %452 = vst.msk [vmem:[#allocation2 + $0x58] sm:$0x3] %vm442, 0.0
        %453 = vst.msk [vmem:[#allocation2 + $0x60] sm:$0xff] %vm439, 0.0
        %454 = vst.msk [vmem:[#allocation2 + $0x68] sm:$0xff] %vm439, 0.0
        %455 = vst.msk [vmem:[#allocation2 + $0x70] sm:$0x3] %vm442, 0.0
        %456 = vst.msk [vmem:[#allocation2 + $0x78] sm:$0xff] %vm439, 0.0
        %457 = vst.msk [vmem:[#allocation2 + $0x80] sm:$0xff] %vm439, 0.0
        %458 = vst.msk [vmem:[#allocation2 + $0x88] sm:$0x3] %vm442, 0.0
        %459 = vst.msk [vmem:[#allocation2 + $0x90] sm:$0xff] %vm439, 0.0
        %460 = vst.msk [vmem:[#allocation2 + $0x98] sm:$0xff] %vm439, 0.0
        %461 = vst.msk [vmem:[#allocation2 + $0xa0] sm:$0x3] %vm442, 0.0
        %462 = vst.msk [vmem:[#allocation2 + $0xa8] sm:$0xff] %vm439, 0.0
        %463 = vst.msk [vmem:[#allocation2 + $0xb0] sm:$0xff] %vm439, 0.0
        %464 = vst.msk [vmem:[#allocation2 + $0xb8] sm:$0x3] %vm442, 0.0
        %465 = vst.msk [vmem:[#allocation2 + $0xc0] sm:$0xff] %vm439, 0.0
        %466 = vst.msk [vmem:[#allocation2 + $0xc8] sm:$0xff] %vm439, 0.0
        %467 = vst.msk [vmem:[#allocation2 + $0xd0] sm:$0x3] %vm442, 0.0
        %468 = vst.msk [vmem:[#allocation2 + $0xd8] sm:$0xff] %vm439, 0.0
        %469 = vst.msk [vmem:[#allocation2 + $0xe0] sm:$0xff] %vm439, 0.0
        %470 = vst.msk [vmem:[#allocation2 + $0xe8] sm:$0x3] %vm442, 0.0
        %471 = vst.msk [vmem:[#allocation2 + $0xf0] sm:$0xff] %vm439, 0.0
        %472 = vst.msk [vmem:[#allocation2 + $0xf8] sm:$0xff] %vm439, 0.0
        %473 = vst.msk [vmem:[#allocation2 + $0x100] sm:$0x3] %vm442, 0.0
        %474 = vst.msk [vmem:[#allocation2 + $0x108] sm:$0xff] %vm439, 0.0
        %475 = vst.msk [vmem:[#allocation2 + $0x110] sm:$0xff] %vm439, 0.0
        %476 = vst.msk [vmem:[#allocation2 + $0x118] sm:$0x3] %vm442, 0.0
        %477 = vst.msk [vmem:[#allocation2 + $0x120] sm:$0xff] %vm439, 0.0
        %478 = vst.msk [vmem:[#allocation2 + $0x128] sm:$0xff] %vm439, 0.0
        %479 = vst.msk [vmem:[#allocation2 + $0x130] sm:$0x3] %vm442, 0.0
        %480 = vst.msk [vmem:[#allocation2 + $0x138] sm:$0xff] %vm439, 0.0
        %481 = vst.msk [vmem:[#allocation2 + $0x140] sm:$0xff] %vm439, 0.0
        %482 = vst.msk [vmem:[#allocation2 + $0x148] sm:$0x3] %vm442, 0.0
        %483 = vst.msk [vmem:[#allocation2 + $0x150] sm:$0xff] %vm439, 0.0
        %484 = vst.msk [vmem:[#allocation2 + $0x158] sm:$0xff] %vm439, 0.0
        %485 = vst.msk [vmem:[#allocation2 + $0x160] sm:$0x3] %vm442, 0.0
        %486 = vst.msk [vmem:[#allocation2 + $0x168] sm:$0xff] %vm439, 0.0
        %487 = vst.msk [vmem:[#allocation2 + $0x170] sm:$0xff] %vm439, 0.0
        %488 = vst.msk [vmem:[#allocation2 + $0x178] sm:$0x3] %vm442, 0.0
        %489 = vst.msk [vmem:[#allocation2 + $0x180] sm:$0xff] %vm439, 0.0
        %490 = vst.msk [vmem:[#allocation2 + $0x188] sm:$0xff] %vm439, 0.0
        %491 = vst.msk [vmem:[#allocation2 + $0x190] sm:$0x3] %vm442, 0.0
        %492 = vst.msk [vmem:[#allocation2 + $0x198] sm:$0xff] %vm439, 0.0
        %493 = vst.msk [vmem:[#allocation2 + $0x1a0] sm:$0xff] %vm439, 0.0
        %494 = vst.msk [vmem:[#allocation2 + $0x1a8] sm:$0x3] %vm442, 0.0
        %v495 = vld [vmem:[%s438] sm:$0xff]
        %v496 = vld [vmem:[%s438 + $0x8] sm:$0xff]
        %v497 = vld [vmem:[%s438 + $0x10] sm:$0xff]
        %v498 = vld [vmem:[%s438 + $0x18] sm:$0xff]
        %v499 = vld [vmem:[%s438 + $0x20] sm:$0xff]
        %v500 = vld [vmem:[%s438 + $0x28] sm:$0xff]
        %v501 = vld [vmem:[%s438 + $0x30] sm:$0xff]
        %v502 = vld [vmem:[%s438 + $0x38] sm:$0xff]
        %v503 = vld [vmem:[%s438 + $0x40] sm:$0xff]
        %v504 = vld [vmem:[%s438 + $0x48] sm:$0xff]
        %v505 = vld [vmem:[%s438 + $0x50] sm:$0xff]
        %v506 = vld [vmem:[%s438 + $0x58] sm:$0xff]
        %v507 = vld [vmem:[%s438 + $0x60] sm:$0xff]
        %v508 = vld [vmem:[%s438 + $0x68] sm:$0xff]
        %v509 = vld [vmem:[%s438 + $0x70] sm:$0xff]
        %v510 = vld [vmem:[%s438 + $0x78] sm:$0xff]
        %v511 = vld [vmem:[%s438 + $0x80] sm:$0xff]
        %v512 = vld [vmem:[%s438 + $0x88] sm:$0xff]
        %v513 = vld [vmem:[%s438 + $0x90] sm:$0xff]
        %v514 = vld [vmem:[%s438 + $0x98] sm:$0xff]
        %v515 = vld [vmem:[%s438 + $0xa0] sm:$0xff]
        %v516 = vld [vmem:[%s438 + $0xa8] sm:$0xff]
        %v517 = vld [vmem:[%s438 + $0xb0] sm:$0xff]
        %v518 = vld [vmem:[%s438 + $0xb8] sm:$0xff]
        %v519 = vld [vmem:[%s438 + $0xc0] sm:$0xff]
        %v520 = vld [vmem:[%s438 + $0xc8] sm:$0xff]
        %v521 = vld [vmem:[%s438 + $0xd0] sm:$0xff]
        %v522 = vld [vmem:[%s438 + $0xd8] sm:$0xff]
        %v523 = vld [vmem:[%s438 + $0xe0] sm:$0xff]
        %v524 = vld [vmem:[%s438 + $0xe8] sm:$0xff]
        %v525 = vld [vmem:[%s438 + $0xf0] sm:$0xff]
        %v526 = vld [vmem:[%s438 + $0xf8] sm:$0xff]
        %s527 = scalar_lea.vmem [#allocation2], 24
        %528 = vst.msk [vmem:[%s527 + $0x1] sm:$0xff] %vm439, %v495
        %529 = vst.msk [vmem:[%s527 + $0x9] sm:$0xff] %vm439, %v496
        %530 = vst.msk [vmem:[%s527 + $0x19] sm:$0xff] %vm439, %v497
        %531 = vst.msk [vmem:[%s527 + $0x21] sm:$0xff] %vm439, %v498
        %532 = vst.msk [vmem:[%s527 + $0x31] sm:$0xff] %vm439, %v499
        %533 = vst.msk [vmem:[%s527 + $0x39] sm:$0xff] %vm439, %v500
        %534 = vst.msk [vmem:[%s527 + $0x49] sm:$0xff] %vm439, %v501
        %535 = vst.msk [vmem:[%s527 + $0x51] sm:$0xff] %vm439, %v502
        %536 = vst.msk [vmem:[%s527 + $0x61] sm:$0xff] %vm439, %v503
        %537 = vst.msk [vmem:[%s527 + $0x69] sm:$0xff] %vm439, %v504
        %538 = vst.msk [vmem:[%s527 + $0x79] sm:$0xff] %vm439, %v505
        %539 = vst.msk [vmem:[%s527 + $0x81] sm:$0xff] %vm439, %v506
        %540 = vst.msk [vmem:[%s527 + $0x91] sm:$0xff] %vm439, %v507
        %541 = vst.msk [vmem:[%s527 + $0x99] sm:$0xff] %vm439, %v508
        %542 = vst.msk [vmem:[%s527 + $0xa9] sm:$0xff] %vm439, %v509
        %543 = vst.msk [vmem:[%s527 + $0xb1] sm:$0xff] %vm439, %v510
        %544 = vst.msk [vmem:[%s527 + $0xc1] sm:$0xff] %vm439, %v511
        %545 = vst.msk [vmem:[%s527 + $0xc9] sm:$0xff] %vm439, %v512
        %546 = vst.msk [vmem:[%s527 + $0xd9] sm:$0xff] %vm439, %v513
        %547 = vst.msk [vmem:[%s527 + $0xe1] sm:$0xff] %vm439, %v514
        %548 = vst.msk [vmem:[%s527 + $0xf1] sm:$0xff] %vm439, %v515
        %549 = vst.msk [vmem:[%s527 + $0xf9] sm:$0xff] %vm439, %v516
        %550 = vst.msk [vmem:[%s527 + $0x109] sm:$0xff] %vm439, %v517
        %551 = vst.msk [vmem:[%s527 + $0x111] sm:$0xff] %vm439, %v518
        %552 = vst.msk [vmem:[%s527 + $0x121] sm:$0xff] %vm439, %v519
        %553 = vst.msk [vmem:[%s527 + $0x129] sm:$0xff] %vm439, %v520
        %554 = vst.msk [vmem:[%s527 + $0x139] sm:$0xff] %vm439, %v521
        %555 = vst.msk [vmem:[%s527 + $0x141] sm:$0xff] %vm439, %v522
        %556 = vst.msk [vmem:[%s527 + $0x151] sm:$0xff] %vm439, %v523
        %557 = vst.msk [vmem:[%s527 + $0x159] sm:$0xff] %vm439, %v524
        %558 = vst.msk [vmem:[%s527 + $0x169] sm:$0xff] %vm439, %v525
        %559 = vst.msk [vmem:[%s527 + $0x171] sm:$0xff] %vm439, %v526
        %v560 = vld [vmem:[%s1] sm:$0xff]
        %v561 = vld [vmem:[%s1 + $0x8] sm:$0x1]
        %v562 = vld [vmem:[#allocation2] sm:$0xff]
        %v563 = vld [vmem:[#allocation2 + $0x8] sm:$0xff]
        %v564 = vld [vmem:[#allocation2 + $0x18] sm:$0xff]
        %v565 = vld [vmem:[#allocation2 + $0x20] sm:$0xff]
        %v566 = vld [vmem:[#allocation2 + $0x30] sm:$0xff]
        %v567 = vld [vmem:[#allocation2 + $0x38] sm:$0xff]
        %v568 = vld [vmem:[#allocation2 + $0x48] sm:$0xff]
        %v569 = vld [vmem:[#allocation2 + $0x50] sm:$0xff]
        %v570 = vld [vmem:[#allocation2 + $0x60] sm:$0xff]
        %v571 = vld [vmem:[#allocation2 + $0x68] sm:$0xff]
        %v572 = vld [vmem:[#allocation2 + $0x78] sm:$0xff]
        %v573 = vld [vmem:[#allocation2 + $0x80] sm:$0xff]
        %v574 = vld [vmem:[#allocation2 + $0x90] sm:$0xff]
        %v575 = vld [vmem:[#allocation2 + $0x98] sm:$0xff]
        %v576 = vld [vmem:[#allocation2 + $0xa8] sm:$0xff]
        %v577 = vld [vmem:[#allocation2 + $0xb0] sm:$0xff]
        %v578 = vld [vmem:[#allocation2 + $0xc0] sm:$0xff]
        %v579 = vld [vmem:[#allocation2 + $0xc8] sm:$0xff]
        %v580 = vld [vmem:[#allocation2 + $0xd8] sm:$0xff]
        %v581 = vld [vmem:[#allocation2 + $0xe0] sm:$0xff]
        %v582 = vld [vmem:[#allocation2 + $0xf0] sm:$0xff]
        %v583 = vld [vmem:[#allocation2 + $0xf8] sm:$0xff]
        %v584 = vld [vmem:[#allocation2 + $0x108] sm:$0xff]
        %v585 = vld [vmem:[#allocation2 + $0x110] sm:$0xff]
        %v586 = vld [vmem:[#allocation2 + $0x120] sm:$0xff]
        %v587 = vld [vmem:[#allocation2 + $0x128] sm:$0xff]
        %v588 = vld [vmem:[#allocation2 + $0x138] sm:$0xff]
        %v589 = vld [vmem:[#allocation2 + $0x140] sm:$0xff]
        %v590 = vld [vmem:[#allocation2 + $0x150] sm:$0xff]
        %v591 = vld [vmem:[#allocation2 + $0x158] sm:$0xff]
        %v592 = vld [vmem:[#allocation2 + $0x168] sm:$0xff]
        %v593 = vld [vmem:[#allocation2 + $0x170] sm:$0xff]
        %v594 = vld [vmem:[#allocation2 + $0x180] sm:$0xff]
        %v595 = vld [vmem:[#allocation2 + $0x188] sm:$0xff]
        %v596 = vld [vmem:[#allocation2 + $0x198] sm:$0xff]
        %v597 = vld [vmem:[#allocation2 + $0x1a0] sm:$0xff]
        %v598 = vlaneseq
        %v599 = vshrl.u32 %v598, 7
        %v600 = vsub.s32 0, %v599
        %v601 = vrot.slane %v560, %v600
        %v602 = vmul.f32 %v562, %v601
        %v603 = vmul.f32 %v563, %v601
        %v604 = vmul.f32 %v564, %v601
        %v605 = vmul.f32 %v565, %v601
        %v606 = vmul.f32 %v566, %v601
        %v607 = vmul.f32 %v567, %v601
        %v608 = vmul.f32 %v568, %v601
        %v609 = vmul.f32 %v569, %v601
        %v610 = vmul.f32 %v570, %v601
        %v611 = vmul.f32 %v571, %v601
        %v612 = vmul.f32 %v572, %v601
        %v613 = vmul.f32 %v573, %v601
        %v614 = vmul.f32 %v574, %v601
        %v615 = vmul.f32 %v575, %v601
        %v616 = vmul.f32 %v576, %v601
        %v617 = vmul.f32 %v577, %v601
        %v618 = vmul.f32 %v578, %v601
        %v619 = vmul.f32 %v579, %v601
        %v620 = vmul.f32 %v580, %v601
        %v621 = vmul.f32 %v581, %v601
        %v622 = vmul.f32 %v582, %v601
        %v623 = vmul.f32 %v583, %v601
        %v624 = vmul.f32 %v584, %v601
        %v625 = vmul.f32 %v585, %v601
        %v626 = vmul.f32 %v586, %v601
        %v627 = vmul.f32 %v587, %v601
        %v628 = vmul.f32 %v588, %v601
        %v629 = vmul.f32 %v589, %v601
        %v630 = vmul.f32 %v590, %v601
        %v631 = vmul.f32 %v591, %v601
        %v632 = vmul.f32 %v592, %v601
        %v633 = vmul.f32 %v593, %v601
        %v634 = vlaneseq
        %v635 = vshrl.u32 %v634, 7
        %v636 = vsub.s32 3, %v635
        %v637 = vrot.slane %v560, %v636
        %v638 = vmul.f32 %v564, %v637
        %v639 = vmul.f32 %v565, %v637
        %v640 = vmul.f32 %v566, %v637
        %v641 = vmul.f32 %v567, %v637
        %v642 = vmul.f32 %v568, %v637
        %v643 = vmul.f32 %v569, %v637
        %v644 = vmul.f32 %v570, %v637
        %v645 = vmul.f32 %v571, %v637
        %v646 = vmul.f32 %v572, %v637
        %v647 = vmul.f32 %v573, %v637
        %v648 = vmul.f32 %v574, %v637
        %v649 = vmul.f32 %v575, %v637
        %v650 = vmul.f32 %v576, %v637
        %v651 = vmul.f32 %v577, %v637
        %v652 = vmul.f32 %v578, %v637
        %v653 = vmul.f32 %v579, %v637
        %v654 = vmul.f32 %v580, %v637
        %v655 = vmul.f32 %v581, %v637
        %v656 = vmul.f32 %v582, %v637
        %v657 = vmul.f32 %v583, %v637
        %v658 = vmul.f32 %v584, %v637
        %v659 = vmul.f32 %v585, %v637
        %v660 = vmul.f32 %v586, %v637
        %v661 = vmul.f32 %v587, %v637
        %v662 = vmul.f32 %v588, %v637
        %v663 = vmul.f32 %v589, %v637
        %v664 = vmul.f32 %v590, %v637
        %v665 = vmul.f32 %v591, %v637
        %v666 = vmul.f32 %v592, %v637
        %v667 = vmul.f32 %v593, %v637
        %v668 = vmul.f32 %v594, %v637
        %v669 = vmul.f32 %v595, %v637
        %v670 = vadd.f32 %v602, %v638
        %v671 = vadd.f32 %v603, %v639
        %v672 = vadd.f32 %v604, %v640
        %v673 = vadd.f32 %v605, %v641
        %v674 = vadd.f32 %v606, %v642
        %v675 = vadd.f32 %v607, %v643
        %v676 = vadd.f32 %v608, %v644
        %v677 = vadd.f32 %v609, %v645
        %v678 = vadd.f32 %v610, %v646
        %v679 = vadd.f32 %v611, %v647
        %v680 = vadd.f32 %v612, %v648
        %v681 = vadd.f32 %v613, %v649
        %v682 = vadd.f32 %v614, %v650
        %v683 = vadd.f32 %v615, %v651
        %v684 = vadd.f32 %v616, %v652
        %v685 = vadd.f32 %v617, %v653
        %v686 = vadd.f32 %v618, %v654
        %v687 = vadd.f32 %v619, %v655
        %v688 = vadd.f32 %v620, %v656
        %v689 = vadd.f32 %v621, %v657
        %v690 = vadd.f32 %v622, %v658
        %v691 = vadd.f32 %v623, %v659
        %v692 = vadd.f32 %v624, %v660
        %v693 = vadd.f32 %v625, %v661
        %v694 = vadd.f32 %v626, %v662
        %v695 = vadd.f32 %v627, %v663
        %v696 = vadd.f32 %v628, %v664
        %v697 = vadd.f32 %v629, %v665
        %v698 = vadd.f32 %v630, %v666
        %v699 = vadd.f32 %v631, %v667
        %v700 = vadd.f32 %v632, %v668
        %v701 = vadd.f32 %v633, %v669
        %v702 = vlaneseq
        %v703 = vshrl.u32 %v702, 7
        %v704 = vsub.s32 6, %v703
        %v705 = vrot.slane %v560, %v704
        %v706 = vmul.f32 %v566, %v705
        %v707 = vmul.f32 %v567, %v705
        %v708 = vmul.f32 %v568, %v705
        %v709 = vmul.f32 %v569, %v705
        %v710 = vmul.f32 %v570, %v705
        %v711 = vmul.f32 %v571, %v705
        %v712 = vmul.f32 %v572, %v705
        %v713 = vmul.f32 %v573, %v705
        %v714 = vmul.f32 %v574, %v705
        %v715 = vmul.f32 %v575, %v705
        %v716 = vmul.f32 %v576, %v705
        %v717 = vmul.f32 %v577, %v705
        %v718 = vmul.f32 %v578, %v705
        %v719 = vmul.f32 %v579, %v705
        %v720 = vmul.f32 %v580, %v705
        %v721 = vmul.f32 %v581, %v705
        %v722 = vmul.f32 %v582, %v705
        %v723 = vmul.f32 %v583, %v705
        %v724 = vmul.f32 %v584, %v705
        %v725 = vmul.f32 %v585, %v705
        %v726 = vmul.f32 %v586, %v705
        %v727 = vmul.f32 %v587, %v705
        %v728 = vmul.f32 %v588, %v705
        %v729 = vmul.f32 %v589, %v705
        %v730 = vmul.f32 %v590, %v705
        %v731 = vmul.f32 %v591, %v705
        %v732 = vmul.f32 %v592, %v705
        %v733 = vmul.f32 %v593, %v705
        %v734 = vmul.f32 %v594, %v705
        %v735 = vmul.f32 %v595, %v705
        %v736 = vmul.f32 %v596, %v705
        %v737 = vmul.f32 %v597, %v705
        %v738 = vadd.f32 %v670, %v706
        %v739 = vadd.f32 %v671, %v707
        %v740 = vadd.f32 %v672, %v708
        %v741 = vadd.f32 %v673, %v709
        %v742 = vadd.f32 %v674, %v710
        %v743 = vadd.f32 %v675, %v711
        %v744 = vadd.f32 %v676, %v712
        %v745 = vadd.f32 %v677, %v713
        %v746 = vadd.f32 %v678, %v714
        %v747 = vadd.f32 %v679, %v715
        %v748 = vadd.f32 %v680, %v716
        %v749 = vadd.f32 %v681, %v717
        %v750 = vadd.f32 %v682, %v718
        %v751 = vadd.f32 %v683, %v719
        %v752 = vadd.f32 %v684, %v720
        %v753 = vadd.f32 %v685, %v721
        %v754 = vadd.f32 %v686, %v722
        %v755 = vadd.f32 %v687, %v723
        %v756 = vadd.f32 %v688, %v724
        %v757 = vadd.f32 %v689, %v725
        %v758 = vadd.f32 %v690, %v726
        %v759 = vadd.f32 %v691, %v727
        %v760 = vadd.f32 %v692, %v728
        %v761 = vadd.f32 %v693, %v729
        %v762 = vadd.f32 %v694, %v730
        %v763 = vadd.f32 %v695, %v731
        %v764 = vadd.f32 %v696, %v732
        %v765 = vadd.f32 %v697, %v733
        %v766 = vadd.f32 %v698, %v734
        %v767 = vadd.f32 %v699, %v735
        %v768 = vadd.f32 %v700, %v736
        %v769 = vadd.f32 %v701, %v737
        %v770 = vld [vmem:[#allocation2 + $0x1] sm:$0xff]
        %v771 = vld [vmem:[#allocation2 + $0x9] sm:$0xff]
        %v772 = vld [vmem:[#allocation2 + $0x19] sm:$0xff]
        %v773 = vld [vmem:[#allocation2 + $0x21] sm:$0xff]
        %v774 = vld [vmem:[#allocation2 + $0x31] sm:$0xff]
        %v775 = vld [vmem:[#allocation2 + $0x39] sm:$0xff]
        %v776 = vld [vmem:[#allocation2 + $0x49] sm:$0xff]
        %v777 = vld [vmem:[#allocation2 + $0x51] sm:$0xff]
        %v778 = vld [vmem:[#allocation2 + $0x61] sm:$0xff]
        %v779 = vld [vmem:[#allocation2 + $0x69] sm:$0xff]
        %v780 = vld [vmem:[#allocation2 + $0x79] sm:$0xff]
        %v781 = vld [vmem:[#allocation2 + $0x81] sm:$0xff]
        %v782 = vld [vmem:[#allocation2 + $0x91] sm:$0xff]
        %v783 = vld [vmem:[#allocation2 + $0x99] sm:$0xff]
        %v784 = vld [vmem:[#allocation2 + $0xa9] sm:$0xff]
        %v785 = vld [vmem:[#allocation2 + $0xb1] sm:$0xff]
        %v786 = vld [vmem:[#allocation2 + $0xc1] sm:$0xff]
        %v787 = vld [vmem:[#allocation2 + $0xc9] sm:$0xff]
        %v788 = vld [vmem:[#allocation2 + $0xd9] sm:$0xff]
        %v789 = vld [vmem:[#allocation2 + $0xe1] sm:$0xff]
        %v790 = vld [vmem:[#allocation2 + $0xf1] sm:$0xff]
        %v791 = vld [vmem:[#allocation2 + $0xf9] sm:$0xff]
        %v792 = vld [vmem:[#allocation2 + $0x109] sm:$0xff]
        %v793 = vld [vmem:[#allocation2 + $0x111] sm:$0xff]
        %v794 = vld [vmem:[#allocation2 + $0x121] sm:$0xff]
        %v795 = vld [vmem:[#allocation2 + $0x129] sm:$0xff]
        %v796 = vld [vmem:[#allocation2 + $0x139] sm:$0xff]
        %v797 = vld [vmem:[#allocation2 + $0x141] sm:$0xff]
        %v798 = vld [vmem:[#allocation2 + $0x151] sm:$0xff]
        %v799 = vld [vmem:[#allocation2 + $0x159] sm:$0xff]
        %v800 = vld [vmem:[#allocation2 + $0x169] sm:$0xff]
        %v801 = vld [vmem:[#allocation2 + $0x171] sm:$0xff]
        %v802 = vld [vmem:[#allocation2 + $0x181] sm:$0xff]
        %v803 = vld [vmem:[#allocation2 + $0x189] sm:$0xff]
        %v804 = vld [vmem:[#allocation2 + $0x199] sm:$0xff]
        %v805 = vld [vmem:[#allocation2 + $0x1a1] sm:$0xff]
        %v806 = vlaneseq
        %v807 = vshrl.u32 %v806, 7
        %v808 = vsub.s32 1, %v807
        %v809 = vrot.slane %v560, %v808
        %v810 = vmul.f32 %v770, %v809
        %v811 = vmul.f32 %v771, %v809
        %v812 = vmul.f32 %v772, %v809
        %v813 = vmul.f32 %v773, %v809
        %v814 = vmul.f32 %v774, %v809
        %v815 = vmul.f32 %v775, %v809
        %v816 = vmul.f32 %v776, %v809
        %v817 = vmul.f32 %v777, %v809
        %v818 = vmul.f32 %v778, %v809
        %v819 = vmul.f32 %v779, %v809
        %v820 = vmul.f32 %v780, %v809
        %v821 = vmul.f32 %v781, %v809
        %v822 = vmul.f32 %v782, %v809
        %v823 = vmul.f32 %v783, %v809
        %v824 = vmul.f32 %v784, %v809
        %v825 = vmul.f32 %v785, %v809
        %v826 = vmul.f32 %v786, %v809
        %v827 = vmul.f32 %v787, %v809
        %v828 = vmul.f32 %v788, %v809
        %v829 = vmul.f32 %v789, %v809
        %v830 = vmul.f32 %v790, %v809
        %v831 = vmul.f32 %v791, %v809
        %v832 = vmul.f32 %v792, %v809
        %v833 = vmul.f32 %v793, %v809
        %v834 = vmul.f32 %v794, %v809
        %v835 = vmul.f32 %v795, %v809
        %v836 = vmul.f32 %v796, %v809
        %v837 = vmul.f32 %v797, %v809
        %v838 = vmul.f32 %v798, %v809
        %v839 = vmul.f32 %v799, %v809
        %v840 = vmul.f32 %v800, %v809
        %v841 = vmul.f32 %v801, %v809
        %v842 = vadd.f32 %v738, %v810
        %v843 = vadd.f32 %v739, %v811
        %v844 = vadd.f32 %v740, %v812
        %v845 = vadd.f32 %v741, %v813
        %v846 = vadd.f32 %v742, %v814
        %v847 = vadd.f32 %v743, %v815
        %v848 = vadd.f32 %v744, %v816
        %v849 = vadd.f32 %v745, %v817
        %v850 = vadd.f32 %v746, %v818
        %v851 = vadd.f32 %v747, %v819
        %v852 = vadd.f32 %v748, %v820
        %v853 = vadd.f32 %v749, %v821
        %v854 = vadd.f32 %v750, %v822
        %v855 = vadd.f32 %v751, %v823
        %v856 = vadd.f32 %v752, %v824
        %v857 = vadd.f32 %v753, %v825
        %v858 = vadd.f32 %v754, %v826
        %v859 = vadd.f32 %v755, %v827
        %v860 = vadd.f32 %v756, %v828
        %v861 = vadd.f32 %v757, %v829
        %v862 = vadd.f32 %v758, %v830
        %v863 = vadd.f32 %v759, %v831
        %v864 = vadd.f32 %v760, %v832
        %v865 = vadd.f32 %v761, %v833
        %v866 = vadd.f32 %v762, %v834
        %v867 = vadd.f32 %v763, %v835
        %v868 = vadd.f32 %v764, %v836
        %v869 = vadd.f32 %v765, %v837
        %v870 = vadd.f32 %v766, %v838
        %v871 = vadd.f32 %v767, %v839
        %v872 = vadd.f32 %v768, %v840
        %v873 = vadd.f32 %v769, %v841
        %v874 = vlaneseq
        %v875 = vshrl.u32 %v874, 7
        %v876 = vsub.s32 4, %v875
        %v877 = vrot.slane %v560, %v876
        %v878 = vmul.f32 %v772, %v877
        %v879 = vmul.f32 %v773, %v877
        %v880 = vmul.f32 %v774, %v877
        %v881 = vmul.f32 %v775, %v877
        %v882 = vmul.f32 %v776, %v877
        %v883 = vmul.f32 %v777, %v877
        %v884 = vmul.f32 %v778, %v877
        %v885 = vmul.f32 %v779, %v877
        %v886 = vmul.f32 %v780, %v877
        %v887 = vmul.f32 %v781, %v877
        %v888 = vmul.f32 %v782, %v877
        %v889 = vmul.f32 %v783, %v877
        %v890 = vmul.f32 %v784, %v877
        %v891 = vmul.f32 %v785, %v877
        %v892 = vmul.f32 %v786, %v877
        %v893 = vmul.f32 %v787, %v877
        %v894 = vmul.f32 %v788, %v877
        %v895 = vmul.f32 %v789, %v877
        %v896 = vmul.f32 %v790, %v877
        %v897 = vmul.f32 %v791, %v877
        %v898 = vmul.f32 %v792, %v877
        %v899 = vmul.f32 %v793, %v877
        %v900 = vmul.f32 %v794, %v877
        %v901 = vmul.f32 %v795, %v877
        %v902 = vmul.f32 %v796, %v877
        %v903 = vmul.f32 %v797, %v877
        %v904 = vmul.f32 %v798, %v877
        %v905 = vmul.f32 %v799, %v877
        %v906 = vmul.f32 %v800, %v877
        %v907 = vmul.f32 %v801, %v877
        %v908 = vmul.f32 %v802, %v877
        %v909 = vmul.f32 %v803, %v877
        %v910 = vadd.f32 %v842, %v878
        %v911 = vadd.f32 %v843, %v879
        %v912 = vadd.f32 %v844, %v880
        %v913 = vadd.f32 %v845, %v881
        %v914 = vadd.f32 %v846, %v882
        %v915 = vadd.f32 %v847, %v883
        %v916 = vadd.f32 %v848, %v884
        %v917 = vadd.f32 %v849, %v885
        %v918 = vadd.f32 %v850, %v886
        %v919 = vadd.f32 %v851, %v887
        %v920 = vadd.f32 %v852, %v888
        %v921 = vadd.f32 %v853, %v889
        %v922 = vadd.f32 %v854, %v890
        %v923 = vadd.f32 %v855, %v891
        %v924 = vadd.f32 %v856, %v892
        %v925 = vadd.f32 %v857, %v893
        %v926 = vadd.f32 %v858, %v894
        %v927 = vadd.f32 %v859, %v895
        %v928 = vadd.f32 %v860, %v896
        %v929 = vadd.f32 %v861, %v897
        %v930 = vadd.f32 %v862, %v898
        %v931 = vadd.f32 %v863, %v899
        %v932 = vadd.f32 %v864, %v900
        %v933 = vadd.f32 %v865, %v901
        %v934 = vadd.f32 %v866, %v902
        %v935 = vadd.f32 %v867, %v903
        %v936 = vadd.f32 %v868, %v904
        %v937 = vadd.f32 %v869, %v905
        %v938 = vadd.f32 %v870, %v906
        %v939 = vadd.f32 %v871, %v907
        %v940 = vadd.f32 %v872, %v908
        %v941 = vadd.f32 %v873, %v909
        %v942 = vlaneseq
        %v943 = vshrl.u32 %v942, 7
        %v944 = vsub.s32 7, %v943
        %v945 = vrot.slane %v560, %v944
        %v946 = vmul.f32 %v774, %v945
        %v947 = vmul.f32 %v775, %v945
        %v948 = vmul.f32 %v776, %v945
        %v949 = vmul.f32 %v777, %v945
        %v950 = vmul.f32 %v778, %v945
        %v951 = vmul.f32 %v779, %v945
        %v952 = vmul.f32 %v780, %v945
        %v953 = vmul.f32 %v781, %v945
        %v954 = vmul.f32 %v782, %v945
        %v955 = vmul.f32 %v783, %v945
        %v956 = vmul.f32 %v784, %v945
        %v957 = vmul.f32 %v785, %v945
        %v958 = vmul.f32 %v786, %v945
        %v959 = vmul.f32 %v787, %v945
        %v960 = vmul.f32 %v788, %v945
        %v961 = vmul.f32 %v789, %v945
        %v962 = vmul.f32 %v790, %v945
        %v963 = vmul.f32 %v791, %v945
        %v964 = vmul.f32 %v792, %v945
        %v965 = vmul.f32 %v793, %v945
        %v966 = vmul.f32 %v794, %v945
        %v967 = vmul.f32 %v795, %v945
        %v968 = vmul.f32 %v796, %v945
        %v969 = vmul.f32 %v797, %v945
        %v970 = vmul.f32 %v798, %v945
        %v971 = vmul.f32 %v799, %v945
        %v972 = vmul.f32 %v800, %v945
        %v973 = vmul.f32 %v801, %v945
        %v974 = vmul.f32 %v802, %v945
        %v975 = vmul.f32 %v803, %v945
        %v976 = vmul.f32 %v804, %v945
        %v977 = vmul.f32 %v805, %v945
        %v978 = vadd.f32 %v910, %v946
        %v979 = vadd.f32 %v911, %v947
        %v980 = vadd.f32 %v912, %v948
        %v981 = vadd.f32 %v913, %v949
        %v982 = vadd.f32 %v914, %v950
        %v983 = vadd.f32 %v915, %v951
        %v984 = vadd.f32 %v916, %v952
        %v985 = vadd.f32 %v917, %v953
        %v986 = vadd.f32 %v918, %v954
        %v987 = vadd.f32 %v919, %v955
        %v988 = vadd.f32 %v920, %v956
        %v989 = vadd.f32 %v921, %v957
        %v990 = vadd.f32 %v922, %v958
        %v991 = vadd.f32 %v923, %v959
        %v992 = vadd.f32 %v924, %v960
        %v993 = vadd.f32 %v925, %v961
        %v994 = vadd.f32 %v926, %v962
        %v995 = vadd.f32 %v927, %v963
        %v996 = vadd.f32 %v928, %v964
        %v997 = vadd.f32 %v929, %v965
        %v998 = vadd.f32 %v930, %v966
        %v999 = vadd.f32 %v931, %v967
        %v1000 = vadd.f32 %v932, %v968
        %v1001 = vadd.f32 %v933, %v969
        %v1002 = vadd.f32 %v934, %v970
        %v1003 = vadd.f32 %v935, %v971
        %v1004 = vadd.f32 %v936, %v972
        %v1005 = vadd.f32 %v937, %v973
        %v1006 = vadd.f32 %v938, %v974
        %v1007 = vadd.f32 %v939, %v975
        %v1008 = vadd.f32 %v940, %v976
        %v1009 = vadd.f32 %v941, %v977
        %v1010 = vld [vmem:[#allocation2 + $0x2] sm:$0xff]
        %v1011 = vld [vmem:[#allocation2 + $0xa] sm:$0xff]
        %v1012 = vld [vmem:[#allocation2 + $0x1a] sm:$0xff]
        %v1013 = vld [vmem:[#allocation2 + $0x22] sm:$0xff]
        %v1014 = vld [vmem:[#allocation2 + $0x32] sm:$0xff]
        %v1015 = vld [vmem:[#allocation2 + $0x3a] sm:$0xff]
        %v1016 = vld [vmem:[#allocation2 + $0x4a] sm:$0xff]
        %v1017 = vld [vmem:[#allocation2 + $0x52] sm:$0xff]
        %v1018 = vld [vmem:[#allocation2 + $0x62] sm:$0xff]
        %v1019 = vld [vmem:[#allocation2 + $0x6a] sm:$0xff]
        %v1020 = vld [vmem:[#allocation2 + $0x7a] sm:$0xff]
        %v1021 = vld [vmem:[#allocation2 + $0x82] sm:$0xff]
        %v1022 = vld [vmem:[#allocation2 + $0x92] sm:$0xff]
        %v1023 = vld [vmem:[#allocation2 + $0x9a] sm:$0xff]
        %v1024 = vld [vmem:[#allocation2 + $0xaa] sm:$0xff]
        %v1025 = vld [vmem:[#allocation2 + $0xb2] sm:$0xff]
        %v1026 = vld [vmem:[#allocation2 + $0xc2] sm:$0xff]
        %v1027 = vld [vmem:[#allocation2 + $0xca] sm:$0xff]
        %v1028 = vld [vmem:[#allocation2 + $0xda] sm:$0xff]
        %v1029 = vld [vmem:[#allocation2 + $0xe2] sm:$0xff]
        %v1030 = vld [vmem:[#allocation2 + $0xf2] sm:$0xff]
        %v1031 = vld [vmem:[#allocation2 + $0xfa] sm:$0xff]
        %v1032 = vld [vmem:[#allocation2 + $0x10a] sm:$0xff]
        %v1033 = vld [vmem:[#allocation2 + $0x112] sm:$0xff]
        %v1034 = vld [vmem:[#allocation2 + $0x122] sm:$0xff]
        %v1035 = vld [vmem:[#allocation2 + $0x12a] sm:$0xff]
        %v1036 = vld [vmem:[#allocation2 + $0x13a] sm:$0xff]
        %v1037 = vld [vmem:[#allocation2 + $0x142] sm:$0xff]
        %v1038 = vld [vmem:[#allocation2 + $0x152] sm:$0xff]
        %v1039 = vld [vmem:[#allocation2 + $0x15a] sm:$0xff]
        %v1040 = vld [vmem:[#allocation2 + $0x16a] sm:$0xff]
        %v1041 = vld [vmem:[#allocation2 + $0x172] sm:$0xff]
        %v1042 = vld [vmem:[#allocation2 + $0x182] sm:$0xff]
        %v1043 = vld [vmem:[#allocation2 + $0x18a] sm:$0xff]
        %v1044 = vld [vmem:[#allocation2 + $0x19a] sm:$0xff]
        %v1045 = vld [vmem:[#allocation2 + $0x1a2] sm:$0xff]
        %v1046 = vlaneseq
        %v1047 = vshrl.u32 %v1046, 7
        %v1048 = vsub.s32 2, %v1047
        %v1049 = vrot.slane %v560, %v1048
        %v1050 = vmul.f32 %v1010, %v1049
        %v1051 = vmul.f32 %v1011, %v1049
        %v1052 = vmul.f32 %v1012, %v1049
        %v1053 = vmul.f32 %v1013, %v1049
        %v1054 = vmul.f32 %v1014, %v1049
        %v1055 = vmul.f32 %v1015, %v1049
        %v1056 = vmul.f32 %v1016, %v1049
        %v1057 = vmul.f32 %v1017, %v1049
        %v1058 = vmul.f32 %v1018, %v1049
        %v1059 = vmul.f32 %v1019, %v1049
        %v1060 = vmul.f32 %v1020, %v1049
        %v1061 = vmul.f32 %v1021, %v1049
        %v1062 = vmul.f32 %v1022, %v1049
        %v1063 = vmul.f32 %v1023, %v1049
        %v1064 = vmul.f32 %v1024, %v1049
        %v1065 = vmul.f32 %v1025, %v1049
        %v1066 = vmul.f32 %v1026, %v1049
        %v1067 = vmul.f32 %v1027, %v1049
        %v1068 = vmul.f32 %v1028, %v1049
        %v1069 = vmul.f32 %v1029, %v1049
        %v1070 = vmul.f32 %v1030, %v1049
        %v1071 = vmul.f32 %v1031, %v1049
        %v1072 = vmul.f32 %v1032, %v1049
        %v1073 = vmul.f32 %v1033, %v1049
        %v1074 = vmul.f32 %v1034, %v1049
        %v1075 = vmul.f32 %v1035, %v1049
        %v1076 = vmul.f32 %v1036, %v1049
        %v1077 = vmul.f32 %v1037, %v1049
        %v1078 = vmul.f32 %v1038, %v1049
        %v1079 = vmul.f32 %v1039, %v1049
        %v1080 = vmul.f32 %v1040, %v1049
        %v1081 = vmul.f32 %v1041, %v1049
        %v1082 = vadd.f32 %v978, %v1050
        %v1083 = vadd.f32 %v979, %v1051
        %v1084 = vadd.f32 %v980, %v1052
        %v1085 = vadd.f32 %v981, %v1053
        %v1086 = vadd.f32 %v982, %v1054
        %v1087 = vadd.f32 %v983, %v1055
        %v1088 = vadd.f32 %v984, %v1056
        %v1089 = vadd.f32 %v985, %v1057
        %v1090 = vadd.f32 %v986, %v1058
        %v1091 = vadd.f32 %v987, %v1059
        %v1092 = vadd.f32 %v988, %v1060
        %v1093 = vadd.f32 %v989, %v1061
        %v1094 = vadd.f32 %v990, %v1062
        %v1095 = vadd.f32 %v991, %v1063
        %v1096 = vadd.f32 %v992, %v1064
        %v1097 = vadd.f32 %v993, %v1065
        %v1098 = vadd.f32 %v994, %v1066
        %v1099 = vadd.f32 %v995, %v1067
        %v1100 = vadd.f32 %v996, %v1068
        %v1101 = vadd.f32 %v997, %v1069
        %v1102 = vadd.f32 %v998, %v1070
        %v1103 = vadd.f32 %v999, %v1071
        %v1104 = vadd.f32 %v1000, %v1072
        %v1105 = vadd.f32 %v1001, %v1073
        %v1106 = vadd.f32 %v1002, %v1074
        %v1107 = vadd.f32 %v1003, %v1075
        %v1108 = vadd.f32 %v1004, %v1076
        %v1109 = vadd.f32 %v1005, %v1077
        %v1110 = vadd.f32 %v1006, %v1078
        %v1111 = vadd.f32 %v1007, %v1079
        %v1112 = vadd.f32 %v1008, %v1080
        %v1113 = vadd.f32 %v1009, %v1081
        %v1114 = vlaneseq
        %v1115 = vshrl.u32 %v1114, 7
        %v1116 = vsub.s32 5, %v1115
        %v1117 = vrot.slane %v560, %v1116
        %v1118 = vmul.f32 %v1012, %v1117
        %v1119 = vmul.f32 %v1013, %v1117
        %v1120 = vmul.f32 %v1014, %v1117
        %v1121 = vmul.f32 %v1015, %v1117
        %v1122 = vmul.f32 %v1016, %v1117
        %v1123 = vmul.f32 %v1017, %v1117
        %v1124 = vmul.f32 %v1018, %v1117
        %v1125 = vmul.f32 %v1019, %v1117
        %v1126 = vmul.f32 %v1020, %v1117
        %v1127 = vmul.f32 %v1021, %v1117
        %v1128 = vmul.f32 %v1022, %v1117
        %v1129 = vmul.f32 %v1023, %v1117
        %v1130 = vmul.f32 %v1024, %v1117
        %v1131 = vmul.f32 %v1025, %v1117
        %v1132 = vmul.f32 %v1026, %v1117
        %v1133 = vmul.f32 %v1027, %v1117
        %v1134 = vmul.f32 %v1028, %v1117
        %v1135 = vmul.f32 %v1029, %v1117
        %v1136 = vmul.f32 %v1030, %v1117
        %v1137 = vmul.f32 %v1031, %v1117
        %v1138 = vmul.f32 %v1032, %v1117
        %v1139 = vmul.f32 %v1033, %v1117
        %v1140 = vmul.f32 %v1034, %v1117
        %v1141 = vmul.f32 %v1035, %v1117
        %v1142 = vmul.f32 %v1036, %v1117
        %v1143 = vmul.f32 %v1037, %v1117
        %v1144 = vmul.f32 %v1038, %v1117
        %v1145 = vmul.f32 %v1039, %v1117
        %v1146 = vmul.f32 %v1040, %v1117
        %v1147 = vmul.f32 %v1041, %v1117
        %v1148 = vmul.f32 %v1042, %v1117
        %v1149 = vmul.f32 %v1043, %v1117
        %v1150 = vadd.f32 %v1082, %v1118
        %v1151 = vadd.f32 %v1083, %v1119
        %v1152 = vadd.f32 %v1084, %v1120
        %v1153 = vadd.f32 %v1085, %v1121
        %v1154 = vadd.f32 %v1086, %v1122
        %v1155 = vadd.f32 %v1087, %v1123
        %v1156 = vadd.f32 %v1088, %v1124
        %v1157 = vadd.f32 %v1089, %v1125
        %v1158 = vadd.f32 %v1090, %v1126
        %v1159 = vadd.f32 %v1091, %v1127
        %v1160 = vadd.f32 %v1092, %v1128
        %v1161 = vadd.f32 %v1093, %v1129
        %v1162 = vadd.f32 %v1094, %v1130
        %v1163 = vadd.f32 %v1095, %v1131
        %v1164 = vadd.f32 %v1096, %v1132
        %v1165 = vadd.f32 %v1097, %v1133
        %v1166 = vadd.f32 %v1098, %v1134
        %v1167 = vadd.f32 %v1099, %v1135
        %v1168 = vadd.f32 %v1100, %v1136
        %v1169 = vadd.f32 %v1101, %v1137
        %v1170 = vadd.f32 %v1102, %v1138
        %v1171 = vadd.f32 %v1103, %v1139
        %v1172 = vadd.f32 %v1104, %v1140
        %v1173 = vadd.f32 %v1105, %v1141
        %v1174 = vadd.f32 %v1106, %v1142
        %v1175 = vadd.f32 %v1107, %v1143
        %v1176 = vadd.f32 %v1108, %v1144
        %v1177 = vadd.f32 %v1109, %v1145
        %v1178 = vadd.f32 %v1110, %v1146
        %v1179 = vadd.f32 %v1111, %v1147
        %v1180 = vadd.f32 %v1112, %v1148
        %v1181 = vadd.f32 %v1113, %v1149
        %v1182 = vlaneseq
        %v1183 = vshrl.u32 %v1182, 7
        %v1184 = vsub.s32 0, %v1183
        %v1185 = vrot.slane %v561, %v1184
        %v1186 = vmul.f32 %v1014, %v1185
        %v1187 = vmul.f32 %v1015, %v1185
        %v1188 = vmul.f32 %v1016, %v1185
        %v1189 = vmul.f32 %v1017, %v1185
        %v1190 = vmul.f32 %v1018, %v1185
        %v1191 = vmul.f32 %v1019, %v1185
        %v1192 = vmul.f32 %v1020, %v1185
        %v1193 = vmul.f32 %v1021, %v1185
        %v1194 = vmul.f32 %v1022, %v1185
        %v1195 = vmul.f32 %v1023, %v1185
        %v1196 = vmul.f32 %v1024, %v1185
        %v1197 = vmul.f32 %v1025, %v1185
        %v1198 = vmul.f32 %v1026, %v1185
        %v1199 = vmul.f32 %v1027, %v1185
        %v1200 = vmul.f32 %v1028, %v1185
        %v1201 = vmul.f32 %v1029, %v1185
        %v1202 = vmul.f32 %v1030, %v1185
        %v1203 = vmul.f32 %v1031, %v1185
        %v1204 = vmul.f32 %v1032, %v1185
        %v1205 = vmul.f32 %v1033, %v1185
        %v1206 = vmul.f32 %v1034, %v1185
        %v1207 = vmul.f32 %v1035, %v1185
        %v1208 = vmul.f32 %v1036, %v1185
        %v1209 = vmul.f32 %v1037, %v1185
        %v1210 = vmul.f32 %v1038, %v1185
        %v1211 = vmul.f32 %v1039, %v1185
        %v1212 = vmul.f32 %v1040, %v1185
        %v1213 = vmul.f32 %v1041, %v1185
        %v1214 = vmul.f32 %v1042, %v1185
        %v1215 = vmul.f32 %v1043, %v1185
        %v1216 = vmul.f32 %v1044, %v1185
        %v1217 = vmul.f32 %v1045, %v1185
        %v1218 = vadd.f32 %v1150, %v1186
        %v1219 = vadd.f32 %v1151, %v1187
        %v1220 = vadd.f32 %v1152, %v1188
        %v1221 = vadd.f32 %v1153, %v1189
        %v1222 = vadd.f32 %v1154, %v1190
        %v1223 = vadd.f32 %v1155, %v1191
        %v1224 = vadd.f32 %v1156, %v1192
        %v1225 = vadd.f32 %v1157, %v1193
        %v1226 = vadd.f32 %v1158, %v1194
        %v1227 = vadd.f32 %v1159, %v1195
        %v1228 = vadd.f32 %v1160, %v1196
        %v1229 = vadd.f32 %v1161, %v1197
        %v1230 = vadd.f32 %v1162, %v1198
        %v1231 = vadd.f32 %v1163, %v1199
        %v1232 = vadd.f32 %v1164, %v1200
        %v1233 = vadd.f32 %v1165, %v1201
        %v1234 = vadd.f32 %v1166, %v1202
        %v1235 = vadd.f32 %v1167, %v1203
        %v1236 = vadd.f32 %v1168, %v1204
        %v1237 = vadd.f32 %v1169, %v1205
        %v1238 = vadd.f32 %v1170, %v1206
        %v1239 = vadd.f32 %v1171, %v1207
        %v1240 = vadd.f32 %v1172, %v1208
        %v1241 = vadd.f32 %v1173, %v1209
        %v1242 = vadd.f32 %v1174, %v1210
        %v1243 = vadd.f32 %v1175, %v1211
        %v1244 = vadd.f32 %v1176, %v1212
        %v1245 = vadd.f32 %v1177, %v1213
        %v1246 = vadd.f32 %v1178, %v1214
        %v1247 = vadd.f32 %v1179, %v1215
        %v1248 = vadd.f32 %v1180, %v1216
        %v1249 = vadd.f32 %v1181, %v1217
        %v1250 = vld [vmem:[%s2] sm:$0xff]
        %v1251 = vld [vmem:[%s2 + $0x8] sm:$0xff]
        %v1252 = vld [vmem:[%s2 + $0x10] sm:$0xff]
        %v1253 = vld [vmem:[%s2 + $0x18] sm:$0xff]
        %v1254 = vld [vmem:[%s3] sm:$0x1]
        %v1256 = vlaneseq
        %v1257 = vshrl.u32 %v1256, 7
        %v1258 = vsub.s32 0, %v1257
        %v1259 = vrot.slane %v1254, %v1258
        %v1262 = vsel %vm439, %v1218, 0
        %v1265 = vsel %vm439, %v1219, 0
        %v1268 = vsel %vm439, %v1220, 0
        %v1271 = vsel %vm439, %v1221, 0
        %v1274 = vsel %vm439, %v1222, 0
        %v1277 = vsel %vm439, %v1223, 0
        %v1280 = vsel %vm439, %v1224, 0
        %v1283 = vsel %vm439, %v1225, 0
        %v1286 = vsel %vm439, %v1226, 0
        %v1289 = vsel %vm439, %v1227, 0
        %v1292 = vsel %vm439, %v1228, 0
        %v1295 = vsel %vm439, %v1229, 0
        %v1298 = vsel %vm439, %v1230, 0
        %v1301 = vsel %vm439, %v1231, 0
        %v1304 = vsel %vm439, %v1232, 0
        %v1307 = vsel %vm439, %v1233, 0
        %v1310 = vsel %vm439, %v1234, 0
        %v1313 = vsel %vm439, %v1235, 0
        %v1316 = vsel %vm439, %v1236, 0
        %v1319 = vsel %vm439, %v1237, 0
        %v1322 = vsel %vm439, %v1238, 0
        %v1325 = vsel %vm439, %v1239, 0
        %v1328 = vsel %vm439, %v1240, 0
        %v1331 = vsel %vm439, %v1241, 0
        %v1334 = vsel %vm439, %v1242, 0
        %v1337 = vsel %vm439, %v1243, 0
        %v1340 = vsel %vm439, %v1244, 0
        %v1343 = vsel %vm439, %v1245, 0
        %v1346 = vsel %vm439, %v1246, 0
        %v1349 = vsel %vm439, %v1247, 0
        %v1352 = vsel %vm439, %v1248, 0
        %v1355 = vsel %vm439, %v1249, 0
        %1357 = vmatprep.subr.mxu0 0.0
        %1358 = vmatpush1.msra.mxu0 %v1250
        %1359 = vmatprep.subr.mxu0 0.0
        %1360 = vmatpush1.msra.mxu0 %v1251
        %1361 = vmatprep.subr.mxu0 0.0
        %1362 = vmatpush1.msra.mxu0 %v1252
        %1363 = vmatprep.subr.mxu0 0.0
        %1364 = vmatpush1.msra.mxu0 %v1253
        %1365 = vmatprep.subr.mxu0 0.0
        %1366 = vmatpush1.msra.mxu0 0.0
        %1367 = vmatprep.subr.mxu0 0.0
        %1368 = vmatpush1.msra.mxu0 0.0
        %1369 = vmatprep.subr.mxu0 0.0
        %1370 = vmatpush1.msra.mxu0 0.0
        %1371 = vmatprep.subr.mxu0 0.0
        %1372 = vmatpush1.msra.mxu0 0.0
        %1373 = vmatprep.subr.mxu0 0.0
        %1374 = vmatpush1.msra.mxu0 0.0
        %1375 = vmatprep.subr.mxu0 0.0
        %1376 = vmatpush1.msra.mxu0 0.0
        %1377 = vmatprep.subr.mxu0 0.0
        %1378 = vmatpush1.msra.mxu0 0.0
        %1379 = vmatprep.subr.mxu0 0.0
        %1380 = vmatpush1.msra.mxu0 0.0
        %1381 = vmatprep.subr.mxu0 0.0
        %1382 = vmatpush1.msra.mxu0 0.0
        %1383 = vmatprep.subr.mxu0 0.0
        %1384 = vmatpush1.msra.mxu0 0.0
        %1385 = vmatprep.subr.mxu0 0.0
        %1386 = vmatpush1.msra.mxu0 0.0
        %1387 = vmatprep.subr.mxu0 0.0
        %1388 = vmatpush1.msra.mxu0 0.0
        %1389 = vmatprep.subr.mxu0 0.0
        %1390 = vmatpush1.msra.mxu0 0.0
        %1391 = vmatprep.subr.mxu0 0.0
        %1392 = vmatpush1.msra.mxu0 0.0
        %1393 = vmatprep.subr.mxu0 0.0
        %1394 = vmatpush1.msra.mxu0 0.0
        %1395 = vmatprep.subr.mxu0 0.0
        %1396 = vmatpush1.msra.mxu0 0.0
        %1397 = vmatprep.subr.mxu0 0.0
        %1398 = vmatpush1.msra.mxu0 0.0
        %1399 = vmatprep.subr.mxu0 0.0
        %1400 = vmatpush1.msra.mxu0 0.0
        %1401 = vmatprep.subr.mxu0 0.0
        %1402 = vmatpush1.msra.mxu0 0.0
        %1403 = vmatprep.subr.mxu0 0.0
        %1404 = vmatpush1.msra.mxu0 0.0
        %1405 = vmatprep.subr.mxu0 0.0
        %1406 = vmatpush1.msra.mxu0 0.0
        %1407 = vmatprep.subr.mxu0 0.0
        %1408 = vmatpush1.msra.mxu0 0.0
        %1409 = vmatprep.subr.mxu0 0.0
        %1410 = vmatpush1.msra.mxu0 0.0
        %1411 = vmatprep.subr.mxu0 0.0
        %1412 = vmatpush1.msra.mxu0 0.0
        %1413 = vmatprep.subr.mxu0 0.0
        %1414 = vmatpush1.msra.mxu0 0.0
        %1415 = vmatprep.subr.mxu0 0.0
        %1416 = vmatpush1.msra.mxu0 0.0
        %1417 = vmatprep.subr.mxu0 0.0
        %1418 = vmatpush1.msra.mxu0 0.0
        %1419 = vmatprep.subr.mxu0 0.0
        %1420 = vmatpush1.msra.mxu0 0.0
        %1421 = vmatprep.mubr.f32.mxu0 0.0
        %1422 = vmatmul.mubr.f32.gmra.mrb[0].mxu0 %v1262
        %v1423 = vpop.f32.mrb[0].mxu0
        %v1424 = vadd.f32 %v1259, %v1423
        %v1425 = vpop.f32.mrb[0].mxu0
        %1426 = vmatprep.mubr.f32.mxu0 0.0
        %1427 = vmatmul.mubr.f32.gmra.mrb[0].mxu0 %v1265
        %v1428 = vpop.f32.mrb[0].mxu0
        %v1429 = vadd.f32 %v1259, %v1428
        %v1430 = vpop.f32.mrb[0].mxu0
        %1431 = vmatprep.mubr.f32.mxu0 0.0
        %1432 = vmatmul.mubr.f32.gmra.mrb[0].mxu0 %v1268
        %v1433 = vpop.f32.mrb[0].mxu0
        %v1434 = vadd.f32 %v1259, %v1433
        %v1435 = vpop.f32.mrb[0].mxu0
        %1436 = vmatprep.mubr.f32.mxu0 0.0
        %1437 = vmatmul.mubr.f32.gmra.mrb[0].mxu0 %v1271
        %v1438 = vpop.f32.mrb[0].mxu0
        %v1439 = vadd.f32 %v1259, %v1438
        %v1440 = vpop.f32.mrb[0].mxu0
        %1441 = vmatprep.mubr.f32.mxu0 0.0
        %1442 = vmatmul.mubr.f32.gmra.mrb[0].mxu0 %v1274
        %v1443 = vpop.f32.mrb[0].mxu0
        %v1444 = vadd.f32 %v1259, %v1443
        %v1445 = vpop.f32.mrb[0].mxu0
        %1446 = vmatprep.mubr.f32.mxu0 0.0
        %1447 = vmatmul.mubr.f32.gmra.mrb[0].mxu0 %v1277
        %v1448 = vpop.f32.mrb[0].mxu0
        %v1449 = vadd.f32 %v1259, %v1448
        %v1450 = vpop.f32.mrb[0].mxu0
        %1451 = vmatprep.mubr.f32.mxu0 0.0
        %1452 = vmatmul.mubr.f32.gmra.mrb[0].mxu0 %v1280
        %v1453 = vpop.f32.mrb[0].mxu0
        %v1454 = vadd.f32 %v1259, %v1453
        %v1455 = vpop.f32.mrb[0].mxu0
        %1456 = vmatprep.mubr.f32.mxu0 0.0
        %1457 = vmatmul.mubr.f32.gmra.mrb[0].mxu0 %v1283
        %v1458 = vpop.f32.mrb[0].mxu0
        %v1459 = vadd.f32 %v1259, %v1458
        %v1460 = vpop.f32.mrb[0].mxu0
        %1461 = vmatprep.mubr.f32.mxu0 0.0
        %1462 = vmatmul.mubr.f32.gmra.mrb[0].mxu0 %v1286
        %v1463 = vpop.f32.mrb[0].mxu0
        %v1464 = vadd.f32 %v1259, %v1463
        %v1465 = vpop.f32.mrb[0].mxu0
        %1466 = vmatprep.mubr.f32.mxu0 0.0
        %1467 = vmatmul.mubr.f32.gmra.mrb[0].mxu0 %v1289
        %v1468 = vpop.f32.mrb[0].mxu0
        %v1469 = vadd.f32 %v1259, %v1468
        %v1470 = vpop.f32.mrb[0].mxu0
        %1471 = vmatprep.mubr.f32.mxu0 0.0
        %1472 = vmatmul.mubr.f32.gmra.mrb[0].mxu0 %v1292
        %v1473 = vpop.f32.mrb[0].mxu0
        %v1474 = vadd.f32 %v1259, %v1473
        %v1475 = vpop.f32.mrb[0].mxu0
        %1476 = vmatprep.mubr.f32.mxu0 0.0
        %1477 = vmatmul.mubr.f32.gmra.mrb[0].mxu0 %v1295
        %v1478 = vpop.f32.mrb[0].mxu0
        %v1479 = vadd.f32 %v1259, %v1478
        %v1480 = vpop.f32.mrb[0].mxu0
        %1481 = vmatprep.mubr.f32.mxu0 0.0
        %1482 = vmatmul.mubr.f32.gmra.mrb[0].mxu0 %v1298
        %v1483 = vpop.f32.mrb[0].mxu0
        %v1484 = vadd.f32 %v1259, %v1483
        %v1485 = vpop.f32.mrb[0].mxu0
        %1486 = vmatprep.mubr.f32.mxu0 0.0
        %1487 = vmatmul.mubr.f32.gmra.mrb[0].mxu0 %v1301
        %v1488 = vpop.f32.mrb[0].mxu0
        %v1489 = vadd.f32 %v1259, %v1488
        %v1490 = vpop.f32.mrb[0].mxu0
        %1491 = vmatprep.mubr.f32.mxu0 0.0
        %1492 = vmatmul.mubr.f32.gmra.mrb[0].mxu0 %v1304
        %v1493 = vpop.f32.mrb[0].mxu0
        %v1494 = vadd.f32 %v1259, %v1493
        %v1495 = vpop.f32.mrb[0].mxu0
        %1496 = vmatprep.mubr.f32.mxu0 0.0
        %1497 = vmatmul.mubr.f32.gmra.mrb[0].mxu0 %v1307
        %v1498 = vpop.f32.mrb[0].mxu0
        %v1499 = vadd.f32 %v1259, %v1498
        %v1500 = vpop.f32.mrb[0].mxu0
        %1501 = vmatprep.mubr.f32.mxu0 0.0
        %1502 = vmatmul.mubr.f32.gmra.mrb[0].mxu0 %v1310
        %v1503 = vpop.f32.mrb[0].mxu0
        %v1504 = vadd.f32 %v1259, %v1503
        %v1505 = vpop.f32.mrb[0].mxu0
        %1506 = vmatprep.mubr.f32.mxu0 0.0
        %1507 = vmatmul.mubr.f32.gmra.mrb[0].mxu0 %v1313
        %v1508 = vpop.f32.mrb[0].mxu0
        %v1509 = vadd.f32 %v1259, %v1508
        %v1510 = vpop.f32.mrb[0].mxu0
        %1511 = vmatprep.mubr.f32.mxu0 0.0
        %1512 = vmatmul.mubr.f32.gmra.mrb[0].mxu0 %v1316
        %v1513 = vpop.f32.mrb[0].mxu0
        %v1514 = vadd.f32 %v1259, %v1513
        %v1515 = vpop.f32.mrb[0].mxu0
        %1516 = vmatprep.mubr.f32.mxu0 0.0
        %1517 = vmatmul.mubr.f32.gmra.mrb[0].mxu0 %v1319
        %v1518 = vpop.f32.mrb[0].mxu0
        %v1519 = vadd.f32 %v1259, %v1518
        %v1520 = vpop.f32.mrb[0].mxu0
        %1521 = vmatprep.mubr.f32.mxu0 0.0
        %1522 = vmatmul.mubr.f32.gmra.mrb[0].mxu0 %v1322
        %v1523 = vpop.f32.mrb[0].mxu0
        %v1524 = vadd.f32 %v1259, %v1523
        %v1525 = vpop.f32.mrb[0].mxu0
        %1526 = vmatprep.mubr.f32.mxu0 0.0
        %1527 = vmatmul.mubr.f32.gmra.mrb[0].mxu0 %v1325
        %v1528 = vpop.f32.mrb[0].mxu0
        %v1529 = vadd.f32 %v1259, %v1528
        %v1530 = vpop.f32.mrb[0].mxu0
        %1531 = vmatprep.mubr.f32.mxu0 0.0
        %1532 = vmatmul.mubr.f32.gmra.mrb[0].mxu0 %v1328
        %v1533 = vpop.f32.mrb[0].mxu0
        %v1534 = vadd.f32 %v1259, %v1533
        %v1535 = vpop.f32.mrb[0].mxu0
        %1536 = vmatprep.mubr.f32.mxu0 0.0
        %1537 = vmatmul.mubr.f32.gmra.mrb[0].mxu0 %v1331
        %v1538 = vpop.f32.mrb[0].mxu0
        %v1539 = vadd.f32 %v1259, %v1538
        %v1540 = vpop.f32.mrb[0].mxu0
        %1541 = vmatprep.mubr.f32.mxu0 0.0
        %1542 = vmatmul.mubr.f32.gmra.mrb[0].mxu0 %v1334
        %v1543 = vpop.f32.mrb[0].mxu0
        %v1544 = vadd.f32 %v1259, %v1543
        %v1545 = vpop.f32.mrb[0].mxu0
        %1546 = vmatprep.mubr.f32.mxu0 0.0
        %1547 = vmatmul.mubr.f32.gmra.mrb[0].mxu0 %v1337
        %v1548 = vpop.f32.mrb[0].mxu0
        %v1549 = vadd.f32 %v1259, %v1548
        %v1550 = vpop.f32.mrb[0].mxu0
        %1551 = vmatprep.mubr.f32.mxu0 0.0
        %1552 = vmatmul.mubr.f32.gmra.mrb[0].mxu0 %v1340
        %v1553 = vpop.f32.mrb[0].mxu0
        %v1554 = vadd.f32 %v1259, %v1553
        %v1555 = vpop.f32.mrb[0].mxu0
        %1556 = vmatprep.mubr.f32.mxu0 0.0
        %1557 = vmatmul.mubr.f32.gmra.mrb[0].mxu0 %v1343
        %v1558 = vpop.f32.mrb[0].mxu0
        %v1559 = vadd.f32 %v1259, %v1558
        %v1560 = vpop.f32.mrb[0].mxu0
        %1561 = vmatprep.mubr.f32.mxu0 0.0
        %1562 = vmatmul.mubr.f32.gmra.mrb[0].mxu0 %v1346
        %v1563 = vpop.f32.mrb[0].mxu0
        %v1564 = vadd.f32 %v1259, %v1563
        %v1565 = vpop.f32.mrb[0].mxu0
        %1566 = vmatprep.mubr.f32.mxu0 0.0
        %1567 = vmatmul.mubr.f32.gmra.mrb[0].mxu0 %v1349
        %v1568 = vpop.f32.mrb[0].mxu0
        %v1569 = vadd.f32 %v1259, %v1568
        %v1570 = vpop.f32.mrb[0].mxu0
        %1571 = vmatprep.mubr.f32.mxu0 0.0
        %1572 = vmatmul.mubr.f32.gmra.mrb[0].mxu0 %v1352
        %v1573 = vpop.f32.mrb[0].mxu0
        %v1574 = vadd.f32 %v1259, %v1573
        %v1575 = vpop.f32.mrb[0].mxu0
        %1576 = vmatprep.mubr.f32.mxu0 0.0
        %1577 = vmatmul.mubr.f32.gmra.mrb[0].mxu0 %v1355
        %v1578 = vpop.f32.mrb[0].mxu0
        %v1579 = vadd.f32 %v1259, %v1578
        %v1580 = vpop.f32.mrb[0].mxu0
        %1581 = vdwg.mxu0
        %v1582 = vmax.f32 %v1424, 0.0
        %v1583 = vmax.f32 %v1429, 0.0
        %v1584 = vmax.f32 %v1434, 0.0
        %v1585 = vmax.f32 %v1439, 0.0
        %v1586 = vmax.f32 %v1444, 0.0
        %v1587 = vmax.f32 %v1449, 0.0
        %v1588 = vmax.f32 %v1454, 0.0
        %v1589 = vmax.f32 %v1459, 0.0
        %v1590 = vmax.f32 %v1464, 0.0
        %v1591 = vmax.f32 %v1469, 0.0
        %v1592 = vmax.f32 %v1474, 0.0
        %v1593 = vmax.f32 %v1479, 0.0
        %v1594 = vmax.f32 %v1484, 0.0
        %v1595 = vmax.f32 %v1489, 0.0
        %v1596 = vmax.f32 %v1494, 0.0
        %v1597 = vmax.f32 %v1499, 0.0
        %v1598 = vmax.f32 %v1504, 0.0
        %v1599 = vmax.f32 %v1509, 0.0
        %v1600 = vmax.f32 %v1514, 0.0
        %v1601 = vmax.f32 %v1519, 0.0
        %v1602 = vmax.f32 %v1524, 0.0
        %v1603 = vmax.f32 %v1529, 0.0
        %v1604 = vmax.f32 %v1534, 0.0
        %v1605 = vmax.f32 %v1539, 0.0
        %v1606 = vmax.f32 %v1544, 0.0
        %v1607 = vmax.f32 %v1549, 0.0
        %v1608 = vmax.f32 %v1554, 0.0
        %v1609 = vmax.f32 %v1559, 0.0
        %v1610 = vmax.f32 %v1564, 0.0
        %v1611 = vmax.f32 %v1569, 0.0
        %v1612 = vmax.f32 %v1574, 0.0
        %v1613 = vmax.f32 %v1579, 0.0
        %1614 = vst [vmem:[#allocation3] sm:$0xff] 0.0
        %1615 = vst [vmem:[#allocation3 + $0x8] sm:$0xff] 0.0
        %1616 = vst [vmem:[#allocation3 + $0x10] sm:$0x3] 0.0
        %1617 = vst [vmem:[#allocation3 + $0x18] sm:$0xff] 0.0
        %1618 = vst [vmem:[#allocation3 + $0x20] sm:$0xff] 0.0
        %1619 = vst [vmem:[#allocation3 + $0x28] sm:$0x3] 0.0
        %1620 = vst [vmem:[#allocation3 + $0x30] sm:$0xff] 0.0
        %1621 = vst [vmem:[#allocation3 + $0x38] sm:$0xff] 0.0
        %1622 = vst [vmem:[#allocation3 + $0x40] sm:$0x3] 0.0
        %1623 = vst [vmem:[#allocation3 + $0x48] sm:$0xff] 0.0
        %1624 = vst [vmem:[#allocation3 + $0x50] sm:$0xff] 0.0
        %1625 = vst [vmem:[#allocation3 + $0x58] sm:$0x3] 0.0
        %1626 = vst [vmem:[#allocation3 + $0x60] sm:$0xff] 0.0
        %1627 = vst [vmem:[#allocation3 + $0x68] sm:$0xff] 0.0
        %1628 = vst [vmem:[#allocation3 + $0x70] sm:$0x3] 0.0
        %1629 = vst [vmem:[#allocation3 + $0x78] sm:$0xff] 0.0
        %1630 = vst [vmem:[#allocation3 + $0x80] sm:$0xff] 0.0
        %1631 = vst [vmem:[#allocation3 + $0x88] sm:$0x3] 0.0
        %1632 = vst [vmem:[#allocation3 + $0x90] sm:$0xff] 0.0
        %1633 = vst [vmem:[#allocation3 + $0x98] sm:$0xff] 0.0
        %1634 = vst [vmem:[#allocation3 + $0xa0] sm:$0x3] 0.0
        %1635 = vst [vmem:[#allocation3 + $0xa8] sm:$0xff] 0.0
        %1636 = vst [vmem:[#allocation3 + $0xb0] sm:$0xff] 0.0
        %1637 = vst [vmem:[#allocation3 + $0xb8] sm:$0x3] 0.0
        %1638 = vst [vmem:[#allocation3 + $0xc0] sm:$0xff] 0.0
        %1639 = vst [vmem:[#allocation3 + $0xc8] sm:$0xff] 0.0
        %1640 = vst [vmem:[#allocation3 + $0xd0] sm:$0x3] 0.0
        %1641 = vst [vmem:[#allocation3 + $0xd8] sm:$0xff] 0.0
        %1642 = vst [vmem:[#allocation3 + $0xe0] sm:$0xff] 0.0
        %1643 = vst [vmem:[#allocation3 + $0xe8] sm:$0x3] 0.0
        %1644 = vst [vmem:[#allocation3 + $0xf0] sm:$0xff] 0.0
        %1645 = vst [vmem:[#allocation3 + $0xf8] sm:$0xff] 0.0
        %1646 = vst [vmem:[#allocation3 + $0x100] sm:$0x3] 0.0
        %1647 = vst [vmem:[#allocation3 + $0x108] sm:$0xff] 0.0
        %1648 = vst [vmem:[#allocation3 + $0x110] sm:$0xff] 0.0
        %1649 = vst [vmem:[#allocation3 + $0x118] sm:$0x3] 0.0
        %1650 = vst [vmem:[#allocation3 + $0x120] sm:$0xff] 0.0
        %1651 = vst [vmem:[#allocation3 + $0x128] sm:$0xff] 0.0
        %1652 = vst [vmem:[#allocation3 + $0x130] sm:$0x3] 0.0
        %1653 = vst [vmem:[#allocation3 + $0x138] sm:$0xff] 0.0
        %1654 = vst [vmem:[#allocation3 + $0x140] sm:$0xff] 0.0
        %1655 = vst [vmem:[#allocation3 + $0x148] sm:$0x3] 0.0
        %1656 = vst [vmem:[#allocation3 + $0x150] sm:$0xff] 0.0
        %1657 = vst [vmem:[#allocation3 + $0x158] sm:$0xff] 0.0
        %1658 = vst [vmem:[#allocation3 + $0x160] sm:$0x3] 0.0
        %1659 = vst [vmem:[#allocation3 + $0x168] sm:$0xff] 0.0
        %1660 = vst [vmem:[#allocation3 + $0x170] sm:$0xff] 0.0
        %1661 = vst [vmem:[#allocation3 + $0x178] sm:$0x3] 0.0
        %1662 = vst [vmem:[#allocation3 + $0x180] sm:$0xff] 0.0
        %1663 = vst [vmem:[#allocation3 + $0x188] sm:$0xff] 0.0
        %1664 = vst [vmem:[#allocation3 + $0x190] sm:$0x3] 0.0
        %1665 = vst [vmem:[#allocation3 + $0x198] sm:$0xff] 0.0
        %1666 = vst [vmem:[#allocation3 + $0x1a0] sm:$0xff] 0.0
        %1667 = vst [vmem:[#allocation3 + $0x1a8] sm:$0x3] 0.0
        %s1668 = scalar_lea.vmem [#allocation3], 24
        %1669 = vst [vmem:[%s1668 + $0x1] sm:$0xff] %v1582
        %1670 = vst [vmem:[%s1668 + $0x9] sm:$0xff] %v1583
        %1671 = vst [vmem:[%s1668 + $0x19] sm:$0xff] %v1584
        %1672 = vst [vmem:[%s1668 + $0x21] sm:$0xff] %v1585
        %1673 = vst [vmem:[%s1668 + $0x31] sm:$0xff] %v1586
        %1674 = vst [vmem:[%s1668 + $0x39] sm:$0xff] %v1587
        %1675 = vst [vmem:[%s1668 + $0x49] sm:$0xff] %v1588
        %1676 = vst [vmem:[%s1668 + $0x51] sm:$0xff] %v1589
        %1677 = vst [vmem:[%s1668 + $0x61] sm:$0xff] %v1590
        %1678 = vst [vmem:[%s1668 + $0x69] sm:$0xff] %v1591
        %1679 = vst [vmem:[%s1668 + $0x79] sm:$0xff] %v1592
        %1680 = vst [vmem:[%s1668 + $0x81] sm:$0xff] %v1593
        %1681 = vst [vmem:[%s1668 + $0x91] sm:$0xff] %v1594
        %1682 = vst [vmem:[%s1668 + $0x99] sm:$0xff] %v1595
        %1683 = vst [vmem:[%s1668 + $0xa9] sm:$0xff] %v1596
        %1684 = vst [vmem:[%s1668 + $0xb1] sm:$0xff] %v1597
        %1685 = vst [vmem:[%s1668 + $0xc1] sm:$0xff] %v1598
        %1686 = vst [vmem:[%s1668 + $0xc9] sm:$0xff] %v1599
        %1687 = vst [vmem:[%s1668 + $0xd9] sm:$0xff] %v1600
        %1688 = vst [vmem:[%s1668 + $0xe1] sm:$0xff] %v1601
        %1689 = vst [vmem:[%s1668 + $0xf1] sm:$0xff] %v1602
        %1690 = vst [vmem:[%s1668 + $0xf9] sm:$0xff] %v1603
        %1691 = vst [vmem:[%s1668 + $0x109] sm:$0xff] %v1604
        %1692 = vst [vmem:[%s1668 + $0x111] sm:$0xff] %v1605
        %1693 = vst [vmem:[%s1668 + $0x121] sm:$0xff] %v1606
        %1694 = vst [vmem:[%s1668 + $0x129] sm:$0xff] %v1607
        %1695 = vst [vmem:[%s1668 + $0x139] sm:$0xff] %v1608
        %1696 = vst [vmem:[%s1668 + $0x141] sm:$0xff] %v1609
        %1697 = vst [vmem:[%s1668 + $0x151] sm:$0xff] %v1610
        %1698 = vst [vmem:[%s1668 + $0x159] sm:$0xff] %v1611
        %1699 = vst [vmem:[%s1668 + $0x169] sm:$0xff] %v1612
        %1700 = vst [vmem:[%s1668 + $0x171] sm:$0xff] %v1613
        %v1701 = vld [vmem:[%s4] sm:$0xff]
        %v1702 = vld [vmem:[%s4 + $0x8] sm:$0x1]
        %v1703 = vld [vmem:[#allocation3] sm:$0xff]
        %v1704 = vld [vmem:[#allocation3 + $0x8] sm:$0xff]
        %v1705 = vld [vmem:[#allocation3 + $0x18] sm:$0xff]
        %v1706 = vld [vmem:[#allocation3 + $0x20] sm:$0xff]
        %v1707 = vld [vmem:[#allocation3 + $0x30] sm:$0xff]
        %v1708 = vld [vmem:[#allocation3 + $0x38] sm:$0xff]
        %v1709 = vld [vmem:[#allocation3 + $0x48] sm:$0xff]
        %v1710 = vld [vmem:[#allocation3 + $0x50] sm:$0xff]
        %v1711 = vld [vmem:[#allocation3 + $0x60] sm:$0xff]
        %v1712 = vld [vmem:[#allocation3 + $0x68] sm:$0xff]
        %v1713 = vld [vmem:[#allocation3 + $0x78] sm:$0xff]
        %v1714 = vld [vmem:[#allocation3 + $0x80] sm:$0xff]
        %v1715 = vld [vmem:[#allocation3 + $0x90] sm:$0xff]
        %v1716 = vld [vmem:[#allocation3 + $0x98] sm:$0xff]
        %v1717 = vld [vmem:[#allocation3 + $0xa8] sm:$0xff]
        %v1718 = vld [vmem:[#allocation3 + $0xb0] sm:$0xff]
        %v1719 = vld [vmem:[#allocation3 + $0xc0] sm:$0xff]
        %v1720 = vld [vmem:[#allocation3 + $0xc8] sm:$0xff]
        %v1721 = vld [vmem:[#allocation3 + $0xd8] sm:$0xff]
        %v1722 = vld [vmem:[#allocation3 + $0xe0] sm:$0xff]
        %v1723 = vld [vmem:[#allocation3 + $0xf0] sm:$0xff]
        %v1724 = vld [vmem:[#allocation3 + $0xf8] sm:$0xff]
        %v1725 = vld [vmem:[#allocation3 + $0x108] sm:$0xff]
        %v1726 = vld [vmem:[#allocation3 + $0x110] sm:$0xff]
        %v1727 = vld [vmem:[#allocation3 + $0x120] sm:$0xff]
        %v1728 = vld [vmem:[#allocation3 + $0x128] sm:$0xff]
        %v1729 = vld [vmem:[#allocation3 + $0x138] sm:$0xff]
        %v1730 = vld [vmem:[#allocation3 + $0x140] sm:$0xff]
        %v1731 = vld [vmem:[#allocation3 + $0x150] sm:$0xff]
        %v1732 = vld [vmem:[#allocation3 + $0x158] sm:$0xff]
        %v1733 = vld [vmem:[#allocation3 + $0x168] sm:$0xff]
        %v1734 = vld [vmem:[#allocation3 + $0x170] sm:$0xff]
        %v1735 = vld [vmem:[#allocation3 + $0x180] sm:$0xff]
        %v1736 = vld [vmem:[#allocation3 + $0x188] sm:$0xff]
        %v1737 = vld [vmem:[#allocation3 + $0x198] sm:$0xff]
        %v1738 = vld [vmem:[#allocation3 + $0x1a0] sm:$0xff]
        %v1739 = vlaneseq
        %v1740 = vshrl.u32 %v1739, 7
        %v1741 = vsub.s32 0, %v1740
        %v1742 = vrot.slane %v1701, %v1741
        %v1743 = vmul.f32 %v1703, %v1742
        %v1744 = vmul.f32 %v1704, %v1742
        %v1745 = vmul.f32 %v1705, %v1742
        %v1746 = vmul.f32 %v1706, %v1742
        %v1747 = vmul.f32 %v1707, %v1742
        %v1748 = vmul.f32 %v1708, %v1742
        %v1749 = vmul.f32 %v1709, %v1742
        %v1750 = vmul.f32 %v1710, %v1742
        %v1751 = vmul.f32 %v1711, %v1742
        %v1752 = vmul.f32 %v1712, %v1742
        %v1753 = vmul.f32 %v1713, %v1742
        %v1754 = vmul.f32 %v1714, %v1742
        %v1755 = vmul.f32 %v1715, %v1742
        %v1756 = vmul.f32 %v1716, %v1742
        %v1757 = vmul.f32 %v1717, %v1742
        %v1758 = vmul.f32 %v1718, %v1742
        %v1759 = vmul.f32 %v1719, %v1742
        %v1760 = vmul.f32 %v1720, %v1742
        %v1761 = vmul.f32 %v1721, %v1742
        %v1762 = vmul.f32 %v1722, %v1742
        %v1763 = vmul.f32 %v1723, %v1742
        %v1764 = vmul.f32 %v1724, %v1742
        %v1765 = vmul.f32 %v1725, %v1742
        %v1766 = vmul.f32 %v1726, %v1742
        %v1767 = vmul.f32 %v1727, %v1742
        %v1768 = vmul.f32 %v1728, %v1742
        %v1769 = vmul.f32 %v1729, %v1742
        %v1770 = vmul.f32 %v1730, %v1742
        %v1771 = vmul.f32 %v1731, %v1742
        %v1772 = vmul.f32 %v1732, %v1742
        %v1773 = vmul.f32 %v1733, %v1742
        %v1774 = vmul.f32 %v1734, %v1742
        %v1775 = vlaneseq
        %v1776 = vshrl.u32 %v1775, 7
        %v1777 = vsub.s32 3, %v1776
        %v1778 = vrot.slane %v1701, %v1777
        %v1779 = vmul.f32 %v1705, %v1778
        %v1780 = vmul.f32 %v1706, %v1778
        %v1781 = vmul.f32 %v1707, %v1778
        %v1782 = vmul.f32 %v1708, %v1778
        %v1783 = vmul.f32 %v1709, %v1778
        %v1784 = vmul.f32 %v1710, %v1778
        %v1785 = vmul.f32 %v1711, %v1778
        %v1786 = vmul.f32 %v1712, %v1778
        %v1787 = vmul.f32 %v1713, %v1778
        %v1788 = vmul.f32 %v1714, %v1778
        %v1789 = vmul.f32 %v1715, %v1778
        %v1790 = vmul.f32 %v1716, %v1778
        %v1791 = vmul.f32 %v1717, %v1778
        %v1792 = vmul.f32 %v1718, %v1778
        %v1793 = vmul.f32 %v1719, %v1778
        %v1794 = vmul.f32 %v1720, %v1778
        %v1795 = vmul.f32 %v1721, %v1778
        %v1796 = vmul.f32 %v1722, %v1778
        %v1797 = vmul.f32 %v1723, %v1778
        %v1798 = vmul.f32 %v1724, %v1778
        %v1799 = vmul.f32 %v1725, %v1778
        %v1800 = vmul.f32 %v1726, %v1778
        %v1801 = vmul.f32 %v1727, %v1778
        %v1802 = vmul.f32 %v1728, %v1778
        %v1803 = vmul.f32 %v1729, %v1778
        %v1804 = vmul.f32 %v1730, %v1778
        %v1805 = vmul.f32 %v1731, %v1778
        %v1806 = vmul.f32 %v1732, %v1778
        %v1807 = vmul.f32 %v1733, %v1778
        %v1808 = vmul.f32 %v1734, %v1778
        %v1809 = vmul.f32 %v1735, %v1778
        %v1810 = vmul.f32 %v1736, %v1778
        %v1811 = vadd.f32 %v1743, %v1779
        %v1812 = vadd.f32 %v1744, %v1780
        %v1813 = vadd.f32 %v1745, %v1781
        %v1814 = vadd.f32 %v1746, %v1782
        %v1815 = vadd.f32 %v1747, %v1783
        %v1816 = vadd.f32 %v1748, %v1784
        %v1817 = vadd.f32 %v1749, %v1785
        %v1818 = vadd.f32 %v1750, %v1786
        %v1819 = vadd.f32 %v1751, %v1787
        %v1820 = vadd.f32 %v1752, %v1788
        %v1821 = vadd.f32 %v1753, %v1789
        %v1822 = vadd.f32 %v1754, %v1790
        %v1823 = vadd.f32 %v1755, %v1791
        %v1824 = vadd.f32 %v1756, %v1792
        %v1825 = vadd.f32 %v1757, %v1793
        %v1826 = vadd.f32 %v1758, %v1794
        %v1827 = vadd.f32 %v1759, %v1795
        %v1828 = vadd.f32 %v1760, %v1796
        %v1829 = vadd.f32 %v1761, %v1797
        %v1830 = vadd.f32 %v1762, %v1798
        %v1831 = vadd.f32 %v1763, %v1799
        %v1832 = vadd.f32 %v1764, %v1800
        %v1833 = vadd.f32 %v1765, %v1801
        %v1834 = vadd.f32 %v1766, %v1802
        %v1835 = vadd.f32 %v1767, %v1803
        %v1836 = vadd.f32 %v1768, %v1804
        %v1837 = vadd.f32 %v1769, %v1805
        %v1838 = vadd.f32 %v1770, %v1806
        %v1839 = vadd.f32 %v1771, %v1807
        %v1840 = vadd.f32 %v1772, %v1808
        %v1841 = vadd.f32 %v1773, %v1809
        %v1842 = vadd.f32 %v1774, %v1810
        %v1843 = vlaneseq
        %v1844 = vshrl.u32 %v1843, 7
        %v1845 = vsub.s32 6, %v1844
        %v1846 = vrot.slane %v1701, %v1845
        %v1847 = vmul.f32 %v1707, %v1846
        %v1848 = vmul.f32 %v1708, %v1846
        %v1849 = vmul.f32 %v1709, %v1846
        %v1850 = vmul.f32 %v1710, %v1846
        %v1851 = vmul.f32 %v1711, %v1846
        %v1852 = vmul.f32 %v1712, %v1846
        %v1853 = vmul.f32 %v1713, %v1846
        %v1854 = vmul.f32 %v1714, %v1846
        %v1855 = vmul.f32 %v1715, %v1846
        %v1856 = vmul.f32 %v1716, %v1846
        %v1857 = vmul.f32 %v1717, %v1846
        %v1858 = vmul.f32 %v1718, %v1846
        %v1859 = vmul.f32 %v1719, %v1846
        %v1860 = vmul.f32 %v1720, %v1846
        %v1861 = vmul.f32 %v1721, %v1846
        %v1862 = vmul.f32 %v1722, %v1846
        %v1863 = vmul.f32 %v1723, %v1846
        %v1864 = vmul.f32 %v1724, %v1846
        %v1865 = vmul.f32 %v1725, %v1846
        %v1866 = vmul.f32 %v1726, %v1846
        %v1867 = vmul.f32 %v1727, %v1846
        %v1868 = vmul.f32 %v1728, %v1846
        %v1869 = vmul.f32 %v1729, %v1846
        %v1870 = vmul.f32 %v1730, %v1846
        %v1871 = vmul.f32 %v1731, %v1846
        %v1872 = vmul.f32 %v1732, %v1846
        %v1873 = vmul.f32 %v1733, %v1846
        %v1874 = vmul.f32 %v1734, %v1846
        %v1875 = vmul.f32 %v1735, %v1846
        %v1876 = vmul.f32 %v1736, %v1846
        %v1877 = vmul.f32 %v1737, %v1846
        %v1878 = vmul.f32 %v1738, %v1846
        %v1879 = vadd.f32 %v1811, %v1847
        %v1880 = vadd.f32 %v1812, %v1848
        %v1881 = vadd.f32 %v1813, %v1849
        %v1882 = vadd.f32 %v1814, %v1850
        %v1883 = vadd.f32 %v1815, %v1851
        %v1884 = vadd.f32 %v1816, %v1852
        %v1885 = vadd.f32 %v1817, %v1853
        %v1886 = vadd.f32 %v1818, %v1854
        %v1887 = vadd.f32 %v1819, %v1855
        %v1888 = vadd.f32 %v1820, %v1856
        %v1889 = vadd.f32 %v1821, %v1857
        %v1890 = vadd.f32 %v1822, %v1858
        %v1891 = vadd.f32 %v1823, %v1859
        %v1892 = vadd.f32 %v1824, %v1860
        %v1893 = vadd.f32 %v1825, %v1861
        %v1894 = vadd.f32 %v1826, %v1862
        %v1895 = vadd.f32 %v1827, %v1863
        %v1896 = vadd.f32 %v1828, %v1864
        %v1897 = vadd.f32 %v1829, %v1865
        %v1898 = vadd.f32 %v1830, %v1866
        %v1899 = vadd.f32 %v1831, %v1867
        %v1900 = vadd.f32 %v1832, %v1868
        %v1901 = vadd.f32 %v1833, %v1869
        %v1902 = vadd.f32 %v1834, %v1870
        %v1903 = vadd.f32 %v1835, %v1871
        %v1904 = vadd.f32 %v1836, %v1872
        %v1905 = vadd.f32 %v1837, %v1873
        %v1906 = vadd.f32 %v1838, %v1874
        %v1907 = vadd.f32 %v1839, %v1875
        %v1908 = vadd.f32 %v1840, %v1876
        %v1909 = vadd.f32 %v1841, %v1877
        %v1910 = vadd.f32 %v1842, %v1878
        %v1911 = vld [vmem:[#allocation3 + $0x1] sm:$0xff]
        %v1912 = vld [vmem:[#allocation3 + $0x9] sm:$0xff]
        %v1913 = vld [vmem:[#allocation3 + $0x19] sm:$0xff]
        %v1914 = vld [vmem:[#allocation3 + $0x21] sm:$0xff]
        %v1915 = vld [vmem:[#allocation3 + $0x31] sm:$0xff]
        %v1916 = vld [vmem:[#allocation3 + $0x39] sm:$0xff]
        %v1917 = vld [vmem:[#allocation3 + $0x49] sm:$0xff]
        %v1918 = vld [vmem:[#allocation3 + $0x51] sm:$0xff]
        %v1919 = vld [vmem:[#allocation3 + $0x61] sm:$0xff]
        %v1920 = vld [vmem:[#allocation3 + $0x69] sm:$0xff]
        %v1921 = vld [vmem:[#allocation3 + $0x79] sm:$0xff]
        %v1922 = vld [vmem:[#allocation3 + $0x81] sm:$0xff]
        %v1923 = vld [vmem:[#allocation3 + $0x91] sm:$0xff]
        %v1924 = vld [vmem:[#allocation3 + $0x99] sm:$0xff]
        %v1925 = vld [vmem:[#allocation3 + $0xa9] sm:$0xff]
        %v1926 = vld [vmem:[#allocation3 + $0xb1] sm:$0xff]
        %v1927 = vld [vmem:[#allocation3 + $0xc1] sm:$0xff]
        %v1928 = vld [vmem:[#allocation3 + $0xc9] sm:$0xff]
        %v1929 = vld [vmem:[#allocation3 + $0xd9] sm:$0xff]
        %v1930 = vld [vmem:[#allocation3 + $0xe1] sm:$0xff]
        %v1931 = vld [vmem:[#allocation3 + $0xf1] sm:$0xff]
        %v1932 = vld [vmem:[#allocation3 + $0xf9] sm:$0xff]
        %v1933 = vld [vmem:[#allocation3 + $0x109] sm:$0xff]
        %v1934 = vld [vmem:[#allocation3 + $0x111] sm:$0xff]
        %v1935 = vld [vmem:[#allocation3 + $0x121] sm:$0xff]
        %v1936 = vld [vmem:[#allocation3 + $0x129] sm:$0xff]
        %v1937 = vld [vmem:[#allocation3 + $0x139] sm:$0xff]
        %v1938 = vld [vmem:[#allocation3 + $0x141] sm:$0xff]
        %v1939 = vld [vmem:[#allocation3 + $0x151] sm:$0xff]
        %v1940 = vld [vmem:[#allocation3 + $0x159] sm:$0xff]
        %v1941 = vld [vmem:[#allocation3 + $0x169] sm:$0xff]
        %v1942 = vld [vmem:[#allocation3 + $0x171] sm:$0xff]
        %v1943 = vld [vmem:[#allocation3 + $0x181] sm:$0xff]
        %v1944 = vld [vmem:[#allocation3 + $0x189] sm:$0xff]
        %v1945 = vld [vmem:[#allocation3 + $0x199] sm:$0xff]
        %v1946 = vld [vmem:[#allocation3 + $0x1a1] sm:$0xff]
        %v1947 = vlaneseq
        %v1948 = vshrl.u32 %v1947, 7
        %v1949 = vsub.s32 1, %v1948
        %v1950 = vrot.slane %v1701, %v1949
        %v1951 = vmul.f32 %v1911, %v1950
        %v1952 = vmul.f32 %v1912, %v1950
        %v1953 = vmul.f32 %v1913, %v1950
        %v1954 = vmul.f32 %v1914, %v1950
        %v1955 = vmul.f32 %v1915, %v1950
        %v1956 = vmul.f32 %v1916, %v1950
        %v1957 = vmul.f32 %v1917, %v1950
        %v1958 = vmul.f32 %v1918, %v1950
        %v1959 = vmul.f32 %v1919, %v1950
        %v1960 = vmul.f32 %v1920, %v1950
        %v1961 = vmul.f32 %v1921, %v1950
        %v1962 = vmul.f32 %v1922, %v1950
        %v1963 = vmul.f32 %v1923, %v1950
        %v1964 = vmul.f32 %v1924, %v1950
        %v1965 = vmul.f32 %v1925, %v1950
        %v1966 = vmul.f32 %v1926, %v1950
        %v1967 = vmul.f32 %v1927, %v1950
        %v1968 = vmul.f32 %v1928, %v1950
        %v1969 = vmul.f32 %v1929, %v1950
        %v1970 = vmul.f32 %v1930, %v1950
        %v1971 = vmul.f32 %v1931, %v1950
        %v1972 = vmul.f32 %v1932, %v1950
        %v1973 = vmul.f32 %v1933, %v1950
        %v1974 = vmul.f32 %v1934, %v1950
        %v1975 = vmul.f32 %v1935, %v1950
        %v1976 = vmul.f32 %v1936, %v1950
        %v1977 = vmul.f32 %v1937, %v1950
        %v1978 = vmul.f32 %v1938, %v1950
        %v1979 = vmul.f32 %v1939, %v1950
        %v1980 = vmul.f32 %v1940, %v1950
        %v1981 = vmul.f32 %v1941, %v1950
        %v1982 = vmul.f32 %v1942, %v1950
        %v1983 = vadd.f32 %v1879, %v1951
        %v1984 = vadd.f32 %v1880, %v1952
        %v1985 = vadd.f32 %v1881, %v1953
        %v1986 = vadd.f32 %v1882, %v1954
        %v1987 = vadd.f32 %v1883, %v1955
        %v1988 = vadd.f32 %v1884, %v1956
        %v1989 = vadd.f32 %v1885, %v1957
        %v1990 = vadd.f32 %v1886, %v1958
        %v1991 = vadd.f32 %v1887, %v1959
        %v1992 = vadd.f32 %v1888, %v1960
        %v1993 = vadd.f32 %v1889, %v1961
        %v1994 = vadd.f32 %v1890, %v1962
        %v1995 = vadd.f32 %v1891, %v1963
        %v1996 = vadd.f32 %v1892, %v1964
        %v1997 = vadd.f32 %v1893, %v1965
        %v1998 = vadd.f32 %v1894, %v1966
        %v1999 = vadd.f32 %v1895, %v1967
        %v2000 = vadd.f32 %v1896, %v1968
        %v2001 = vadd.f32 %v1897, %v1969
        %v2002 = vadd.f32 %v1898, %v1970
        %v2003 = vadd.f32 %v1899, %v1971
        %v2004 = vadd.f32 %v1900, %v1972
        %v2005 = vadd.f32 %v1901, %v1973
        %v2006 = vadd.f32 %v1902, %v1974
        %v2007 = vadd.f32 %v1903, %v1975
        %v2008 = vadd.f32 %v1904, %v1976
        %v2009 = vadd.f32 %v1905, %v1977
        %v2010 = vadd.f32 %v1906, %v1978
        %v2011 = vadd.f32 %v1907, %v1979
        %v2012 = vadd.f32 %v1908, %v1980
        %v2013 = vadd.f32 %v1909, %v1981
        %v2014 = vadd.f32 %v1910, %v1982
        %v2015 = vlaneseq
        %v2016 = vshrl.u32 %v2015, 7
        %v2017 = vsub.s32 4, %v2016
        %v2018 = vrot.slane %v1701, %v2017
        %v2019 = vmul.f32 %v1913, %v2018
        %v2020 = vmul.f32 %v1914, %v2018
        %v2021 = vmul.f32 %v1915, %v2018
        %v2022 = vmul.f32 %v1916, %v2018
        %v2023 = vmul.f32 %v1917, %v2018
        %v2024 = vmul.f32 %v1918, %v2018
        %v2025 = vmul.f32 %v1919, %v2018
        %v2026 = vmul.f32 %v1920, %v2018
        %v2027 = vmul.f32 %v1921, %v2018
        %v2028 = vmul.f32 %v1922, %v2018
        %v2029 = vmul.f32 %v1923, %v2018
        %v2030 = vmul.f32 %v1924, %v2018
        %v2031 = vmul.f32 %v1925, %v2018
        %v2032 = vmul.f32 %v1926, %v2018
        %v2033 = vmul.f32 %v1927, %v2018
        %v2034 = vmul.f32 %v1928, %v2018
        %v2035 = vmul.f32 %v1929, %v2018
        %v2036 = vmul.f32 %v1930, %v2018
        %v2037 = vmul.f32 %v1931, %v2018
        %v2038 = vmul.f32 %v1932, %v2018
        %v2039 = vmul.f32 %v1933, %v2018
        %v2040 = vmul.f32 %v1934, %v2018
        %v2041 = vmul.f32 %v1935, %v2018
        %v2042 = vmul.f32 %v1936, %v2018
        %v2043 = vmul.f32 %v1937, %v2018
        %v2044 = vmul.f32 %v1938, %v2018
        %v2045 = vmul.f32 %v1939, %v2018
        %v2046 = vmul.f32 %v1940, %v2018
        %v2047 = vmul.f32 %v1941, %v2018
        %v2048 = vmul.f32 %v1942, %v2018
        %v2049 = vmul.f32 %v1943, %v2018
        %v2050 = vmul.f32 %v1944, %v2018
        %v2051 = vadd.f32 %v1983, %v2019
        %v2052 = vadd.f32 %v1984, %v2020
        %v2053 = vadd.f32 %v1985, %v2021
        %v2054 = vadd.f32 %v1986, %v2022
        %v2055 = vadd.f32 %v1987, %v2023
        %v2056 = vadd.f32 %v1988, %v2024
        %v2057 = vadd.f32 %v1989, %v2025
        %v2058 = vadd.f32 %v1990, %v2026
        %v2059 = vadd.f32 %v1991, %v2027
        %v2060 = vadd.f32 %v1992, %v2028
        %v2061 = vadd.f32 %v1993, %v2029
        %v2062 = vadd.f32 %v1994, %v2030
        %v2063 = vadd.f32 %v1995, %v2031
        %v2064 = vadd.f32 %v1996, %v2032
        %v2065 = vadd.f32 %v1997, %v2033
        %v2066 = vadd.f32 %v1998, %v2034
        %v2067 = vadd.f32 %v1999, %v2035
        %v2068 = vadd.f32 %v2000, %v2036
        %v2069 = vadd.f32 %v2001, %v2037
        %v2070 = vadd.f32 %v2002, %v2038
        %v2071 = vadd.f32 %v2003, %v2039
        %v2072 = vadd.f32 %v2004, %v2040
        %v2073 = vadd.f32 %v2005, %v2041
        %v2074 = vadd.f32 %v2006, %v2042
        %v2075 = vadd.f32 %v2007, %v2043
        %v2076 = vadd.f32 %v2008, %v2044
        %v2077 = vadd.f32 %v2009, %v2045
        %v2078 = vadd.f32 %v2010, %v2046
        %v2079 = vadd.f32 %v2011, %v2047
        %v2080 = vadd.f32 %v2012, %v2048
        %v2081 = vadd.f32 %v2013, %v2049
        %v2082 = vadd.f32 %v2014, %v2050
        %v2083 = vlaneseq
        %v2084 = vshrl.u32 %v2083, 7
        %v2085 = vsub.s32 7, %v2084
        %v2086 = vrot.slane %v1701, %v2085
        %v2087 = vmul.f32 %v1915, %v2086
        %v2088 = vmul.f32 %v1916, %v2086
        %v2089 = vmul.f32 %v1917, %v2086
        %v2090 = vmul.f32 %v1918, %v2086
        %v2091 = vmul.f32 %v1919, %v2086
        %v2092 = vmul.f32 %v1920, %v2086
        %v2093 = vmul.f32 %v1921, %v2086
        %v2094 = vmul.f32 %v1922, %v2086
        %v2095 = vmul.f32 %v1923, %v2086
        %v2096 = vmul.f32 %v1924, %v2086
        %v2097 = vmul.f32 %v1925, %v2086
        %v2098 = vmul.f32 %v1926, %v2086
        %v2099 = vmul.f32 %v1927, %v2086
        %v2100 = vmul.f32 %v1928, %v2086
        %v2101 = vmul.f32 %v1929, %v2086
        %v2102 = vmul.f32 %v1930, %v2086
        %v2103 = vmul.f32 %v1931, %v2086
        %v2104 = vmul.f32 %v1932, %v2086
        %v2105 = vmul.f32 %v1933, %v2086
        %v2106 = vmul.f32 %v1934, %v2086
        %v2107 = vmul.f32 %v1935, %v2086
        %v2108 = vmul.f32 %v1936, %v2086
        %v2109 = vmul.f32 %v1937, %v2086
        %v2110 = vmul.f32 %v1938, %v2086
        %v2111 = vmul.f32 %v1939, %v2086
        %v2112 = vmul.f32 %v1940, %v2086
        %v2113 = vmul.f32 %v1941, %v2086
        %v2114 = vmul.f32 %v1942, %v2086
        %v2115 = vmul.f32 %v1943, %v2086
        %v2116 = vmul.f32 %v1944, %v2086
        %v2117 = vmul.f32 %v1945, %v2086
        %v2118 = vmul.f32 %v1946, %v2086
        %v2119 = vadd.f32 %v2051, %v2087
        %v2120 = vadd.f32 %v2052, %v2088
        %v2121 = vadd.f32 %v2053, %v2089
        %v2122 = vadd.f32 %v2054, %v2090
        %v2123 = vadd.f32 %v2055, %v2091
        %v2124 = vadd.f32 %v2056, %v2092
        %v2125 = vadd.f32 %v2057, %v2093
        %v2126 = vadd.f32 %v2058, %v2094
        %v2127 = vadd.f32 %v2059, %v2095
        %v2128 = vadd.f32 %v2060, %v2096
        %v2129 = vadd.f32 %v2061, %v2097
        %v2130 = vadd.f32 %v2062, %v2098
        %v2131 = vadd.f32 %v2063, %v2099
        %v2132 = vadd.f32 %v2064, %v2100
        %v2133 = vadd.f32 %v2065, %v2101
        %v2134 = vadd.f32 %v2066, %v2102
        %v2135 = vadd.f32 %v2067, %v2103
        %v2136 = vadd.f32 %v2068, %v2104
        %v2137 = vadd.f32 %v2069, %v2105
        %v2138 = vadd.f32 %v2070, %v2106
        %v2139 = vadd.f32 %v2071, %v2107
        %v2140 = vadd.f32 %v2072, %v2108
        %v2141 = vadd.f32 %v2073, %v2109
        %v2142 = vadd.f32 %v2074, %v2110
        %v2143 = vadd.f32 %v2075, %v2111
        %v2144 = vadd.f32 %v2076, %v2112
        %v2145 = vadd.f32 %v2077, %v2113
        %v2146 = vadd.f32 %v2078, %v2114
        %v2147 = vadd.f32 %v2079, %v2115
        %v2148 = vadd.f32 %v2080, %v2116
        %v2149 = vadd.f32 %v2081, %v2117
        %v2150 = vadd.f32 %v2082, %v2118
        %v2151 = vld [vmem:[#allocation3 + $0x2] sm:$0xff]
        %v2152 = vld [vmem:[#allocation3 + $0xa] sm:$0xff]
        %v2153 = vld [vmem:[#allocation3 + $0x1a] sm:$0xff]
        %v2154 = vld [vmem:[#allocation3 + $0x22] sm:$0xff]
        %v2155 = vld [vmem:[#allocation3 + $0x32] sm:$0xff]
        %v2156 = vld [vmem:[#allocation3 + $0x3a] sm:$0xff]
        %v2157 = vld [vmem:[#allocation3 + $0x4a] sm:$0xff]
        %v2158 = vld [vmem:[#allocation3 + $0x52] sm:$0xff]
        %v2159 = vld [vmem:[#allocation3 + $0x62] sm:$0xff]
        %v2160 = vld [vmem:[#allocation3 + $0x6a] sm:$0xff]
        %v2161 = vld [vmem:[#allocation3 + $0x7a] sm:$0xff]
        %v2162 = vld [vmem:[#allocation3 + $0x82] sm:$0xff]
        %v2163 = vld [vmem:[#allocation3 + $0x92] sm:$0xff]
        %v2164 = vld [vmem:[#allocation3 + $0x9a] sm:$0xff]
        %v2165 = vld [vmem:[#allocation3 + $0xaa] sm:$0xff]
        %v2166 = vld [vmem:[#allocation3 + $0xb2] sm:$0xff]
        %v2167 = vld [vmem:[#allocation3 + $0xc2] sm:$0xff]
        %v2168 = vld [vmem:[#allocation3 + $0xca] sm:$0xff]
        %v2169 = vld [vmem:[#allocation3 + $0xda] sm:$0xff]
        %v2170 = vld [vmem:[#allocation3 + $0xe2] sm:$0xff]
        %v2171 = vld [vmem:[#allocation3 + $0xf2] sm:$0xff]
        %v2172 = vld [vmem:[#allocation3 + $0xfa] sm:$0xff]
        %v2173 = vld [vmem:[#allocation3 + $0x10a] sm:$0xff]
        %v2174 = vld [vmem:[#allocation3 + $0x112] sm:$0xff]
        %v2175 = vld [vmem:[#allocation3 + $0x122] sm:$0xff]
        %v2176 = vld [vmem:[#allocation3 + $0x12a] sm:$0xff]
        %v2177 = vld [vmem:[#allocation3 + $0x13a] sm:$0xff]
        %v2178 = vld [vmem:[#allocation3 + $0x142] sm:$0xff]
        %v2179 = vld [vmem:[#allocation3 + $0x152] sm:$0xff]
        %v2180 = vld [vmem:[#allocation3 + $0x15a] sm:$0xff]
        %v2181 = vld [vmem:[#allocation3 + $0x16a] sm:$0xff]
        %v2182 = vld [vmem:[#allocation3 + $0x172] sm:$0xff]
        %v2183 = vld [vmem:[#allocation3 + $0x182] sm:$0xff]
        %v2184 = vld [vmem:[#allocation3 + $0x18a] sm:$0xff]
        %v2185 = vld [vmem:[#allocation3 + $0x19a] sm:$0xff]
        %v2186 = vld [vmem:[#allocation3 + $0x1a2] sm:$0xff]
        %v2187 = vlaneseq
        %v2188 = vshrl.u32 %v2187, 7
        %v2189 = vsub.s32 2, %v2188
        %v2190 = vrot.slane %v1701, %v2189
        %v2191 = vmul.f32 %v2151, %v2190
        %v2192 = vmul.f32 %v2152, %v2190
        %v2193 = vmul.f32 %v2153, %v2190
        %v2194 = vmul.f32 %v2154, %v2190
        %v2195 = vmul.f32 %v2155, %v2190
        %v2196 = vmul.f32 %v2156, %v2190
        %v2197 = vmul.f32 %v2157, %v2190
        %v2198 = vmul.f32 %v2158, %v2190
        %v2199 = vmul.f32 %v2159, %v2190
        %v2200 = vmul.f32 %v2160, %v2190
        %v2201 = vmul.f32 %v2161, %v2190
        %v2202 = vmul.f32 %v2162, %v2190
        %v2203 = vmul.f32 %v2163, %v2190
        %v2204 = vmul.f32 %v2164, %v2190
        %v2205 = vmul.f32 %v2165, %v2190
        %v2206 = vmul.f32 %v2166, %v2190
        %v2207 = vmul.f32 %v2167, %v2190
        %v2208 = vmul.f32 %v2168, %v2190
        %v2209 = vmul.f32 %v2169, %v2190
        %v2210 = vmul.f32 %v2170, %v2190
        %v2211 = vmul.f32 %v2171, %v2190
        %v2212 = vmul.f32 %v2172, %v2190
        %v2213 = vmul.f32 %v2173, %v2190
        %v2214 = vmul.f32 %v2174, %v2190
        %v2215 = vmul.f32 %v2175, %v2190
        %v2216 = vmul.f32 %v2176, %v2190
        %v2217 = vmul.f32 %v2177, %v2190
        %v2218 = vmul.f32 %v2178, %v2190
        %v2219 = vmul.f32 %v2179, %v2190
        %v2220 = vmul.f32 %v2180, %v2190
        %v2221 = vmul.f32 %v2181, %v2190
        %v2222 = vmul.f32 %v2182, %v2190
        %v2223 = vadd.f32 %v2119, %v2191
        %v2224 = vadd.f32 %v2120, %v2192
        %v2225 = vadd.f32 %v2121, %v2193
        %v2226 = vadd.f32 %v2122, %v2194
        %v2227 = vadd.f32 %v2123, %v2195
        %v2228 = vadd.f32 %v2124, %v2196
        %v2229 = vadd.f32 %v2125, %v2197
        %v2230 = vadd.f32 %v2126, %v2198
        %v2231 = vadd.f32 %v2127, %v2199
        %v2232 = vadd.f32 %v2128, %v2200
        %v2233 = vadd.f32 %v2129, %v2201
        %v2234 = vadd.f32 %v2130, %v2202
        %v2235 = vadd.f32 %v2131, %v2203
        %v2236 = vadd.f32 %v2132, %v2204
        %v2237 = vadd.f32 %v2133, %v2205
        %v2238 = vadd.f32 %v2134, %v2206
        %v2239 = vadd.f32 %v2135, %v2207
        %v2240 = vadd.f32 %v2136, %v2208
        %v2241 = vadd.f32 %v2137, %v2209
        %v2242 = vadd.f32 %v2138, %v2210
        %v2243 = vadd.f32 %v2139, %v2211
        %v2244 = vadd.f32 %v2140, %v2212
        %v2245 = vadd.f32 %v2141, %v2213
        %v2246 = vadd.f32 %v2142, %v2214
        %v2247 = vadd.f32 %v2143, %v2215
        %v2248 = vadd.f32 %v2144, %v2216
        %v2249 = vadd.f32 %v2145, %v2217
        %v2250 = vadd.f32 %v2146, %v2218
        %v2251 = vadd.f32 %v2147, %v2219
        %v2252 = vadd.f32 %v2148, %v2220
        %v2253 = vadd.f32 %v2149, %v2221
        %v2254 = vadd.f32 %v2150, %v2222
        %v2255 = vlaneseq
        %v2256 = vshrl.u32 %v2255, 7
        %v2257 = vsub.s32 5, %v2256
        %v2258 = vrot.slane %v1701, %v2257
        %v2259 = vmul.f32 %v2153, %v2258
        %v2260 = vmul.f32 %v2154, %v2258
        %v2261 = vmul.f32 %v2155, %v2258
        %v2262 = vmul.f32 %v2156, %v2258
        %v2263 = vmul.f32 %v2157, %v2258
        %v2264 = vmul.f32 %v2158, %v2258
        %v2265 = vmul.f32 %v2159, %v2258
        %v2266 = vmul.f32 %v2160, %v2258
        %v2267 = vmul.f32 %v2161, %v2258
        %v2268 = vmul.f32 %v2162, %v2258
        %v2269 = vmul.f32 %v2163, %v2258
        %v2270 = vmul.f32 %v2164, %v2258
        %v2271 = vmul.f32 %v2165, %v2258
        %v2272 = vmul.f32 %v2166, %v2258
        %v2273 = vmul.f32 %v2167, %v2258
        %v2274 = vmul.f32 %v2168, %v2258
        %v2275 = vmul.f32 %v2169, %v2258
        %v2276 = vmul.f32 %v2170, %v2258
        %v2277 = vmul.f32 %v2171, %v2258
        %v2278 = vmul.f32 %v2172, %v2258
        %v2279 = vmul.f32 %v2173, %v2258
        %v2280 = vmul.f32 %v2174, %v2258
        %v2281 = vmul.f32 %v2175, %v2258
        %v2282 = vmul.f32 %v2176, %v2258
        %v2283 = vmul.f32 %v2177, %v2258
        %v2284 = vmul.f32 %v2178, %v2258
        %v2285 = vmul.f32 %v2179, %v2258
        %v2286 = vmul.f32 %v2180, %v2258
        %v2287 = vmul.f32 %v2181, %v2258
        %v2288 = vmul.f32 %v2182, %v2258
        %v2289 = vmul.f32 %v2183, %v2258
        %v2290 = vmul.f32 %v2184, %v2258
        %v2291 = vadd.f32 %v2223, %v2259
        %v2292 = vadd.f32 %v2224, %v2260
        %v2293 = vadd.f32 %v2225, %v2261
        %v2294 = vadd.f32 %v2226, %v2262
        %v2295 = vadd.f32 %v2227, %v2263
        %v2296 = vadd.f32 %v2228, %v2264
        %v2297 = vadd.f32 %v2229, %v2265
        %v2298 = vadd.f32 %v2230, %v2266
        %v2299 = vadd.f32 %v2231, %v2267
        %v2300 = vadd.f32 %v2232, %v2268
        %v2301 = vadd.f32 %v2233, %v2269
        %v2302 = vadd.f32 %v2234, %v2270
        %v2303 = vadd.f32 %v2235, %v2271
        %v2304 = vadd.f32 %v2236, %v2272
        %v2305 = vadd.f32 %v2237, %v2273
        %v2306 = vadd.f32 %v2238, %v2274
        %v2307 = vadd.f32 %v2239, %v2275
        %v2308 = vadd.f32 %v2240, %v2276
        %v2309 = vadd.f32 %v2241, %v2277
        %v2310 = vadd.f32 %v2242, %v2278
        %v2311 = vadd.f32 %v2243, %v2279
        %v2312 = vadd.f32 %v2244, %v2280
        %v2313 = vadd.f32 %v2245, %v2281
        %v2314 = vadd.f32 %v2246, %v2282
        %v2315 = vadd.f32 %v2247, %v2283
        %v2316 = vadd.f32 %v2248, %v2284
        %v2317 = vadd.f32 %v2249, %v2285
        %v2318 = vadd.f32 %v2250, %v2286
        %v2319 = vadd.f32 %v2251, %v2287
        %v2320 = vadd.f32 %v2252, %v2288
        %v2321 = vadd.f32 %v2253, %v2289
        %v2322 = vadd.f32 %v2254, %v2290
        %v2323 = vlaneseq
        %v2324 = vshrl.u32 %v2323, 7
        %v2325 = vsub.s32 0, %v2324
        %v2326 = vrot.slane %v1702, %v2325
        %v2327 = vmul.f32 %v2155, %v2326
        %v2328 = vmul.f32 %v2156, %v2326
        %v2329 = vmul.f32 %v2157, %v2326
        %v2330 = vmul.f32 %v2158, %v2326
        %v2331 = vmul.f32 %v2159, %v2326
        %v2332 = vmul.f32 %v2160, %v2326
        %v2333 = vmul.f32 %v2161, %v2326
        %v2334 = vmul.f32 %v2162, %v2326
        %v2335 = vmul.f32 %v2163, %v2326
        %v2336 = vmul.f32 %v2164, %v2326
        %v2337 = vmul.f32 %v2165, %v2326
        %v2338 = vmul.f32 %v2166, %v2326
        %v2339 = vmul.f32 %v2167, %v2326
        %v2340 = vmul.f32 %v2168, %v2326
        %v2341 = vmul.f32 %v2169, %v2326
        %v2342 = vmul.f32 %v2170, %v2326
        %v2343 = vmul.f32 %v2171, %v2326
        %v2344 = vmul.f32 %v2172, %v2326
        %v2345 = vmul.f32 %v2173, %v2326
        %v2346 = vmul.f32 %v2174, %v2326
        %v2347 = vmul.f32 %v2175, %v2326
        %v2348 = vmul.f32 %v2176, %v2326
        %v2349 = vmul.f32 %v2177, %v2326
        %v2350 = vmul.f32 %v2178, %v2326
        %v2351 = vmul.f32 %v2179, %v2326
        %v2352 = vmul.f32 %v2180, %v2326
        %v2353 = vmul.f32 %v2181, %v2326
        %v2354 = vmul.f32 %v2182, %v2326
        %v2355 = vmul.f32 %v2183, %v2326
        %v2356 = vmul.f32 %v2184, %v2326
        %v2357 = vmul.f32 %v2185, %v2326
        %v2358 = vmul.f32 %v2186, %v2326
        %v2359 = vadd.f32 %v2291, %v2327
        %v2360 = vadd.f32 %v2292, %v2328
        %v2361 = vadd.f32 %v2293, %v2329
        %v2362 = vadd.f32 %v2294, %v2330
        %v2363 = vadd.f32 %v2295, %v2331
        %v2364 = vadd.f32 %v2296, %v2332
        %v2365 = vadd.f32 %v2297, %v2333
        %v2366 = vadd.f32 %v2298, %v2334
        %v2367 = vadd.f32 %v2299, %v2335
        %v2368 = vadd.f32 %v2300, %v2336
        %v2369 = vadd.f32 %v2301, %v2337
        %v2370 = vadd.f32 %v2302, %v2338
        %v2371 = vadd.f32 %v2303, %v2339
        %v2372 = vadd.f32 %v2304, %v2340
        %v2373 = vadd.f32 %v2305, %v2341
        %v2374 = vadd.f32 %v2306, %v2342
        %v2375 = vadd.f32 %v2307, %v2343
        %v2376 = vadd.f32 %v2308, %v2344
        %v2377 = vadd.f32 %v2309, %v2345
        %v2378 = vadd.f32 %v2310, %v2346
        %v2379 = vadd.f32 %v2311, %v2347
        %v2380 = vadd.f32 %v2312, %v2348
        %v2381 = vadd.f32 %v2313, %v2349
        %v2382 = vadd.f32 %v2314, %v2350
        %v2383 = vadd.f32 %v2315, %v2351
        %v2384 = vadd.f32 %v2316, %v2352
        %v2385 = vadd.f32 %v2317, %v2353
        %v2386 = vadd.f32 %v2318, %v2354
        %v2387 = vadd.f32 %v2319, %v2355
        %v2388 = vadd.f32 %v2320, %v2356
        %v2389 = vadd.f32 %v2321, %v2357
        %v2390 = vadd.f32 %v2322, %v2358
        %v2391 = vld [vmem:[%s5] sm:$0xff]
        %v2392 = vld [vmem:[%s5 + $0x8] sm:$0xff]
        %v2393 = vld [vmem:[%s5 + $0x10] sm:$0xff]
        %v2394 = vld [vmem:[%s5 + $0x18] sm:$0xff]
        %v2395 = vld [vmem:[%s5 + $0x20] sm:$0xff]
        %v2396 = vld [vmem:[%s5 + $0x28] sm:$0xff]
        %v2397 = vld [vmem:[%s5 + $0x30] sm:$0xff]
        %v2398 = vld [vmem:[%s5 + $0x38] sm:$0xff]
        %v2399 = vld [vmem:[%s5 + $0x40] sm:$0xff]
        %v2400 = vld [vmem:[%s5 + $0x48] sm:$0xff]
        %v2401 = vld [vmem:[%s5 + $0x50] sm:$0xff]
        %v2402 = vld [vmem:[%s5 + $0x58] sm:$0xff]
        %v2403 = vld [vmem:[%s5 + $0x60] sm:$0xff]
        %v2404 = vld [vmem:[%s5 + $0x68] sm:$0xff]
        %v2405 = vld [vmem:[%s5 + $0x70] sm:$0xff]
        %v2406 = vld [vmem:[%s5 + $0x78] sm:$0xff]
        %v2407 = vld [vmem:[%s6] sm:$0x1]
        %v2409 = vlaneseq
        %v2410 = vshrl.u32 %v2409, 7
        %v2411 = vsub.s32 0, %v2410
        %v2412 = vrot.slane %v2407, %v2411
        %2414 = vmatprep.subr.mxu0 0.0
        %2415 = vmatpush1.msra.mxu0 %v2391
        %2416 = vmatprep.subr.mxu0 0.0
        %2417 = vmatpush1.msra.mxu0 %v2392
        %2418 = vmatprep.subr.mxu0 0.0
        %2419 = vmatpush1.msra.mxu0 %v2393
        %2420 = vmatprep.subr.mxu0 0.0
        %2421 = vmatpush1.msra.mxu0 %v2394
        %2422 = vmatprep.subr.mxu0 0.0
        %2423 = vmatpush1.msra.mxu0 %v2395
        %2424 = vmatprep.subr.mxu0 0.0
        %2425 = vmatpush1.msra.mxu0 %v2396
        %2426 = vmatprep.subr.mxu0 0.0
        %2427 = vmatpush1.msra.mxu0 %v2397
        %2428 = vmatprep.subr.mxu0 0.0
        %2429 = vmatpush1.msra.mxu0 %v2398
        %2430 = vmatprep.subr.mxu0 0.0
        %2431 = vmatpush1.msra.mxu0 %v2399
        %2432 = vmatprep.subr.mxu0 0.0
        %2433 = vmatpush1.msra.mxu0 %v2400
        %2434 = vmatprep.subr.mxu0 0.0
        %2435 = vmatpush1.msra.mxu0 %v2401
        %2436 = vmatprep.subr.mxu0 0.0
        %2437 = vmatpush1.msra.mxu0 %v2402
        %2438 = vmatprep.subr.mxu0 0.0
        %2439 = vmatpush1.msra.mxu0 %v2403
        %2440 = vmatprep.subr.mxu0 0.0
        %2441 = vmatpush1.msra.mxu0 %v2404
        %2442 = vmatprep.subr.mxu0 0.0
        %2443 = vmatpush1.msra.mxu0 %v2405
        %2444 = vmatprep.subr.mxu0 0.0
        %2445 = vmatpush1.msra.mxu0 %v2406
        %2446 = vmatprep.subr.mxu0 0.0
        %2447 = vmatpush1.msra.mxu0 0.0
        %2448 = vmatprep.subr.mxu0 0.0
        %2449 = vmatpush1.msra.mxu0 0.0
        %2450 = vmatprep.subr.mxu0 0.0
        %2451 = vmatpush1.msra.mxu0 0.0
        %2452 = vmatprep.subr.mxu0 0.0
        %2453 = vmatpush1.msra.mxu0 0.0
        %2454 = vmatprep.subr.mxu0 0.0
        %2455 = vmatpush1.msra.mxu0 0.0
        %2456 = vmatprep.subr.mxu0 0.0
        %2457 = vmatpush1.msra.mxu0 0.0
        %2458 = vmatprep.subr.mxu0 0.0
        %2459 = vmatpush1.msra.mxu0 0.0
        %2460 = vmatprep.subr.mxu0 0.0
        %2461 = vmatpush1.msra.mxu0 0.0
        %2462 = vmatprep.subr.mxu0 0.0
        %2463 = vmatpush1.msra.mxu0 0.0
        %2464 = vmatprep.subr.mxu0 0.0
        %2465 = vmatpush1.msra.mxu0 0.0
        %2466 = vmatprep.subr.mxu0 0.0
        %2467 = vmatpush1.msra.mxu0 0.0
        %2468 = vmatprep.subr.mxu0 0.0
        %2469 = vmatpush1.msra.mxu0 0.0
        %2470 = vmatprep.subr.mxu0 0.0
        %2471 = vmatpush1.msra.mxu0 0.0
        %2472 = vmatprep.subr.mxu0 0.0
        %2473 = vmatpush1.msra.mxu0 0.0
        %2474 = vmatprep.subr.mxu0 0.0
        %2475 = vmatpush1.msra.mxu0 0.0
        %2476 = vmatprep.subr.mxu0 0.0
        %2477 = vmatpush1.msra.mxu0 0.0
        %2478 = vmatprep.mubr.f32.mxu0 0.0
        %2479 = vmatmul.mubr.f32.gmra.mrb[0].mxu0 %v2359
        %v2480 = vpop.f32.mrb[0].mxu0
        %v2481 = vadd.f32 %v2412, %v2480
        %v2482 = vpop.f32.mrb[0].mxu0
        %2483 = vmatprep.mubr.f32.mxu0 0.0
        %2484 = vmatmul.mubr.f32.gmra.mrb[0].mxu0 %v2360
        %v2485 = vpop.f32.mrb[0].mxu0
        %v2486 = vadd.f32 %v2412, %v2485
        %v2487 = vpop.f32.mrb[0].mxu0
        %2488 = vmatprep.mubr.f32.mxu0 0.0
        %2489 = vmatmul.mubr.f32.gmra.mrb[0].mxu0 %v2361
        %v2490 = vpop.f32.mrb[0].mxu0
        %v2491 = vadd.f32 %v2412, %v2490
        %v2492 = vpop.f32.mrb[0].mxu0
        %2493 = vmatprep.mubr.f32.mxu0 0.0
        %2494 = vmatmul.mubr.f32.gmra.mrb[0].mxu0 %v2362
        %v2495 = vpop.f32.mrb[0].mxu0
        %v2496 = vadd.f32 %v2412, %v2495
        %v2497 = vpop.f32.mrb[0].mxu0
        %2498 = vmatprep.mubr.f32.mxu0 0.0
        %2499 = vmatmul.mubr.f32.gmra.mrb[0].mxu0 %v2363
        %v2500 = vpop.f32.mrb[0].mxu0
        %v2501 = vadd.f32 %v2412, %v2500
        %v2502 = vpop.f32.mrb[0].mxu0
        %2503 = vmatprep.mubr.f32.mxu0 0.0
        %2504 = vmatmul.mubr.f32.gmra.mrb[0].mxu0 %v2364
        %v2505 = vpop.f32.mrb[0].mxu0
        %v2506 = vadd.f32 %v2412, %v2505
        %v2507 = vpop.f32.mrb[0].mxu0
        %2508 = vmatprep.mubr.f32.mxu0 0.0
        %2509 = vmatmul.mubr.f32.gmra.mrb[0].mxu0 %v2365
        %v2510 = vpop.f32.mrb[0].mxu0
        %v2511 = vadd.f32 %v2412, %v2510
        %v2512 = vpop.f32.mrb[0].mxu0
        %2513 = vmatprep.mubr.f32.mxu0 0.0
        %2514 = vmatmul.mubr.f32.gmra.mrb[0].mxu0 %v2366
        %v2515 = vpop.f32.mrb[0].mxu0
        %v2516 = vadd.f32 %v2412, %v2515
        %v2517 = vpop.f32.mrb[0].mxu0
        %2518 = vmatprep.mubr.f32.mxu0 0.0
        %2519 = vmatmul.mubr.f32.gmra.mrb[0].mxu0 %v2367
        %v2520 = vpop.f32.mrb[0].mxu0
        %v2521 = vadd.f32 %v2412, %v2520
        %v2522 = vpop.f32.mrb[0].mxu0
        %2523 = vmatprep.mubr.f32.mxu0 0.0
        %2524 = vmatmul.mubr.f32.gmra.mrb[0].mxu0 %v2368
        %v2525 = vpop.f32.mrb[0].mxu0
        %v2526 = vadd.f32 %v2412, %v2525
        %v2527 = vpop.f32.mrb[0].mxu0
        %2528 = vmatprep.mubr.f32.mxu0 0.0
        %2529 = vmatmul.mubr.f32.gmra.mrb[0].mxu0 %v2369
        %v2530 = vpop.f32.mrb[0].mxu0
        %v2531 = vadd.f32 %v2412, %v2530
        %v2532 = vpop.f32.mrb[0].mxu0
        %2533 = vmatprep.mubr.f32.mxu0 0.0
        %2534 = vmatmul.mubr.f32.gmra.mrb[0].mxu0 %v2370
        %v2535 = vpop.f32.mrb[0].mxu0
        %v2536 = vadd.f32 %v2412, %v2535
        %v2537 = vpop.f32.mrb[0].mxu0
        %2538 = vmatprep.mubr.f32.mxu0 0.0
        %2539 = vmatmul.mubr.f32.gmra.mrb[0].mxu0 %v2371
        %v2540 = vpop.f32.mrb[0].mxu0
        %v2541 = vadd.f32 %v2412, %v2540
        %v2542 = vpop.f32.mrb[0].mxu0
        %2543 = vmatprep.mubr.f32.mxu0 0.0
        %2544 = vmatmul.mubr.f32.gmra.mrb[0].mxu0 %v2372
        %v2545 = vpop.f32.mrb[0].mxu0
        %v2546 = vadd.f32 %v2412, %v2545
        %v2547 = vpop.f32.mrb[0].mxu0
        %2548 = vmatprep.mubr.f32.mxu0 0.0
        %2549 = vmatmul.mubr.f32.gmra.mrb[0].mxu0 %v2373
        %v2550 = vpop.f32.mrb[0].mxu0
        %v2551 = vadd.f32 %v2412, %v2550
        %v2552 = vpop.f32.mrb[0].mxu0
        %2553 = vmatprep.mubr.f32.mxu0 0.0
        %2554 = vmatmul.mubr.f32.gmra.mrb[0].mxu0 %v2374
        %v2555 = vpop.f32.mrb[0].mxu0
        %v2556 = vadd.f32 %v2412, %v2555
        %v2557 = vpop.f32.mrb[0].mxu0
        %2558 = vmatprep.mubr.f32.mxu0 0.0
        %2559 = vmatmul.mubr.f32.gmra.mrb[0].mxu0 %v2375
        %v2560 = vpop.f32.mrb[0].mxu0
        %v2561 = vadd.f32 %v2412, %v2560
        %v2562 = vpop.f32.mrb[0].mxu0
        %2563 = vmatprep.mubr.f32.mxu0 0.0
        %2564 = vmatmul.mubr.f32.gmra.mrb[0].mxu0 %v2376
        %v2565 = vpop.f32.mrb[0].mxu0
        %v2566 = vadd.f32 %v2412, %v2565
        %v2567 = vpop.f32.mrb[0].mxu0
        %2568 = vmatprep.mubr.f32.mxu0 0.0
        %2569 = vmatmul.mubr.f32.gmra.mrb[0].mxu0 %v2377
        %v2570 = vpop.f32.mrb[0].mxu0
        %v2571 = vadd.f32 %v2412, %v2570
        %v2572 = vpop.f32.mrb[0].mxu0
        %2573 = vmatprep.mubr.f32.mxu0 0.0
        %2574 = vmatmul.mubr.f32.gmra.mrb[0].mxu0 %v2378
        %v2575 = vpop.f32.mrb[0].mxu0
        %v2576 = vadd.f32 %v2412, %v2575
        %v2577 = vpop.f32.mrb[0].mxu0
        %2578 = vmatprep.mubr.f32.mxu0 0.0
        %2579 = vmatmul.mubr.f32.gmra.mrb[0].mxu0 %v2379
        %v2580 = vpop.f32.mrb[0].mxu0
        %v2581 = vadd.f32 %v2412, %v2580
        %v2582 = vpop.f32.mrb[0].mxu0
        %2583 = vmatprep.mubr.f32.mxu0 0.0
        %2584 = vmatmul.mubr.f32.gmra.mrb[0].mxu0 %v2380
        %v2585 = vpop.f32.mrb[0].mxu0
        %v2586 = vadd.f32 %v2412, %v2585
        %v2587 = vpop.f32.mrb[0].mxu0
        %2588 = vmatprep.mubr.f32.mxu0 0.0
        %2589 = vmatmul.mubr.f32.gmra.mrb[0].mxu0 %v2381
        %v2590 = vpop.f32.mrb[0].mxu0
        %v2591 = vadd.f32 %v2412, %v2590
        %v2592 = vpop.f32.mrb[0].mxu0
        %2593 = vmatprep.mubr.f32.mxu0 0.0
        %2594 = vmatmul.mubr.f32.gmra.mrb[0].mxu0 %v2382
        %v2595 = vpop.f32.mrb[0].mxu0
        %v2596 = vadd.f32 %v2412, %v2595
        %v2597 = vpop.f32.mrb[0].mxu0
        %2598 = vmatprep.mubr.f32.mxu0 0.0
        %2599 = vmatmul.mubr.f32.gmra.mrb[0].mxu0 %v2383
        %v2600 = vpop.f32.mrb[0].mxu0
        %v2601 = vadd.f32 %v2412, %v2600
        %v2602 = vpop.f32.mrb[0].mxu0
        %2603 = vmatprep.mubr.f32.mxu0 0.0
        %2604 = vmatmul.mubr.f32.gmra.mrb[0].mxu0 %v2384
        %v2605 = vpop.f32.mrb[0].mxu0
        %v2606 = vadd.f32 %v2412, %v2605
        %v2607 = vpop.f32.mrb[0].mxu0
        %2608 = vmatprep.mubr.f32.mxu0 0.0
        %2609 = vmatmul.mubr.f32.gmra.mrb[0].mxu0 %v2385
        %v2610 = vpop.f32.mrb[0].mxu0
        %v2611 = vadd.f32 %v2412, %v2610
        %v2612 = vpop.f32.mrb[0].mxu0
        %2613 = vmatprep.mubr.f32.mxu0 0.0
        %2614 = vmatmul.mubr.f32.gmra.mrb[0].mxu0 %v2386
        %v2615 = vpop.f32.mrb[0].mxu0
        %v2616 = vadd.f32 %v2412, %v2615
        %v2617 = vpop.f32.mrb[0].mxu0
        %2618 = vmatprep.mubr.f32.mxu0 0.0
        %2619 = vmatmul.mubr.f32.gmra.mrb[0].mxu0 %v2387
        %v2620 = vpop.f32.mrb[0].mxu0
        %v2621 = vadd.f32 %v2412, %v2620
        %v2622 = vpop.f32.mrb[0].mxu0
        %2623 = vmatprep.mubr.f32.mxu0 0.0
        %2624 = vmatmul.mubr.f32.gmra.mrb[0].mxu0 %v2388
        %v2625 = vpop.f32.mrb[0].mxu0
        %v2626 = vadd.f32 %v2412, %v2625
        %v2627 = vpop.f32.mrb[0].mxu0
        %2628 = vmatprep.mubr.f32.mxu0 0.0
        %2629 = vmatmul.mubr.f32.gmra.mrb[0].mxu0 %v2389
        %v2630 = vpop.f32.mrb[0].mxu0
        %v2631 = vadd.f32 %v2412, %v2630
        %v2632 = vpop.f32.mrb[0].mxu0
        %2633 = vmatprep.mubr.f32.mxu0 0.0
        %2634 = vmatmul.mubr.f32.gmra.mrb[0].mxu0 %v2390
        %v2635 = vpop.f32.mrb[0].mxu0
        %v2636 = vadd.f32 %v2412, %v2635
        %v2637 = vpop.f32.mrb[0].mxu0
        %2638 = vdwg.mxu0
        %v2639 = vmax.f32 %v2481, 0.0
        %v2640 = vmax.f32 %v2486, 0.0
        %v2641 = vmax.f32 %v2491, 0.0
        %v2642 = vmax.f32 %v2496, 0.0
        %v2643 = vmax.f32 %v2501, 0.0
        %v2644 = vmax.f32 %v2506, 0.0
        %v2645 = vmax.f32 %v2511, 0.0
        %v2646 = vmax.f32 %v2516, 0.0
        %v2647 = vmax.f32 %v2521, 0.0
        %v2648 = vmax.f32 %v2526, 0.0
        %v2649 = vmax.f32 %v2531, 0.0
        %v2650 = vmax.f32 %v2536, 0.0
        %v2651 = vmax.f32 %v2541, 0.0
        %v2652 = vmax.f32 %v2546, 0.0
        %v2653 = vmax.f32 %v2551, 0.0
        %v2654 = vmax.f32 %v2556, 0.0
        %v2655 = vmax.f32 %v2561, 0.0
        %v2656 = vmax.f32 %v2566, 0.0
        %v2657 = vmax.f32 %v2571, 0.0
        %v2658 = vmax.f32 %v2576, 0.0
        %v2659 = vmax.f32 %v2581, 0.0
        %v2660 = vmax.f32 %v2586, 0.0
        %v2661 = vmax.f32 %v2591, 0.0
        %v2662 = vmax.f32 %v2596, 0.0
        %v2663 = vmax.f32 %v2601, 0.0
        %v2664 = vmax.f32 %v2606, 0.0
        %v2665 = vmax.f32 %v2611, 0.0
        %v2666 = vmax.f32 %v2616, 0.0
        %v2667 = vmax.f32 %v2621, 0.0
        %v2668 = vmax.f32 %v2626, 0.0
        %v2669 = vmax.f32 %v2631, 0.0
        %v2670 = vmax.f32 %v2636, 0.0
        %2671 = vst [vmem:[%s1668 + $0x1] sm:$0xff] %v2639
        %2672 = vst [vmem:[%s1668 + $0x9] sm:$0xff] %v2640
        %2673 = vst [vmem:[%s1668 + $0x19] sm:$0xff] %v2641
        %2674 = vst [vmem:[%s1668 + $0x21] sm:$0xff] %v2642
        %2675 = vst [vmem:[%s1668 + $0x31] sm:$0xff] %v2643
        %2676 = vst [vmem:[%s1668 + $0x39] sm:$0xff] %v2644
        %2677 = vst [vmem:[%s1668 + $0x49] sm:$0xff] %v2645
        %2678 = vst [vmem:[%s1668 + $0x51] sm:$0xff] %v2646
        %2679 = vst [vmem:[%s1668 + $0x61] sm:$0xff] %v2647
        %2680 = vst [vmem:[%s1668 + $0x69] sm:$0xff] %v2648
        %2681 = vst [vmem:[%s1668 + $0x79] sm:$0xff] %v2649
        %2682 = vst [vmem:[%s1668 + $0x81] sm:$0xff] %v2650
        %2683 = vst [vmem:[%s1668 + $0x91] sm:$0xff] %v2651
        %2684 = vst [vmem:[%s1668 + $0x99] sm:$0xff] %v2652
        %2685 = vst [vmem:[%s1668 + $0xa9] sm:$0xff] %v2653
        %2686 = vst [vmem:[%s1668 + $0xb1] sm:$0xff] %v2654
        %2687 = vst [vmem:[%s1668 + $0xc1] sm:$0xff] %v2655
        %2688 = vst [vmem:[%s1668 + $0xc9] sm:$0xff] %v2656
        %2689 = vst [vmem:[%s1668 + $0xd9] sm:$0xff] %v2657
        %2690 = vst [vmem:[%s1668 + $0xe1] sm:$0xff] %v2658
        %2691 = vst [vmem:[%s1668 + $0xf1] sm:$0xff] %v2659
        %2692 = vst [vmem:[%s1668 + $0xf9] sm:$0xff] %v2660
        %2693 = vst [vmem:[%s1668 + $0x109] sm:$0xff] %v2661
        %2694 = vst [vmem:[%s1668 + $0x111] sm:$0xff] %v2662
        %2695 = vst [vmem:[%s1668 + $0x121] sm:$0xff] %v2663
        %2696 = vst [vmem:[%s1668 + $0x129] sm:$0xff] %v2664
        %2697 = vst [vmem:[%s1668 + $0x139] sm:$0xff] %v2665
        %2698 = vst [vmem:[%s1668 + $0x141] sm:$0xff] %v2666
        %2699 = vst [vmem:[%s1668 + $0x151] sm:$0xff] %v2667
        %2700 = vst [vmem:[%s1668 + $0x159] sm:$0xff] %v2668
        %2701 = vst [vmem:[%s1668 + $0x169] sm:$0xff] %v2669
        %2702 = vst [vmem:[%s1668 + $0x171] sm:$0xff] %v2670
        %v2703 = vld [vmem:[%s7] sm:$0xff]
        %v2704 = vld [vmem:[%s7 + $0x8] sm:$0x1]
        %v2705 = vld [vmem:[#allocation3] sm:$0xff]
        %v2706 = vld [vmem:[#allocation3 + $0x8] sm:$0xff]
        %v2707 = vld [vmem:[#allocation3 + $0x18] sm:$0xff]
        %v2708 = vld [vmem:[#allocation3 + $0x20] sm:$0xff]
        %v2709 = vld [vmem:[#allocation3 + $0x30] sm:$0xff]
        %v2710 = vld [vmem:[#allocation3 + $0x38] sm:$0xff]
        %v2711 = vld [vmem:[#allocation3 + $0x48] sm:$0xff]
        %v2712 = vld [vmem:[#allocation3 + $0x50] sm:$0xff]
        %v2713 = vld [vmem:[#allocation3 + $0x60] sm:$0xff]
        %v2714 = vld [vmem:[#allocation3 + $0x68] sm:$0xff]
        %v2715 = vld [vmem:[#allocation3 + $0x78] sm:$0xff]
        %v2716 = vld [vmem:[#allocation3 + $0x80] sm:$0xff]
        %v2717 = vld [vmem:[#allocation3 + $0x90] sm:$0xff]
        %v2718 = vld [vmem:[#allocation3 + $0x98] sm:$0xff]
        %v2719 = vld [vmem:[#allocation3 + $0xa8] sm:$0xff]
        %v2720 = vld [vmem:[#allocation3 + $0xb0] sm:$0xff]
        %v2721 = vld [vmem:[#allocation3 + $0xc0] sm:$0xff]
        %v2722 = vld [vmem:[#allocation3 + $0xc8] sm:$0xff]
        %v2723 = vld [vmem:[#allocation3 + $0xd8] sm:$0xff]
        %v2724 = vld [vmem:[#allocation3 + $0xe0] sm:$0xff]
        %v2725 = vld [vmem:[#allocation3 + $0xf0] sm:$0xff]
        %v2726 = vld [vmem:[#allocation3 + $0xf8] sm:$0xff]
        %v2727 = vld [vmem:[#allocation3 + $0x108] sm:$0xff]
        %v2728 = vld [vmem:[#allocation3 + $0x110] sm:$0xff]
        %v2729 = vld [vmem:[#allocation3 + $0x120] sm:$0xff]
        %v2730 = vld [vmem:[#allocation3 + $0x128] sm:$0xff]
        %v2731 = vld [vmem:[#allocation3 + $0x138] sm:$0xff]
        %v2732 = vld [vmem:[#allocation3 + $0x140] sm:$0xff]
        %v2733 = vld [vmem:[#allocation3 + $0x150] sm:$0xff]
        %v2734 = vld [vmem:[#allocation3 + $0x158] sm:$0xff]
        %v2735 = vld [vmem:[#allocation3 + $0x168] sm:$0xff]
        %v2736 = vld [vmem:[#allocation3 + $0x170] sm:$0xff]
        %v2737 = vld [vmem:[#allocation3 + $0x180] sm:$0xff]
        %v2738 = vld [vmem:[#allocation3 + $0x188] sm:$0xff]
        %v2739 = vld [vmem:[#allocation3 + $0x198] sm:$0xff]
        %v2740 = vld [vmem:[#allocation3 + $0x1a0] sm:$0xff]
        %v2741 = vlaneseq
        %v2742 = vshrl.u32 %v2741, 7
        %v2743 = vsub.s32 0, %v2742
        %v2744 = vrot.slane %v2703, %v2743
        %v2745 = vmul.f32 %v2705, %v2744
        %v2746 = vmul.f32 %v2706, %v2744
        %v2747 = vmul.f32 %v2707, %v2744
        %v2748 = vmul.f32 %v2708, %v2744
        %v2749 = vmul.f32 %v2709, %v2744
        %v2750 = vmul.f32 %v2710, %v2744
        %v2751 = vmul.f32 %v2711, %v2744
        %v2752 = vmul.f32 %v2712, %v2744
        %v2753 = vmul.f32 %v2713, %v2744
        %v2754 = vmul.f32 %v2714, %v2744
        %v2755 = vmul.f32 %v2715, %v2744
        %v2756 = vmul.f32 %v2716, %v2744
        %v2757 = vmul.f32 %v2717, %v2744
        %v2758 = vmul.f32 %v2718, %v2744
        %v2759 = vmul.f32 %v2719, %v2744
        %v2760 = vmul.f32 %v2720, %v2744
        %v2761 = vmul.f32 %v2721, %v2744
        %v2762 = vmul.f32 %v2722, %v2744
        %v2763 = vmul.f32 %v2723, %v2744
        %v2764 = vmul.f32 %v2724, %v2744
        %v2765 = vmul.f32 %v2725, %v2744
        %v2766 = vmul.f32 %v2726, %v2744
        %v2767 = vmul.f32 %v2727, %v2744
        %v2768 = vmul.f32 %v2728, %v2744
        %v2769 = vmul.f32 %v2729, %v2744
        %v2770 = vmul.f32 %v2730, %v2744
        %v2771 = vmul.f32 %v2731, %v2744
        %v2772 = vmul.f32 %v2732, %v2744
        %v2773 = vmul.f32 %v2733, %v2744
        %v2774 = vmul.f32 %v2734, %v2744
        %v2775 = vmul.f32 %v2735, %v2744
        %v2776 = vmul.f32 %v2736, %v2744
        %v2777 = vlaneseq
        %v2778 = vshrl.u32 %v2777, 7
        %v2779 = vsub.s32 3, %v2778
        %v2780 = vrot.slane %v2703, %v2779
        %v2781 = vmul.f32 %v2707, %v2780
        %v2782 = vmul.f32 %v2708, %v2780
        %v2783 = vmul.f32 %v2709, %v2780
        %v2784 = vmul.f32 %v2710, %v2780
        %v2785 = vmul.f32 %v2711, %v2780
        %v2786 = vmul.f32 %v2712, %v2780
        %v2787 = vmul.f32 %v2713, %v2780
        %v2788 = vmul.f32 %v2714, %v2780
        %v2789 = vmul.f32 %v2715, %v2780
        %v2790 = vmul.f32 %v2716, %v2780
        %v2791 = vmul.f32 %v2717, %v2780
        %v2792 = vmul.f32 %v2718, %v2780
        %v2793 = vmul.f32 %v2719, %v2780
        %v2794 = vmul.f32 %v2720, %v2780
        %v2795 = vmul.f32 %v2721, %v2780
        %v2796 = vmul.f32 %v2722, %v2780
        %v2797 = vmul.f32 %v2723, %v2780
        %v2798 = vmul.f32 %v2724, %v2780
        %v2799 = vmul.f32 %v2725, %v2780
        %v2800 = vmul.f32 %v2726, %v2780
        %v2801 = vmul.f32 %v2727, %v2780
        %v2802 = vmul.f32 %v2728, %v2780
        %v2803 = vmul.f32 %v2729, %v2780
        %v2804 = vmul.f32 %v2730, %v2780
        %v2805 = vmul.f32 %v2731, %v2780
        %v2806 = vmul.f32 %v2732, %v2780
        %v2807 = vmul.f32 %v2733, %v2780
        %v2808 = vmul.f32 %v2734, %v2780
        %v2809 = vmul.f32 %v2735, %v2780
        %v2810 = vmul.f32 %v2736, %v2780
        %v2811 = vmul.f32 %v2737, %v2780
        %v2812 = vmul.f32 %v2738, %v2780
        %v2813 = vadd.f32 %v2745, %v2781
        %v2814 = vadd.f32 %v2746, %v2782
        %v2815 = vadd.f32 %v2747, %v2783
        %v2816 = vadd.f32 %v2748, %v2784
        %v2817 = vadd.f32 %v2749, %v2785
        %v2818 = vadd.f32 %v2750, %v2786
        %v2819 = vadd.f32 %v2751, %v2787
        %v2820 = vadd.f32 %v2752, %v2788
        %v2821 = vadd.f32 %v2753, %v2789
        %v2822 = vadd.f32 %v2754, %v2790
        %v2823 = vadd.f32 %v2755, %v2791
        %v2824 = vadd.f32 %v2756, %v2792
        %v2825 = vadd.f32 %v2757, %v2793
        %v2826 = vadd.f32 %v2758, %v2794
        %v2827 = vadd.f32 %v2759, %v2795
        %v2828 = vadd.f32 %v2760, %v2796
        %v2829 = vadd.f32 %v2761, %v2797
        %v2830 = vadd.f32 %v2762, %v2798
        %v2831 = vadd.f32 %v2763, %v2799
        %v2832 = vadd.f32 %v2764, %v2800
        %v2833 = vadd.f32 %v2765, %v2801
        %v2834 = vadd.f32 %v2766, %v2802
        %v2835 = vadd.f32 %v2767, %v2803
        %v2836 = vadd.f32 %v2768, %v2804
        %v2837 = vadd.f32 %v2769, %v2805
        %v2838 = vadd.f32 %v2770, %v2806
        %v2839 = vadd.f32 %v2771, %v2807
        %v2840 = vadd.f32 %v2772, %v2808
        %v2841 = vadd.f32 %v2773, %v2809
        %v2842 = vadd.f32 %v2774, %v2810
        %v2843 = vadd.f32 %v2775, %v2811
        %v2844 = vadd.f32 %v2776, %v2812
        %v2845 = vlaneseq
        %v2846 = vshrl.u32 %v2845, 7
        %v2847 = vsub.s32 6, %v2846
        %v2848 = vrot.slane %v2703, %v2847
        %v2849 = vmul.f32 %v2709, %v2848
        %v2850 = vmul.f32 %v2710, %v2848
        %v2851 = vmul.f32 %v2711, %v2848
        %v2852 = vmul.f32 %v2712, %v2848
        %v2853 = vmul.f32 %v2713, %v2848
        %v2854 = vmul.f32 %v2714, %v2848
        %v2855 = vmul.f32 %v2715, %v2848
        %v2856 = vmul.f32 %v2716, %v2848
        %v2857 = vmul.f32 %v2717, %v2848
        %v2858 = vmul.f32 %v2718, %v2848
        %v2859 = vmul.f32 %v2719, %v2848
        %v2860 = vmul.f32 %v2720, %v2848
        %v2861 = vmul.f32 %v2721, %v2848
        %v2862 = vmul.f32 %v2722, %v2848
        %v2863 = vmul.f32 %v2723, %v2848
        %v2864 = vmul.f32 %v2724, %v2848
        %v2865 = vmul.f32 %v2725, %v2848
        %v2866 = vmul.f32 %v2726, %v2848
        %v2867 = vmul.f32 %v2727, %v2848
        %v2868 = vmul.f32 %v2728, %v2848
        %v2869 = vmul.f32 %v2729, %v2848
        %v2870 = vmul.f32 %v2730, %v2848
        %v2871 = vmul.f32 %v2731, %v2848
        %v2872 = vmul.f32 %v2732, %v2848
        %v2873 = vmul.f32 %v2733, %v2848
        %v2874 = vmul.f32 %v2734, %v2848
        %v2875 = vmul.f32 %v2735, %v2848
        %v2876 = vmul.f32 %v2736, %v2848
        %v2877 = vmul.f32 %v2737, %v2848
        %v2878 = vmul.f32 %v2738, %v2848
        %v2879 = vmul.f32 %v2739, %v2848
        %v2880 = vmul.f32 %v2740, %v2848
        %v2881 = vadd.f32 %v2813, %v2849
        %v2882 = vadd.f32 %v2814, %v2850
        %v2883 = vadd.f32 %v2815, %v2851
        %v2884 = vadd.f32 %v2816, %v2852
        %v2885 = vadd.f32 %v2817, %v2853
        %v2886 = vadd.f32 %v2818, %v2854
        %v2887 = vadd.f32 %v2819, %v2855
        %v2888 = vadd.f32 %v2820, %v2856
        %v2889 = vadd.f32 %v2821, %v2857
        %v2890 = vadd.f32 %v2822, %v2858
        %v2891 = vadd.f32 %v2823, %v2859
        %v2892 = vadd.f32 %v2824, %v2860
        %v2893 = vadd.f32 %v2825, %v2861
        %v2894 = vadd.f32 %v2826, %v2862
        %v2895 = vadd.f32 %v2827, %v2863
        %v2896 = vadd.f32 %v2828, %v2864
        %v2897 = vadd.f32 %v2829, %v2865
        %v2898 = vadd.f32 %v2830, %v2866
        %v2899 = vadd.f32 %v2831, %v2867
        %v2900 = vadd.f32 %v2832, %v2868
        %v2901 = vadd.f32 %v2833, %v2869
        %v2902 = vadd.f32 %v2834, %v2870
        %v2903 = vadd.f32 %v2835, %v2871
        %v2904 = vadd.f32 %v2836, %v2872
        %v2905 = vadd.f32 %v2837, %v2873
        %v2906 = vadd.f32 %v2838, %v2874
        %v2907 = vadd.f32 %v2839, %v2875
        %v2908 = vadd.f32 %v2840, %v2876
        %v2909 = vadd.f32 %v2841, %v2877
        %v2910 = vadd.f32 %v2842, %v2878
        %v2911 = vadd.f32 %v2843, %v2879
        %v2912 = vadd.f32 %v2844, %v2880
        %v2913 = vld [vmem:[#allocation3 + $0x1] sm:$0xff]
        %v2914 = vld [vmem:[#allocation3 + $0x9] sm:$0xff]
        %v2915 = vld [vmem:[#allocation3 + $0x19] sm:$0xff]
        %v2916 = vld [vmem:[#allocation3 + $0x21] sm:$0xff]
        %v2917 = vld [vmem:[#allocation3 + $0x31] sm:$0xff]
        %v2918 = vld [vmem:[#allocation3 + $0x39] sm:$0xff]
        %v2919 = vld [vmem:[#allocation3 + $0x49] sm:$0xff]
        %v2920 = vld [vmem:[#allocation3 + $0x51] sm:$0xff]
        %v2921 = vld [vmem:[#allocation3 + $0x61] sm:$0xff]
        %v2922 = vld [vmem:[#allocation3 + $0x69] sm:$0xff]
        %v2923 = vld [vmem:[#allocation3 + $0x79] sm:$0xff]
        %v2924 = vld [vmem:[#allocation3 + $0x81] sm:$0xff]
        %v2925 = vld [vmem:[#allocation3 + $0x91] sm:$0xff]
        %v2926 = vld [vmem:[#allocation3 + $0x99] sm:$0xff]
        %v2927 = vld [vmem:[#allocation3 + $0xa9] sm:$0xff]
        %v2928 = vld [vmem:[#allocation3 + $0xb1] sm:$0xff]
        %v2929 = vld [vmem:[#allocation3 + $0xc1] sm:$0xff]
        %v2930 = vld [vmem:[#allocation3 + $0xc9] sm:$0xff]
        %v2931 = vld [vmem:[#allocation3 + $0xd9] sm:$0xff]
        %v2932 = vld [vmem:[#allocation3 + $0xe1] sm:$0xff]
        %v2933 = vld [vmem:[#allocation3 + $0xf1] sm:$0xff]
        %v2934 = vld [vmem:[#allocation3 + $0xf9] sm:$0xff]
        %v2935 = vld [vmem:[#allocation3 + $0x109] sm:$0xff]
        %v2936 = vld [vmem:[#allocation3 + $0x111] sm:$0xff]
        %v2937 = vld [vmem:[#allocation3 + $0x121] sm:$0xff]
        %v2938 = vld [vmem:[#allocation3 + $0x129] sm:$0xff]
        %v2939 = vld [vmem:[#allocation3 + $0x139] sm:$0xff]
        %v2940 = vld [vmem:[#allocation3 + $0x141] sm:$0xff]
        %v2941 = vld [vmem:[#allocation3 + $0x151] sm:$0xff]
        %v2942 = vld [vmem:[#allocation3 + $0x159] sm:$0xff]
        %v2943 = vld [vmem:[#allocation3 + $0x169] sm:$0xff]
        %v2944 = vld [vmem:[#allocation3 + $0x171] sm:$0xff]
        %v2945 = vld [vmem:[#allocation3 + $0x181] sm:$0xff]
        %v2946 = vld [vmem:[#allocation3 + $0x189] sm:$0xff]
        %v2947 = vld [vmem:[#allocation3 + $0x199] sm:$0xff]
        %v2948 = vld [vmem:[#allocation3 + $0x1a1] sm:$0xff]
        %v2949 = vlaneseq
        %v2950 = vshrl.u32 %v2949, 7
        %v2951 = vsub.s32 1, %v2950
        %v2952 = vrot.slane %v2703, %v2951
        %v2953 = vmul.f32 %v2913, %v2952
        %v2954 = vmul.f32 %v2914, %v2952
        %v2955 = vmul.f32 %v2915, %v2952
        %v2956 = vmul.f32 %v2916, %v2952
        %v2957 = vmul.f32 %v2917, %v2952
        %v2958 = vmul.f32 %v2918, %v2952
        %v2959 = vmul.f32 %v2919, %v2952
        %v2960 = vmul.f32 %v2920, %v2952
        %v2961 = vmul.f32 %v2921, %v2952
        %v2962 = vmul.f32 %v2922, %v2952
        %v2963 = vmul.f32 %v2923, %v2952
        %v2964 = vmul.f32 %v2924, %v2952
        %v2965 = vmul.f32 %v2925, %v2952
        %v2966 = vmul.f32 %v2926, %v2952
        %v2967 = vmul.f32 %v2927, %v2952
        %v2968 = vmul.f32 %v2928, %v2952
        %v2969 = vmul.f32 %v2929, %v2952
        %v2970 = vmul.f32 %v2930, %v2952
        %v2971 = vmul.f32 %v2931, %v2952
        %v2972 = vmul.f32 %v2932, %v2952
        %v2973 = vmul.f32 %v2933, %v2952
        %v2974 = vmul.f32 %v2934, %v2952
        %v2975 = vmul.f32 %v2935, %v2952
        %v2976 = vmul.f32 %v2936, %v2952
        %v2977 = vmul.f32 %v2937, %v2952
        %v2978 = vmul.f32 %v2938, %v2952
        %v2979 = vmul.f32 %v2939, %v2952
        %v2980 = vmul.f32 %v2940, %v2952
        %v2981 = vmul.f32 %v2941, %v2952
        %v2982 = vmul.f32 %v2942, %v2952
        %v2983 = vmul.f32 %v2943, %v2952
        %v2984 = vmul.f32 %v2944, %v2952
        %v2985 = vadd.f32 %v2881, %v2953
        %v2986 = vadd.f32 %v2882, %v2954
        %v2987 = vadd.f32 %v2883, %v2955
        %v2988 = vadd.f32 %v2884, %v2956
        %v2989 = vadd.f32 %v2885, %v2957
        %v2990 = vadd.f32 %v2886, %v2958
        %v2991 = vadd.f32 %v2887, %v2959
        %v2992 = vadd.f32 %v2888, %v2960
        %v2993 = vadd.f32 %v2889, %v2961
        %v2994 = vadd.f32 %v2890, %v2962
        %v2995 = vadd.f32 %v2891, %v2963
        %v2996 = vadd.f32 %v2892, %v2964
        %v2997 = vadd.f32 %v2893, %v2965
        %v2998 = vadd.f32 %v2894, %v2966
        %v2999 = vadd.f32 %v2895, %v2967
        %v3000 = vadd.f32 %v2896, %v2968
        %v3001 = vadd.f32 %v2897, %v2969
        %v3002 = vadd.f32 %v2898, %v2970
        %v3003 = vadd.f32 %v2899, %v2971
        %v3004 = vadd.f32 %v2900, %v2972
        %v3005 = vadd.f32 %v2901, %v2973
        %v3006 = vadd.f32 %v2902, %v2974
        %v3007 = vadd.f32 %v2903, %v2975
        %v3008 = vadd.f32 %v2904, %v2976
        %v3009 = vadd.f32 %v2905, %v2977
        %v3010 = vadd.f32 %v2906, %v2978
        %v3011 = vadd.f32 %v2907, %v2979
        %v3012 = vadd.f32 %v2908, %v2980
        %v3013 = vadd.f32 %v2909, %v2981
        %v3014 = vadd.f32 %v2910, %v2982
        %v3015 = vadd.f32 %v2911, %v2983
        %v3016 = vadd.f32 %v2912, %v2984
        %v3017 = vlaneseq
        %v3018 = vshrl.u32 %v3017, 7
        %v3019 = vsub.s32 4, %v3018
        %v3020 = vrot.slane %v2703, %v3019
        %v3021 = vmul.f32 %v2915, %v3020
        %v3022 = vmul.f32 %v2916, %v3020
        %v3023 = vmul.f32 %v2917, %v3020
        %v3024 = vmul.f32 %v2918, %v3020
        %v3025 = vmul.f32 %v2919, %v3020
        %v3026 = vmul.f32 %v2920, %v3020
        %v3027 = vmul.f32 %v2921, %v3020
        %v3028 = vmul.f32 %v2922, %v3020
        %v3029 = vmul.f32 %v2923, %v3020
        %v3030 = vmul.f32 %v2924, %v3020
        %v3031 = vmul.f32 %v2925, %v3020
        %v3032 = vmul.f32 %v2926, %v3020
        %v3033 = vmul.f32 %v2927, %v3020
        %v3034 = vmul.f32 %v2928, %v3020
        %v3035 = vmul.f32 %v2929, %v3020
        %v3036 = vmul.f32 %v2930, %v3020
        %v3037 = vmul.f32 %v2931, %v3020
        %v3038 = vmul.f32 %v2932, %v3020
        %v3039 = vmul.f32 %v2933, %v3020
        %v3040 = vmul.f32 %v2934, %v3020
        %v3041 = vmul.f32 %v2935, %v3020
        %v3042 = vmul.f32 %v2936, %v3020
        %v3043 = vmul.f32 %v2937, %v3020
        %v3044 = vmul.f32 %v2938, %v3020
        %v3045 = vmul.f32 %v2939, %v3020
        %v3046 = vmul.f32 %v2940, %v3020
        %v3047 = vmul.f32 %v2941, %v3020
        %v3048 = vmul.f32 %v2942, %v3020
        %v3049 = vmul.f32 %v2943, %v3020
        %v3050 = vmul.f32 %v2944, %v3020
        %v3051 = vmul.f32 %v2945, %v3020
        %v3052 = vmul.f32 %v2946, %v3020
        %v3053 = vadd.f32 %v2985, %v3021
        %v3054 = vadd.f32 %v2986, %v3022
        %v3055 = vadd.f32 %v2987, %v3023
        %v3056 = vadd.f32 %v2988, %v3024
        %v3057 = vadd.f32 %v2989, %v3025
        %v3058 = vadd.f32 %v2990, %v3026
        %v3059 = vadd.f32 %v2991, %v3027
        %v3060 = vadd.f32 %v2992, %v3028
        %v3061 = vadd.f32 %v2993, %v3029
        %v3062 = vadd.f32 %v2994, %v3030
        %v3063 = vadd.f32 %v2995, %v3031
        %v3064 = vadd.f32 %v2996, %v3032
        %v3065 = vadd.f32 %v2997, %v3033
        %v3066 = vadd.f32 %v2998, %v3034
        %v3067 = vadd.f32 %v2999, %v3035
        %v3068 = vadd.f32 %v3000, %v3036
        %v3069 = vadd.f32 %v3001, %v3037
        %v3070 = vadd.f32 %v3002, %v3038
        %v3071 = vadd.f32 %v3003, %v3039
        %v3072 = vadd.f32 %v3004, %v3040
        %v3073 = vadd.f32 %v3005, %v3041
        %v3074 = vadd.f32 %v3006, %v3042
        %v3075 = vadd.f32 %v3007, %v3043
        %v3076 = vadd.f32 %v3008, %v3044
        %v3077 = vadd.f32 %v3009, %v3045
        %v3078 = vadd.f32 %v3010, %v3046
        %v3079 = vadd.f32 %v3011, %v3047
        %v3080 = vadd.f32 %v3012, %v3048
        %v3081 = vadd.f32 %v3013, %v3049
        %v3082 = vadd.f32 %v3014, %v3050
        %v3083 = vadd.f32 %v3015, %v3051
        %v3084 = vadd.f32 %v3016, %v3052
        %v3085 = vlaneseq
        %v3086 = vshrl.u32 %v3085, 7
        %v3087 = vsub.s32 7, %v3086
        %v3088 = vrot.slane %v2703, %v3087
        %v3089 = vmul.f32 %v2917, %v3088
        %v3090 = vmul.f32 %v2918, %v3088
        %v3091 = vmul.f32 %v2919, %v3088
        %v3092 = vmul.f32 %v2920, %v3088
        %v3093 = vmul.f32 %v2921, %v3088
        %v3094 = vmul.f32 %v2922, %v3088
        %v3095 = vmul.f32 %v2923, %v3088
        %v3096 = vmul.f32 %v2924, %v3088
        %v3097 = vmul.f32 %v2925, %v3088
        %v3098 = vmul.f32 %v2926, %v3088
        %v3099 = vmul.f32 %v2927, %v3088
        %v3100 = vmul.f32 %v2928, %v3088
        %v3101 = vmul.f32 %v2929, %v3088
        %v3102 = vmul.f32 %v2930, %v3088
        %v3103 = vmul.f32 %v2931, %v3088
        %v3104 = vmul.f32 %v2932, %v3088
        %v3105 = vmul.f32 %v2933, %v3088
        %v3106 = vmul.f32 %v2934, %v3088
        %v3107 = vmul.f32 %v2935, %v3088
        %v3108 = vmul.f32 %v2936, %v3088
        %v3109 = vmul.f32 %v2937, %v3088
        %v3110 = vmul.f32 %v2938, %v3088
        %v3111 = vmul.f32 %v2939, %v3088
        %v3112 = vmul.f32 %v2940, %v3088
        %v3113 = vmul.f32 %v2941, %v3088
        %v3114 = vmul.f32 %v2942, %v3088
        %v3115 = vmul.f32 %v2943, %v3088
        %v3116 = vmul.f32 %v2944, %v3088
        %v3117 = vmul.f32 %v2945, %v3088
        %v3118 = vmul.f32 %v2946, %v3088
        %v3119 = vmul.f32 %v2947, %v3088
        %v3120 = vmul.f32 %v2948, %v3088
        %v3121 = vadd.f32 %v3053, %v3089
        %v3122 = vadd.f32 %v3054, %v3090
        %v3123 = vadd.f32 %v3055, %v3091
        %v3124 = vadd.f32 %v3056, %v3092
        %v3125 = vadd.f32 %v3057, %v3093
        %v3126 = vadd.f32 %v3058, %v3094
        %v3127 = vadd.f32 %v3059, %v3095
        %v3128 = vadd.f32 %v3060, %v3096
        %v3129 = vadd.f32 %v3061, %v3097
        %v3130 = vadd.f32 %v3062, %v3098
        %v3131 = vadd.f32 %v3063, %v3099
        %v3132 = vadd.f32 %v3064, %v3100
        %v3133 = vadd.f32 %v3065, %v3101
        %v3134 = vadd.f32 %v3066, %v3102
        %v3135 = vadd.f32 %v3067, %v3103
        %v3136 = vadd.f32 %v3068, %v3104
        %v3137 = vadd.f32 %v3069, %v3105
        %v3138 = vadd.f32 %v3070, %v3106
        %v3139 = vadd.f32 %v3071, %v3107
        %v3140 = vadd.f32 %v3072, %v3108
        %v3141 = vadd.f32 %v3073, %v3109
        %v3142 = vadd.f32 %v3074, %v3110
        %v3143 = vadd.f32 %v3075, %v3111
        %v3144 = vadd.f32 %v3076, %v3112
        %v3145 = vadd.f32 %v3077, %v3113
        %v3146 = vadd.f32 %v3078, %v3114
        %v3147 = vadd.f32 %v3079, %v3115
        %v3148 = vadd.f32 %v3080, %v3116
        %v3149 = vadd.f32 %v3081, %v3117
        %v3150 = vadd.f32 %v3082, %v3118
        %v3151 = vadd.f32 %v3083, %v3119
        %v3152 = vadd.f32 %v3084, %v3120
        %v3153 = vld [vmem:[#allocation3 + $0x2] sm:$0xff]
        %v3154 = vld [vmem:[#allocation3 + $0xa] sm:$0xff]
        %v3155 = vld [vmem:[#allocation3 + $0x1a] sm:$0xff]
        %v3156 = vld [vmem:[#allocation3 + $0x22] sm:$0xff]
        %v3157 = vld [vmem:[#allocation3 + $0x32] sm:$0xff]
        %v3158 = vld [vmem:[#allocation3 + $0x3a] sm:$0xff]
        %v3159 = vld [vmem:[#allocation3 + $0x4a] sm:$0xff]
        %v3160 = vld [vmem:[#allocation3 + $0x52] sm:$0xff]
        %v3161 = vld [vmem:[#allocation3 + $0x62] sm:$0xff]
        %v3162 = vld [vmem:[#allocation3 + $0x6a] sm:$0xff]
        %v3163 = vld [vmem:[#allocation3 + $0x7a] sm:$0xff]
        %v3164 = vld [vmem:[#allocation3 + $0x82] sm:$0xff]
        %v3165 = vld [vmem:[#allocation3 + $0x92] sm:$0xff]
        %v3166 = vld [vmem:[#allocation3 + $0x9a] sm:$0xff]
        %v3167 = vld [vmem:[#allocation3 + $0xaa] sm:$0xff]
        %v3168 = vld [vmem:[#allocation3 + $0xb2] sm:$0xff]
        %v3169 = vld [vmem:[#allocation3 + $0xc2] sm:$0xff]
        %v3170 = vld [vmem:[#allocation3 + $0xca] sm:$0xff]
        %v3171 = vld [vmem:[#allocation3 + $0xda] sm:$0xff]
        %v3172 = vld [vmem:[#allocation3 + $0xe2] sm:$0xff]
        %v3173 = vld [vmem:[#allocation3 + $0xf2] sm:$0xff]
        %v3174 = vld [vmem:[#allocation3 + $0xfa] sm:$0xff]
        %v3175 = vld [vmem:[#allocation3 + $0x10a] sm:$0xff]
        %v3176 = vld [vmem:[#allocation3 + $0x112] sm:$0xff]
        %v3177 = vld [vmem:[#allocation3 + $0x122] sm:$0xff]
        %v3178 = vld [vmem:[#allocation3 + $0x12a] sm:$0xff]
        %v3179 = vld [vmem:[#allocation3 + $0x13a] sm:$0xff]
        %v3180 = vld [vmem:[#allocation3 + $0x142] sm:$0xff]
        %v3181 = vld [vmem:[#allocation3 + $0x152] sm:$0xff]
        %v3182 = vld [vmem:[#allocation3 + $0x15a] sm:$0xff]
        %v3183 = vld [vmem:[#allocation3 + $0x16a] sm:$0xff]
        %v3184 = vld [vmem:[#allocation3 + $0x172] sm:$0xff]
        %v3185 = vld [vmem:[#allocation3 + $0x182] sm:$0xff]
        %v3186 = vld [vmem:[#allocation3 + $0x18a] sm:$0xff]
        %v3187 = vld [vmem:[#allocation3 + $0x19a] sm:$0xff]
        %v3188 = vld [vmem:[#allocation3 + $0x1a2] sm:$0xff]
        %v3189 = vlaneseq
        %v3190 = vshrl.u32 %v3189, 7
        %v3191 = vsub.s32 2, %v3190
        %v3192 = vrot.slane %v2703, %v3191
        %v3193 = vmul.f32 %v3153, %v3192
        %v3194 = vmul.f32 %v3154, %v3192
        %v3195 = vmul.f32 %v3155, %v3192
        %v3196 = vmul.f32 %v3156, %v3192
        %v3197 = vmul.f32 %v3157, %v3192
        %v3198 = vmul.f32 %v3158, %v3192
        %v3199 = vmul.f32 %v3159, %v3192
        %v3200 = vmul.f32 %v3160, %v3192
        %v3201 = vmul.f32 %v3161, %v3192
        %v3202 = vmul.f32 %v3162, %v3192
        %v3203 = vmul.f32 %v3163, %v3192
        %v3204 = vmul.f32 %v3164, %v3192
        %v3205 = vmul.f32 %v3165, %v3192
        %v3206 = vmul.f32 %v3166, %v3192
        %v3207 = vmul.f32 %v3167, %v3192
        %v3208 = vmul.f32 %v3168, %v3192
        %v3209 = vmul.f32 %v3169, %v3192
        %v3210 = vmul.f32 %v3170, %v3192
        %v3211 = vmul.f32 %v3171, %v3192
        %v3212 = vmul.f32 %v3172, %v3192
        %v3213 = vmul.f32 %v3173, %v3192
        %v3214 = vmul.f32 %v3174, %v3192
        %v3215 = vmul.f32 %v3175, %v3192
        %v3216 = vmul.f32 %v3176, %v3192
        %v3217 = vmul.f32 %v3177, %v3192
        %v3218 = vmul.f32 %v3178, %v3192
        %v3219 = vmul.f32 %v3179, %v3192
        %v3220 = vmul.f32 %v3180, %v3192
        %v3221 = vmul.f32 %v3181, %v3192
        %v3222 = vmul.f32 %v3182, %v3192
        %v3223 = vmul.f32 %v3183, %v3192
        %v3224 = vmul.f32 %v3184, %v3192
        %v3225 = vadd.f32 %v3121, %v3193
        %v3226 = vadd.f32 %v3122, %v3194
        %v3227 = vadd.f32 %v3123, %v3195
        %v3228 = vadd.f32 %v3124, %v3196
        %v3229 = vadd.f32 %v3125, %v3197
        %v3230 = vadd.f32 %v3126, %v3198
        %v3231 = vadd.f32 %v3127, %v3199
        %v3232 = vadd.f32 %v3128, %v3200
        %v3233 = vadd.f32 %v3129, %v3201
        %v3234 = vadd.f32 %v3130, %v3202
        %v3235 = vadd.f32 %v3131, %v3203
        %v3236 = vadd.f32 %v3132, %v3204
        %v3237 = vadd.f32 %v3133, %v3205
        %v3238 = vadd.f32 %v3134, %v3206
        %v3239 = vadd.f32 %v3135, %v3207
        %v3240 = vadd.f32 %v3136, %v3208
        %v3241 = vadd.f32 %v3137, %v3209
        %v3242 = vadd.f32 %v3138, %v3210
        %v3243 = vadd.f32 %v3139, %v3211
        %v3244 = vadd.f32 %v3140, %v3212
        %v3245 = vadd.f32 %v3141, %v3213
        %v3246 = vadd.f32 %v3142, %v3214
        %v3247 = vadd.f32 %v3143, %v3215
        %v3248 = vadd.f32 %v3144, %v3216
        %v3249 = vadd.f32 %v3145, %v3217
        %v3250 = vadd.f32 %v3146, %v3218
        %v3251 = vadd.f32 %v3147, %v3219
        %v3252 = vadd.f32 %v3148, %v3220
        %v3253 = vadd.f32 %v3149, %v3221
        %v3254 = vadd.f32 %v3150, %v3222
        %v3255 = vadd.f32 %v3151, %v3223
        %v3256 = vadd.f32 %v3152, %v3224
        %v3257 = vlaneseq
        %v3258 = vshrl.u32 %v3257, 7
        %v3259 = vsub.s32 5, %v3258
        %v3260 = vrot.slane %v2703, %v3259
        %v3261 = vmul.f32 %v3155, %v3260
        %v3262 = vmul.f32 %v3156, %v3260
        %v3263 = vmul.f32 %v3157, %v3260
        %v3264 = vmul.f32 %v3158, %v3260
        %v3265 = vmul.f32 %v3159, %v3260
        %v3266 = vmul.f32 %v3160, %v3260
        %v3267 = vmul.f32 %v3161, %v3260
        %v3268 = vmul.f32 %v3162, %v3260
        %v3269 = vmul.f32 %v3163, %v3260
        %v3270 = vmul.f32 %v3164, %v3260
        %v3271 = vmul.f32 %v3165, %v3260
        %v3272 = vmul.f32 %v3166, %v3260
        %v3273 = vmul.f32 %v3167, %v3260
        %v3274 = vmul.f32 %v3168, %v3260
        %v3275 = vmul.f32 %v3169, %v3260
        %v3276 = vmul.f32 %v3170, %v3260
        %v3277 = vmul.f32 %v3171, %v3260
        %v3278 = vmul.f32 %v3172, %v3260
        %v3279 = vmul.f32 %v3173, %v3260
        %v3280 = vmul.f32 %v3174, %v3260
        %v3281 = vmul.f32 %v3175, %v3260
        %v3282 = vmul.f32 %v3176, %v3260
        %v3283 = vmul.f32 %v3177, %v3260
        %v3284 = vmul.f32 %v3178, %v3260
        %v3285 = vmul.f32 %v3179, %v3260
        %v3286 = vmul.f32 %v3180, %v3260
        %v3287 = vmul.f32 %v3181, %v3260
        %v3288 = vmul.f32 %v3182, %v3260
        %v3289 = vmul.f32 %v3183, %v3260
        %v3290 = vmul.f32 %v3184, %v3260
        %v3291 = vmul.f32 %v3185, %v3260
        %v3292 = vmul.f32 %v3186, %v3260
        %v3293 = vadd.f32 %v3225, %v3261
        %v3294 = vadd.f32 %v3226, %v3262
        %v3295 = vadd.f32 %v3227, %v3263
        %v3296 = vadd.f32 %v3228, %v3264
        %v3297 = vadd.f32 %v3229, %v3265
        %v3298 = vadd.f32 %v3230, %v3266
        %v3299 = vadd.f32 %v3231, %v3267
        %v3300 = vadd.f32 %v3232, %v3268
        %v3301 = vadd.f32 %v3233, %v3269
        %v3302 = vadd.f32 %v3234, %v3270
        %v3303 = vadd.f32 %v3235, %v3271
        %v3304 = vadd.f32 %v3236, %v3272
        %v3305 = vadd.f32 %v3237, %v3273
        %v3306 = vadd.f32 %v3238, %v3274
        %v3307 = vadd.f32 %v3239, %v3275
        %v3308 = vadd.f32 %v3240, %v3276
        %v3309 = vadd.f32 %v3241, %v3277
        %v3310 = vadd.f32 %v3242, %v3278
        %v3311 = vadd.f32 %v3243, %v3279
        %v3312 = vadd.f32 %v3244, %v3280
        %v3313 = vadd.f32 %v3245, %v3281
        %v3314 = vadd.f32 %v3246, %v3282
        %v3315 = vadd.f32 %v3247, %v3283
        %v3316 = vadd.f32 %v3248, %v3284
        %v3317 = vadd.f32 %v3249, %v3285
        %v3318 = vadd.f32 %v3250, %v3286
        %v3319 = vadd.f32 %v3251, %v3287
        %v3320 = vadd.f32 %v3252, %v3288
        %v3321 = vadd.f32 %v3253, %v3289
        %v3322 = vadd.f32 %v3254, %v3290
        %v3323 = vadd.f32 %v3255, %v3291
        %v3324 = vadd.f32 %v3256, %v3292
        %v3325 = vlaneseq
        %v3326 = vshrl.u32 %v3325, 7
        %v3327 = vsub.s32 0, %v3326
        %v3328 = vrot.slane %v2704, %v3327
        %v3329 = vmul.f32 %v3157, %v3328
        %v3330 = vmul.f32 %v3158, %v3328
        %v3331 = vmul.f32 %v3159, %v3328
        %v3332 = vmul.f32 %v3160, %v3328
        %v3333 = vmul.f32 %v3161, %v3328
        %v3334 = vmul.f32 %v3162, %v3328
        %v3335 = vmul.f32 %v3163, %v3328
        %v3336 = vmul.f32 %v3164, %v3328
        %v3337 = vmul.f32 %v3165, %v3328
        %v3338 = vmul.f32 %v3166, %v3328
        %v3339 = vmul.f32 %v3167, %v3328
        %v3340 = vmul.f32 %v3168, %v3328
        %v3341 = vmul.f32 %v3169, %v3328
        %v3342 = vmul.f32 %v3170, %v3328
        %v3343 = vmul.f32 %v3171, %v3328
        %v3344 = vmul.f32 %v3172, %v3328
        %v3345 = vmul.f32 %v3173, %v3328
        %v3346 = vmul.f32 %v3174, %v3328
        %v3347 = vmul.f32 %v3175, %v3328
        %v3348 = vmul.f32 %v3176, %v3328
        %v3349 = vmul.f32 %v3177, %v3328
        %v3350 = vmul.f32 %v3178, %v3328
        %v3351 = vmul.f32 %v3179, %v3328
        %v3352 = vmul.f32 %v3180, %v3328
        %v3353 = vmul.f32 %v3181, %v3328
        %v3354 = vmul.f32 %v3182, %v3328
        %v3355 = vmul.f32 %v3183, %v3328
        %v3356 = vmul.f32 %v3184, %v3328
        %v3357 = vmul.f32 %v3185, %v3328
        %v3358 = vmul.f32 %v3186, %v3328
        %v3359 = vmul.f32 %v3187, %v3328
        %v3360 = vmul.f32 %v3188, %v3328
        %v3361 = vadd.f32 %v3293, %v3329
        %v3362 = vadd.f32 %v3294, %v3330
        %v3363 = vadd.f32 %v3295, %v3331
        %v3364 = vadd.f32 %v3296, %v3332
        %v3365 = vadd.f32 %v3297, %v3333
        %v3366 = vadd.f32 %v3298, %v3334
        %v3367 = vadd.f32 %v3299, %v3335
        %v3368 = vadd.f32 %v3300, %v3336
        %v3369 = vadd.f32 %v3301, %v3337
        %v3370 = vadd.f32 %v3302, %v3338
        %v3371 = vadd.f32 %v3303, %v3339
        %v3372 = vadd.f32 %v3304, %v3340
        %v3373 = vadd.f32 %v3305, %v3341
        %v3374 = vadd.f32 %v3306, %v3342
        %v3375 = vadd.f32 %v3307, %v3343
        %v3376 = vadd.f32 %v3308, %v3344
        %v3377 = vadd.f32 %v3309, %v3345
        %v3378 = vadd.f32 %v3310, %v3346
        %v3379 = vadd.f32 %v3311, %v3347
        %v3380 = vadd.f32 %v3312, %v3348
        %v3381 = vadd.f32 %v3313, %v3349
        %v3382 = vadd.f32 %v3314, %v3350
        %v3383 = vadd.f32 %v3315, %v3351
        %v3384 = vadd.f32 %v3316, %v3352
        %v3385 = vadd.f32 %v3317, %v3353
        %v3386 = vadd.f32 %v3318, %v3354
        %v3387 = vadd.f32 %v3319, %v3355
        %v3388 = vadd.f32 %v3320, %v3356
        %v3389 = vadd.f32 %v3321, %v3357
        %v3390 = vadd.f32 %v3322, %v3358
        %v3391 = vadd.f32 %v3323, %v3359
        %v3392 = vadd.f32 %v3324, %v3360
        %v3393 = vld [vmem:[%s8] sm:$0xff]
        %v3394 = vld [vmem:[%s8 + $0x8] sm:$0xff]
        %v3395 = vld [vmem:[%s8 + $0x10] sm:$0xff]
        %v3396 = vld [vmem:[%s8 + $0x18] sm:$0xff]
        %v3397 = vld [vmem:[%s8 + $0x20] sm:$0xff]
        %v3398 = vld [vmem:[%s8 + $0x28] sm:$0xff]
        %v3399 = vld [vmem:[%s8 + $0x30] sm:$0xff]
        %v3400 = vld [vmem:[%s8 + $0x38] sm:$0xff]
        %v3401 = vld [vmem:[%s8 + $0x40] sm:$0xff]
        %v3402 = vld [vmem:[%s8 + $0x48] sm:$0xff]
        %v3403 = vld [vmem:[%s8 + $0x50] sm:$0xff]
        %v3404 = vld [vmem:[%s8 + $0x58] sm:$0xff]
        %v3405 = vld [vmem:[%s8 + $0x60] sm:$0xff]
        %v3406 = vld [vmem:[%s8 + $0x68] sm:$0xff]
        %v3407 = vld [vmem:[%s8 + $0x70] sm:$0xff]
        %v3408 = vld [vmem:[%s8 + $0x78] sm:$0xff]
        %v3409 = vld [vmem:[%s9] sm:$0x1]
        %v3411 = vlaneseq
        %v3412 = vshrl.u32 %v3411, 7
        %v3413 = vsub.s32 0, %v3412
        %v3414 = vrot.slane %v3409, %v3413
        %3416 = vmatprep.subr.mxu0 0.0
        %3417 = vmatpush1.msra.mxu0 %v3393
        %3418 = vmatprep.subr.mxu0 0.0
        %3419 = vmatpush1.msra.mxu0 %v3394
        %3420 = vmatprep.subr.mxu0 0.0
        %3421 = vmatpush1.msra.mxu0 %v3395
        %3422 = vmatprep.subr.mxu0 0.0
        %3423 = vmatpush1.msra.mxu0 %v3396
        %3424 = vmatprep.subr.mxu0 0.0
        %3425 = vmatpush1.msra.mxu0 %v3397
        %3426 = vmatprep.subr.mxu0 0.0
        %3427 = vmatpush1.msra.mxu0 %v3398
        %3428 = vmatprep.subr.mxu0 0.0
        %3429 = vmatpush1.msra.mxu0 %v3399
        %3430 = vmatprep.subr.mxu0 0.0
        %3431 = vmatpush1.msra.mxu0 %v3400
        %3432 = vmatprep.subr.mxu0 0.0
        %3433 = vmatpush1.msra.mxu0 %v3401
        %3434 = vmatprep.subr.mxu0 0.0
        %3435 = vmatpush1.msra.mxu0 %v3402
        %3436 = vmatprep.subr.mxu0 0.0
        %3437 = vmatpush1.msra.mxu0 %v3403
        %3438 = vmatprep.subr.mxu0 0.0
        %3439 = vmatpush1.msra.mxu0 %v3404
        %3440 = vmatprep.subr.mxu0 0.0
        %3441 = vmatpush1.msra.mxu0 %v3405
        %3442 = vmatprep.subr.mxu0 0.0
        %3443 = vmatpush1.msra.mxu0 %v3406
        %3444 = vmatprep.subr.mxu0 0.0
        %3445 = vmatpush1.msra.mxu0 %v3407
        %3446 = vmatprep.subr.mxu0 0.0
        %3447 = vmatpush1.msra.mxu0 %v3408
        %3448 = vmatprep.subr.mxu0 0.0
        %3449 = vmatpush1.msra.mxu0 0.0
        %3450 = vmatprep.subr.mxu0 0.0
        %3451 = vmatpush1.msra.mxu0 0.0
        %3452 = vmatprep.subr.mxu0 0.0
        %3453 = vmatpush1.msra.mxu0 0.0
        %3454 = vmatprep.subr.mxu0 0.0
        %3455 = vmatpush1.msra.mxu0 0.0
        %3456 = vmatprep.subr.mxu0 0.0
        %3457 = vmatpush1.msra.mxu0 0.0
        %3458 = vmatprep.subr.mxu0 0.0
        %3459 = vmatpush1.msra.mxu0 0.0
        %3460 = vmatprep.subr.mxu0 0.0
        %3461 = vmatpush1.msra.mxu0 0.0
        %3462 = vmatprep.subr.mxu0 0.0
        %3463 = vmatpush1.msra.mxu0 0.0
        %3464 = vmatprep.subr.mxu0 0.0
        %3465 = vmatpush1.msra.mxu0 0.0
        %3466 = vmatprep.subr.mxu0 0.0
        %3467 = vmatpush1.msra.mxu0 0.0
        %3468 = vmatprep.subr.mxu0 0.0
        %3469 = vmatpush1.msra.mxu0 0.0
        %3470 = vmatprep.subr.mxu0 0.0
        %3471 = vmatpush1.msra.mxu0 0.0
        %3472 = vmatprep.subr.mxu0 0.0
        %3473 = vmatpush1.msra.mxu0 0.0
        %3474 = vmatprep.subr.mxu0 0.0
        %3475 = vmatpush1.msra.mxu0 0.0
        %3476 = vmatprep.subr.mxu0 0.0
        %3477 = vmatpush1.msra.mxu0 0.0
        %3478 = vmatprep.subr.mxu0 0.0
        %3479 = vmatpush1.msra.mxu0 0.0
        %3480 = vmatprep.mubr.f32.mxu0 0.0
        %3481 = vmatmul.mubr.f32.gmra.mrb[0].mxu0 %v3361
        %v3482 = vpop.f32.mrb[0].mxu0
        %v3483 = vadd.f32 %v3414, %v3482
        %v3484 = vpop.f32.mrb[0].mxu0
        %3485 = vmatprep.mubr.f32.mxu0 0.0
        %3486 = vmatmul.mubr.f32.gmra.mrb[0].mxu0 %v3362
        %v3487 = vpop.f32.mrb[0].mxu0
        %v3488 = vadd.f32 %v3414, %v3487
        %v3489 = vpop.f32.mrb[0].mxu0
        %3490 = vmatprep.mubr.f32.mxu0 0.0
        %3491 = vmatmul.mubr.f32.gmra.mrb[0].mxu0 %v3363
        %v3492 = vpop.f32.mrb[0].mxu0
        %v3493 = vadd.f32 %v3414, %v3492
        %v3494 = vpop.f32.mrb[0].mxu0
        %3495 = vmatprep.mubr.f32.mxu0 0.0
        %3496 = vmatmul.mubr.f32.gmra.mrb[0].mxu0 %v3364
        %v3497 = vpop.f32.mrb[0].mxu0
        %v3498 = vadd.f32 %v3414, %v3497
        %v3499 = vpop.f32.mrb[0].mxu0
        %3500 = vmatprep.mubr.f32.mxu0 0.0
        %3501 = vmatmul.mubr.f32.gmra.mrb[0].mxu0 %v3365
        %v3502 = vpop.f32.mrb[0].mxu0
        %v3503 = vadd.f32 %v3414, %v3502
        %v3504 = vpop.f32.mrb[0].mxu0
        %3505 = vmatprep.mubr.f32.mxu0 0.0
        %3506 = vmatmul.mubr.f32.gmra.mrb[0].mxu0 %v3366
        %v3507 = vpop.f32.mrb[0].mxu0
        %v3508 = vadd.f32 %v3414, %v3507
        %v3509 = vpop.f32.mrb[0].mxu0
        %3510 = vmatprep.mubr.f32.mxu0 0.0
        %3511 = vmatmul.mubr.f32.gmra.mrb[0].mxu0 %v3367
        %v3512 = vpop.f32.mrb[0].mxu0
        %v3513 = vadd.f32 %v3414, %v3512
        %v3514 = vpop.f32.mrb[0].mxu0
        %3515 = vmatprep.mubr.f32.mxu0 0.0
        %3516 = vmatmul.mubr.f32.gmra.mrb[0].mxu0 %v3368
        %v3517 = vpop.f32.mrb[0].mxu0
        %v3518 = vadd.f32 %v3414, %v3517
        %v3519 = vpop.f32.mrb[0].mxu0
        %3520 = vmatprep.mubr.f32.mxu0 0.0
        %3521 = vmatmul.mubr.f32.gmra.mrb[0].mxu0 %v3369
        %v3522 = vpop.f32.mrb[0].mxu0
        %v3523 = vadd.f32 %v3414, %v3522
        %v3524 = vpop.f32.mrb[0].mxu0
        %3525 = vmatprep.mubr.f32.mxu0 0.0
        %3526 = vmatmul.mubr.f32.gmra.mrb[0].mxu0 %v3370
        %v3527 = vpop.f32.mrb[0].mxu0
        %v3528 = vadd.f32 %v3414, %v3527
        %v3529 = vpop.f32.mrb[0].mxu0
        %3530 = vmatprep.mubr.f32.mxu0 0.0
        %3531 = vmatmul.mubr.f32.gmra.mrb[0].mxu0 %v3371
        %v3532 = vpop.f32.mrb[0].mxu0
        %v3533 = vadd.f32 %v3414, %v3532
        %v3534 = vpop.f32.mrb[0].mxu0
        %3535 = vmatprep.mubr.f32.mxu0 0.0
        %3536 = vmatmul.mubr.f32.gmra.mrb[0].mxu0 %v3372
        %v3537 = vpop.f32.mrb[0].mxu0
        %v3538 = vadd.f32 %v3414, %v3537
        %v3539 = vpop.f32.mrb[0].mxu0
        %3540 = vmatprep.mubr.f32.mxu0 0.0
        %3541 = vmatmul.mubr.f32.gmra.mrb[0].mxu0 %v3373
        %v3542 = vpop.f32.mrb[0].mxu0
        %v3543 = vadd.f32 %v3414, %v3542
        %v3544 = vpop.f32.mrb[0].mxu0
        %3545 = vmatprep.mubr.f32.mxu0 0.0
        %3546 = vmatmul.mubr.f32.gmra.mrb[0].mxu0 %v3374
        %v3547 = vpop.f32.mrb[0].mxu0
        %v3548 = vadd.f32 %v3414, %v3547
        %v3549 = vpop.f32.mrb[0].mxu0
        %3550 = vmatprep.mubr.f32.mxu0 0.0
        %3551 = vmatmul.mubr.f32.gmra.mrb[0].mxu0 %v3375
        %v3552 = vpop.f32.mrb[0].mxu0
        %v3553 = vadd.f32 %v3414, %v3552
        %v3554 = vpop.f32.mrb[0].mxu0
        %3555 = vmatprep.mubr.f32.mxu0 0.0
        %3556 = vmatmul.mubr.f32.gmra.mrb[0].mxu0 %v3376
        %v3557 = vpop.f32.mrb[0].mxu0
        %v3558 = vadd.f32 %v3414, %v3557
        %v3559 = vpop.f32.mrb[0].mxu0
        %3560 = vmatprep.mubr.f32.mxu0 0.0
        %3561 = vmatmul.mubr.f32.gmra.mrb[0].mxu0 %v3377
        %v3562 = vpop.f32.mrb[0].mxu0
        %v3563 = vadd.f32 %v3414, %v3562
        %v3564 = vpop.f32.mrb[0].mxu0
        %3565 = vmatprep.mubr.f32.mxu0 0.0
        %3566 = vmatmul.mubr.f32.gmra.mrb[0].mxu0 %v3378
        %v3567 = vpop.f32.mrb[0].mxu0
        %v3568 = vadd.f32 %v3414, %v3567
        %v3569 = vpop.f32.mrb[0].mxu0
        %3570 = vmatprep.mubr.f32.mxu0 0.0
        %3571 = vmatmul.mubr.f32.gmra.mrb[0].mxu0 %v3379
        %v3572 = vpop.f32.mrb[0].mxu0
        %v3573 = vadd.f32 %v3414, %v3572
        %v3574 = vpop.f32.mrb[0].mxu0
        %3575 = vmatprep.mubr.f32.mxu0 0.0
        %3576 = vmatmul.mubr.f32.gmra.mrb[0].mxu0 %v3380
        %v3577 = vpop.f32.mrb[0].mxu0
        %v3578 = vadd.f32 %v3414, %v3577
        %v3579 = vpop.f32.mrb[0].mxu0
        %3580 = vmatprep.mubr.f32.mxu0 0.0
        %3581 = vmatmul.mubr.f32.gmra.mrb[0].mxu0 %v3381
        %v3582 = vpop.f32.mrb[0].mxu0
        %v3583 = vadd.f32 %v3414, %v3582
        %v3584 = vpop.f32.mrb[0].mxu0
        %3585 = vmatprep.mubr.f32.mxu0 0.0
        %3586 = vmatmul.mubr.f32.gmra.mrb[0].mxu0 %v3382
        %v3587 = vpop.f32.mrb[0].mxu0
        %v3588 = vadd.f32 %v3414, %v3587
        %v3589 = vpop.f32.mrb[0].mxu0
        %3590 = vmatprep.mubr.f32.mxu0 0.0
        %3591 = vmatmul.mubr.f32.gmra.mrb[0].mxu0 %v3383
        %v3592 = vpop.f32.mrb[0].mxu0
        %v3593 = vadd.f32 %v3414, %v3592
        %v3594 = vpop.f32.mrb[0].mxu0
        %3595 = vmatprep.mubr.f32.mxu0 0.0
        %3596 = vmatmul.mubr.f32.gmra.mrb[0].mxu0 %v3384
        %v3597 = vpop.f32.mrb[0].mxu0
        %v3598 = vadd.f32 %v3414, %v3597
        %v3599 = vpop.f32.mrb[0].mxu0
        %3600 = vmatprep.mubr.f32.mxu0 0.0
        %3601 = vmatmul.mubr.f32.gmra.mrb[0].mxu0 %v3385
        %v3602 = vpop.f32.mrb[0].mxu0
        %v3603 = vadd.f32 %v3414, %v3602
        %v3604 = vpop.f32.mrb[0].mxu0
        %3605 = vmatprep.mubr.f32.mxu0 0.0
        %3606 = vmatmul.mubr.f32.gmra.mrb[0].mxu0 %v3386
        %v3607 = vpop.f32.mrb[0].mxu0
        %v3608 = vadd.f32 %v3414, %v3607
        %v3609 = vpop.f32.mrb[0].mxu0
        %3610 = vmatprep.mubr.f32.mxu0 0.0
        %3611 = vmatmul.mubr.f32.gmra.mrb[0].mxu0 %v3387
        %v3612 = vpop.f32.mrb[0].mxu0
        %v3613 = vadd.f32 %v3414, %v3612
        %v3614 = vpop.f32.mrb[0].mxu0
        %3615 = vmatprep.mubr.f32.mxu0 0.0
        %3616 = vmatmul.mubr.f32.gmra.mrb[0].mxu0 %v3388
        %v3617 = vpop.f32.mrb[0].mxu0
        %v3618 = vadd.f32 %v3414, %v3617
        %v3619 = vpop.f32.mrb[0].mxu0
        %3620 = vmatprep.mubr.f32.mxu0 0.0
        %3621 = vmatmul.mubr.f32.gmra.mrb[0].mxu0 %v3389
        %v3622 = vpop.f32.mrb[0].mxu0
        %v3623 = vadd.f32 %v3414, %v3622
        %v3624 = vpop.f32.mrb[0].mxu0
        %3625 = vmatprep.mubr.f32.mxu0 0.0
        %3626 = vmatmul.mubr.f32.gmra.mrb[0].mxu0 %v3390
        %v3627 = vpop.f32.mrb[0].mxu0
        %v3628 = vadd.f32 %v3414, %v3627
        %v3629 = vpop.f32.mrb[0].mxu0
        %3630 = vmatprep.mubr.f32.mxu0 0.0
        %3631 = vmatmul.mubr.f32.gmra.mrb[0].mxu0 %v3391
        %v3632 = vpop.f32.mrb[0].mxu0
        %v3633 = vadd.f32 %v3414, %v3632
        %v3634 = vpop.f32.mrb[0].mxu0
        %3635 = vmatprep.mubr.f32.mxu0 0.0
        %3636 = vmatmul.mubr.f32.gmra.mrb[0].mxu0 %v3392
        %v3637 = vpop.f32.mrb[0].mxu0
        %v3638 = vadd.f32 %v3414, %v3637
        %v3639 = vpop.f32.mrb[0].mxu0
        %3640 = vdwg.mxu0
        %v3641 = vmax.f32 %v3483, 0.0
        %v3642 = vmax.f32 %v3488, 0.0
        %v3643 = vmax.f32 %v3493, 0.0
        %v3644 = vmax.f32 %v3498, 0.0
        %v3645 = vmax.f32 %v3503, 0.0
        %v3646 = vmax.f32 %v3508, 0.0
        %v3647 = vmax.f32 %v3513, 0.0
        %v3648 = vmax.f32 %v3518, 0.0
        %v3649 = vmax.f32 %v3523, 0.0
        %v3650 = vmax.f32 %v3528, 0.0
        %v3651 = vmax.f32 %v3533, 0.0
        %v3652 = vmax.f32 %v3538, 0.0
        %v3653 = vmax.f32 %v3543, 0.0
        %v3654 = vmax.f32 %v3548, 0.0
        %v3655 = vmax.f32 %v3553, 0.0
        %v3656 = vmax.f32 %v3558, 0.0
        %v3657 = vmax.f32 %v3563, 0.0
        %v3658 = vmax.f32 %v3568, 0.0
        %v3659 = vmax.f32 %v3573, 0.0
        %v3660 = vmax.f32 %v3578, 0.0
        %v3661 = vmax.f32 %v3583, 0.0
        %v3662 = vmax.f32 %v3588, 0.0
        %v3663 = vmax.f32 %v3593, 0.0
        %v3664 = vmax.f32 %v3598, 0.0
        %v3665 = vmax.f32 %v3603, 0.0
        %v3666 = vmax.f32 %v3608, 0.0
        %v3667 = vmax.f32 %v3613, 0.0
        %v3668 = vmax.f32 %v3618, 0.0
        %v3669 = vmax.f32 %v3623, 0.0
        %v3670 = vmax.f32 %v3628, 0.0
        %v3671 = vmax.f32 %v3633, 0.0
        %v3672 = vmax.f32 %v3638, 0.0
        %v3673 = vsel %vm439, %v3641, 0.0
        %v3674 = vsel %vm439, %v3642, 0.0
        %v3675 = vadd.f32 %v3673, %v3674
        %v3676 = vsel %vm439, %v3643, 0.0
        %v3677 = vadd.f32 %v3675, %v3676
        %v3678 = vsel %vm439, %v3644, 0.0
        %v3679 = vadd.f32 %v3677, %v3678
        %v3680 = vsel %vm439, %v3645, 0.0
        %v3681 = vadd.f32 %v3679, %v3680
        %v3682 = vsel %vm439, %v3646, 0.0
        %v3683 = vadd.f32 %v3681, %v3682
        %v3684 = vsel %vm439, %v3647, 0.0
        %v3685 = vadd.f32 %v3683, %v3684
        %v3686 = vsel %vm439, %v3648, 0.0
        %v3687 = vadd.f32 %v3685, %v3686
        %v3688 = vsel %vm439, %v3649, 0.0
        %v3689 = vadd.f32 %v3687, %v3688
        %v3690 = vsel %vm439, %v3650, 0.0
        %v3691 = vadd.f32 %v3689, %v3690
        %v3692 = vsel %vm439, %v3651, 0.0
        %v3693 = vadd.f32 %v3691, %v3692
        %v3694 = vsel %vm439, %v3652, 0.0
        %v3695 = vadd.f32 %v3693, %v3694
        %v3696 = vsel %vm439, %v3653, 0.0
        %v3697 = vadd.f32 %v3695, %v3696
        %v3698 = vsel %vm439, %v3654, 0.0
        %v3699 = vadd.f32 %v3697, %v3698
        %v3700 = vsel %vm439, %v3655, 0.0
        %v3701 = vadd.f32 %v3699, %v3700
        %v3702 = vsel %vm439, %v3656, 0.0
        %v3703 = vadd.f32 %v3701, %v3702
        %v3704 = vsel %vm439, %v3657, 0.0
        %v3705 = vadd.f32 %v3703, %v3704
        %v3706 = vsel %vm439, %v3658, 0.0
        %v3707 = vadd.f32 %v3705, %v3706
        %v3708 = vsel %vm439, %v3659, 0.0
        %v3709 = vadd.f32 %v3707, %v3708
        %v3710 = vsel %vm439, %v3660, 0.0
        %v3711 = vadd.f32 %v3709, %v3710
        %v3712 = vsel %vm439, %v3661, 0.0
        %v3713 = vadd.f32 %v3711, %v3712
        %v3714 = vsel %vm439, %v3662, 0.0
        %v3715 = vadd.f32 %v3713, %v3714
        %v3716 = vsel %vm439, %v3663, 0.0
        %v3717 = vadd.f32 %v3715, %v3716
        %v3718 = vsel %vm439, %v3664, 0.0
        %v3719 = vadd.f32 %v3717, %v3718
        %v3720 = vsel %vm439, %v3665, 0.0
        %v3721 = vadd.f32 %v3719, %v3720
        %v3722 = vsel %vm439, %v3666, 0.0
        %v3723 = vadd.f32 %v3721, %v3722
        %v3724 = vsel %vm439, %v3667, 0.0
        %v3725 = vadd.f32 %v3723, %v3724
        %v3726 = vsel %vm439, %v3668, 0.0
        %v3727 = vadd.f32 %v3725, %v3726
        %v3728 = vsel %vm439, %v3669, 0.0
        %v3729 = vadd.f32 %v3727, %v3728
        %v3730 = vsel %vm439, %v3670, 0.0
        %v3731 = vadd.f32 %v3729, %v3730
        %v3732 = vsel %vm439, %v3671, 0.0
        %v3733 = vadd.f32 %v3731, %v3732
        %v3734 = vsel %vm439, %v3672, 0.0
        %v3735 = vadd.f32 %v3733, %v3734
        %v3736 = vrot.slane %v3735, 4
        %v3737 = vadd.f32 %v3735, %v3736
        %v3738 = vrot.slane %v3737, 2
        %v3739 = vadd.f32 %v3737, %v3738
        %v3740 = vrot.slane %v3739, 1
        %v3741 = vadd.f32 %v3739, %v3740
        %v3742 = vmul.f32 %v3741, 0.00390625
        %vm3743 = vcmask 253952
        %3744 = vst.msk [vmem:[#allocation4] sm:$0x1] %vm3743, %v3742
        %v3745 = vsel %vm439, %v3641, -inf
        %v3746 = vsel %vm439, %v3642, -inf
        %v3747 = vsel %vm439, %v3643, -inf
        %v3748 = vsel %vm439, %v3644, -inf
        %v3749 = vsel %vm439, %v3645, -inf
        %v3750 = vmax.f32 %v3745, %v3749
        %v3751 = vsel %vm439, %v3646, -inf
        %v3752 = vmax.f32 %v3746, %v3751
        %v3753 = vsel %vm439, %v3647, -inf
        %v3754 = vmax.f32 %v3747, %v3753
        %v3755 = vsel %vm439, %v3648, -inf
        %v3756 = vmax.f32 %v3748, %v3755
        %v3757 = vsel %vm439, %v3649, -inf
        %v3758 = vmax.f32 %v3750, %v3757
        %v3759 = vsel %vm439, %v3650, -inf
        %v3760 = vmax.f32 %v3752, %v3759
        %v3761 = vsel %vm439, %v3651, -inf
        %v3762 = vmax.f32 %v3754, %v3761
        %v3763 = vsel %vm439, %v3652, -inf
        %v3764 = vmax.f32 %v3756, %v3763
        %v3765 = vsel %vm439, %v3653, -inf
        %v3766 = vmax.f32 %v3758, %v3765
        %v3767 = vsel %vm439, %v3654, -inf
        %v3768 = vmax.f32 %v3760, %v3767
        %v3769 = vsel %vm439, %v3655, -inf
        %v3770 = vmax.f32 %v3762, %v3769
        %v3771 = vsel %vm439, %v3656, -inf
        %v3772 = vmax.f32 %v3764, %v3771
        %v3773 = vsel %vm439, %v3657, -inf
        %v3774 = vmax.f32 %v3766, %v3773
        %v3775 = vsel %vm439, %v3658, -inf
        %v3776 = vmax.f32 %v3768, %v3775
        %v3777 = vsel %vm439, %v3659, -inf
        %v3778 = vmax.f32 %v3770, %v3777
        %v3779 = vsel %vm439, %v3660, -inf
        %v3780 = vmax.f32 %v3772, %v3779
        %v3781 = vsel %vm439, %v3661, -inf
        %v3782 = vmax.f32 %v3774, %v3781
        %v3783 = vsel %vm439, %v3662, -inf
        %v3784 = vmax.f32 %v3776, %v3783
        %v3785 = vsel %vm439, %v3663, -inf
        %v3786 = vmax.f32 %v3778, %v3785
        %v3787 = vsel %vm439, %v3664, -inf
        %v3788 = vmax.f32 %v3780, %v3787
        %v3789 = vsel %vm439, %v3665, -inf
        %v3790 = vmax.f32 %v3782, %v3789
        %v3791 = vsel %vm439, %v3666, -inf
        %v3792 = vmax.f32 %v3784, %v3791
        %v3793 = vsel %vm439, %v3667, -inf
        %v3794 = vmax.f32 %v3786, %v3793
        %v3795 = vsel %vm439, %v3668, -inf
        %v3796 = vmax.f32 %v3788, %v3795
        %v3797 = vsel %vm439, %v3669, -inf
        %v3798 = vmax.f32 %v3790, %v3797
        %v3799 = vsel %vm439, %v3670, -inf
        %v3800 = vmax.f32 %v3792, %v3799
        %v3801 = vsel %vm439, %v3671, -inf
        %v3802 = vmax.f32 %v3794, %v3801
        %v3803 = vsel %vm439, %v3672, -inf
        %v3804 = vmax.f32 %v3796, %v3803
        %v3805 = vmax.f32 %v3798, %v3800
        %v3806 = vmax.f32 %v3802, %v3804
        %v3807 = vmax.f32 %v3805, %v3806
        %v3808 = vrot.slane %v3807, 4
        %v3809 = vmax.f32 %v3807, %v3808
        %v3810 = vrot.slane %v3809, 2
        %v3811 = vmax.f32 %v3809, %v3810
        %v3812 = vrot.slane %v3811, 1
        %v3813 = vmax.f32 %v3811, %v3812
        %3814 = vst.msk [vmem:[#allocation4 + $0x1] sm:$0x1] %vm3743, %v3813
        %v3815 = vld [vmem:[#allocation4] sm:$0x3]
        %v3816 = vld [vmem:[%s10] sm:$0xff]
        %v3817 = vld [vmem:[%s10 + $0x8] sm:$0xff]
        %v3818 = vld [vmem:[%s10 + $0x10] sm:$0xff]
        %v3819 = vld [vmem:[%s10 + $0x18] sm:$0xff]
        %v3821 = vsel %vm439, %v3815, 0
        %3823 = vmatprep.subr.mxu0 0.0
        %3824 = vmatpush1.msra.mxu0 %v3816
        %3825 = vmatprep.subr.mxu0 0.0
        %3826 = vmatpush1.msra.mxu0 %v3817
        %3827 = vmatprep.subr.mxu0 0.0
        %3828 = vmatpush1.msra.mxu0 %v3818
        %3829 = vmatprep.subr.mxu0 0.0
        %3830 = vmatpush1.msra.mxu0 %v3819
        %3831 = vmatprep.subr.mxu0 0.0
        %3832 = vmatpush1.msra.mxu0 0.0
        %3833 = vmatprep.subr.mxu0 0.0
        %3834 = vmatpush1.msra.mxu0 0.0
        %3835 = vmatprep.subr.mxu0 0.0
        %3836 = vmatpush1.msra.mxu0 0.0
        %3837 = vmatprep.subr.mxu0 0.0
        %3838 = vmatpush1.msra.mxu0 0.0
        %3839 = vmatprep.subr.mxu0 0.0
        %3840 = vmatpush1.msra.mxu0 0.0
        %3841 = vmatprep.subr.mxu0 0.0
        %3842 = vmatpush1.msra.mxu0 0.0
        %3843 = vmatprep.subr.mxu0 0.0
        %3844 = vmatpush1.msra.mxu0 0.0
        %3845 = vmatprep.subr.mxu0 0.0
        %3846 = vmatpush1.msra.mxu0 0.0
        %3847 = vmatprep.subr.mxu0 0.0
        %3848 = vmatpush1.msra.mxu0 0.0
        %3849 = vmatprep.subr.mxu0 0.0
        %3850 = vmatpush1.msra.mxu0 0.0
        %3851 = vmatprep.subr.mxu0 0.0
        %3852 = vmatpush1.msra.mxu0 0.0
        %3853 = vmatprep.subr.mxu0 0.0
        %3854 = vmatpush1.msra.mxu0 0.0
        %3855 = vmatprep.subr.mxu0 0.0
        %3856 = vmatpush1.msra.mxu0 0.0
        %3857 = vmatprep.subr.mxu0 0.0
        %3858 = vmatpush1.msra.mxu0 0.0
        %3859 = vmatprep.subr.mxu0 0.0
        %3860 = vmatpush1.msra.mxu0 0.0
        %3861 = vmatprep.subr.mxu0 0.0
        %3862 = vmatpush1.msra.mxu0 0.0
        %3863 = vmatprep.subr.mxu0 0.0
        %3864 = vmatpush1.msra.mxu0 0.0
        %3865 = vmatprep.subr.mxu0 0.0
        %3866 = vmatpush1.msra.mxu0 0.0
        %3867 = vmatprep.subr.mxu0 0.0
        %3868 = vmatpush1.msra.mxu0 0.0
        %3869 = vmatprep.subr.mxu0 0.0
        %3870 = vmatpush1.msra.mxu0 0.0
        %3871 = vmatprep.subr.mxu0 0.0
        %3872 = vmatpush1.msra.mxu0 0.0
        %3873 = vmatprep.subr.mxu0 0.0
        %3874 = vmatpush1.msra.mxu0 0.0
        %3875 = vmatprep.subr.mxu0 0.0
        %3876 = vmatpush1.msra.mxu0 0.0
        %3877 = vmatprep.subr.mxu0 0.0
        %3878 = vmatpush1.msra.mxu0 0.0
        %3879 = vmatprep.subr.mxu0 0.0
        %3880 = vmatpush1.msra.mxu0 0.0
        %3881 = vmatprep.subr.mxu0 0.0
        %3882 = vmatpush1.msra.mxu0 0.0
        %3883 = vmatprep.subr.mxu0 0.0
        %3884 = vmatpush1.msra.mxu0 0.0
        %3885 = vmatprep.subr.mxu0 0.0
        %3886 = vmatpush1.msra.mxu0 0.0
        %3887 = vmatprep.mubr.f32.mxu0 0.0
        %3888 = vmatmul.mubr.f32.gmra.mrb[0].mxu0 %v3821
        %v3889 = vpop.f32.mrb[0].mxu0
        %v3890 = vadd.f32 0.0, %v3889
        %v3891 = vpop.f32.mrb[0].mxu0
        %3892 = vdwg.mxu0
        %v3893 = vmax.f32 %v3890, 0.0
        %v3894 = vld [vmem:[%s11] sm:$0x3]
        %vm3895 = vcmask 15360
        %v3897 = vsel %vm3895, %v3893, 0
        %vm3899 = vcmask 1041408
        %v3901 = vsel %vm3899, %v3894, 0
        %3903 = vmatprep.subr.mxu0 0.0
        %3904 = vmatpush1.msra.mxu0 %v3901
        %3905 = vmatprep.subr.mxu0 0.0
        %3906 = vmatpush1.msra.mxu0 0.0
        %3907 = vmatprep.subr.mxu0 0.0
        %3908 = vmatpush1.msra.mxu0 0.0
        %3909 = vmatprep.subr.mxu0 0.0
        %3910 = vmatpush1.msra.mxu0 0.0
        %3911 = vmatprep.subr.mxu0 0.0
        %3912 = vmatpush1.msra.mxu0 0.0
        %3913 = vmatprep.subr.mxu0 0.0
        %3914 = vmatpush1.msra.mxu0 0.0
        %3915 = vmatprep.subr.mxu0 0.0
        %3916 = vmatpush1.msra.mxu0 0.0
        %3917 = vmatprep.subr.mxu0 0.0
        %3918 = vmatpush1.msra.mxu0 0.0
        %3919 = vmatprep.subr.mxu0 0.0
        %3920 = vmatpush1.msra.mxu0 0.0
        %3921 = vmatprep.subr.mxu0 0.0
        %3922 = vmatpush1.msra.mxu0 0.0
        %3923 = vmatprep.subr.mxu0 0.0
        %3924 = vmatpush1.msra.mxu0 0.0
        %3925 = vmatprep.subr.mxu0 0.0
        %3926 = vmatpush1.msra.mxu0 0.0
        %3927 = vmatprep.subr.mxu0 0.0
        %3928 = vmatpush1.msra.mxu0 0.0
        %3929 = vmatprep.subr.mxu0 0.0
        %3930 = vmatpush1.msra.mxu0 0.0
        %3931 = vmatprep.subr.mxu0 0.0
        %3932 = vmatpush1.msra.mxu0 0.0
        %3933 = vmatprep.subr.mxu0 0.0
        %3934 = vmatpush1.msra.mxu0 0.0
        %3935 = vmatprep.subr.mxu0 0.0
        %3936 = vmatpush1.msra.mxu0 0.0
        %3937 = vmatprep.subr.mxu0 0.0
        %3938 = vmatpush1.msra.mxu0 0.0
        %3939 = vmatprep.subr.mxu0 0.0
        %3940 = vmatpush1.msra.mxu0 0.0
        %3941 = vmatprep.subr.mxu0 0.0
        %3942 = vmatpush1.msra.mxu0 0.0
        %3943 = vmatprep.subr.mxu0 0.0
        %3944 = vmatpush1.msra.mxu0 0.0
        %3945 = vmatprep.subr.mxu0 0.0
        %3946 = vmatpush1.msra.mxu0 0.0
        %3947 = vmatprep.subr.mxu0 0.0
        %3948 = vmatpush1.msra.mxu0 0.0
        %3949 = vmatprep.subr.mxu0 0.0
        %3950 = vmatpush1.msra.mxu0 0.0
        %3951 = vmatprep.subr.mxu0 0.0
        %3952 = vmatpush1.msra.mxu0 0.0
        %3953 = vmatprep.subr.mxu0 0.0
        %3954 = vmatpush1.msra.mxu0 0.0
        %3955 = vmatprep.subr.mxu0 0.0
        %3956 = vmatpush1.msra.mxu0 0.0
        %3957 = vmatprep.subr.mxu0 0.0
        %3958 = vmatpush1.msra.mxu0 0.0
        %3959 = vmatprep.subr.mxu0 0.0
        %3960 = vmatpush1.msra.mxu0 0.0
        %3961 = vmatprep.subr.mxu0 0.0
        %3962 = vmatpush1.msra.mxu0 0.0
        %3963 = vmatprep.subr.mxu0 0.0
        %3964 = vmatpush1.msra.mxu0 0.0
        %3965 = vmatprep.subr.mxu0 0.0
        %3966 = vmatpush1.msra.mxu0 0.0
        %3967 = vmatprep.mubr.f32.mxu0 0.0
        %3968 = vmatmul.mubr.f32.gmra.mrb[0].mxu0 %v3897
        %v3969 = vpop.f32.mrb[0].mxu0
        %v3970 = vadd.f32 0.0, %v3969
        %v3971 = vpop.f32.mrb[0].mxu0
        %3972 = vdwg.mxu0
        %v3974 = vrot.slane %v3970, 1
        %v3976 = vadd.f32 %v3970, %v3974
        %v3977 = vxor.u32 %v3976, 2147483648
        %v3978 = vmul.f32 %v3977, 1.442695
        %v3979 = vpow.pop %v3978
        %v3980 = vadd.f32 %v3979, 1.0
        %v3981 = vrcp.pop %v3980
        %v3982 = vmul.f32 1.0, %v3981
        %v3983 = vlaneseq
        %v3984 = vshrl.u32 %v3983, 7
        %v3985 = vsub.s32 0, %v3984
        %v3986 = vrot.slane %v3982, %v3985
        %v3987 = vmul.f32 %v3641, %v3986
        %v3988 = vmul.f32 %v3642, %v3986
        %v3989 = vmul.f32 %v3643, %v3986
        %v3990 = vmul.f32 %v3644, %v3986
        %v3991 = vmul.f32 %v3645, %v3986
        %v3992 = vmul.f32 %v3646, %v3986
        %v3993 = vmul.f32 %v3647, %v3986
        %v3994 = vmul.f32 %v3648, %v3986
        %v3995 = vmul.f32 %v3649, %v3986
        %v3996 = vmul.f32 %v3650, %v3986
        %v3997 = vmul.f32 %v3651, %v3986
        %v3998 = vmul.f32 %v3652, %v3986
        %v3999 = vmul.f32 %v3653, %v3986
        %v4000 = vmul.f32 %v3654, %v3986
        %v4001 = vmul.f32 %v3655, %v3986
        %v4002 = vmul.f32 %v3656, %v3986
        %v4003 = vmul.f32 %v3657, %v3986
        %v4004 = vmul.f32 %v3658, %v3986
        %v4005 = vmul.f32 %v3659, %v3986
        %v4006 = vmul.f32 %v3660, %v3986
        %v4007 = vmul.f32 %v3661, %v3986
        %v4008 = vmul.f32 %v3662, %v3986
        %v4009 = vmul.f32 %v3663, %v3986
        %v4010 = vmul.f32 %v3664, %v3986
        %v4011 = vmul.f32 %v3665, %v3986
        %v4012 = vmul.f32 %v3666, %v3986
        %v4013 = vmul.f32 %v3667, %v3986
        %v4014 = vmul.f32 %v3668, %v3986
        %v4015 = vmul.f32 %v3669, %v3986
        %v4016 = vmul.f32 %v3670, %v3986
        %v4017 = vmul.f32 %v3671, %v3986
        %v4018 = vmul.f32 %v3672, %v3986
        %4019 = vst.msk [vmem:[#allocation5] sm:$0xff] %vm3895, 0.0
        %4020 = vst.msk [vmem:[#allocation5 + $0x8] sm:$0xff] %vm3895, 0.0
        %vm4021 = vcmask 13312
        %4022 = vst.msk [vmem:[#allocation5 + $0x10] sm:$0x3f] %vm4021, 0.0
        %4023 = vst.msk [vmem:[#allocation5 + $0x18] sm:$0xff] %vm3895, 0.0
        %4024 = vst.msk [vmem:[#allocation5 + $0x20] sm:$0xff] %vm3895, 0.0
        %4025 = vst.msk [vmem:[#allocation5 + $0x28] sm:$0x3f] %vm4021, 0.0
        %4026 = vst.msk [vmem:[#allocation5 + $0x30] sm:$0xff] %vm3895, 0.0
        %4027 = vst.msk [vmem:[#allocation5 + $0x38] sm:$0xff] %vm3895, 0.0
        %4028 = vst.msk [vmem:[#allocation5 + $0x40] sm:$0x3f] %vm4021, 0.0
        %4029 = vst.msk [vmem:[#allocation5 + $0x48] sm:$0xff] %vm3895, 0.0
        %4030 = vst.msk [vmem:[#allocation5 + $0x50] sm:$0xff] %vm3895, 0.0
        %4031 = vst.msk [vmem:[#allocation5 + $0x58] sm:$0x3f] %vm4021, 0.0
        %4032 = vst.msk [vmem:[#allocation5 + $0x60] sm:$0xff] %vm3895, 0.0
        %4033 = vst.msk [vmem:[#allocation5 + $0x68] sm:$0xff] %vm3895, 0.0
        %4034 = vst.msk [vmem:[#allocation5 + $0x70] sm:$0x3f] %vm4021, 0.0
        %4035 = vst.msk [vmem:[#allocation5 + $0x78] sm:$0xff] %vm3895, 0.0
        %4036 = vst.msk [vmem:[#allocation5 + $0x80] sm:$0xff] %vm3895, 0.0
        %4037 = vst.msk [vmem:[#allocation5 + $0x88] sm:$0x3f] %vm4021, 0.0
        %4038 = vst.msk [vmem:[#allocation5 + $0x90] sm:$0xff] %vm3895, 0.0
        %4039 = vst.msk [vmem:[#allocation5 + $0x98] sm:$0xff] %vm3895, 0.0
        %4040 = vst.msk [vmem:[#allocation5 + $0xa0] sm:$0x3f] %vm4021, 0.0
        %4041 = vst.msk [vmem:[#allocation5 + $0xa8] sm:$0xff] %vm3895, 0.0
        %4042 = vst.msk [vmem:[#allocation5 + $0xb0] sm:$0xff] %vm3895, 0.0
        %4043 = vst.msk [vmem:[#allocation5 + $0xb8] sm:$0x3f] %vm4021, 0.0
        %4044 = vst.msk [vmem:[#allocation5 + $0xc0] sm:$0xff] %vm3895, 0.0
        %4045 = vst.msk [vmem:[#allocation5 + $0xc8] sm:$0xff] %vm3895, 0.0
        %4046 = vst.msk [vmem:[#allocation5 + $0xd0] sm:$0x3f] %vm4021, 0.0
        %4047 = vst.msk [vmem:[#allocation5 + $0xd8] sm:$0xff] %vm3895, 0.0
        %4048 = vst.msk [vmem:[#allocation5 + $0xe0] sm:$0xff] %vm3895, 0.0
        %4049 = vst.msk [vmem:[#allocation5 + $0xe8] sm:$0x3f] %vm4021, 0.0
        %4050 = vst.msk [vmem:[#allocation5 + $0xf0] sm:$0xff] %vm3895, 0.0
        %4051 = vst.msk [vmem:[#allocation5 + $0xf8] sm:$0xff] %vm3895, 0.0
        %4052 = vst.msk [vmem:[#allocation5 + $0x100] sm:$0x3f] %vm4021, 0.0
        %4053 = vst.msk [vmem:[#allocation5 + $0x108] sm:$0xff] %vm3895, 0.0
        %4054 = vst.msk [vmem:[#allocation5 + $0x110] sm:$0xff] %vm3895, 0.0
        %4055 = vst.msk [vmem:[#allocation5 + $0x118] sm:$0x3f] %vm4021, 0.0
        %4056 = vst.msk [vmem:[#allocation5 + $0x120] sm:$0xff] %vm3895, 0.0
        %4057 = vst.msk [vmem:[#allocation5 + $0x128] sm:$0xff] %vm3895, 0.0
        %4058 = vst.msk [vmem:[#allocation5 + $0x130] sm:$0x3f] %vm4021, 0.0
        %4059 = vst.msk [vmem:[#allocation5 + $0x138] sm:$0xff] %vm3895, 0.0
        %4060 = vst.msk [vmem:[#allocation5 + $0x140] sm:$0xff] %vm3895, 0.0
        %4061 = vst.msk [vmem:[#allocation5 + $0x148] sm:$0x3f] %vm4021, 0.0
        %4062 = vst.msk [vmem:[#allocation5 + $0x150] sm:$0xff] %vm3895, 0.0
        %4063 = vst.msk [vmem:[#allocation5 + $0x158] sm:$0xff] %vm3895, 0.0
        %4064 = vst.msk [vmem:[#allocation5 + $0x160] sm:$0x3f] %vm4021, 0.0
        %4065 = vst.msk [vmem:[#allocation5 + $0x168] sm:$0xff] %vm3895, 0.0
        %4066 = vst.msk [vmem:[#allocation5 + $0x170] sm:$0xff] %vm3895, 0.0
        %4067 = vst.msk [vmem:[#allocation5 + $0x178] sm:$0x3f] %vm4021, 0.0
        %4068 = vst.msk [vmem:[#allocation5 + $0x180] sm:$0xff] %vm3895, 0.0
        %4069 = vst.msk [vmem:[#allocation5 + $0x188] sm:$0xff] %vm3895, 0.0
        %4070 = vst.msk [vmem:[#allocation5 + $0x190] sm:$0x3f] %vm4021, 0.0
        %4071 = vst.msk [vmem:[#allocation5 + $0x198] sm:$0xff] %vm3895, 0.0
        %4072 = vst.msk [vmem:[#allocation5 + $0x1a0] sm:$0xff] %vm3895, 0.0
        %4073 = vst.msk [vmem:[#allocation5 + $0x1a8] sm:$0x3f] %vm4021, 0.0
        %4074 = vst.msk [vmem:[#allocation5 + $0x1b0] sm:$0xff] %vm3895, 0.0
        %4075 = vst.msk [vmem:[#allocation5 + $0x1b8] sm:$0xff] %vm3895, 0.0
        %4076 = vst.msk [vmem:[#allocation5 + $0x1c0] sm:$0x3f] %vm4021, 0.0
        %4077 = vst.msk [vmem:[#allocation5 + $0x1c8] sm:$0xff] %vm3895, 0.0
        %4078 = vst.msk [vmem:[#allocation5 + $0x1d0] sm:$0xff] %vm3895, 0.0
        %4079 = vst.msk [vmem:[#allocation5 + $0x1d8] sm:$0x3f] %vm4021, 0.0
        %4080 = vst.msk [vmem:[#allocation5 + $0x1e0] sm:$0xff] %vm3895, 0.0
        %4081 = vst.msk [vmem:[#allocation5 + $0x1e8] sm:$0xff] %vm3895, 0.0
        %4082 = vst.msk [vmem:[#allocation5 + $0x1f0] sm:$0x3f] %vm4021, 0.0
        %4083 = vst.msk [vmem:[#allocation5 + $0x1f8] sm:$0xff] %vm3895, 0.0
        %4084 = vst.msk [vmem:[#allocation5 + $0x200] sm:$0xff] %vm3895, 0.0
        %4085 = vst.msk [vmem:[#allocation5 + $0x208] sm:$0x3f] %vm4021, 0.0
        %v4086 = vsel %vm439, %v3987, 0.0
        %4087 = vadd.xlane.f32.xlu0 %v4086
        %v4088 = vpop.xlane.xlu0 %4087
        %v4089 = vsel %vm439, %v3988, 0.0
        %4090 = vadd.xlane.f32.xlu0 %v4089
        %v4091 = vpop.xlane.xlu0 %4090
        %v4092 = vsel %vm439, %v3989, 0.0
        %4093 = vadd.xlane.f32.xlu0 %v4092
        %v4094 = vpop.xlane.xlu0 %4093
        %v4095 = vsel %vm439, %v3990, 0.0
        %4096 = vadd.xlane.f32.xlu0 %v4095
        %v4097 = vpop.xlane.xlu0 %4096
        %v4098 = vsel %vm439, %v3991, 0.0
        %4099 = vadd.xlane.f32.xlu0 %v4098
        %v4100 = vpop.xlane.xlu0 %4099
        %v4101 = vsel %vm439, %v3992, 0.0
        %4102 = vadd.xlane.f32.xlu0 %v4101
        %v4103 = vpop.xlane.xlu0 %4102
        %v4104 = vsel %vm439, %v3993, 0.0
        %4105 = vadd.xlane.f32.xlu0 %v4104
        %v4106 = vpop.xlane.xlu0 %4105
        %v4107 = vsel %vm439, %v3994, 0.0
        %4108 = vadd.xlane.f32.xlu0 %v4107
        %v4109 = vpop.xlane.xlu0 %4108
        %v4110 = vsel %vm439, %v3995, 0.0
        %4111 = vadd.xlane.f32.xlu0 %v4110
        %v4112 = vpop.xlane.xlu0 %4111
        %v4113 = vsel %vm439, %v3996, 0.0
        %4114 = vadd.xlane.f32.xlu0 %v4113
        %v4115 = vpop.xlane.xlu0 %4114
        %v4116 = vsel %vm439, %v3997, 0.0
        %4117 = vadd.xlane.f32.xlu0 %v4116
        %v4118 = vpop.xlane.xlu0 %4117
        %v4119 = vsel %vm439, %v3998, 0.0
        %4120 = vadd.xlane.f32.xlu0 %v4119
        %v4121 = vpop.xlane.xlu0 %4120
        %v4122 = vsel %vm439, %v3999, 0.0
        %4123 = vadd.xlane.f32.xlu0 %v4122
        %v4124 = vpop.xlane.xlu0 %4123
        %v4125 = vsel %vm439, %v4000, 0.0
        %4126 = vadd.xlane.f32.xlu0 %v4125
        %v4127 = vpop.xlane.xlu0 %4126
        %v4128 = vsel %vm439, %v4001, 0.0
        %4129 = vadd.xlane.f32.xlu0 %v4128
        %v4130 = vpop.xlane.xlu0 %4129
        %v4131 = vsel %vm439, %v4002, 0.0
        %4132 = vadd.xlane.f32.xlu0 %v4131
        %v4133 = vpop.xlane.xlu0 %4132
        %v4134 = vsel %vm439, %v4003, 0.0
        %4135 = vadd.xlane.f32.xlu0 %v4134
        %v4136 = vpop.xlane.xlu0 %4135
        %v4137 = vsel %vm439, %v4004, 0.0
        %4138 = vadd.xlane.f32.xlu0 %v4137
        %v4139 = vpop.xlane.xlu0 %4138
        %v4140 = vsel %vm439, %v4005, 0.0
        %4141 = vadd.xlane.f32.xlu0 %v4140
        %v4142 = vpop.xlane.xlu0 %4141
        %v4143 = vsel %vm439, %v4006, 0.0
        %4144 = vadd.xlane.f32.xlu0 %v4143
        %v4145 = vpop.xlane.xlu0 %4144
        %v4146 = vsel %vm439, %v4007, 0.0
        %4147 = vadd.xlane.f32.xlu0 %v4146
        %v4148 = vpop.xlane.xlu0 %4147
        %v4149 = vsel %vm439, %v4008, 0.0
        %4150 = vadd.xlane.f32.xlu0 %v4149
        %v4151 = vpop.xlane.xlu0 %4150
        %v4152 = vsel %vm439, %v4009, 0.0
        %4153 = vadd.xlane.f32.xlu0 %v4152
        %v4154 = vpop.xlane.xlu0 %4153
        %v4155 = vsel %vm439, %v4010, 0.0
        %4156 = vadd.xlane.f32.xlu0 %v4155
        %v4157 = vpop.xlane.xlu0 %4156
        %v4158 = vsel %vm439, %v4011, 0.0
        %4159 = vadd.xlane.f32.xlu0 %v4158
        %v4160 = vpop.xlane.xlu0 %4159
        %v4161 = vsel %vm439, %v4012, 0.0
        %4162 = vadd.xlane.f32.xlu0 %v4161
        %v4163 = vpop.xlane.xlu0 %4162
        %v4164 = vsel %vm439, %v4013, 0.0
        %4165 = vadd.xlane.f32.xlu0 %v4164
        %v4166 = vpop.xlane.xlu0 %4165
        %v4167 = vsel %vm439, %v4014, 0.0
        %4168 = vadd.xlane.f32.xlu0 %v4167
        %v4169 = vpop.xlane.xlu0 %4168
        %v4170 = vsel %vm439, %v4015, 0.0
        %4171 = vadd.xlane.f32.xlu0 %v4170
        %v4172 = vpop.xlane.xlu0 %4171
        %v4173 = vsel %vm439, %v4016, 0.0
        %4174 = vadd.xlane.f32.xlu0 %v4173
        %v4175 = vpop.xlane.xlu0 %4174
        %v4176 = vsel %vm439, %v4017, 0.0
        %4177 = vadd.xlane.f32.xlu0 %v4176
        %v4178 = vpop.xlane.xlu0 %4177
        %v4179 = vsel %vm439, %v4018, 0.0
        %4180 = vadd.xlane.f32.xlu0 %v4179
        %v4181 = vpop.xlane.xlu0 %4180
        %v4182 = vmul.f32 %v4088, 0.03125
        %v4183 = vmul.f32 %v4091, 0.03125
        %v4184 = vmul.f32 %v4094, 0.03125
        %v4185 = vmul.f32 %v4097, 0.03125
        %v4186 = vmul.f32 %v4100, 0.03125
        %v4187 = vmul.f32 %v4103, 0.03125
        %v4188 = vmul.f32 %v4106, 0.03125
        %v4189 = vmul.f32 %v4109, 0.03125
        %v4190 = vmul.f32 %v4112, 0.03125
        %v4191 = vmul.f32 %v4115, 0.03125
        %v4192 = vmul.f32 %v4118, 0.03125
        %v4193 = vmul.f32 %v4121, 0.03125
        %v4194 = vmul.f32 %v4124, 0.03125
        %v4195 = vmul.f32 %v4127, 0.03125
        %v4196 = vmul.f32 %v4130, 0.03125
        %v4197 = vmul.f32 %v4133, 0.03125
        %v4198 = vmul.f32 %v4136, 0.03125
        %v4199 = vmul.f32 %v4139, 0.03125
        %v4200 = vmul.f32 %v4142, 0.03125
        %v4201 = vmul.f32 %v4145, 0.03125
        %v4202 = vmul.f32 %v4148, 0.03125
        %v4203 = vmul.f32 %v4151, 0.03125
        %v4204 = vmul.f32 %v4154, 0.03125
        %v4205 = vmul.f32 %v4157, 0.03125
        %v4206 = vmul.f32 %v4160, 0.03125
        %v4207 = vmul.f32 %v4163, 0.03125
        %v4208 = vmul.f32 %v4166, 0.03125
        %v4209 = vmul.f32 %v4169, 0.03125
        %v4210 = vmul.f32 %v4172, 0.03125
        %v4211 = vmul.f32 %v4175, 0.03125
        %v4212 = vmul.f32 %v4178, 0.03125
        %v4213 = vmul.f32 %v4181, 0.03125
        %s4214 = scalar_lea.vmem [#allocation5], 72
        %vm4215 = vcmask 7168
        %4216 = vst.msk [vmem:[%s4214 + $0x3] sm:$0xff] %vm4215, %v4182
        %4217 = vst.msk [vmem:[%s4214 + $0xb] sm:$0xff] %vm4215, %v4183
        %4218 = vst.msk [vmem:[%s4214 + $0x1b] sm:$0xff] %vm4215, %v4184
        %4219 = vst.msk [vmem:[%s4214 + $0x23] sm:$0xff] %vm4215, %v4185
        %4220 = vst.msk [vmem:[%s4214 + $0x33] sm:$0xff] %vm4215, %v4186
        %4221 = vst.msk [vmem:[%s4214 + $0x3b] sm:$0xff] %vm4215, %v4187
        %4222 = vst.msk [vmem:[%s4214 + $0x4b] sm:$0xff] %vm4215, %v4188
        %4223 = vst.msk [vmem:[%s4214 + $0x53] sm:$0xff] %vm4215, %v4189
        %4224 = vst.msk [vmem:[%s4214 + $0x63] sm:$0xff] %vm4215, %v4190
        %4225 = vst.msk [vmem:[%s4214 + $0x6b] sm:$0xff] %vm4215, %v4191
        %4226 = vst.msk [vmem:[%s4214 + $0x7b] sm:$0xff] %vm4215, %v4192
        %4227 = vst.msk [vmem:[%s4214 + $0x83] sm:$0xff] %vm4215, %v4193
        %4228 = vst.msk [vmem:[%s4214 + $0x93] sm:$0xff] %vm4215, %v4194
        %4229 = vst.msk [vmem:[%s4214 + $0x9b] sm:$0xff] %vm4215, %v4195
        %4230 = vst.msk [vmem:[%s4214 + $0xab] sm:$0xff] %vm4215, %v4196
        %4231 = vst.msk [vmem:[%s4214 + $0xb3] sm:$0xff] %vm4215, %v4197
        %4232 = vst.msk [vmem:[%s4214 + $0xc3] sm:$0xff] %vm4215, %v4198
        %4233 = vst.msk [vmem:[%s4214 + $0xcb] sm:$0xff] %vm4215, %v4199
        %4234 = vst.msk [vmem:[%s4214 + $0xdb] sm:$0xff] %vm4215, %v4200
        %4235 = vst.msk [vmem:[%s4214 + $0xe3] sm:$0xff] %vm4215, %v4201
        %4236 = vst.msk [vmem:[%s4214 + $0xf3] sm:$0xff] %vm4215, %v4202
        %4237 = vst.msk [vmem:[%s4214 + $0xfb] sm:$0xff] %vm4215, %v4203
        %4238 = vst.msk [vmem:[%s4214 + $0x10b] sm:$0xff] %vm4215, %v4204
        %4239 = vst.msk [vmem:[%s4214 + $0x113] sm:$0xff] %vm4215, %v4205
        %4240 = vst.msk [vmem:[%s4214 + $0x123] sm:$0xff] %vm4215, %v4206
        %4241 = vst.msk [vmem:[%s4214 + $0x12b] sm:$0xff] %vm4215, %v4207
        %4242 = vst.msk [vmem:[%s4214 + $0x13b] sm:$0xff] %vm4215, %v4208
        %4243 = vst.msk [vmem:[%s4214 + $0x143] sm:$0xff] %vm4215, %v4209
        %4244 = vst.msk [vmem:[%s4214 + $0x153] sm:$0xff] %vm4215, %v4210
        %4245 = vst.msk [vmem:[%s4214 + $0x15b] sm:$0xff] %vm4215, %v4211
        %4246 = vst.msk [vmem:[%s4214 + $0x16b] sm:$0xff] %vm4215, %v4212
        %4247 = vst.msk [vmem:[%s4214 + $0x173] sm:$0xff] %vm4215, %v4213
        %v4248 = vsel %vm439, %v3987, -inf
        %4249 = vmax.xlane.f32.xlu0 %v4248
        %v4250 = vpop.xlane.xlu0 %4249
        %v4251 = vsel %vm439, %v3988, -inf
        %4252 = vmax.xlane.f32.xlu0 %v4251
        %v4253 = vpop.xlane.xlu0 %4252
        %v4254 = vsel %vm439, %v3989, -inf
        %4255 = vmax.xlane.f32.xlu0 %v4254
        %v4256 = vpop.xlane.xlu0 %4255
        %v4257 = vsel %vm439, %v3990, -inf
        %4258 = vmax.xlane.f32.xlu0 %v4257
        %v4259 = vpop.xlane.xlu0 %4258
        %v4260 = vsel %vm439, %v3991, -inf
        %4261 = vmax.xlane.f32.xlu0 %v4260
        %v4262 = vpop.xlane.xlu0 %4261
        %v4263 = vsel %vm439, %v3992, -inf
        %4264 = vmax.xlane.f32.xlu0 %v4263
        %v4265 = vpop.xlane.xlu0 %4264
        %v4266 = vsel %vm439, %v3993, -inf
        %4267 = vmax.xlane.f32.xlu0 %v4266
        %v4268 = vpop.xlane.xlu0 %4267
        %v4269 = vsel %vm439, %v3994, -inf
        %4270 = vmax.xlane.f32.xlu0 %v4269
        %v4271 = vpop.xlane.xlu0 %4270
        %v4272 = vsel %vm439, %v3995, -inf
        %4273 = vmax.xlane.f32.xlu0 %v4272
        %v4274 = vpop.xlane.xlu0 %4273
        %v4275 = vsel %vm439, %v3996, -inf
        %4276 = vmax.xlane.f32.xlu0 %v4275
        %v4277 = vpop.xlane.xlu0 %4276
        %v4278 = vsel %vm439, %v3997, -inf
        %4279 = vmax.xlane.f32.xlu0 %v4278
        %v4280 = vpop.xlane.xlu0 %4279
        %v4281 = vsel %vm439, %v3998, -inf
        %4282 = vmax.xlane.f32.xlu0 %v4281
        %v4283 = vpop.xlane.xlu0 %4282
        %v4284 = vsel %vm439, %v3999, -inf
        %4285 = vmax.xlane.f32.xlu0 %v4284
        %v4286 = vpop.xlane.xlu0 %4285
        %v4287 = vsel %vm439, %v4000, -inf
        %4288 = vmax.xlane.f32.xlu0 %v4287
        %v4289 = vpop.xlane.xlu0 %4288
        %v4290 = vsel %vm439, %v4001, -inf
        %4291 = vmax.xlane.f32.xlu0 %v4290
        %v4292 = vpop.xlane.xlu0 %4291
        %v4293 = vsel %vm439, %v4002, -inf
        %4294 = vmax.xlane.f32.xlu0 %v4293
        %v4295 = vpop.xlane.xlu0 %4294
        %v4296 = vsel %vm439, %v4003, -inf
        %4297 = vmax.xlane.f32.xlu0 %v4296
        %v4298 = vpop.xlane.xlu0 %4297
        %v4299 = vsel %vm439, %v4004, -inf
        %4300 = vmax.xlane.f32.xlu0 %v4299
        %v4301 = vpop.xlane.xlu0 %4300
        %v4302 = vsel %vm439, %v4005, -inf
        %4303 = vmax.xlane.f32.xlu0 %v4302
        %v4304 = vpop.xlane.xlu0 %4303
        %v4305 = vsel %vm439, %v4006, -inf
        %4306 = vmax.xlane.f32.xlu0 %v4305
        %v4307 = vpop.xlane.xlu0 %4306
        %v4308 = vsel %vm439, %v4007, -inf
        %4309 = vmax.xlane.f32.xlu0 %v4308
        %v4310 = vpop.xlane.xlu0 %4309
        %v4311 = vsel %vm439, %v4008, -inf
        %4312 = vmax.xlane.f32.xlu0 %v4311
        %v4313 = vpop.xlane.xlu0 %4312
        %v4314 = vsel %vm439, %v4009, -inf
        %4315 = vmax.xlane.f32.xlu0 %v4314
        %v4316 = vpop.xlane.xlu0 %4315
        %v4317 = vsel %vm439, %v4010, -inf
        %4318 = vmax.xlane.f32.xlu0 %v4317
        %v4319 = vpop.xlane.xlu0 %4318
        %v4320 = vsel %vm439, %v4011, -inf
        %4321 = vmax.xlane.f32.xlu0 %v4320
        %v4322 = vpop.xlane.xlu0 %4321
        %v4323 = vsel %vm439, %v4012, -inf
        %4324 = vmax.xlane.f32.xlu0 %v4323
        %v4325 = vpop.xlane.xlu0 %4324
        %v4326 = vsel %vm439, %v4013, -inf
        %4327 = vmax.xlane.f32.xlu0 %v4326
        %v4328 = vpop.xlane.xlu0 %4327
        %v4329 = vsel %vm439, %v4014, -inf
        %4330 = vmax.xlane.f32.xlu0 %v4329
        %v4331 = vpop.xlane.xlu0 %4330
        %v4332 = vsel %vm439, %v4015, -inf
        %4333 = vmax.xlane.f32.xlu0 %v4332
        %v4334 = vpop.xlane.xlu0 %4333
        %v4335 = vsel %vm439, %v4016, -inf
        %4336 = vmax.xlane.f32.xlu0 %v4335
        %v4337 = vpop.xlane.xlu0 %4336
        %v4338 = vsel %vm439, %v4017, -inf
        %4339 = vmax.xlane.f32.xlu0 %v4338
        %v4340 = vpop.xlane.xlu0 %4339
        %v4341 = vsel %vm439, %v4018, -inf
        %4342 = vmax.xlane.f32.xlu0 %v4341
        %v4343 = vpop.xlane.xlu0 %4342
        %vm4344 = vcmask 15368
        %4345 = vst.msk [vmem:[%s4214 + $0x3] sm:$0xff] %vm4344, %v4250
        %4346 = vst.msk [vmem:[%s4214 + $0xb] sm:$0xff] %vm4344, %v4253
        %4347 = vst.msk [vmem:[%s4214 + $0x1b] sm:$0xff] %vm4344, %v4256
        %4348 = vst.msk [vmem:[%s4214 + $0x23] sm:$0xff] %vm4344, %v4259
        %4349 = vst.msk [vmem:[%s4214 + $0x33] sm:$0xff] %vm4344, %v4262
        %4350 = vst.msk [vmem:[%s4214 + $0x3b] sm:$0xff] %vm4344, %v4265
        %4351 = vst.msk [vmem:[%s4214 + $0x4b] sm:$0xff] %vm4344, %v4268
        %4352 = vst.msk [vmem:[%s4214 + $0x53] sm:$0xff] %vm4344, %v4271
        %4353 = vst.msk [vmem:[%s4214 + $0x63] sm:$0xff] %vm4344, %v4274
        %4354 = vst.msk [vmem:[%s4214 + $0x6b] sm:$0xff] %vm4344, %v4277
        %4355 = vst.msk [vmem:[%s4214 + $0x7b] sm:$0xff] %vm4344, %v4280
        %4356 = vst.msk [vmem:[%s4214 + $0x83] sm:$0xff] %vm4344, %v4283
        %4357 = vst.msk [vmem:[%s4214 + $0x93] sm:$0xff] %vm4344, %v4286
        %4358 = vst.msk [vmem:[%s4214 + $0x9b] sm:$0xff] %vm4344, %v4289
        %4359 = vst.msk [vmem:[%s4214 + $0xab] sm:$0xff] %vm4344, %v4292
        %4360 = vst.msk [vmem:[%s4214 + $0xb3] sm:$0xff] %vm4344, %v4295
        %4361 = vst.msk [vmem:[%s4214 + $0xc3] sm:$0xff] %vm4344, %v4298
        %4362 = vst.msk [vmem:[%s4214 + $0xcb] sm:$0xff] %vm4344, %v4301
        %4363 = vst.msk [vmem:[%s4214 + $0xdb] sm:$0xff] %vm4344, %v4304
        %4364 = vst.msk [vmem:[%s4214 + $0xe3] sm:$0xff] %vm4344, %v4307
        %4365 = vst.msk [vmem:[%s4214 + $0xf3] sm:$0xff] %vm4344, %v4310
        %4366 = vst.msk [vmem:[%s4214 + $0xfb] sm:$0xff] %vm4344, %v4313
        %4367 = vst.msk [vmem:[%s4214 + $0x10b] sm:$0xff] %vm4344, %v4316
        %4368 = vst.msk [vmem:[%s4214 + $0x113] sm:$0xff] %vm4344, %v4319
        %4369 = vst.msk [vmem:[%s4214 + $0x123] sm:$0xff] %vm4344, %v4322
        %4370 = vst.msk [vmem:[%s4214 + $0x12b] sm:$0xff] %vm4344, %v4325
        %4371 = vst.msk [vmem:[%s4214 + $0x13b] sm:$0xff] %vm4344, %v4328
        %4372 = vst.msk [vmem:[%s4214 + $0x143] sm:$0xff] %vm4344, %v4331
        %4373 = vst.msk [vmem:[%s4214 + $0x153] sm:$0xff] %vm4344, %v4334
        %4374 = vst.msk [vmem:[%s4214 + $0x15b] sm:$0xff] %vm4344, %v4337
        %4375 = vst.msk [vmem:[%s4214 + $0x16b] sm:$0xff] %vm4344, %v4340
        %4376 = vst.msk [vmem:[%s4214 + $0x173] sm:$0xff] %vm4344, %v4343
        %v4377 = vld [vmem:[%s12] sm:$0xff]
        %v4378 = vld [vmem:[%s12 + $0x8] sm:$0xff]
        %v4379 = vld [vmem:[%s12 + $0x10] sm:$0xff]
        %v4380 = vld [vmem:[%s12 + $0x18] sm:$0xff]
        %v4381 = vld [vmem:[%s12 + $0x20] sm:$0xff]
        %v4382 = vld [vmem:[%s12 + $0x28] sm:$0xff]
        %v4383 = vld [vmem:[%s12 + $0x30] sm:$0x1]
        %v4384 = vld [vmem:[#allocation5] sm:$0xff]
        %v4385 = vld [vmem:[#allocation5 + $0x8] sm:$0xff]
        %v4386 = vld [vmem:[#allocation5 + $0x18] sm:$0xff]
        %v4387 = vld [vmem:[#allocation5 + $0x20] sm:$0xff]
        %v4388 = vld [vmem:[#allocation5 + $0x30] sm:$0xff]
        %v4389 = vld [vmem:[#allocation5 + $0x38] sm:$0xff]
        %v4390 = vld [vmem:[#allocation5 + $0x48] sm:$0xff]
        %v4391 = vld [vmem:[#allocation5 + $0x50] sm:$0xff]
        %v4392 = vld [vmem:[#allocation5 + $0x60] sm:$0xff]
        %v4393 = vld [vmem:[#allocation5 + $0x68] sm:$0xff]
        %v4394 = vld [vmem:[#allocation5 + $0x78] sm:$0xff]
        %v4395 = vld [vmem:[#allocation5 + $0x80] sm:$0xff]
        %v4396 = vld [vmem:[#allocation5 + $0x90] sm:$0xff]
        %v4397 = vld [vmem:[#allocation5 + $0x98] sm:$0xff]
        %v4398 = vld [vmem:[#allocation5 + $0xa8] sm:$0xff]
        %v4399 = vld [vmem:[#allocation5 + $0xb0] sm:$0xff]
        %v4400 = vld [vmem:[#allocation5 + $0xc0] sm:$0xff]
        %v4401 = vld [vmem:[#allocation5 + $0xc8] sm:$0xff]
        %v4402 = vld [vmem:[#allocation5 + $0xd8] sm:$0xff]
        %v4403 = vld [vmem:[#allocation5 + $0xe0] sm:$0xff]
        %v4404 = vld [vmem:[#allocation5 + $0xf0] sm:$0xff]
        %v4405 = vld [vmem:[#allocation5 + $0xf8] sm:$0xff]
        %v4406 = vld [vmem:[#allocation5 + $0x108] sm:$0xff]
        %v4407 = vld [vmem:[#allocation5 + $0x110] sm:$0xff]
        %v4408 = vld [vmem:[#allocation5 + $0x120] sm:$0xff]
        %v4409 = vld [vmem:[#allocation5 + $0x128] sm:$0xff]
        %v4410 = vld [vmem:[#allocation5 + $0x138] sm:$0xff]
        %v4411 = vld [vmem:[#allocation5 + $0x140] sm:$0xff]
        %v4412 = vld [vmem:[#allocation5 + $0x150] sm:$0xff]
        %v4413 = vld [vmem:[#allocation5 + $0x158] sm:$0xff]
        %v4414 = vld [vmem:[#allocation5 + $0x168] sm:$0xff]
        %v4415 = vld [vmem:[#allocation5 + $0x170] sm:$0xff]
        %v4416 = vld [vmem:[#allocation5 + $0x180] sm:$0xff]
        %v4417 = vld [vmem:[#allocation5 + $0x188] sm:$0xff]
        %v4418 = vld [vmem:[#allocation5 + $0x198] sm:$0xff]
        %v4419 = vld [vmem:[#allocation5 + $0x1a0] sm:$0xff]
        %v4420 = vld [vmem:[#allocation5 + $0x1b0] sm:$0xff]
        %v4421 = vld [vmem:[#allocation5 + $0x1b8] sm:$0xff]
        %v4422 = vld [vmem:[#allocation5 + $0x1c8] sm:$0xff]
        %v4423 = vld [vmem:[#allocation5 + $0x1d0] sm:$0xff]
        %v4424 = vld [vmem:[#allocation5 + $0x1e0] sm:$0xff]
        %v4425 = vld [vmem:[#allocation5 + $0x1e8] sm:$0xff]
        %v4426 = vld [vmem:[#allocation5 + $0x1f8] sm:$0xff]
        %v4427 = vld [vmem:[#allocation5 + $0x200] sm:$0xff]
        %v4428 = vlaneseq
        %v4429 = vshrl.u32 %v4428, 7
        %v4430 = vsub.s32 0, %v4429
        %v4431 = vrot.slane %v4377, %v4430
        %v4432 = vmul.f32 %v4384, %v4431
        %v4433 = vmul.f32 %v4385, %v4431
        %v4434 = vmul.f32 %v4386, %v4431
        %v4435 = vmul.f32 %v4387, %v4431
        %v4436 = vmul.f32 %v4388, %v4431
        %v4437 = vmul.f32 %v4389, %v4431
        %v4438 = vmul.f32 %v4390, %v4431
        %v4439 = vmul.f32 %v4391, %v4431
        %v4440 = vmul.f32 %v4392, %v4431
        %v4441 = vmul.f32 %v4393, %v4431
        %v4442 = vmul.f32 %v4394, %v4431
        %v4443 = vmul.f32 %v4395, %v4431
        %v4444 = vmul.f32 %v4396, %v4431
        %v4445 = vmul.f32 %v4397, %v4431
        %v4446 = vmul.f32 %v4398, %v4431
        %v4447 = vmul.f32 %v4399, %v4431
        %v4448 = vmul.f32 %v4400, %v4431
        %v4449 = vmul.f32 %v4401, %v4431
        %v4450 = vmul.f32 %v4402, %v4431
        %v4451 = vmul.f32 %v4403, %v4431
        %v4452 = vmul.f32 %v4404, %v4431
        %v4453 = vmul.f32 %v4405, %v4431
        %v4454 = vmul.f32 %v4406, %v4431
        %v4455 = vmul.f32 %v4407, %v4431
        %v4456 = vmul.f32 %v4408, %v4431
        %v4457 = vmul.f32 %v4409, %v4431
        %v4458 = vmul.f32 %v4410, %v4431
        %v4459 = vmul.f32 %v4411, %v4431
        %v4460 = vmul.f32 %v4412, %v4431
        %v4461 = vmul.f32 %v4413, %v4431
        %v4462 = vmul.f32 %v4414, %v4431
        %v4463 = vmul.f32 %v4415, %v4431
        %v4464 = vlaneseq
        %v4465 = vshrl.u32 %v4464, 7
        %v4466 = vsub.s32 7, %v4465
        %v4467 = vrot.slane %v4377, %v4466
        %v4468 = vmul.f32 %v4386, %v4467
        %v4469 = vmul.f32 %v4387, %v4467
        %v4470 = vmul.f32 %v4388, %v4467
        %v4471 = vmul.f32 %v4389, %v4467
        %v4472 = vmul.f32 %v4390, %v4467
        %v4473 = vmul.f32 %v4391, %v4467
        %v4474 = vmul.f32 %v4392, %v4467
        %v4475 = vmul.f32 %v4393, %v4467
        %v4476 = vmul.f32 %v4394, %v4467
        %v4477 = vmul.f32 %v4395, %v4467
        %v4478 = vmul.f32 %v4396, %v4467
        %v4479 = vmul.f32 %v4397, %v4467
        %v4480 = vmul.f32 %v4398, %v4467
        %v4481 = vmul.f32 %v4399, %v4467
        %v4482 = vmul.f32 %v4400, %v4467
        %v4483 = vmul.f32 %v4401, %v4467
        %v4484 = vmul.f32 %v4402, %v4467
        %v4485 = vmul.f32 %v4403, %v4467
        %v4486 = vmul.f32 %v4404, %v4467
        %v4487 = vmul.f32 %v4405, %v4467
        %v4488 = vmul.f32 %v4406, %v4467
        %v4489 = vmul.f32 %v4407, %v4467
        %v4490 = vmul.f32 %v4408, %v4467
        %v4491 = vmul.f32 %v4409, %v4467
        %v4492 = vmul.f32 %v4410, %v4467
        %v4493 = vmul.f32 %v4411, %v4467
        %v4494 = vmul.f32 %v4412, %v4467
        %v4495 = vmul.f32 %v4413, %v4467
        %v4496 = vmul.f32 %v4414, %v4467
        %v4497 = vmul.f32 %v4415, %v4467
        %v4498 = vmul.f32 %v4416, %v4467
        %v4499 = vmul.f32 %v4417, %v4467
        %v4500 = vadd.f32 %v4432, %v4468
        %v4501 = vadd.f32 %v4433, %v4469
        %v4502 = vadd.f32 %v4434, %v4470
        %v4503 = vadd.f32 %v4435, %v4471
        %v4504 = vadd.f32 %v4436, %v4472
        %v4505 = vadd.f32 %v4437, %v4473
        %v4506 = vadd.f32 %v4438, %v4474
        %v4507 = vadd.f32 %v4439, %v4475
        %v4508 = vadd.f32 %v4440, %v4476
        %v4509 = vadd.f32 %v4441, %v4477
        %v4510 = vadd.f32 %v4442, %v4478
        %v4511 = vadd.f32 %v4443, %v4479
        %v4512 = vadd.f32 %v4444, %v4480
        %v4513 = vadd.f32 %v4445, %v4481
        %v4514 = vadd.f32 %v4446, %v4482
        %v4515 = vadd.f32 %v4447, %v4483
        %v4516 = vadd.f32 %v4448, %v4484
        %v4517 = vadd.f32 %v4449, %v4485
        %v4518 = vadd.f32 %v4450, %v4486
        %v4519 = vadd.f32 %v4451, %v4487
        %v4520 = vadd.f32 %v4452, %v4488
        %v4521 = vadd.f32 %v4453, %v4489
        %v4522 = vadd.f32 %v4454, %v4490
        %v4523 = vadd.f32 %v4455, %v4491
        %v4524 = vadd.f32 %v4456, %v4492
        %v4525 = vadd.f32 %v4457, %v4493
        %v4526 = vadd.f32 %v4458, %v4494
        %v4527 = vadd.f32 %v4459, %v4495
        %v4528 = vadd.f32 %v4460, %v4496
        %v4529 = vadd.f32 %v4461, %v4497
        %v4530 = vadd.f32 %v4462, %v4498
        %v4531 = vadd.f32 %v4463, %v4499
        %v4532 = vlaneseq
        %v4533 = vshrl.u32 %v4532, 7
        %v4534 = vsub.s32 6, %v4533
        %v4535 = vrot.slane %v4378, %v4534
        %v4536 = vmul.f32 %v4388, %v4535
        %v4537 = vmul.f32 %v4389, %v4535
        %v4538 = vmul.f32 %v4390, %v4535
        %v4539 = vmul.f32 %v4391, %v4535
        %v4540 = vmul.f32 %v4392, %v4535
        %v4541 = vmul.f32 %v4393, %v4535
        %v4542 = vmul.f32 %v4394, %v4535
        %v4543 = vmul.f32 %v4395, %v4535
        %v4544 = vmul.f32 %v4396, %v4535
        %v4545 = vmul.f32 %v4397, %v4535
        %v4546 = vmul.f32 %v4398, %v4535
        %v4547 = vmul.f32 %v4399, %v4535
        %v4548 = vmul.f32 %v4400, %v4535
        %v4549 = vmul.f32 %v4401, %v4535
        %v4550 = vmul.f32 %v4402, %v4535
        %v4551 = vmul.f32 %v4403, %v4535
        %v4552 = vmul.f32 %v4404, %v4535
        %v4553 = vmul.f32 %v4405, %v4535
        %v4554 = vmul.f32 %v4406, %v4535
        %v4555 = vmul.f32 %v4407, %v4535
        %v4556 = vmul.f32 %v4408, %v4535
        %v4557 = vmul.f32 %v4409, %v4535
        %v4558 = vmul.f32 %v4410, %v4535
        %v4559 = vmul.f32 %v4411, %v4535
        %v4560 = vmul.f32 %v4412, %v4535
        %v4561 = vmul.f32 %v4413, %v4535
        %v4562 = vmul.f32 %v4414, %v4535
        %v4563 = vmul.f32 %v4415, %v4535
        %v4564 = vmul.f32 %v4416, %v4535
        %v4565 = vmul.f32 %v4417, %v4535
        %v4566 = vmul.f32 %v4418, %v4535
        %v4567 = vmul.f32 %v4419, %v4535
        %v4568 = vadd.f32 %v4500, %v4536
        %v4569 = vadd.f32 %v4501, %v4537
        %v4570 = vadd.f32 %v4502, %v4538
        %v4571 = vadd.f32 %v4503, %v4539
        %v4572 = vadd.f32 %v4504, %v4540
        %v4573 = vadd.f32 %v4505, %v4541
        %v4574 = vadd.f32 %v4506, %v4542
        %v4575 = vadd.f32 %v4507, %v4543
        %v4576 = vadd.f32 %v4508, %v4544
        %v4577 = vadd.f32 %v4509, %v4545
        %v4578 = vadd.f32 %v4510, %v4546
        %v4579 = vadd.f32 %v4511, %v4547
        %v4580 = vadd.f32 %v4512, %v4548
        %v4581 = vadd.f32 %v4513, %v4549
        %v4582 = vadd.f32 %v4514, %v4550
        %v4583 = vadd.f32 %v4515, %v4551
        %v4584 = vadd.f32 %v4516, %v4552
        %v4585 = vadd.f32 %v4517, %v4553
        %v4586 = vadd.f32 %v4518, %v4554
        %v4587 = vadd.f32 %v4519, %v4555
        %v4588 = vadd.f32 %v4520, %v4556
        %v4589 = vadd.f32 %v4521, %v4557
        %v4590 = vadd.f32 %v4522, %v4558
        %v4591 = vadd.f32 %v4523, %v4559
        %v4592 = vadd.f32 %v4524, %v4560
        %v4593 = vadd.f32 %v4525, %v4561
        %v4594 = vadd.f32 %v4526, %v4562
        %v4595 = vadd.f32 %v4527, %v4563
        %v4596 = vadd.f32 %v4528, %v4564
        %v4597 = vadd.f32 %v4529, %v4565
        %v4598 = vadd.f32 %v4530, %v4566
        %v4599 = vadd.f32 %v4531, %v4567
        %v4600 = vlaneseq
        %v4601 = vshrl.u32 %v4600, 7
        %v4602 = vsub.s32 5, %v4601
        %v4603 = vrot.slane %v4379, %v4602
        %v4604 = vmul.f32 %v4390, %v4603
        %v4605 = vmul.f32 %v4391, %v4603
        %v4606 = vmul.f32 %v4392, %v4603
        %v4607 = vmul.f32 %v4393, %v4603
        %v4608 = vmul.f32 %v4394, %v4603
        %v4609 = vmul.f32 %v4395, %v4603
        %v4610 = vmul.f32 %v4396, %v4603
        %v4611 = vmul.f32 %v4397, %v4603
        %v4612 = vmul.f32 %v4398, %v4603
        %v4613 = vmul.f32 %v4399, %v4603
        %v4614 = vmul.f32 %v4400, %v4603
        %v4615 = vmul.f32 %v4401, %v4603
        %v4616 = vmul.f32 %v4402, %v4603
        %v4617 = vmul.f32 %v4403, %v4603
        %v4618 = vmul.f32 %v4404, %v4603
        %v4619 = vmul.f32 %v4405, %v4603
        %v4620 = vmul.f32 %v4406, %v4603
        %v4621 = vmul.f32 %v4407, %v4603
        %v4622 = vmul.f32 %v4408, %v4603
        %v4623 = vmul.f32 %v4409, %v4603
        %v4624 = vmul.f32 %v4410, %v4603
        %v4625 = vmul.f32 %v4411, %v4603
        %v4626 = vmul.f32 %v4412, %v4603
        %v4627 = vmul.f32 %v4413, %v4603
        %v4628 = vmul.f32 %v4414, %v4603
        %v4629 = vmul.f32 %v4415, %v4603
        %v4630 = vmul.f32 %v4416, %v4603
        %v4631 = vmul.f32 %v4417, %v4603
        %v4632 = vmul.f32 %v4418, %v4603
        %v4633 = vmul.f32 %v4419, %v4603
        %v4634 = vmul.f32 %v4420, %v4603
        %v4635 = vmul.f32 %v4421, %v4603
        %v4636 = vadd.f32 %v4568, %v4604
        %v4637 = vadd.f32 %v4569, %v4605
        %v4638 = vadd.f32 %v4570, %v4606
        %v4639 = vadd.f32 %v4571, %v4607
        %v4640 = vadd.f32 %v4572, %v4608
        %v4641 = vadd.f32 %v4573, %v4609
        %v4642 = vadd.f32 %v4574, %v4610
        %v4643 = vadd.f32 %v4575, %v4611
        %v4644 = vadd.f32 %v4576, %v4612
        %v4645 = vadd.f32 %v4577, %v4613
        %v4646 = vadd.f32 %v4578, %v4614
        %v4647 = vadd.f32 %v4579, %v4615
        %v4648 = vadd.f32 %v4580, %v4616
        %v4649 = vadd.f32 %v4581, %v4617
        %v4650 = vadd.f32 %v4582, %v4618
        %v4651 = vadd.f32 %v4583, %v4619
        %v4652 = vadd.f32 %v4584, %v4620
        %v4653 = vadd.f32 %v4585, %v4621
        %v4654 = vadd.f32 %v4586, %v4622
        %v4655 = vadd.f32 %v4587, %v4623
        %v4656 = vadd.f32 %v4588, %v4624
        %v4657 = vadd.f32 %v4589, %v4625
        %v4658 = vadd.f32 %v4590, %v4626
        %v4659 = vadd.f32 %v4591, %v4627
        %v4660 = vadd.f32 %v4592, %v4628
        %v4661 = vadd.f32 %v4593, %v4629
        %v4662 = vadd.f32 %v4594, %v4630
        %v4663 = vadd.f32 %v4595, %v4631
        %v4664 = vadd.f32 %v4596, %v4632
        %v4665 = vadd.f32 %v4597, %v4633
        %v4666 = vadd.f32 %v4598, %v4634
        %v4667 = vadd.f32 %v4599, %v4635
        %v4668 = vlaneseq
        %v4669 = vshrl.u32 %v4668, 7
        %v4670 = vsub.s32 4, %v4669
        %v4671 = vrot.slane %v4380, %v4670
        %v4672 = vmul.f32 %v4392, %v4671
        %v4673 = vmul.f32 %v4393, %v4671
        %v4674 = vmul.f32 %v4394, %v4671
        %v4675 = vmul.f32 %v4395, %v4671
        %v4676 = vmul.f32 %v4396, %v4671
        %v4677 = vmul.f32 %v4397, %v4671
        %v4678 = vmul.f32 %v4398, %v4671
        %v4679 = vmul.f32 %v4399, %v4671
        %v4680 = vmul.f32 %v4400, %v4671
        %v4681 = vmul.f32 %v4401, %v4671
        %v4682 = vmul.f32 %v4402, %v4671
        %v4683 = vmul.f32 %v4403, %v4671
        %v4684 = vmul.f32 %v4404, %v4671
        %v4685 = vmul.f32 %v4405, %v4671
        %v4686 = vmul.f32 %v4406, %v4671
        %v4687 = vmul.f32 %v4407, %v4671
        %v4688 = vmul.f32 %v4408, %v4671
        %v4689 = vmul.f32 %v4409, %v4671
        %v4690 = vmul.f32 %v4410, %v4671
        %v4691 = vmul.f32 %v4411, %v4671
        %v4692 = vmul.f32 %v4412, %v4671
        %v4693 = vmul.f32 %v4413, %v4671
        %v4694 = vmul.f32 %v4414, %v4671
        %v4695 = vmul.f32 %v4415, %v4671
        %v4696 = vmul.f32 %v4416, %v4671
        %v4697 = vmul.f32 %v4417, %v4671
        %v4698 = vmul.f32 %v4418, %v4671
        %v4699 = vmul.f32 %v4419, %v4671
        %v4700 = vmul.f32 %v4420, %v4671
        %v4701 = vmul.f32 %v4421, %v4671
        %v4702 = vmul.f32 %v4422, %v4671
        %v4703 = vmul.f32 %v4423, %v4671
        %v4704 = vadd.f32 %v4636, %v4672
        %v4705 = vadd.f32 %v4637, %v4673
        %v4706 = vadd.f32 %v4638, %v4674
        %v4707 = vadd.f32 %v4639, %v4675
        %v4708 = vadd.f32 %v4640, %v4676
        %v4709 = vadd.f32 %v4641, %v4677
        %v4710 = vadd.f32 %v4642, %v4678
        %v4711 = vadd.f32 %v4643, %v4679
        %v4712 = vadd.f32 %v4644, %v4680
        %v4713 = vadd.f32 %v4645, %v4681
        %v4714 = vadd.f32 %v4646, %v4682
        %v4715 = vadd.f32 %v4647, %v4683
        %v4716 = vadd.f32 %v4648, %v4684
        %v4717 = vadd.f32 %v4649, %v4685
        %v4718 = vadd.f32 %v4650, %v4686
        %v4719 = vadd.f32 %v4651, %v4687
        %v4720 = vadd.f32 %v4652, %v4688
        %v4721 = vadd.f32 %v4653, %v4689
        %v4722 = vadd.f32 %v4654, %v4690
        %v4723 = vadd.f32 %v4655, %v4691
        %v4724 = vadd.f32 %v4656, %v4692
        %v4725 = vadd.f32 %v4657, %v4693
        %v4726 = vadd.f32 %v4658, %v4694
        %v4727 = vadd.f32 %v4659, %v4695
        %v4728 = vadd.f32 %v4660, %v4696
        %v4729 = vadd.f32 %v4661, %v4697
        %v4730 = vadd.f32 %v4662, %v4698
        %v4731 = vadd.f32 %v4663, %v4699
        %v4732 = vadd.f32 %v4664, %v4700
        %v4733 = vadd.f32 %v4665, %v4701
        %v4734 = vadd.f32 %v4666, %v4702
        %v4735 = vadd.f32 %v4667, %v4703
        %v4736 = vlaneseq
        %v4737 = vshrl.u32 %v4736, 7
        %v4738 = vsub.s32 3, %v4737
        %v4739 = vrot.slane %v4381, %v4738
        %v4740 = vmul.f32 %v4394, %v4739
        %v4741 = vmul.f32 %v4395, %v4739
        %v4742 = vmul.f32 %v4396, %v4739
        %v4743 = vmul.f32 %v4397, %v4739
        %v4744 = vmul.f32 %v4398, %v4739
        %v4745 = vmul.f32 %v4399, %v4739
        %v4746 = vmul.f32 %v4400, %v4739
        %v4747 = vmul.f32 %v4401, %v4739
        %v4748 = vmul.f32 %v4402, %v4739
        %v4749 = vmul.f32 %v4403, %v4739
        %v4750 = vmul.f32 %v4404, %v4739
        %v4751 = vmul.f32 %v4405, %v4739
        %v4752 = vmul.f32 %v4406, %v4739
        %v4753 = vmul.f32 %v4407, %v4739
        %v4754 = vmul.f32 %v4408, %v4739
        %v4755 = vmul.f32 %v4409, %v4739
        %v4756 = vmul.f32 %v4410, %v4739
        %v4757 = vmul.f32 %v4411, %v4739
        %v4758 = vmul.f32 %v4412, %v4739
        %v4759 = vmul.f32 %v4413, %v4739
        %v4760 = vmul.f32 %v4414, %v4739
        %v4761 = vmul.f32 %v4415, %v4739
        %v4762 = vmul.f32 %v4416, %v4739
        %v4763 = vmul.f32 %v4417, %v4739
        %v4764 = vmul.f32 %v4418, %v4739
        %v4765 = vmul.f32 %v4419, %v4739
        %v4766 = vmul.f32 %v4420, %v4739
        %v4767 = vmul.f32 %v4421, %v4739
        %v4768 = vmul.f32 %v4422, %v4739
        %v4769 = vmul.f32 %v4423, %v4739
        %v4770 = vmul.f32 %v4424, %v4739
        %v4771 = vmul.f32 %v4425, %v4739
        %v4772 = vadd.f32 %v4704, %v4740
        %v4773 = vadd.f32 %v4705, %v4741
        %v4774 = vadd.f32 %v4706, %v4742
        %v4775 = vadd.f32 %v4707, %v4743
        %v4776 = vadd.f32 %v4708, %v4744
        %v4777 = vadd.f32 %v4709, %v4745
        %v4778 = vadd.f32 %v4710, %v4746
        %v4779 = vadd.f32 %v4711, %v4747
        %v4780 = vadd.f32 %v4712, %v4748
        %v4781 = vadd.f32 %v4713, %v4749
        %v4782 = vadd.f32 %v4714, %v4750
        %v4783 = vadd.f32 %v4715, %v4751
        %v4784 = vadd.f32 %v4716, %v4752
        %v4785 = vadd.f32 %v4717, %v4753
        %v4786 = vadd.f32 %v4718, %v4754
        %v4787 = vadd.f32 %v4719, %v4755
        %v4788 = vadd.f32 %v4720, %v4756
        %v4789 = vadd.f32 %v4721, %v4757
        %v4790 = vadd.f32 %v4722, %v4758
        %v4791 = vadd.f32 %v4723, %v4759
        %v4792 = vadd.f32 %v4724, %v4760
        %v4793 = vadd.f32 %v4725, %v4761
        %v4794 = vadd.f32 %v4726, %v4762
        %v4795 = vadd.f32 %v4727, %v4763
        %v4796 = vadd.f32 %v4728, %v4764
        %v4797 = vadd.f32 %v4729, %v4765
        %v4798 = vadd.f32 %v4730, %v4766
        %v4799 = vadd.f32 %v4731, %v4767
        %v4800 = vadd.f32 %v4732, %v4768
        %v4801 = vadd.f32 %v4733, %v4769
        %v4802 = vadd.f32 %v4734, %v4770
        %v4803 = vadd.f32 %v4735, %v4771
        %v4804 = vlaneseq
        %v4805 = vshrl.u32 %v4804, 7
        %v4806 = vsub.s32 2, %v4805
        %v4807 = vrot.slane %v4382, %v4806
        %v4808 = vmul.f32 %v4396, %v4807
        %v4809 = vmul.f32 %v4397, %v4807
        %v4810 = vmul.f32 %v4398, %v4807
        %v4811 = vmul.f32 %v4399, %v4807
        %v4812 = vmul.f32 %v4400, %v4807
        %v4813 = vmul.f32 %v4401, %v4807
        %v4814 = vmul.f32 %v4402, %v4807
        %v4815 = vmul.f32 %v4403, %v4807
        %v4816 = vmul.f32 %v4404, %v4807
        %v4817 = vmul.f32 %v4405, %v4807
        %v4818 = vmul.f32 %v4406, %v4807
        %v4819 = vmul.f32 %v4407, %v4807
        %v4820 = vmul.f32 %v4408, %v4807
        %v4821 = vmul.f32 %v4409, %v4807
        %v4822 = vmul.f32 %v4410, %v4807
        %v4823 = vmul.f32 %v4411, %v4807
        %v4824 = vmul.f32 %v4412, %v4807
        %v4825 = vmul.f32 %v4413, %v4807
        %v4826 = vmul.f32 %v4414, %v4807
        %v4827 = vmul.f32 %v4415, %v4807
        %v4828 = vmul.f32 %v4416, %v4807
        %v4829 = vmul.f32 %v4417, %v4807
        %v4830 = vmul.f32 %v4418, %v4807
        %v4831 = vmul.f32 %v4419, %v4807
        %v4832 = vmul.f32 %v4420, %v4807
        %v4833 = vmul.f32 %v4421, %v4807
        %v4834 = vmul.f32 %v4422, %v4807
        %v4835 = vmul.f32 %v4423, %v4807
        %v4836 = vmul.f32 %v4424, %v4807
        %v4837 = vmul.f32 %v4425, %v4807
        %v4838 = vmul.f32 %v4426, %v4807
        %v4839 = vmul.f32 %v4427, %v4807
        %v4840 = vadd.f32 %v4772, %v4808
        %v4841 = vadd.f32 %v4773, %v4809
        %v4842 = vadd.f32 %v4774, %v4810
        %v4843 = vadd.f32 %v4775, %v4811
        %v4844 = vadd.f32 %v4776, %v4812
        %v4845 = vadd.f32 %v4777, %v4813
        %v4846 = vadd.f32 %v4778, %v4814
        %v4847 = vadd.f32 %v4779, %v4815
        %v4848 = vadd.f32 %v4780, %v4816
        %v4849 = vadd.f32 %v4781, %v4817
        %v4850 = vadd.f32 %v4782, %v4818
        %v4851 = vadd.f32 %v4783, %v4819
        %v4852 = vadd.f32 %v4784, %v4820
        %v4853 = vadd.f32 %v4785, %v4821
        %v4854 = vadd.f32 %v4786, %v4822
        %v4855 = vadd.f32 %v4787, %v4823
        %v4856 = vadd.f32 %v4788, %v4824
        %v4857 = vadd.f32 %v4789, %v4825
        %v4858 = vadd.f32 %v4790, %v4826
        %v4859 = vadd.f32 %v4791, %v4827
        %v4860 = vadd.f32 %v4792, %v4828
        %v4861 = vadd.f32 %v4793, %v4829
        %v4862 = vadd.f32 %v4794, %v4830
        %v4863 = vadd.f32 %v4795, %v4831
        %v4864 = vadd.f32 %v4796, %v4832
        %v4865 = vadd.f32 %v4797, %v4833
        %v4866 = vadd.f32 %v4798, %v4834
        %v4867 = vadd.f32 %v4799, %v4835
        %v4868 = vadd.f32 %v4800, %v4836
        %v4869 = vadd.f32 %v4801, %v4837
        %v4870 = vadd.f32 %v4802, %v4838
        %v4871 = vadd.f32 %v4803, %v4839
        %v4872 = vld [vmem:[#allocation5 + $0x1] sm:$0xff]
        %v4873 = vld [vmem:[#allocation5 + $0x9] sm:$0xff]
        %v4874 = vld [vmem:[#allocation5 + $0x19] sm:$0xff]
        %v4875 = vld [vmem:[#allocation5 + $0x21] sm:$0xff]
        %v4876 = vld [vmem:[#allocation5 + $0x31] sm:$0xff]
        %v4877 = vld [vmem:[#allocation5 + $0x39] sm:$0xff]
        %v4878 = vld [vmem:[#allocation5 + $0x49] sm:$0xff]
        %v4879 = vld [vmem:[#allocation5 + $0x51] sm:$0xff]
        %v4880 = vld [vmem:[#allocation5 + $0x61] sm:$0xff]
        %v4881 = vld [vmem:[#allocation5 + $0x69] sm:$0xff]
        %v4882 = vld [vmem:[#allocation5 + $0x79] sm:$0xff]
        %v4883 = vld [vmem:[#allocation5 + $0x81] sm:$0xff]
        %v4884 = vld [vmem:[#allocation5 + $0x91] sm:$0xff]
        %v4885 = vld [vmem:[#allocation5 + $0x99] sm:$0xff]
        %v4886 = vld [vmem:[#allocation5 + $0xa9] sm:$0xff]
        %v4887 = vld [vmem:[#allocation5 + $0xb1] sm:$0xff]
        %v4888 = vld [vmem:[#allocation5 + $0xc1] sm:$0xff]
        %v4889 = vld [vmem:[#allocation5 + $0xc9] sm:$0xff]
        %v4890 = vld [vmem:[#allocation5 + $0xd9] sm:$0xff]
        %v4891 = vld [vmem:[#allocation5 + $0xe1] sm:$0xff]
        %v4892 = vld [vmem:[#allocation5 + $0xf1] sm:$0xff]
        %v4893 = vld [vmem:[#allocation5 + $0xf9] sm:$0xff]
        %v4894 = vld [vmem:[#allocation5 + $0x109] sm:$0xff]
        %v4895 = vld [vmem:[#allocation5 + $0x111] sm:$0xff]
        %v4896 = vld [vmem:[#allocation5 + $0x121] sm:$0xff]
        %v4897 = vld [vmem:[#allocation5 + $0x129] sm:$0xff]
        %v4898 = vld [vmem:[#allocation5 + $0x139] sm:$0xff]
        %v4899 = vld [vmem:[#allocation5 + $0x141] sm:$0xff]
        %v4900 = vld [vmem:[#allocation5 + $0x151] sm:$0xff]
        %v4901 = vld [vmem:[#allocation5 + $0x159] sm:$0xff]
        %v4902 = vld [vmem:[#allocation5 + $0x169] sm:$0xff]
        %v4903 = vld [vmem:[#allocation5 + $0x171] sm:$0xff]
        %v4904 = vld [vmem:[#allocation5 + $0x181] sm:$0xff]
        %v4905 = vld [vmem:[#allocation5 + $0x189] sm:$0xff]
        %v4906 = vld [vmem:[#allocation5 + $0x199] sm:$0xff]
        %v4907 = vld [vmem:[#allocation5 + $0x1a1] sm:$0xff]
        %v4908 = vld [vmem:[#allocation5 + $0x1b1] sm:$0xff]
        %v4909 = vld [vmem:[#allocation5 + $0x1b9] sm:$0xff]
        %v4910 = vld [vmem:[#allocation5 + $0x1c9] sm:$0xff]
        %v4911 = vld [vmem:[#allocation5 + $0x1d1] sm:$0xff]
        %v4912 = vld [vmem:[#allocation5 + $0x1e1] sm:$0xff]
        %v4913 = vld [vmem:[#allocation5 + $0x1e9] sm:$0xff]
        %v4914 = vld [vmem:[#allocation5 + $0x1f9] sm:$0xff]
        %v4915 = vld [vmem:[#allocation5 + $0x201] sm:$0xff]
        %v4916 = vlaneseq
        %v4917 = vshrl.u32 %v4916, 7
        %v4918 = vsub.s32 1, %v4917
        %v4919 = vrot.slane %v4377, %v4918
        %v4920 = vmul.f32 %v4872, %v4919
        %v4921 = vmul.f32 %v4873, %v4919
        %v4922 = vmul.f32 %v4874, %v4919
        %v4923 = vmul.f32 %v4875, %v4919
        %v4924 = vmul.f32 %v4876, %v4919
        %v4925 = vmul.f32 %v4877, %v4919
        %v4926 = vmul.f32 %v4878, %v4919
        %v4927 = vmul.f32 %v4879, %v4919
        %v4928 = vmul.f32 %v4880, %v4919
        %v4929 = vmul.f32 %v4881, %v4919
        %v4930 = vmul.f32 %v4882, %v4919
        %v4931 = vmul.f32 %v4883, %v4919
        %v4932 = vmul.f32 %v4884, %v4919
        %v4933 = vmul.f32 %v4885, %v4919
        %v4934 = vmul.f32 %v4886, %v4919
        %v4935 = vmul.f32 %v4887, %v4919
        %v4936 = vmul.f32 %v4888, %v4919
        %v4937 = vmul.f32 %v4889, %v4919
        %v4938 = vmul.f32 %v4890, %v4919
        %v4939 = vmul.f32 %v4891, %v4919
        %v4940 = vmul.f32 %v4892, %v4919
        %v4941 = vmul.f32 %v4893, %v4919
        %v4942 = vmul.f32 %v4894, %v4919
        %v4943 = vmul.f32 %v4895, %v4919
        %v4944 = vmul.f32 %v4896, %v4919
        %v4945 = vmul.f32 %v4897, %v4919
        %v4946 = vmul.f32 %v4898, %v4919
        %v4947 = vmul.f32 %v4899, %v4919
        %v4948 = vmul.f32 %v4900, %v4919
        %v4949 = vmul.f32 %v4901, %v4919
        %v4950 = vmul.f32 %v4902, %v4919
        %v4951 = vmul.f32 %v4903, %v4919
        %v4952 = vadd.f32 %v4840, %v4920
        %v4953 = vadd.f32 %v4841, %v4921
        %v4954 = vadd.f32 %v4842, %v4922
        %v4955 = vadd.f32 %v4843, %v4923
        %v4956 = vadd.f32 %v4844, %v4924
        %v4957 = vadd.f32 %v4845, %v4925
        %v4958 = vadd.f32 %v4846, %v4926
        %v4959 = vadd.f32 %v4847, %v4927
        %v4960 = vadd.f32 %v4848, %v4928
        %v4961 = vadd.f32 %v4849, %v4929
        %v4962 = vadd.f32 %v4850, %v4930
        %v4963 = vadd.f32 %v4851, %v4931
        %v4964 = vadd.f32 %v4852, %v4932
        %v4965 = vadd.f32 %v4853, %v4933
        %v4966 = vadd.f32 %v4854, %v4934
        %v4967 = vadd.f32 %v4855, %v4935
        %v4968 = vadd.f32 %v4856, %v4936
        %v4969 = vadd.f32 %v4857, %v4937
        %v4970 = vadd.f32 %v4858, %v4938
        %v4971 = vadd.f32 %v4859, %v4939
        %v4972 = vadd.f32 %v4860, %v4940
        %v4973 = vadd.f32 %v4861, %v4941
        %v4974 = vadd.f32 %v4862, %v4942
        %v4975 = vadd.f32 %v4863, %v4943
        %v4976 = vadd.f32 %v4864, %v4944
        %v4977 = vadd.f32 %v4865, %v4945
        %v4978 = vadd.f32 %v4866, %v4946
        %v4979 = vadd.f32 %v4867, %v4947
        %v4980 = vadd.f32 %v4868, %v4948
        %v4981 = vadd.f32 %v4869, %v4949
        %v4982 = vadd.f32 %v4870, %v4950
        %v4983 = vadd.f32 %v4871, %v4951
        %v4984 = vlaneseq
        %v4985 = vshrl.u32 %v4984, 7
        %v4986 = vsub.s32 0, %v4985
        %v4987 = vrot.slane %v4378, %v4986
        %v4988 = vmul.f32 %v4874, %v4987
        %v4989 = vmul.f32 %v4875, %v4987
        %v4990 = vmul.f32 %v4876, %v4987
        %v4991 = vmul.f32 %v4877, %v4987
        %v4992 = vmul.f32 %v4878, %v4987
        %v4993 = vmul.f32 %v4879, %v4987
        %v4994 = vmul.f32 %v4880, %v4987
        %v4995 = vmul.f32 %v4881, %v4987
        %v4996 = vmul.f32 %v4882, %v4987
        %v4997 = vmul.f32 %v4883, %v4987
        %v4998 = vmul.f32 %v4884, %v4987
        %v4999 = vmul.f32 %v4885, %v4987
        %v5000 = vmul.f32 %v4886, %v4987
        %v5001 = vmul.f32 %v4887, %v4987
        %v5002 = vmul.f32 %v4888, %v4987
        %v5003 = vmul.f32 %v4889, %v4987
        %v5004 = vmul.f32 %v4890, %v4987
        %v5005 = vmul.f32 %v4891, %v4987
        %v5006 = vmul.f32 %v4892, %v4987
        %v5007 = vmul.f32 %v4893, %v4987
        %v5008 = vmul.f32 %v4894, %v4987
        %v5009 = vmul.f32 %v4895, %v4987
        %v5010 = vmul.f32 %v4896, %v4987
        %v5011 = vmul.f32 %v4897, %v4987
        %v5012 = vmul.f32 %v4898, %v4987
        %v5013 = vmul.f32 %v4899, %v4987
        %v5014 = vmul.f32 %v4900, %v4987
        %v5015 = vmul.f32 %v4901, %v4987
        %v5016 = vmul.f32 %v4902, %v4987
        %v5017 = vmul.f32 %v4903, %v4987
        %v5018 = vmul.f32 %v4904, %v4987
        %v5019 = vmul.f32 %v4905, %v4987
        %v5020 = vadd.f32 %v4952, %v4988
        %v5021 = vadd.f32 %v4953, %v4989
        %v5022 = vadd.f32 %v4954, %v4990
        %v5023 = vadd.f32 %v4955, %v4991
        %v5024 = vadd.f32 %v4956, %v4992
        %v5025 = vadd.f32 %v4957, %v4993
        %v5026 = vadd.f32 %v4958, %v4994
        %v5027 = vadd.f32 %v4959, %v4995
        %v5028 = vadd.f32 %v4960, %v4996
        %v5029 = vadd.f32 %v4961, %v4997
        %v5030 = vadd.f32 %v4962, %v4998
        %v5031 = vadd.f32 %v4963, %v4999
        %v5032 = vadd.f32 %v4964, %v5000
        %v5033 = vadd.f32 %v4965, %v5001
        %v5034 = vadd.f32 %v4966, %v5002
        %v5035 = vadd.f32 %v4967, %v5003
        %v5036 = vadd.f32 %v4968, %v5004
        %v5037 = vadd.f32 %v4969, %v5005
        %v5038 = vadd.f32 %v4970, %v5006
        %v5039 = vadd.f32 %v4971, %v5007
        %v5040 = vadd.f32 %v4972, %v5008
        %v5041 = vadd.f32 %v4973, %v5009
        %v5042 = vadd.f32 %v4974, %v5010
        %v5043 = vadd.f32 %v4975, %v5011
        %v5044 = vadd.f32 %v4976, %v5012
        %v5045 = vadd.f32 %v4977, %v5013
        %v5046 = vadd.f32 %v4978, %v5014
        %v5047 = vadd.f32 %v4979, %v5015
        %v5048 = vadd.f32 %v4980, %v5016
        %v5049 = vadd.f32 %v4981, %v5017
        %v5050 = vadd.f32 %v4982, %v5018
        %v5051 = vadd.f32 %v4983, %v5019
        %v5052 = vlaneseq
        %v5053 = vshrl.u32 %v5052, 7
        %v5054 = vsub.s32 7, %v5053
        %v5055 = vrot.slane %v4378, %v5054
        %v5056 = vmul.f32 %v4876, %v5055
        %v5057 = vmul.f32 %v4877, %v5055
        %v5058 = vmul.f32 %v4878, %v5055
        %v5059 = vmul.f32 %v4879, %v5055
        %v5060 = vmul.f32 %v4880, %v5055
        %v5061 = vmul.f32 %v4881, %v5055
        %v5062 = vmul.f32 %v4882, %v5055
        %v5063 = vmul.f32 %v4883, %v5055
        %v5064 = vmul.f32 %v4884, %v5055
        %v5065 = vmul.f32 %v4885, %v5055
        %v5066 = vmul.f32 %v4886, %v5055
        %v5067 = vmul.f32 %v4887, %v5055
        %v5068 = vmul.f32 %v4888, %v5055
        %v5069 = vmul.f32 %v4889, %v5055
        %v5070 = vmul.f32 %v4890, %v5055
        %v5071 = vmul.f32 %v4891, %v5055
        %v5072 = vmul.f32 %v4892, %v5055
        %v5073 = vmul.f32 %v4893, %v5055
        %v5074 = vmul.f32 %v4894, %v5055
        %v5075 = vmul.f32 %v4895, %v5055
        %v5076 = vmul.f32 %v4896, %v5055
        %v5077 = vmul.f32 %v4897, %v5055
        %v5078 = vmul.f32 %v4898, %v5055
        %v5079 = vmul.f32 %v4899, %v5055
        %v5080 = vmul.f32 %v4900, %v5055
        %v5081 = vmul.f32 %v4901, %v5055
        %v5082 = vmul.f32 %v4902, %v5055
        %v5083 = vmul.f32 %v4903, %v5055
        %v5084 = vmul.f32 %v4904, %v5055
        %v5085 = vmul.f32 %v4905, %v5055
        %v5086 = vmul.f32 %v4906, %v5055
        %v5087 = vmul.f32 %v4907, %v5055
        %v5088 = vadd.f32 %v5020, %v5056
        %v5089 = vadd.f32 %v5021, %v5057
        %v5090 = vadd.f32 %v5022, %v5058
        %v5091 = vadd.f32 %v5023, %v5059
        %v5092 = vadd.f32 %v5024, %v5060
        %v5093 = vadd.f32 %v5025, %v5061
        %v5094 = vadd.f32 %v5026, %v5062
        %v5095 = vadd.f32 %v5027, %v5063
        %v5096 = vadd.f32 %v5028, %v5064
        %v5097 = vadd.f32 %v5029, %v5065
        %v5098 = vadd.f32 %v5030, %v5066
        %v5099 = vadd.f32 %v5031, %v5067
        %v5100 = vadd.f32 %v5032, %v5068
        %v5101 = vadd.f32 %v5033, %v5069
        %v5102 = vadd.f32 %v5034, %v5070
        %v5103 = vadd.f32 %v5035, %v5071
        %v5104 = vadd.f32 %v5036, %v5072
        %v5105 = vadd.f32 %v5037, %v5073
        %v5106 = vadd.f32 %v5038, %v5074
        %v5107 = vadd.f32 %v5039, %v5075
        %v5108 = vadd.f32 %v5040, %v5076
        %v5109 = vadd.f32 %v5041, %v5077
        %v5110 = vadd.f32 %v5042, %v5078
        %v5111 = vadd.f32 %v5043, %v5079
        %v5112 = vadd.f32 %v5044, %v5080
        %v5113 = vadd.f32 %v5045, %v5081
        %v5114 = vadd.f32 %v5046, %v5082
        %v5115 = vadd.f32 %v5047, %v5083
        %v5116 = vadd.f32 %v5048, %v5084
        %v5117 = vadd.f32 %v5049, %v5085
        %v5118 = vadd.f32 %v5050, %v5086
        %v5119 = vadd.f32 %v5051, %v5087
        %v5120 = vlaneseq
        %v5121 = vshrl.u32 %v5120, 7
        %v5122 = vsub.s32 6, %v5121
        %v5123 = vrot.slane %v4379, %v5122
        %v5124 = vmul.f32 %v4878, %v5123
        %v5125 = vmul.f32 %v4879, %v5123
        %v5126 = vmul.f32 %v4880, %v5123
        %v5127 = vmul.f32 %v4881, %v5123
        %v5128 = vmul.f32 %v4882, %v5123
        %v5129 = vmul.f32 %v4883, %v5123
        %v5130 = vmul.f32 %v4884, %v5123
        %v5131 = vmul.f32 %v4885, %v5123
        %v5132 = vmul.f32 %v4886, %v5123
        %v5133 = vmul.f32 %v4887, %v5123
        %v5134 = vmul.f32 %v4888, %v5123
        %v5135 = vmul.f32 %v4889, %v5123
        %v5136 = vmul.f32 %v4890, %v5123
        %v5137 = vmul.f32 %v4891, %v5123
        %v5138 = vmul.f32 %v4892, %v5123
        %v5139 = vmul.f32 %v4893, %v5123
        %v5140 = vmul.f32 %v4894, %v5123
        %v5141 = vmul.f32 %v4895, %v5123
        %v5142 = vmul.f32 %v4896, %v5123
        %v5143 = vmul.f32 %v4897, %v5123
        %v5144 = vmul.f32 %v4898, %v5123
        %v5145 = vmul.f32 %v4899, %v5123
        %v5146 = vmul.f32 %v4900, %v5123
        %v5147 = vmul.f32 %v4901, %v5123
        %v5148 = vmul.f32 %v4902, %v5123
        %v5149 = vmul.f32 %v4903, %v5123
        %v5150 = vmul.f32 %v4904, %v5123
        %v5151 = vmul.f32 %v4905, %v5123
        %v5152 = vmul.f32 %v4906, %v5123
        %v5153 = vmul.f32 %v4907, %v5123
        %v5154 = vmul.f32 %v4908, %v5123
        %v5155 = vmul.f32 %v4909, %v5123
        %v5156 = vadd.f32 %v5088, %v5124
        %v5157 = vadd.f32 %v5089, %v5125
        %v5158 = vadd.f32 %v5090, %v5126
        %v5159 = vadd.f32 %v5091, %v5127
        %v5160 = vadd.f32 %v5092, %v5128
        %v5161 = vadd.f32 %v5093, %v5129
        %v5162 = vadd.f32 %v5094, %v5130
        %v5163 = vadd.f32 %v5095, %v5131
        %v5164 = vadd.f32 %v5096, %v5132
        %v5165 = vadd.f32 %v5097, %v5133
        %v5166 = vadd.f32 %v5098, %v5134
        %v5167 = vadd.f32 %v5099, %v5135
        %v5168 = vadd.f32 %v5100, %v5136
        %v5169 = vadd.f32 %v5101, %v5137
        %v5170 = vadd.f32 %v5102, %v5138
        %v5171 = vadd.f32 %v5103, %v5139
        %v5172 = vadd.f32 %v5104, %v5140
        %v5173 = vadd.f32 %v5105, %v5141
        %v5174 = vadd.f32 %v5106, %v5142
        %v5175 = vadd.f32 %v5107, %v5143
        %v5176 = vadd.f32 %v5108, %v5144
        %v5177 = vadd.f32 %v5109, %v5145
        %v5178 = vadd.f32 %v5110, %v5146
        %v5179 = vadd.f32 %v5111, %v5147
        %v5180 = vadd.f32 %v5112, %v5148
        %v5181 = vadd.f32 %v5113, %v5149
        %v5182 = vadd.f32 %v5114, %v5150
        %v5183 = vadd.f32 %v5115, %v5151
        %v5184 = vadd.f32 %v5116, %v5152
        %v5185 = vadd.f32 %v5117, %v5153
        %v5186 = vadd.f32 %v5118, %v5154
        %v5187 = vadd.f32 %v5119, %v5155
        %v5188 = vlaneseq
        %v5189 = vshrl.u32 %v5188, 7
        %v5190 = vsub.s32 5, %v5189
        %v5191 = vrot.slane %v4380, %v5190
        %v5192 = vmul.f32 %v4880, %v5191
        %v5193 = vmul.f32 %v4881, %v5191
        %v5194 = vmul.f32 %v4882, %v5191
        %v5195 = vmul.f32 %v4883, %v5191
        %v5196 = vmul.f32 %v4884, %v5191
        %v5197 = vmul.f32 %v4885, %v5191
        %v5198 = vmul.f32 %v4886, %v5191
        %v5199 = vmul.f32 %v4887, %v5191
        %v5200 = vmul.f32 %v4888, %v5191
        %v5201 = vmul.f32 %v4889, %v5191
        %v5202 = vmul.f32 %v4890, %v5191
        %v5203 = vmul.f32 %v4891, %v5191
        %v5204 = vmul.f32 %v4892, %v5191
        %v5205 = vmul.f32 %v4893, %v5191
        %v5206 = vmul.f32 %v4894, %v5191
        %v5207 = vmul.f32 %v4895, %v5191
        %v5208 = vmul.f32 %v4896, %v5191
        %v5209 = vmul.f32 %v4897, %v5191
        %v5210 = vmul.f32 %v4898, %v5191
        %v5211 = vmul.f32 %v4899, %v5191
        %v5212 = vmul.f32 %v4900, %v5191
        %v5213 = vmul.f32 %v4901, %v5191
        %v5214 = vmul.f32 %v4902, %v5191
        %v5215 = vmul.f32 %v4903, %v5191
        %v5216 = vmul.f32 %v4904, %v5191
        %v5217 = vmul.f32 %v4905, %v5191
        %v5218 = vmul.f32 %v4906, %v5191
        %v5219 = vmul.f32 %v4907, %v5191
        %v5220 = vmul.f32 %v4908, %v5191
        %v5221 = vmul.f32 %v4909, %v5191
        %v5222 = vmul.f32 %v4910, %v5191
        %v5223 = vmul.f32 %v4911, %v5191
        %v5224 = vadd.f32 %v5156, %v5192
        %v5225 = vadd.f32 %v5157, %v5193
        %v5226 = vadd.f32 %v5158, %v5194
        %v5227 = vadd.f32 %v5159, %v5195
        %v5228 = vadd.f32 %v5160, %v5196
        %v5229 = vadd.f32 %v5161, %v5197
        %v5230 = vadd.f32 %v5162, %v5198
        %v5231 = vadd.f32 %v5163, %v5199
        %v5232 = vadd.f32 %v5164, %v5200
        %v5233 = vadd.f32 %v5165, %v5201
        %v5234 = vadd.f32 %v5166, %v5202
        %v5235 = vadd.f32 %v5167, %v5203
        %v5236 = vadd.f32 %v5168, %v5204
        %v5237 = vadd.f32 %v5169, %v5205
        %v5238 = vadd.f32 %v5170, %v5206
        %v5239 = vadd.f32 %v5171, %v5207
        %v5240 = vadd.f32 %v5172, %v5208
        %v5241 = vadd.f32 %v5173, %v5209
        %v5242 = vadd.f32 %v5174, %v5210
        %v5243 = vadd.f32 %v5175, %v5211
        %v5244 = vadd.f32 %v5176, %v5212
        %v5245 = vadd.f32 %v5177, %v5213
        %v5246 = vadd.f32 %v5178, %v5214
        %v5247 = vadd.f32 %v5179, %v5215
        %v5248 = vadd.f32 %v5180, %v5216
        %v5249 = vadd.f32 %v5181, %v5217
        %v5250 = vadd.f32 %v5182, %v5218
        %v5251 = vadd.f32 %v5183, %v5219
        %v5252 = vadd.f32 %v5184, %v5220
        %v5253 = vadd.f32 %v5185, %v5221
        %v5254 = vadd.f32 %v5186, %v5222
        %v5255 = vadd.f32 %v5187, %v5223
        %v5256 = vlaneseq
        %v5257 = vshrl.u32 %v5256, 7
        %v5258 = vsub.s32 4, %v5257
        %v5259 = vrot.slane %v4381, %v5258
        %v5260 = vmul.f32 %v4882, %v5259
        %v5261 = vmul.f32 %v4883, %v5259
        %v5262 = vmul.f32 %v4884, %v5259
        %v5263 = vmul.f32 %v4885, %v5259
        %v5264 = vmul.f32 %v4886, %v5259
        %v5265 = vmul.f32 %v4887, %v5259
        %v5266 = vmul.f32 %v4888, %v5259
        %v5267 = vmul.f32 %v4889, %v5259
        %v5268 = vmul.f32 %v4890, %v5259
        %v5269 = vmul.f32 %v4891, %v5259
        %v5270 = vmul.f32 %v4892, %v5259
        %v5271 = vmul.f32 %v4893, %v5259
        %v5272 = vmul.f32 %v4894, %v5259
        %v5273 = vmul.f32 %v4895, %v5259
        %v5274 = vmul.f32 %v4896, %v5259
        %v5275 = vmul.f32 %v4897, %v5259
        %v5276 = vmul.f32 %v4898, %v5259
        %v5277 = vmul.f32 %v4899, %v5259
        %v5278 = vmul.f32 %v4900, %v5259
        %v5279 = vmul.f32 %v4901, %v5259
        %v5280 = vmul.f32 %v4902, %v5259
        %v5281 = vmul.f32 %v4903, %v5259
        %v5282 = vmul.f32 %v4904, %v5259
        %v5283 = vmul.f32 %v4905, %v5259
        %v5284 = vmul.f32 %v4906, %v5259
        %v5285 = vmul.f32 %v4907, %v5259
        %v5286 = vmul.f32 %v4908, %v5259
        %v5287 = vmul.f32 %v4909, %v5259
        %v5288 = vmul.f32 %v4910, %v5259
        %v5289 = vmul.f32 %v4911, %v5259
        %v5290 = vmul.f32 %v4912, %v5259
        %v5291 = vmul.f32 %v4913, %v5259
        %v5292 = vadd.f32 %v5224, %v5260
        %v5293 = vadd.f32 %v5225, %v5261
        %v5294 = vadd.f32 %v5226, %v5262
        %v5295 = vadd.f32 %v5227, %v5263
        %v5296 = vadd.f32 %v5228, %v5264
        %v5297 = vadd.f32 %v5229, %v5265
        %v5298 = vadd.f32 %v5230, %v5266
        %v5299 = vadd.f32 %v5231, %v5267
        %v5300 = vadd.f32 %v5232, %v5268
        %v5301 = vadd.f32 %v5233, %v5269
        %v5302 = vadd.f32 %v5234, %v5270
        %v5303 = vadd.f32 %v5235, %v5271
        %v5304 = vadd.f32 %v5236, %v5272
        %v5305 = vadd.f32 %v5237, %v5273
        %v5306 = vadd.f32 %v5238, %v5274
        %v5307 = vadd.f32 %v5239, %v5275
        %v5308 = vadd.f32 %v5240, %v5276
        %v5309 = vadd.f32 %v5241, %v5277
        %v5310 = vadd.f32 %v5242, %v5278
        %v5311 = vadd.f32 %v5243, %v5279
        %v5312 = vadd.f32 %v5244, %v5280
        %v5313 = vadd.f32 %v5245, %v5281
        %v5314 = vadd.f32 %v5246, %v5282
        %v5315 = vadd.f32 %v5247, %v5283
        %v5316 = vadd.f32 %v5248, %v5284
        %v5317 = vadd.f32 %v5249, %v5285
        %v5318 = vadd.f32 %v5250, %v5286
        %v5319 = vadd.f32 %v5251, %v5287
        %v5320 = vadd.f32 %v5252, %v5288
        %v5321 = vadd.f32 %v5253, %v5289
        %v5322 = vadd.f32 %v5254, %v5290
        %v5323 = vadd.f32 %v5255, %v5291
        %v5324 = vlaneseq
        %v5325 = vshrl.u32 %v5324, 7
        %v5326 = vsub.s32 3, %v5325
        %v5327 = vrot.slane %v4382, %v5326
        %v5328 = vmul.f32 %v4884, %v5327
        %v5329 = vmul.f32 %v4885, %v5327
        %v5330 = vmul.f32 %v4886, %v5327
        %v5331 = vmul.f32 %v4887, %v5327
        %v5332 = vmul.f32 %v4888, %v5327
        %v5333 = vmul.f32 %v4889, %v5327
        %v5334 = vmul.f32 %v4890, %v5327
        %v5335 = vmul.f32 %v4891, %v5327
        %v5336 = vmul.f32 %v4892, %v5327
        %v5337 = vmul.f32 %v4893, %v5327
        %v5338 = vmul.f32 %v4894, %v5327
        %v5339 = vmul.f32 %v4895, %v5327
        %v5340 = vmul.f32 %v4896, %v5327
        %v5341 = vmul.f32 %v4897, %v5327
        %v5342 = vmul.f32 %v4898, %v5327
        %v5343 = vmul.f32 %v4899, %v5327
        %v5344 = vmul.f32 %v4900, %v5327
        %v5345 = vmul.f32 %v4901, %v5327
        %v5346 = vmul.f32 %v4902, %v5327
        %v5347 = vmul.f32 %v4903, %v5327
        %v5348 = vmul.f32 %v4904, %v5327
        %v5349 = vmul.f32 %v4905, %v5327
        %v5350 = vmul.f32 %v4906, %v5327
        %v5351 = vmul.f32 %v4907, %v5327
        %v5352 = vmul.f32 %v4908, %v5327
        %v5353 = vmul.f32 %v4909, %v5327
        %v5354 = vmul.f32 %v4910, %v5327
        %v5355 = vmul.f32 %v4911, %v5327
        %v5356 = vmul.f32 %v4912, %v5327
        %v5357 = vmul.f32 %v4913, %v5327
        %v5358 = vmul.f32 %v4914, %v5327
        %v5359 = vmul.f32 %v4915, %v5327
        %v5360 = vadd.f32 %v5292, %v5328
        %v5361 = vadd.f32 %v5293, %v5329
        %v5362 = vadd.f32 %v5294, %v5330
        %v5363 = vadd.f32 %v5295, %v5331
        %v5364 = vadd.f32 %v5296, %v5332
        %v5365 = vadd.f32 %v5297, %v5333
        %v5366 = vadd.f32 %v5298, %v5334
        %v5367 = vadd.f32 %v5299, %v5335
        %v5368 = vadd.f32 %v5300, %v5336
        %v5369 = vadd.f32 %v5301, %v5337
        %v5370 = vadd.f32 %v5302, %v5338
        %v5371 = vadd.f32 %v5303, %v5339
        %v5372 = vadd.f32 %v5304, %v5340
        %v5373 = vadd.f32 %v5305, %v5341
        %v5374 = vadd.f32 %v5306, %v5342
        %v5375 = vadd.f32 %v5307, %v5343
        %v5376 = vadd.f32 %v5308, %v5344
        %v5377 = vadd.f32 %v5309, %v5345
        %v5378 = vadd.f32 %v5310, %v5346
        %v5379 = vadd.f32 %v5311, %v5347
        %v5380 = vadd.f32 %v5312, %v5348
        %v5381 = vadd.f32 %v5313, %v5349
        %v5382 = vadd.f32 %v5314, %v5350
        %v5383 = vadd.f32 %v5315, %v5351
        %v5384 = vadd.f32 %v5316, %v5352
        %v5385 = vadd.f32 %v5317, %v5353
        %v5386 = vadd.f32 %v5318, %v5354
        %v5387 = vadd.f32 %v5319, %v5355
        %v5388 = vadd.f32 %v5320, %v5356
        %v5389 = vadd.f32 %v5321, %v5357
        %v5390 = vadd.f32 %v5322, %v5358
        %v5391 = vadd.f32 %v5323, %v5359
        %v5392 = vld [vmem:[#allocation5 + $0x2] sm:$0xff]
        %v5393 = vld [vmem:[#allocation5 + $0xa] sm:$0xff]
        %v5394 = vld [vmem:[#allocation5 + $0x1a] sm:$0xff]
        %v5395 = vld [vmem:[#allocation5 + $0x22] sm:$0xff]
        %v5396 = vld [vmem:[#allocation5 + $0x32] sm:$0xff]
        %v5397 = vld [vmem:[#allocation5 + $0x3a] sm:$0xff]
        %v5398 = vld [vmem:[#allocation5 + $0x4a] sm:$0xff]
        %v5399 = vld [vmem:[#allocation5 + $0x52] sm:$0xff]
        %v5400 = vld [vmem:[#allocation5 + $0x62] sm:$0xff]
        %v5401 = vld [vmem:[#allocation5 + $0x6a] sm:$0xff]
        %v5402 = vld [vmem:[#allocation5 + $0x7a] sm:$0xff]
        %v5403 = vld [vmem:[#allocation5 + $0x82] sm:$0xff]
        %v5404 = vld [vmem:[#allocation5 + $0x92] sm:$0xff]
        %v5405 = vld [vmem:[#allocation5 + $0x9a] sm:$0xff]
        %v5406 = vld [vmem:[#allocation5 + $0xaa] sm:$0xff]
        %v5407 = vld [vmem:[#allocation5 + $0xb2] sm:$0xff]
        %v5408 = vld [vmem:[#allocation5 + $0xc2] sm:$0xff]
        %v5409 = vld [vmem:[#allocation5 + $0xca] sm:$0xff]
        %v5410 = vld [vmem:[#allocation5 + $0xda] sm:$0xff]
        %v5411 = vld [vmem:[#allocation5 + $0xe2] sm:$0xff]
        %v5412 = vld [vmem:[#allocation5 + $0xf2] sm:$0xff]
        %v5413 = vld [vmem:[#allocation5 + $0xfa] sm:$0xff]
        %v5414 = vld [vmem:[#allocation5 + $0x10a] sm:$0xff]
        %v5415 = vld [vmem:[#allocation5 + $0x112] sm:$0xff]
        %v5416 = vld [vmem:[#allocation5 + $0x122] sm:$0xff]
        %v5417 = vld [vmem:[#allocation5 + $0x12a] sm:$0xff]
        %v5418 = vld [vmem:[#allocation5 + $0x13a] sm:$0xff]
        %v5419 = vld [vmem:[#allocation5 + $0x142] sm:$0xff]
        %v5420 = vld [vmem:[#allocation5 + $0x152] sm:$0xff]
        %v5421 = vld [vmem:[#allocation5 + $0x15a] sm:$0xff]
        %v5422 = vld [vmem:[#allocation5 + $0x16a] sm:$0xff]
        %v5423 = vld [vmem:[#allocation5 + $0x172] sm:$0xff]
        %v5424 = vld [vmem:[#allocation5 + $0x182] sm:$0xff]
        %v5425 = vld [vmem:[#allocation5 + $0x18a] sm:$0xff]
        %v5426 = vld [vmem:[#allocation5 + $0x19a] sm:$0xff]
        %v5427 = vld [vmem:[#allocation5 + $0x1a2] sm:$0xff]
        %v5428 = vld [vmem:[#allocation5 + $0x1b2] sm:$0xff]
        %v5429 = vld [vmem:[#allocation5 + $0x1ba] sm:$0xff]
        %v5430 = vld [vmem:[#allocation5 + $0x1ca] sm:$0xff]
        %v5431 = vld [vmem:[#allocation5 + $0x1d2] sm:$0xff]
        %v5432 = vld [vmem:[#allocation5 + $0x1e2] sm:$0xff]
        %v5433 = vld [vmem:[#allocation5 + $0x1ea] sm:$0xff]
        %v5434 = vld [vmem:[#allocation5 + $0x1fa] sm:$0xff]
        %v5435 = vld [vmem:[#allocation5 + $0x202] sm:$0xff]
        %v5436 = vlaneseq
        %v5437 = vshrl.u32 %v5436, 7
        %v5438 = vsub.s32 2, %v5437
        %v5439 = vrot.slane %v4377, %v5438
        %v5440 = vmul.f32 %v5392, %v5439
        %v5441 = vmul.f32 %v5393, %v5439
        %v5442 = vmul.f32 %v5394, %v5439
        %v5443 = vmul.f32 %v5395, %v5439
        %v5444 = vmul.f32 %v5396, %v5439
        %v5445 = vmul.f32 %v5397, %v5439
        %v5446 = vmul.f32 %v5398, %v5439
        %v5447 = vmul.f32 %v5399, %v5439
        %v5448 = vmul.f32 %v5400, %v5439
        %v5449 = vmul.f32 %v5401, %v5439
        %v5450 = vmul.f32 %v5402, %v5439
        %v5451 = vmul.f32 %v5403, %v5439
        %v5452 = vmul.f32 %v5404, %v5439
        %v5453 = vmul.f32 %v5405, %v5439
        %v5454 = vmul.f32 %v5406, %v5439
        %v5455 = vmul.f32 %v5407, %v5439
        %v5456 = vmul.f32 %v5408, %v5439
        %v5457 = vmul.f32 %v5409, %v5439
        %v5458 = vmul.f32 %v5410, %v5439
        %v5459 = vmul.f32 %v5411, %v5439
        %v5460 = vmul.f32 %v5412, %v5439
        %v5461 = vmul.f32 %v5413, %v5439
        %v5462 = vmul.f32 %v5414, %v5439
        %v5463 = vmul.f32 %v5415, %v5439
        %v5464 = vmul.f32 %v5416, %v5439
        %v5465 = vmul.f32 %v5417, %v5439
        %v5466 = vmul.f32 %v5418, %v5439
        %v5467 = vmul.f32 %v5419, %v5439
        %v5468 = vmul.f32 %v5420, %v5439
        %v5469 = vmul.f32 %v5421, %v5439
        %v5470 = vmul.f32 %v5422, %v5439
        %v5471 = vmul.f32 %v5423, %v5439
        %v5472 = vadd.f32 %v5360, %v5440
        %v5473 = vadd.f32 %v5361, %v5441
        %v5474 = vadd.f32 %v5362, %v5442
        %v5475 = vadd.f32 %v5363, %v5443
        %v5476 = vadd.f32 %v5364, %v5444
        %v5477 = vadd.f32 %v5365, %v5445
        %v5478 = vadd.f32 %v5366, %v5446
        %v5479 = vadd.f32 %v5367, %v5447
        %v5480 = vadd.f32 %v5368, %v5448
        %v5481 = vadd.f32 %v5369, %v5449
        %v5482 = vadd.f32 %v5370, %v5450
        %v5483 = vadd.f32 %v5371, %v5451
        %v5484 = vadd.f32 %v5372, %v5452
        %v5485 = vadd.f32 %v5373, %v5453
        %v5486 = vadd.f32 %v5374, %v5454
        %v5487 = vadd.f32 %v5375, %v5455
        %v5488 = vadd.f32 %v5376, %v5456
        %v5489 = vadd.f32 %v5377, %v5457
        %v5490 = vadd.f32 %v5378, %v5458
        %v5491 = vadd.f32 %v5379, %v5459
        %v5492 = vadd.f32 %v5380, %v5460
        %v5493 = vadd.f32 %v5381, %v5461
        %v5494 = vadd.f32 %v5382, %v5462
        %v5495 = vadd.f32 %v5383, %v5463
        %v5496 = vadd.f32 %v5384, %v5464
        %v5497 = vadd.f32 %v5385, %v5465
        %v5498 = vadd.f32 %v5386, %v5466
        %v5499 = vadd.f32 %v5387, %v5467
        %v5500 = vadd.f32 %v5388, %v5468
        %v5501 = vadd.f32 %v5389, %v5469
        %v5502 = vadd.f32 %v5390, %v5470
        %v5503 = vadd.f32 %v5391, %v5471
        %v5504 = vlaneseq
        %v5505 = vshrl.u32 %v5504, 7
        %v5506 = vsub.s32 1, %v5505
        %v5507 = vrot.slane %v4378, %v5506
        %v5508 = vmul.f32 %v5394, %v5507
        %v5509 = vmul.f32 %v5395, %v5507
        %v5510 = vmul.f32 %v5396, %v5507
        %v5511 = vmul.f32 %v5397, %v5507
        %v5512 = vmul.f32 %v5398, %v5507
        %v5513 = vmul.f32 %v5399, %v5507
        %v5514 = vmul.f32 %v5400, %v5507
        %v5515 = vmul.f32 %v5401, %v5507
        %v5516 = vmul.f32 %v5402, %v5507
        %v5517 = vmul.f32 %v5403, %v5507
        %v5518 = vmul.f32 %v5404, %v5507
        %v5519 = vmul.f32 %v5405, %v5507
        %v5520 = vmul.f32 %v5406, %v5507
        %v5521 = vmul.f32 %v5407, %v5507
        %v5522 = vmul.f32 %v5408, %v5507
        %v5523 = vmul.f32 %v5409, %v5507
        %v5524 = vmul.f32 %v5410, %v5507
        %v5525 = vmul.f32 %v5411, %v5507
        %v5526 = vmul.f32 %v5412, %v5507
        %v5527 = vmul.f32 %v5413, %v5507
        %v5528 = vmul.f32 %v5414, %v5507
        %v5529 = vmul.f32 %v5415, %v5507
        %v5530 = vmul.f32 %v5416, %v5507
        %v5531 = vmul.f32 %v5417, %v5507
        %v5532 = vmul.f32 %v5418, %v5507
        %v5533 = vmul.f32 %v5419, %v5507
        %v5534 = vmul.f32 %v5420, %v5507
        %v5535 = vmul.f32 %v5421, %v5507
        %v5536 = vmul.f32 %v5422, %v5507
        %v5537 = vmul.f32 %v5423, %v5507
        %v5538 = vmul.f32 %v5424, %v5507
        %v5539 = vmul.f32 %v5425, %v5507
        %v5540 = vadd.f32 %v5472, %v5508
        %v5541 = vadd.f32 %v5473, %v5509
        %v5542 = vadd.f32 %v5474, %v5510
        %v5543 = vadd.f32 %v5475, %v5511
        %v5544 = vadd.f32 %v5476, %v5512
        %v5545 = vadd.f32 %v5477, %v5513
        %v5546 = vadd.f32 %v5478, %v5514
        %v5547 = vadd.f32 %v5479, %v5515
        %v5548 = vadd.f32 %v5480, %v5516
        %v5549 = vadd.f32 %v5481, %v5517
        %v5550 = vadd.f32 %v5482, %v5518
        %v5551 = vadd.f32 %v5483, %v5519
        %v5552 = vadd.f32 %v5484, %v5520
        %v5553 = vadd.f32 %v5485, %v5521
        %v5554 = vadd.f32 %v5486, %v5522
        %v5555 = vadd.f32 %v5487, %v5523
        %v5556 = vadd.f32 %v5488, %v5524
        %v5557 = vadd.f32 %v5489, %v5525
        %v5558 = vadd.f32 %v5490, %v5526
        %v5559 = vadd.f32 %v5491, %v5527
        %v5560 = vadd.f32 %v5492, %v5528
        %v5561 = vadd.f32 %v5493, %v5529
        %v5562 = vadd.f32 %v5494, %v5530
        %v5563 = vadd.f32 %v5495, %v5531
        %v5564 = vadd.f32 %v5496, %v5532
        %v5565 = vadd.f32 %v5497, %v5533
        %v5566 = vadd.f32 %v5498, %v5534
        %v5567 = vadd.f32 %v5499, %v5535
        %v5568 = vadd.f32 %v5500, %v5536
        %v5569 = vadd.f32 %v5501, %v5537
        %v5570 = vadd.f32 %v5502, %v5538
        %v5571 = vadd.f32 %v5503, %v5539
        %v5572 = vlaneseq
        %v5573 = vshrl.u32 %v5572, 7
        %v5574 = vsub.s32 0, %v5573
        %v5575 = vrot.slane %v4379, %v5574
        %v5576 = vmul.f32 %v5396, %v5575
        %v5577 = vmul.f32 %v5397, %v5575
        %v5578 = vmul.f32 %v5398, %v5575
        %v5579 = vmul.f32 %v5399, %v5575
        %v5580 = vmul.f32 %v5400, %v5575
        %v5581 = vmul.f32 %v5401, %v5575
        %v5582 = vmul.f32 %v5402, %v5575
        %v5583 = vmul.f32 %v5403, %v5575
        %v5584 = vmul.f32 %v5404, %v5575
        %v5585 = vmul.f32 %v5405, %v5575
        %v5586 = vmul.f32 %v5406, %v5575
        %v5587 = vmul.f32 %v5407, %v5575
        %v5588 = vmul.f32 %v5408, %v5575
        %v5589 = vmul.f32 %v5409, %v5575
        %v5590 = vmul.f32 %v5410, %v5575
        %v5591 = vmul.f32 %v5411, %v5575
        %v5592 = vmul.f32 %v5412, %v5575
        %v5593 = vmul.f32 %v5413, %v5575
        %v5594 = vmul.f32 %v5414, %v5575
        %v5595 = vmul.f32 %v5415, %v5575
        %v5596 = vmul.f32 %v5416, %v5575
        %v5597 = vmul.f32 %v5417, %v5575
        %v5598 = vmul.f32 %v5418, %v5575
        %v5599 = vmul.f32 %v5419, %v5575
        %v5600 = vmul.f32 %v5420, %v5575
        %v5601 = vmul.f32 %v5421, %v5575
        %v5602 = vmul.f32 %v5422, %v5575
        %v5603 = vmul.f32 %v5423, %v5575
        %v5604 = vmul.f32 %v5424, %v5575
        %v5605 = vmul.f32 %v5425, %v5575
        %v5606 = vmul.f32 %v5426, %v5575
        %v5607 = vmul.f32 %v5427, %v5575
        %v5608 = vadd.f32 %v5540, %v5576
        %v5609 = vadd.f32 %v5541, %v5577
        %v5610 = vadd.f32 %v5542, %v5578
        %v5611 = vadd.f32 %v5543, %v5579
        %v5612 = vadd.f32 %v5544, %v5580
        %v5613 = vadd.f32 %v5545, %v5581
        %v5614 = vadd.f32 %v5546, %v5582
        %v5615 = vadd.f32 %v5547, %v5583
        %v5616 = vadd.f32 %v5548, %v5584
        %v5617 = vadd.f32 %v5549, %v5585
        %v5618 = vadd.f32 %v5550, %v5586
        %v5619 = vadd.f32 %v5551, %v5587
        %v5620 = vadd.f32 %v5552, %v5588
        %v5621 = vadd.f32 %v5553, %v5589
        %v5622 = vadd.f32 %v5554, %v5590
        %v5623 = vadd.f32 %v5555, %v5591
        %v5624 = vadd.f32 %v5556, %v5592
        %v5625 = vadd.f32 %v5557, %v5593
        %v5626 = vadd.f32 %v5558, %v5594
        %v5627 = vadd.f32 %v5559, %v5595
        %v5628 = vadd.f32 %v5560, %v5596
        %v5629 = vadd.f32 %v5561, %v5597
        %v5630 = vadd.f32 %v5562, %v5598
        %v5631 = vadd.f32 %v5563, %v5599
        %v5632 = vadd.f32 %v5564, %v5600
        %v5633 = vadd.f32 %v5565, %v5601
        %v5634 = vadd.f32 %v5566, %v5602
        %v5635 = vadd.f32 %v5567, %v5603
        %v5636 = vadd.f32 %v5568, %v5604
        %v5637 = vadd.f32 %v5569, %v5605
        %v5638 = vadd.f32 %v5570, %v5606
        %v5639 = vadd.f32 %v5571, %v5607
        %v5640 = vlaneseq
        %v5641 = vshrl.u32 %v5640, 7
        %v5642 = vsub.s32 7, %v5641
        %v5643 = vrot.slane %v4379, %v5642
        %v5644 = vmul.f32 %v5398, %v5643
        %v5645 = vmul.f32 %v5399, %v5643
        %v5646 = vmul.f32 %v5400, %v5643
        %v5647 = vmul.f32 %v5401, %v5643
        %v5648 = vmul.f32 %v5402, %v5643
        %v5649 = vmul.f32 %v5403, %v5643
        %v5650 = vmul.f32 %v5404, %v5643
        %v5651 = vmul.f32 %v5405, %v5643
        %v5652 = vmul.f32 %v5406, %v5643
        %v5653 = vmul.f32 %v5407, %v5643
        %v5654 = vmul.f32 %v5408, %v5643
        %v5655 = vmul.f32 %v5409, %v5643
        %v5656 = vmul.f32 %v5410, %v5643
        %v5657 = vmul.f32 %v5411, %v5643
        %v5658 = vmul.f32 %v5412, %v5643
        %v5659 = vmul.f32 %v5413, %v5643
        %v5660 = vmul.f32 %v5414, %v5643
        %v5661 = vmul.f32 %v5415, %v5643
        %v5662 = vmul.f32 %v5416, %v5643
        %v5663 = vmul.f32 %v5417, %v5643
        %v5664 = vmul.f32 %v5418, %v5643
        %v5665 = vmul.f32 %v5419, %v5643
        %v5666 = vmul.f32 %v5420, %v5643
        %v5667 = vmul.f32 %v5421, %v5643
        %v5668 = vmul.f32 %v5422, %v5643
        %v5669 = vmul.f32 %v5423, %v5643
        %v5670 = vmul.f32 %v5424, %v5643
        %v5671 = vmul.f32 %v5425, %v5643
        %v5672 = vmul.f32 %v5426, %v5643
        %v5673 = vmul.f32 %v5427, %v5643
        %v5674 = vmul.f32 %v5428, %v5643
        %v5675 = vmul.f32 %v5429, %v5643
        %v5676 = vadd.f32 %v5608, %v5644
        %v5677 = vadd.f32 %v5609, %v5645
        %v5678 = vadd.f32 %v5610, %v5646
        %v5679 = vadd.f32 %v5611, %v5647
        %v5680 = vadd.f32 %v5612, %v5648
        %v5681 = vadd.f32 %v5613, %v5649
        %v5682 = vadd.f32 %v5614, %v5650
        %v5683 = vadd.f32 %v5615, %v5651
        %v5684 = vadd.f32 %v5616, %v5652
        %v5685 = vadd.f32 %v5617, %v5653
        %v5686 = vadd.f32 %v5618, %v5654
        %v5687 = vadd.f32 %v5619, %v5655
        %v5688 = vadd.f32 %v5620, %v5656
        %v5689 = vadd.f32 %v5621, %v5657
        %v5690 = vadd.f32 %v5622, %v5658
        %v5691 = vadd.f32 %v5623, %v5659
        %v5692 = vadd.f32 %v5624, %v5660
        %v5693 = vadd.f32 %v5625, %v5661
        %v5694 = vadd.f32 %v5626, %v5662
        %v5695 = vadd.f32 %v5627, %v5663
        %v5696 = vadd.f32 %v5628, %v5664
        %v5697 = vadd.f32 %v5629, %v5665
        %v5698 = vadd.f32 %v5630, %v5666
        %v5699 = vadd.f32 %v5631, %v5667
        %v5700 = vadd.f32 %v5632, %v5668
        %v5701 = vadd.f32 %v5633, %v5669
        %v5702 = vadd.f32 %v5634, %v5670
        %v5703 = vadd.f32 %v5635, %v5671
        %v5704 = vadd.f32 %v5636, %v5672
        %v5705 = vadd.f32 %v5637, %v5673
        %v5706 = vadd.f32 %v5638, %v5674
        %v5707 = vadd.f32 %v5639, %v5675
        %v5708 = vlaneseq
        %v5709 = vshrl.u32 %v5708, 7
        %v5710 = vsub.s32 6, %v5709
        %v5711 = vrot.slane %v4380, %v5710
        %v5712 = vmul.f32 %v5400, %v5711
        %v5713 = vmul.f32 %v5401, %v5711
        %v5714 = vmul.f32 %v5402, %v5711
        %v5715 = vmul.f32 %v5403, %v5711
        %v5716 = vmul.f32 %v5404, %v5711
        %v5717 = vmul.f32 %v5405, %v5711
        %v5718 = vmul.f32 %v5406, %v5711
        %v5719 = vmul.f32 %v5407, %v5711
        %v5720 = vmul.f32 %v5408, %v5711
        %v5721 = vmul.f32 %v5409, %v5711
        %v5722 = vmul.f32 %v5410, %v5711
        %v5723 = vmul.f32 %v5411, %v5711
        %v5724 = vmul.f32 %v5412, %v5711
        %v5725 = vmul.f32 %v5413, %v5711
        %v5726 = vmul.f32 %v5414, %v5711
        %v5727 = vmul.f32 %v5415, %v5711
        %v5728 = vmul.f32 %v5416, %v5711
        %v5729 = vmul.f32 %v5417, %v5711
        %v5730 = vmul.f32 %v5418, %v5711
        %v5731 = vmul.f32 %v5419, %v5711
        %v5732 = vmul.f32 %v5420, %v5711
        %v5733 = vmul.f32 %v5421, %v5711
        %v5734 = vmul.f32 %v5422, %v5711
        %v5735 = vmul.f32 %v5423, %v5711
        %v5736 = vmul.f32 %v5424, %v5711
        %v5737 = vmul.f32 %v5425, %v5711
        %v5738 = vmul.f32 %v5426, %v5711
        %v5739 = vmul.f32 %v5427, %v5711
        %v5740 = vmul.f32 %v5428, %v5711
        %v5741 = vmul.f32 %v5429, %v5711
        %v5742 = vmul.f32 %v5430, %v5711
        %v5743 = vmul.f32 %v5431, %v5711
        %v5744 = vadd.f32 %v5676, %v5712
        %v5745 = vadd.f32 %v5677, %v5713
        %v5746 = vadd.f32 %v5678, %v5714
        %v5747 = vadd.f32 %v5679, %v5715
        %v5748 = vadd.f32 %v5680, %v5716
        %v5749 = vadd.f32 %v5681, %v5717
        %v5750 = vadd.f32 %v5682, %v5718
        %v5751 = vadd.f32 %v5683, %v5719
        %v5752 = vadd.f32 %v5684, %v5720
        %v5753 = vadd.f32 %v5685, %v5721
        %v5754 = vadd.f32 %v5686, %v5722
        %v5755 = vadd.f32 %v5687, %v5723
        %v5756 = vadd.f32 %v5688, %v5724
        %v5757 = vadd.f32 %v5689, %v5725
        %v5758 = vadd.f32 %v5690, %v5726
        %v5759 = vadd.f32 %v5691, %v5727
        %v5760 = vadd.f32 %v5692, %v5728
        %v5761 = vadd.f32 %v5693, %v5729
        %v5762 = vadd.f32 %v5694, %v5730
        %v5763 = vadd.f32 %v5695, %v5731
        %v5764 = vadd.f32 %v5696, %v5732
        %v5765 = vadd.f32 %v5697, %v5733
        %v5766 = vadd.f32 %v5698, %v5734
        %v5767 = vadd.f32 %v5699, %v5735
        %v5768 = vadd.f32 %v5700, %v5736
        %v5769 = vadd.f32 %v5701, %v5737
        %v5770 = vadd.f32 %v5702, %v5738
        %v5771 = vadd.f32 %v5703, %v5739
        %v5772 = vadd.f32 %v5704, %v5740
        %v5773 = vadd.f32 %v5705, %v5741
        %v5774 = vadd.f32 %v5706, %v5742
        %v5775 = vadd.f32 %v5707, %v5743
        %v5776 = vlaneseq
        %v5777 = vshrl.u32 %v5776, 7
        %v5778 = vsub.s32 5, %v5777
        %v5779 = vrot.slane %v4381, %v5778
        %v5780 = vmul.f32 %v5402, %v5779
        %v5781 = vmul.f32 %v5403, %v5779
        %v5782 = vmul.f32 %v5404, %v5779
        %v5783 = vmul.f32 %v5405, %v5779
        %v5784 = vmul.f32 %v5406, %v5779
        %v5785 = vmul.f32 %v5407, %v5779
        %v5786 = vmul.f32 %v5408, %v5779
        %v5787 = vmul.f32 %v5409, %v5779
        %v5788 = vmul.f32 %v5410, %v5779
        %v5789 = vmul.f32 %v5411, %v5779
        %v5790 = vmul.f32 %v5412, %v5779
        %v5791 = vmul.f32 %v5413, %v5779
        %v5792 = vmul.f32 %v5414, %v5779
        %v5793 = vmul.f32 %v5415, %v5779
        %v5794 = vmul.f32 %v5416, %v5779
        %v5795 = vmul.f32 %v5417, %v5779
        %v5796 = vmul.f32 %v5418, %v5779
        %v5797 = vmul.f32 %v5419, %v5779
        %v5798 = vmul.f32 %v5420, %v5779
        %v5799 = vmul.f32 %v5421, %v5779
        %v5800 = vmul.f32 %v5422, %v5779
        %v5801 = vmul.f32 %v5423, %v5779
        %v5802 = vmul.f32 %v5424, %v5779
        %v5803 = vmul.f32 %v5425, %v5779
        %v5804 = vmul.f32 %v5426, %v5779
        %v5805 = vmul.f32 %v5427, %v5779
        %v5806 = vmul.f32 %v5428, %v5779
        %v5807 = vmul.f32 %v5429, %v5779
        %v5808 = vmul.f32 %v5430, %v5779
        %v5809 = vmul.f32 %v5431, %v5779
        %v5810 = vmul.f32 %v5432, %v5779
        %v5811 = vmul.f32 %v5433, %v5779
        %v5812 = vadd.f32 %v5744, %v5780
        %v5813 = vadd.f32 %v5745, %v5781
        %v5814 = vadd.f32 %v5746, %v5782
        %v5815 = vadd.f32 %v5747, %v5783
        %v5816 = vadd.f32 %v5748, %v5784
        %v5817 = vadd.f32 %v5749, %v5785
        %v5818 = vadd.f32 %v5750, %v5786
        %v5819 = vadd.f32 %v5751, %v5787
        %v5820 = vadd.f32 %v5752, %v5788
        %v5821 = vadd.f32 %v5753, %v5789
        %v5822 = vadd.f32 %v5754, %v5790
        %v5823 = vadd.f32 %v5755, %v5791
        %v5824 = vadd.f32 %v5756, %v5792
        %v5825 = vadd.f32 %v5757, %v5793
        %v5826 = vadd.f32 %v5758, %v5794
        %v5827 = vadd.f32 %v5759, %v5795
        %v5828 = vadd.f32 %v5760, %v5796
        %v5829 = vadd.f32 %v5761, %v5797
        %v5830 = vadd.f32 %v5762, %v5798
        %v5831 = vadd.f32 %v5763, %v5799
        %v5832 = vadd.f32 %v5764, %v5800
        %v5833 = vadd.f32 %v5765, %v5801
        %v5834 = vadd.f32 %v5766, %v5802
        %v5835 = vadd.f32 %v5767, %v5803
        %v5836 = vadd.f32 %v5768, %v5804
        %v5837 = vadd.f32 %v5769, %v5805
        %v5838 = vadd.f32 %v5770, %v5806
        %v5839 = vadd.f32 %v5771, %v5807
        %v5840 = vadd.f32 %v5772, %v5808
        %v5841 = vadd.f32 %v5773, %v5809
        %v5842 = vadd.f32 %v5774, %v5810
        %v5843 = vadd.f32 %v5775, %v5811
        %v5844 = vlaneseq
        %v5845 = vshrl.u32 %v5844, 7
        %v5846 = vsub.s32 4, %v5845
        %v5847 = vrot.slane %v4382, %v5846
        %v5848 = vmul.f32 %v5404, %v5847
        %v5849 = vmul.f32 %v5405, %v5847
        %v5850 = vmul.f32 %v5406, %v5847
        %v5851 = vmul.f32 %v5407, %v5847
        %v5852 = vmul.f32 %v5408, %v5847
        %v5853 = vmul.f32 %v5409, %v5847
        %v5854 = vmul.f32 %v5410, %v5847
        %v5855 = vmul.f32 %v5411, %v5847
        %v5856 = vmul.f32 %v5412, %v5847
        %v5857 = vmul.f32 %v5413, %v5847
        %v5858 = vmul.f32 %v5414, %v5847
        %v5859 = vmul.f32 %v5415, %v5847
        %v5860 = vmul.f32 %v5416, %v5847
        %v5861 = vmul.f32 %v5417, %v5847
        %v5862 = vmul.f32 %v5418, %v5847
        %v5863 = vmul.f32 %v5419, %v5847
        %v5864 = vmul.f32 %v5420, %v5847
        %v5865 = vmul.f32 %v5421, %v5847
        %v5866 = vmul.f32 %v5422, %v5847
        %v5867 = vmul.f32 %v5423, %v5847
        %v5868 = vmul.f32 %v5424, %v5847
        %v5869 = vmul.f32 %v5425, %v5847
        %v5870 = vmul.f32 %v5426, %v5847
        %v5871 = vmul.f32 %v5427, %v5847
        %v5872 = vmul.f32 %v5428, %v5847
        %v5873 = vmul.f32 %v5429, %v5847
        %v5874 = vmul.f32 %v5430, %v5847
        %v5875 = vmul.f32 %v5431, %v5847
        %v5876 = vmul.f32 %v5432, %v5847
        %v5877 = vmul.f32 %v5433, %v5847
        %v5878 = vmul.f32 %v5434, %v5847
        %v5879 = vmul.f32 %v5435, %v5847
        %v5880 = vadd.f32 %v5812, %v5848
        %v5881 = vadd.f32 %v5813, %v5849
        %v5882 = vadd.f32 %v5814, %v5850
        %v5883 = vadd.f32 %v5815, %v5851
        %v5884 = vadd.f32 %v5816, %v5852
        %v5885 = vadd.f32 %v5817, %v5853
        %v5886 = vadd.f32 %v5818, %v5854
        %v5887 = vadd.f32 %v5819, %v5855
        %v5888 = vadd.f32 %v5820, %v5856
        %v5889 = vadd.f32 %v5821, %v5857
        %v5890 = vadd.f32 %v5822, %v5858
        %v5891 = vadd.f32 %v5823, %v5859
        %v5892 = vadd.f32 %v5824, %v5860
        %v5893 = vadd.f32 %v5825, %v5861
        %v5894 = vadd.f32 %v5826, %v5862
        %v5895 = vadd.f32 %v5827, %v5863
        %v5896 = vadd.f32 %v5828, %v5864
        %v5897 = vadd.f32 %v5829, %v5865
        %v5898 = vadd.f32 %v5830, %v5866
        %v5899 = vadd.f32 %v5831, %v5867
        %v5900 = vadd.f32 %v5832, %v5868
        %v5901 = vadd.f32 %v5833, %v5869
        %v5902 = vadd.f32 %v5834, %v5870
        %v5903 = vadd.f32 %v5835, %v5871
        %v5904 = vadd.f32 %v5836, %v5872
        %v5905 = vadd.f32 %v5837, %v5873
        %v5906 = vadd.f32 %v5838, %v5874
        %v5907 = vadd.f32 %v5839, %v5875
        %v5908 = vadd.f32 %v5840, %v5876
        %v5909 = vadd.f32 %v5841, %v5877
        %v5910 = vadd.f32 %v5842, %v5878
        %v5911 = vadd.f32 %v5843, %v5879
        %v5912 = vld [vmem:[#allocation5 + $0x3] sm:$0xff]
        %v5913 = vld [vmem:[#allocation5 + $0xb] sm:$0xff]
        %v5914 = vld [vmem:[#allocation5 + $0x1b] sm:$0xff]
        %v5915 = vld [vmem:[#allocation5 + $0x23] sm:$0xff]
        %v5916 = vld [vmem:[#allocation5 + $0x33] sm:$0xff]
        %v5917 = vld [vmem:[#allocation5 + $0x3b] sm:$0xff]
        %v5918 = vld [vmem:[#allocation5 + $0x4b] sm:$0xff]
        %v5919 = vld [vmem:[#allocation5 + $0x53] sm:$0xff]
        %v5920 = vld [vmem:[#allocation5 + $0x63] sm:$0xff]
        %v5921 = vld [vmem:[#allocation5 + $0x6b] sm:$0xff]
        %v5922 = vld [vmem:[#allocation5 + $0x7b] sm:$0xff]
        %v5923 = vld [vmem:[#allocation5 + $0x83] sm:$0xff]
        %v5924 = vld [vmem:[#allocation5 + $0x93] sm:$0xff]
        %v5925 = vld [vmem:[#allocation5 + $0x9b] sm:$0xff]
        %v5926 = vld [vmem:[#allocation5 + $0xab] sm:$0xff]
        %v5927 = vld [vmem:[#allocation5 + $0xb3] sm:$0xff]
        %v5928 = vld [vmem:[#allocation5 + $0xc3] sm:$0xff]
        %v5929 = vld [vmem:[#allocation5 + $0xcb] sm:$0xff]
        %v5930 = vld [vmem:[#allocation5 + $0xdb] sm:$0xff]
        %v5931 = vld [vmem:[#allocation5 + $0xe3] sm:$0xff]
        %v5932 = vld [vmem:[#allocation5 + $0xf3] sm:$0xff]
        %v5933 = vld [vmem:[#allocation5 + $0xfb] sm:$0xff]
        %v5934 = vld [vmem:[#allocation5 + $0x10b] sm:$0xff]
        %v5935 = vld [vmem:[#allocation5 + $0x113] sm:$0xff]
        %v5936 = vld [vmem:[#allocation5 + $0x123] sm:$0xff]
        %v5937 = vld [vmem:[#allocation5 + $0x12b] sm:$0xff]
        %v5938 = vld [vmem:[#allocation5 + $0x13b] sm:$0xff]
        %v5939 = vld [vmem:[#allocation5 + $0x143] sm:$0xff]
        %v5940 = vld [vmem:[#allocation5 + $0x153] sm:$0xff]
        %v5941 = vld [vmem:[#allocation5 + $0x15b] sm:$0xff]
        %v5942 = vld [vmem:[#allocation5 + $0x16b] sm:$0xff]
        %v5943 = vld [vmem:[#allocation5 + $0x173] sm:$0xff]
        %v5944 = vld [vmem:[#allocation5 + $0x183] sm:$0xff]
        %v5945 = vld [vmem:[#allocation5 + $0x18b] sm:$0xff]
        %v5946 = vld [vmem:[#allocation5 + $0x19b] sm:$0xff]
        %v5947 = vld [vmem:[#allocation5 + $0x1a3] sm:$0xff]
        %v5948 = vld [vmem:[#allocation5 + $0x1b3] sm:$0xff]
        %v5949 = vld [vmem:[#allocation5 + $0x1bb] sm:$0xff]
        %v5950 = vld [vmem:[#allocation5 + $0x1cb] sm:$0xff]
        %v5951 = vld [vmem:[#allocation5 + $0x1d3] sm:$0xff]
        %v5952 = vld [vmem:[#allocation5 + $0x1e3] sm:$0xff]
        %v5953 = vld [vmem:[#allocation5 + $0x1eb] sm:$0xff]
        %v5954 = vld [vmem:[#allocation5 + $0x1fb] sm:$0xff]
        %v5955 = vld [vmem:[#allocation5 + $0x203] sm:$0xff]
        %v5956 = vlaneseq
        %v5957 = vshrl.u32 %v5956, 7
        %v5958 = vsub.s32 3, %v5957
        %v5959 = vrot.slane %v4377, %v5958
        %v5960 = vmul.f32 %v5912, %v5959
        %v5961 = vmul.f32 %v5913, %v5959
        %v5962 = vmul.f32 %v5914, %v5959
        %v5963 = vmul.f32 %v5915, %v5959
        %v5964 = vmul.f32 %v5916, %v5959
        %v5965 = vmul.f32 %v5917, %v5959
        %v5966 = vmul.f32 %v5918, %v5959
        %v5967 = vmul.f32 %v5919, %v5959
        %v5968 = vmul.f32 %v5920, %v5959
        %v5969 = vmul.f32 %v5921, %v5959
        %v5970 = vmul.f32 %v5922, %v5959
        %v5971 = vmul.f32 %v5923, %v5959
        %v5972 = vmul.f32 %v5924, %v5959
        %v5973 = vmul.f32 %v5925, %v5959
        %v5974 = vmul.f32 %v5926, %v5959
        %v5975 = vmul.f32 %v5927, %v5959
        %v5976 = vmul.f32 %v5928, %v5959
        %v5977 = vmul.f32 %v5929, %v5959
        %v5978 = vmul.f32 %v5930, %v5959
        %v5979 = vmul.f32 %v5931, %v5959
        %v5980 = vmul.f32 %v5932, %v5959
        %v5981 = vmul.f32 %v5933, %v5959
        %v5982 = vmul.f32 %v5934, %v5959
        %v5983 = vmul.f32 %v5935, %v5959
        %v5984 = vmul.f32 %v5936, %v5959
        %v5985 = vmul.f32 %v5937, %v5959
        %v5986 = vmul.f32 %v5938, %v5959
        %v5987 = vmul.f32 %v5939, %v5959
        %v5988 = vmul.f32 %v5940, %v5959
        %v5989 = vmul.f32 %v5941, %v5959
        %v5990 = vmul.f32 %v5942, %v5959
        %v5991 = vmul.f32 %v5943, %v5959
        %v5992 = vadd.f32 %v5880, %v5960
        %v5993 = vadd.f32 %v5881, %v5961
        %v5994 = vadd.f32 %v5882, %v5962
        %v5995 = vadd.f32 %v5883, %v5963
        %v5996 = vadd.f32 %v5884, %v5964
        %v5997 = vadd.f32 %v5885, %v5965
        %v5998 = vadd.f32 %v5886, %v5966
        %v5999 = vadd.f32 %v5887, %v5967
        %v6000 = vadd.f32 %v5888, %v5968
        %v6001 = vadd.f32 %v5889, %v5969
        %v6002 = vadd.f32 %v5890, %v5970
        %v6003 = vadd.f32 %v5891, %v5971
        %v6004 = vadd.f32 %v5892, %v5972
        %v6005 = vadd.f32 %v5893, %v5973
        %v6006 = vadd.f32 %v5894, %v5974
        %v6007 = vadd.f32 %v5895, %v5975
        %v6008 = vadd.f32 %v5896, %v5976
        %v6009 = vadd.f32 %v5897, %v5977
        %v6010 = vadd.f32 %v5898, %v5978
        %v6011 = vadd.f32 %v5899, %v5979
        %v6012 = vadd.f32 %v5900, %v5980
        %v6013 = vadd.f32 %v5901, %v5981
        %v6014 = vadd.f32 %v5902, %v5982
        %v6015 = vadd.f32 %v5903, %v5983
        %v6016 = vadd.f32 %v5904, %v5984
        %v6017 = vadd.f32 %v5905, %v5985
        %v6018 = vadd.f32 %v5906, %v5986
        %v6019 = vadd.f32 %v5907, %v5987
        %v6020 = vadd.f32 %v5908, %v5988
        %v6021 = vadd.f32 %v5909, %v5989
        %v6022 = vadd.f32 %v5910, %v5990
        %v6023 = vadd.f32 %v5911, %v5991
        %v6024 = vlaneseq
        %v6025 = vshrl.u32 %v6024, 7
        %v6026 = vsub.s32 2, %v6025
        %v6027 = vrot.slane %v4378, %v6026
        %v6028 = vmul.f32 %v5914, %v6027
        %v6029 = vmul.f32 %v5915, %v6027
        %v6030 = vmul.f32 %v5916, %v6027
        %v6031 = vmul.f32 %v5917, %v6027
        %v6032 = vmul.f32 %v5918, %v6027
        %v6033 = vmul.f32 %v5919, %v6027
        %v6034 = vmul.f32 %v5920, %v6027
        %v6035 = vmul.f32 %v5921, %v6027
        %v6036 = vmul.f32 %v5922, %v6027
        %v6037 = vmul.f32 %v5923, %v6027
        %v6038 = vmul.f32 %v5924, %v6027
        %v6039 = vmul.f32 %v5925, %v6027
        %v6040 = vmul.f32 %v5926, %v6027
        %v6041 = vmul.f32 %v5927, %v6027
        %v6042 = vmul.f32 %v5928, %v6027
        %v6043 = vmul.f32 %v5929, %v6027
        %v6044 = vmul.f32 %v5930, %v6027
        %v6045 = vmul.f32 %v5931, %v6027
        %v6046 = vmul.f32 %v5932, %v6027
        %v6047 = vmul.f32 %v5933, %v6027
        %v6048 = vmul.f32 %v5934, %v6027
        %v6049 = vmul.f32 %v5935, %v6027
        %v6050 = vmul.f32 %v5936, %v6027
        %v6051 = vmul.f32 %v5937, %v6027
        %v6052 = vmul.f32 %v5938, %v6027
        %v6053 = vmul.f32 %v5939, %v6027
        %v6054 = vmul.f32 %v5940, %v6027
        %v6055 = vmul.f32 %v5941, %v6027
        %v6056 = vmul.f32 %v5942, %v6027
        %v6057 = vmul.f32 %v5943, %v6027
        %v6058 = vmul.f32 %v5944, %v6027
        %v6059 = vmul.f32 %v5945, %v6027
        %v6060 = vadd.f32 %v5992, %v6028
        %v6061 = vadd.f32 %v5993, %v6029
        %v6062 = vadd.f32 %v5994, %v6030
        %v6063 = vadd.f32 %v5995, %v6031
        %v6064 = vadd.f32 %v5996, %v6032
        %v6065 = vadd.f32 %v5997, %v6033
        %v6066 = vadd.f32 %v5998, %v6034
        %v6067 = vadd.f32 %v5999, %v6035
        %v6068 = vadd.f32 %v6000, %v6036
        %v6069 = vadd.f32 %v6001, %v6037
        %v6070 = vadd.f32 %v6002, %v6038
        %v6071 = vadd.f32 %v6003, %v6039
        %v6072 = vadd.f32 %v6004, %v6040
        %v6073 = vadd.f32 %v6005, %v6041
        %v6074 = vadd.f32 %v6006, %v6042
        %v6075 = vadd.f32 %v6007, %v6043
        %v6076 = vadd.f32 %v6008, %v6044
        %v6077 = vadd.f32 %v6009, %v6045
        %v6078 = vadd.f32 %v6010, %v6046
        %v6079 = vadd.f32 %v6011, %v6047
        %v6080 = vadd.f32 %v6012, %v6048
        %v6081 = vadd.f32 %v6013, %v6049
        %v6082 = vadd.f32 %v6014, %v6050
        %v6083 = vadd.f32 %v6015, %v6051
        %v6084 = vadd.f32 %v6016, %v6052
        %v6085 = vadd.f32 %v6017, %v6053
        %v6086 = vadd.f32 %v6018, %v6054
        %v6087 = vadd.f32 %v6019, %v6055
        %v6088 = vadd.f32 %v6020, %v6056
        %v6089 = vadd.f32 %v6021, %v6057
        %v6090 = vadd.f32 %v6022, %v6058
        %v6091 = vadd.f32 %v6023, %v6059
        %v6092 = vlaneseq
        %v6093 = vshrl.u32 %v6092, 7
        %v6094 = vsub.s32 1, %v6093
        %v6095 = vrot.slane %v4379, %v6094
        %v6096 = vmul.f32 %v5916, %v6095
        %v6097 = vmul.f32 %v5917, %v6095
        %v6098 = vmul.f32 %v5918, %v6095
        %v6099 = vmul.f32 %v5919, %v6095
        %v6100 = vmul.f32 %v5920, %v6095
        %v6101 = vmul.f32 %v5921, %v6095
        %v6102 = vmul.f32 %v5922, %v6095
        %v6103 = vmul.f32 %v5923, %v6095
        %v6104 = vmul.f32 %v5924, %v6095
        %v6105 = vmul.f32 %v5925, %v6095
        %v6106 = vmul.f32 %v5926, %v6095
        %v6107 = vmul.f32 %v5927, %v6095
        %v6108 = vmul.f32 %v5928, %v6095
        %v6109 = vmul.f32 %v5929, %v6095
        %v6110 = vmul.f32 %v5930, %v6095
        %v6111 = vmul.f32 %v5931, %v6095
        %v6112 = vmul.f32 %v5932, %v6095
        %v6113 = vmul.f32 %v5933, %v6095
        %v6114 = vmul.f32 %v5934, %v6095
        %v6115 = vmul.f32 %v5935, %v6095
        %v6116 = vmul.f32 %v5936, %v6095
        %v6117 = vmul.f32 %v5937, %v6095
        %v6118 = vmul.f32 %v5938, %v6095
        %v6119 = vmul.f32 %v5939, %v6095
        %v6120 = vmul.f32 %v5940, %v6095
        %v6121 = vmul.f32 %v5941, %v6095
        %v6122 = vmul.f32 %v5942, %v6095
        %v6123 = vmul.f32 %v5943, %v6095
        %v6124 = vmul.f32 %v5944, %v6095
        %v6125 = vmul.f32 %v5945, %v6095
        %v6126 = vmul.f32 %v5946, %v6095
        %v6127 = vmul.f32 %v5947, %v6095
        %v6128 = vadd.f32 %v6060, %v6096
        %v6129 = vadd.f32 %v6061, %v6097
        %v6130 = vadd.f32 %v6062, %v6098
        %v6131 = vadd.f32 %v6063, %v6099
        %v6132 = vadd.f32 %v6064, %v6100
        %v6133 = vadd.f32 %v6065, %v6101
        %v6134 = vadd.f32 %v6066, %v6102
        %v6135 = vadd.f32 %v6067, %v6103
        %v6136 = vadd.f32 %v6068, %v6104
        %v6137 = vadd.f32 %v6069, %v6105
        %v6138 = vadd.f32 %v6070, %v6106
        %v6139 = vadd.f32 %v6071, %v6107
        %v6140 = vadd.f32 %v6072, %v6108
        %v6141 = vadd.f32 %v6073, %v6109
        %v6142 = vadd.f32 %v6074, %v6110
        %v6143 = vadd.f32 %v6075, %v6111
        %v6144 = vadd.f32 %v6076, %v6112
        %v6145 = vadd.f32 %v6077, %v6113
        %v6146 = vadd.f32 %v6078, %v6114
        %v6147 = vadd.f32 %v6079, %v6115
        %v6148 = vadd.f32 %v6080, %v6116
        %v6149 = vadd.f32 %v6081, %v6117
        %v6150 = vadd.f32 %v6082, %v6118
        %v6151 = vadd.f32 %v6083, %v6119
        %v6152 = vadd.f32 %v6084, %v6120
        %v6153 = vadd.f32 %v6085, %v6121
        %v6154 = vadd.f32 %v6086, %v6122
        %v6155 = vadd.f32 %v6087, %v6123
        %v6156 = vadd.f32 %v6088, %v6124
        %v6157 = vadd.f32 %v6089, %v6125
        %v6158 = vadd.f32 %v6090, %v6126
        %v6159 = vadd.f32 %v6091, %v6127
        %v6160 = vlaneseq
        %v6161 = vshrl.u32 %v6160, 7
        %v6162 = vsub.s32 0, %v6161
        %v6163 = vrot.slane %v4380, %v6162
        %v6164 = vmul.f32 %v5918, %v6163
        %v6165 = vmul.f32 %v5919, %v6163
        %v6166 = vmul.f32 %v5920, %v6163
        %v6167 = vmul.f32 %v5921, %v6163
        %v6168 = vmul.f32 %v5922, %v6163
        %v6169 = vmul.f32 %v5923, %v6163
        %v6170 = vmul.f32 %v5924, %v6163
        %v6171 = vmul.f32 %v5925, %v6163
        %v6172 = vmul.f32 %v5926, %v6163
        %v6173 = vmul.f32 %v5927, %v6163
        %v6174 = vmul.f32 %v5928, %v6163
        %v6175 = vmul.f32 %v5929, %v6163
        %v6176 = vmul.f32 %v5930, %v6163
        %v6177 = vmul.f32 %v5931, %v6163
        %v6178 = vmul.f32 %v5932, %v6163
        %v6179 = vmul.f32 %v5933, %v6163
        %v6180 = vmul.f32 %v5934, %v6163
        %v6181 = vmul.f32 %v5935, %v6163
        %v6182 = vmul.f32 %v5936, %v6163
        %v6183 = vmul.f32 %v5937, %v6163
        %v6184 = vmul.f32 %v5938, %v6163
        %v6185 = vmul.f32 %v5939, %v6163
        %v6186 = vmul.f32 %v5940, %v6163
        %v6187 = vmul.f32 %v5941, %v6163
        %v6188 = vmul.f32 %v5942, %v6163
        %v6189 = vmul.f32 %v5943, %v6163
        %v6190 = vmul.f32 %v5944, %v6163
        %v6191 = vmul.f32 %v5945, %v6163
        %v6192 = vmul.f32 %v5946, %v6163
        %v6193 = vmul.f32 %v5947, %v6163
        %v6194 = vmul.f32 %v5948, %v6163
        %v6195 = vmul.f32 %v5949, %v6163
        %v6196 = vadd.f32 %v6128, %v6164
        %v6197 = vadd.f32 %v6129, %v6165
        %v6198 = vadd.f32 %v6130, %v6166
        %v6199 = vadd.f32 %v6131, %v6167
        %v6200 = vadd.f32 %v6132, %v6168
        %v6201 = vadd.f32 %v6133, %v6169
        %v6202 = vadd.f32 %v6134, %v6170
        %v6203 = vadd.f32 %v6135, %v6171
        %v6204 = vadd.f32 %v6136, %v6172
        %v6205 = vadd.f32 %v6137, %v6173
        %v6206 = vadd.f32 %v6138, %v6174
        %v6207 = vadd.f32 %v6139, %v6175
        %v6208 = vadd.f32 %v6140, %v6176
        %v6209 = vadd.f32 %v6141, %v6177
        %v6210 = vadd.f32 %v6142, %v6178
        %v6211 = vadd.f32 %v6143, %v6179
        %v6212 = vadd.f32 %v6144, %v6180
        %v6213 = vadd.f32 %v6145, %v6181
        %v6214 = vadd.f32 %v6146, %v6182
        %v6215 = vadd.f32 %v6147, %v6183
        %v6216 = vadd.f32 %v6148, %v6184
        %v6217 = vadd.f32 %v6149, %v6185
        %v6218 = vadd.f32 %v6150, %v6186
        %v6219 = vadd.f32 %v6151, %v6187
        %v6220 = vadd.f32 %v6152, %v6188
        %v6221 = vadd.f32 %v6153, %v6189
        %v6222 = vadd.f32 %v6154, %v6190
        %v6223 = vadd.f32 %v6155, %v6191
        %v6224 = vadd.f32 %v6156, %v6192
        %v6225 = vadd.f32 %v6157, %v6193
        %v6226 = vadd.f32 %v6158, %v6194
        %v6227 = vadd.f32 %v6159, %v6195
        %v6228 = vlaneseq
        %v6229 = vshrl.u32 %v6228, 7
        %v6230 = vsub.s32 7, %v6229
        %v6231 = vrot.slane %v4380, %v6230
        %v6232 = vmul.f32 %v5920, %v6231
        %v6233 = vmul.f32 %v5921, %v6231
        %v6234 = vmul.f32 %v5922, %v6231
        %v6235 = vmul.f32 %v5923, %v6231
        %v6236 = vmul.f32 %v5924, %v6231
        %v6237 = vmul.f32 %v5925, %v6231
        %v6238 = vmul.f32 %v5926, %v6231
        %v6239 = vmul.f32 %v5927, %v6231
        %v6240 = vmul.f32 %v5928, %v6231
        %v6241 = vmul.f32 %v5929, %v6231
        %v6242 = vmul.f32 %v5930, %v6231
        %v6243 = vmul.f32 %v5931, %v6231
        %v6244 = vmul.f32 %v5932, %v6231
        %v6245 = vmul.f32 %v5933, %v6231
        %v6246 = vmul.f32 %v5934, %v6231
        %v6247 = vmul.f32 %v5935, %v6231
        %v6248 = vmul.f32 %v5936, %v6231
        %v6249 = vmul.f32 %v5937, %v6231
        %v6250 = vmul.f32 %v5938, %v6231
        %v6251 = vmul.f32 %v5939, %v6231
        %v6252 = vmul.f32 %v5940, %v6231
        %v6253 = vmul.f32 %v5941, %v6231
        %v6254 = vmul.f32 %v5942, %v6231
        %v6255 = vmul.f32 %v5943, %v6231
        %v6256 = vmul.f32 %v5944, %v6231
        %v6257 = vmul.f32 %v5945, %v6231
        %v6258 = vmul.f32 %v5946, %v6231
        %v6259 = vmul.f32 %v5947, %v6231
        %v6260 = vmul.f32 %v5948, %v6231
        %v6261 = vmul.f32 %v5949, %v6231
        %v6262 = vmul.f32 %v5950, %v6231
        %v6263 = vmul.f32 %v5951, %v6231
        %v6264 = vadd.f32 %v6196, %v6232
        %v6265 = vadd.f32 %v6197, %v6233
        %v6266 = vadd.f32 %v6198, %v6234
        %v6267 = vadd.f32 %v6199, %v6235
        %v6268 = vadd.f32 %v6200, %v6236
        %v6269 = vadd.f32 %v6201, %v6237
        %v6270 = vadd.f32 %v6202, %v6238
        %v6271 = vadd.f32 %v6203, %v6239
        %v6272 = vadd.f32 %v6204, %v6240
        %v6273 = vadd.f32 %v6205, %v6241
        %v6274 = vadd.f32 %v6206, %v6242
        %v6275 = vadd.f32 %v6207, %v6243
        %v6276 = vadd.f32 %v6208, %v6244
        %v6277 = vadd.f32 %v6209, %v6245
        %v6278 = vadd.f32 %v6210, %v6246
        %v6279 = vadd.f32 %v6211, %v6247
        %v6280 = vadd.f32 %v6212, %v6248
        %v6281 = vadd.f32 %v6213, %v6249
        %v6282 = vadd.f32 %v6214, %v6250
        %v6283 = vadd.f32 %v6215, %v6251
        %v6284 = vadd.f32 %v6216, %v6252
        %v6285 = vadd.f32 %v6217, %v6253
        %v6286 = vadd.f32 %v6218, %v6254
        %v6287 = vadd.f32 %v6219, %v6255
        %v6288 = vadd.f32 %v6220, %v6256
        %v6289 = vadd.f32 %v6221, %v6257
        %v6290 = vadd.f32 %v6222, %v6258
        %v6291 = vadd.f32 %v6223, %v6259
        %v6292 = vadd.f32 %v6224, %v6260
        %v6293 = vadd.f32 %v6225, %v6261
        %v6294 = vadd.f32 %v6226, %v6262
        %v6295 = vadd.f32 %v6227, %v6263
        %v6296 = vlaneseq
        %v6297 = vshrl.u32 %v6296, 7
        %v6298 = vsub.s32 6, %v6297
        %v6299 = vrot.slane %v4381, %v6298
        %v6300 = vmul.f32 %v5922, %v6299
        %v6301 = vmul.f32 %v5923, %v6299
        %v6302 = vmul.f32 %v5924, %v6299
        %v6303 = vmul.f32 %v5925, %v6299
        %v6304 = vmul.f32 %v5926, %v6299
        %v6305 = vmul.f32 %v5927, %v6299
        %v6306 = vmul.f32 %v5928, %v6299
        %v6307 = vmul.f32 %v5929, %v6299
        %v6308 = vmul.f32 %v5930, %v6299
        %v6309 = vmul.f32 %v5931, %v6299
        %v6310 = vmul.f32 %v5932, %v6299
        %v6311 = vmul.f32 %v5933, %v6299
        %v6312 = vmul.f32 %v5934, %v6299
        %v6313 = vmul.f32 %v5935, %v6299
        %v6314 = vmul.f32 %v5936, %v6299
        %v6315 = vmul.f32 %v5937, %v6299
        %v6316 = vmul.f32 %v5938, %v6299
        %v6317 = vmul.f32 %v5939, %v6299
        %v6318 = vmul.f32 %v5940, %v6299
        %v6319 = vmul.f32 %v5941, %v6299
        %v6320 = vmul.f32 %v5942, %v6299
        %v6321 = vmul.f32 %v5943, %v6299
        %v6322 = vmul.f32 %v5944, %v6299
        %v6323 = vmul.f32 %v5945, %v6299
        %v6324 = vmul.f32 %v5946, %v6299
        %v6325 = vmul.f32 %v5947, %v6299
        %v6326 = vmul.f32 %v5948, %v6299
        %v6327 = vmul.f32 %v5949, %v6299
        %v6328 = vmul.f32 %v5950, %v6299
        %v6329 = vmul.f32 %v5951, %v6299
        %v6330 = vmul.f32 %v5952, %v6299
        %v6331 = vmul.f32 %v5953, %v6299
        %v6332 = vadd.f32 %v6264, %v6300
        %v6333 = vadd.f32 %v6265, %v6301
        %v6334 = vadd.f32 %v6266, %v6302
        %v6335 = vadd.f32 %v6267, %v6303
        %v6336 = vadd.f32 %v6268, %v6304
        %v6337 = vadd.f32 %v6269, %v6305
        %v6338 = vadd.f32 %v6270, %v6306
        %v6339 = vadd.f32 %v6271, %v6307
        %v6340 = vadd.f32 %v6272, %v6308
        %v6341 = vadd.f32 %v6273, %v6309
        %v6342 = vadd.f32 %v6274, %v6310
        %v6343 = vadd.f32 %v6275, %v6311
        %v6344 = vadd.f32 %v6276, %v6312
        %v6345 = vadd.f32 %v6277, %v6313
        %v6346 = vadd.f32 %v6278, %v6314
        %v6347 = vadd.f32 %v6279, %v6315
        %v6348 = vadd.f32 %v6280, %v6316
        %v6349 = vadd.f32 %v6281, %v6317
        %v6350 = vadd.f32 %v6282, %v6318
        %v6351 = vadd.f32 %v6283, %v6319
        %v6352 = vadd.f32 %v6284, %v6320
        %v6353 = vadd.f32 %v6285, %v6321
        %v6354 = vadd.f32 %v6286, %v6322
        %v6355 = vadd.f32 %v6287, %v6323
        %v6356 = vadd.f32 %v6288, %v6324
        %v6357 = vadd.f32 %v6289, %v6325
        %v6358 = vadd.f32 %v6290, %v6326
        %v6359 = vadd.f32 %v6291, %v6327
        %v6360 = vadd.f32 %v6292, %v6328
        %v6361 = vadd.f32 %v6293, %v6329
        %v6362 = vadd.f32 %v6294, %v6330
        %v6363 = vadd.f32 %v6295, %v6331
        %v6364 = vlaneseq
        %v6365 = vshrl.u32 %v6364, 7
        %v6366 = vsub.s32 5, %v6365
        %v6367 = vrot.slane %v4382, %v6366
        %v6368 = vmul.f32 %v5924, %v6367
        %v6369 = vmul.f32 %v5925, %v6367
        %v6370 = vmul.f32 %v5926, %v6367
        %v6371 = vmul.f32 %v5927, %v6367
        %v6372 = vmul.f32 %v5928, %v6367
        %v6373 = vmul.f32 %v5929, %v6367
        %v6374 = vmul.f32 %v5930, %v6367
        %v6375 = vmul.f32 %v5931, %v6367
        %v6376 = vmul.f32 %v5932, %v6367
        %v6377 = vmul.f32 %v5933, %v6367
        %v6378 = vmul.f32 %v5934, %v6367
        %v6379 = vmul.f32 %v5935, %v6367
        %v6380 = vmul.f32 %v5936, %v6367
        %v6381 = vmul.f32 %v5937, %v6367
        %v6382 = vmul.f32 %v5938, %v6367
        %v6383 = vmul.f32 %v5939, %v6367
        %v6384 = vmul.f32 %v5940, %v6367
        %v6385 = vmul.f32 %v5941, %v6367
        %v6386 = vmul.f32 %v5942, %v6367
        %v6387 = vmul.f32 %v5943, %v6367
        %v6388 = vmul.f32 %v5944, %v6367
        %v6389 = vmul.f32 %v5945, %v6367
        %v6390 = vmul.f32 %v5946, %v6367
        %v6391 = vmul.f32 %v5947, %v6367
        %v6392 = vmul.f32 %v5948, %v6367
        %v6393 = vmul.f32 %v5949, %v6367
        %v6394 = vmul.f32 %v5950, %v6367
        %v6395 = vmul.f32 %v5951, %v6367
        %v6396 = vmul.f32 %v5952, %v6367
        %v6397 = vmul.f32 %v5953, %v6367
        %v6398 = vmul.f32 %v5954, %v6367
        %v6399 = vmul.f32 %v5955, %v6367
        %v6400 = vadd.f32 %v6332, %v6368
        %v6401 = vadd.f32 %v6333, %v6369
        %v6402 = vadd.f32 %v6334, %v6370
        %v6403 = vadd.f32 %v6335, %v6371
        %v6404 = vadd.f32 %v6336, %v6372
        %v6405 = vadd.f32 %v6337, %v6373
        %v6406 = vadd.f32 %v6338, %v6374
        %v6407 = vadd.f32 %v6339, %v6375
        %v6408 = vadd.f32 %v6340, %v6376
        %v6409 = vadd.f32 %v6341, %v6377
        %v6410 = vadd.f32 %v6342, %v6378
        %v6411 = vadd.f32 %v6343, %v6379
        %v6412 = vadd.f32 %v6344, %v6380
        %v6413 = vadd.f32 %v6345, %v6381
        %v6414 = vadd.f32 %v6346, %v6382
        %v6415 = vadd.f32 %v6347, %v6383
        %v6416 = vadd.f32 %v6348, %v6384
        %v6417 = vadd.f32 %v6349, %v6385
        %v6418 = vadd.f32 %v6350, %v6386
        %v6419 = vadd.f32 %v6351, %v6387
        %v6420 = vadd.f32 %v6352, %v6388
        %v6421 = vadd.f32 %v6353, %v6389
        %v6422 = vadd.f32 %v6354, %v6390
        %v6423 = vadd.f32 %v6355, %v6391
        %v6424 = vadd.f32 %v6356, %v6392
        %v6425 = vadd.f32 %v6357, %v6393
        %v6426 = vadd.f32 %v6358, %v6394
        %v6427 = vadd.f32 %v6359, %v6395
        %v6428 = vadd.f32 %v6360, %v6396
        %v6429 = vadd.f32 %v6361, %v6397
        %v6430 = vadd.f32 %v6362, %v6398
        %v6431 = vadd.f32 %v6363, %v6399
        %v6432 = vld [vmem:[#allocation5 + $0x4] sm:$0xff]
        %v6433 = vld [vmem:[#allocation5 + $0xc] sm:$0xff]
        %v6434 = vld [vmem:[#allocation5 + $0x1c] sm:$0xff]
        %v6435 = vld [vmem:[#allocation5 + $0x24] sm:$0xff]
        %v6436 = vld [vmem:[#allocation5 + $0x34] sm:$0xff]
        %v6437 = vld [vmem:[#allocation5 + $0x3c] sm:$0xff]
        %v6438 = vld [vmem:[#allocation5 + $0x4c] sm:$0xff]
        %v6439 = vld [vmem:[#allocation5 + $0x54] sm:$0xff]
        %v6440 = vld [vmem:[#allocation5 + $0x64] sm:$0xff]
        %v6441 = vld [vmem:[#allocation5 + $0x6c] sm:$0xff]
        %v6442 = vld [vmem:[#allocation5 + $0x7c] sm:$0xff]
        %v6443 = vld [vmem:[#allocation5 + $0x84] sm:$0xff]
        %v6444 = vld [vmem:[#allocation5 + $0x94] sm:$0xff]
        %v6445 = vld [vmem:[#allocation5 + $0x9c] sm:$0xff]
        %v6446 = vld [vmem:[#allocation5 + $0xac] sm:$0xff]
        %v6447 = vld [vmem:[#allocation5 + $0xb4] sm:$0xff]
        %v6448 = vld [vmem:[#allocation5 + $0xc4] sm:$0xff]
        %v6449 = vld [vmem:[#allocation5 + $0xcc] sm:$0xff]
        %v6450 = vld [vmem:[#allocation5 + $0xdc] sm:$0xff]
        %v6451 = vld [vmem:[#allocation5 + $0xe4] sm:$0xff]
        %v6452 = vld [vmem:[#allocation5 + $0xf4] sm:$0xff]
        %v6453 = vld [vmem:[#allocation5 + $0xfc] sm:$0xff]
        %v6454 = vld [vmem:[#allocation5 + $0x10c] sm:$0xff]
        %v6455 = vld [vmem:[#allocation5 + $0x114] sm:$0xff]
        %v6456 = vld [vmem:[#allocation5 + $0x124] sm:$0xff]
        %v6457 = vld [vmem:[#allocation5 + $0x12c] sm:$0xff]
        %v6458 = vld [vmem:[#allocation5 + $0x13c] sm:$0xff]
        %v6459 = vld [vmem:[#allocation5 + $0x144] sm:$0xff]
        %v6460 = vld [vmem:[#allocation5 + $0x154] sm:$0xff]
        %v6461 = vld [vmem:[#allocation5 + $0x15c] sm:$0xff]
        %v6462 = vld [vmem:[#allocation5 + $0x16c] sm:$0xff]
        %v6463 = vld [vmem:[#allocation5 + $0x174] sm:$0xff]
        %v6464 = vld [vmem:[#allocation5 + $0x184] sm:$0xff]
        %v6465 = vld [vmem:[#allocation5 + $0x18c] sm:$0xff]
        %v6466 = vld [vmem:[#allocation5 + $0x19c] sm:$0xff]
        %v6467 = vld [vmem:[#allocation5 + $0x1a4] sm:$0xff]
        %v6468 = vld [vmem:[#allocation5 + $0x1b4] sm:$0xff]
        %v6469 = vld [vmem:[#allocation5 + $0x1bc] sm:$0xff]
        %v6470 = vld [vmem:[#allocation5 + $0x1cc] sm:$0xff]
        %v6471 = vld [vmem:[#allocation5 + $0x1d4] sm:$0xff]
        %v6472 = vld [vmem:[#allocation5 + $0x1e4] sm:$0xff]
        %v6473 = vld [vmem:[#allocation5 + $0x1ec] sm:$0xff]
        %v6474 = vld [vmem:[#allocation5 + $0x1fc] sm:$0xff]
        %v6475 = vld [vmem:[#allocation5 + $0x204] sm:$0xff]
        %v6476 = vlaneseq
        %v6477 = vshrl.u32 %v6476, 7
        %v6478 = vsub.s32 4, %v6477
        %v6479 = vrot.slane %v4377, %v6478
        %v6480 = vmul.f32 %v6432, %v6479
        %v6481 = vmul.f32 %v6433, %v6479
        %v6482 = vmul.f32 %v6434, %v6479
        %v6483 = vmul.f32 %v6435, %v6479
        %v6484 = vmul.f32 %v6436, %v6479
        %v6485 = vmul.f32 %v6437, %v6479
        %v6486 = vmul.f32 %v6438, %v6479
        %v6487 = vmul.f32 %v6439, %v6479
        %v6488 = vmul.f32 %v6440, %v6479
        %v6489 = vmul.f32 %v6441, %v6479
        %v6490 = vmul.f32 %v6442, %v6479
        %v6491 = vmul.f32 %v6443, %v6479
        %v6492 = vmul.f32 %v6444, %v6479
        %v6493 = vmul.f32 %v6445, %v6479
        %v6494 = vmul.f32 %v6446, %v6479
        %v6495 = vmul.f32 %v6447, %v6479
        %v6496 = vmul.f32 %v6448, %v6479
        %v6497 = vmul.f32 %v6449, %v6479
        %v6498 = vmul.f32 %v6450, %v6479
        %v6499 = vmul.f32 %v6451, %v6479
        %v6500 = vmul.f32 %v6452, %v6479
        %v6501 = vmul.f32 %v6453, %v6479
        %v6502 = vmul.f32 %v6454, %v6479
        %v6503 = vmul.f32 %v6455, %v6479
        %v6504 = vmul.f32 %v6456, %v6479
        %v6505 = vmul.f32 %v6457, %v6479
        %v6506 = vmul.f32 %v6458, %v6479
        %v6507 = vmul.f32 %v6459, %v6479
        %v6508 = vmul.f32 %v6460, %v6479
        %v6509 = vmul.f32 %v6461, %v6479
        %v6510 = vmul.f32 %v6462, %v6479
        %v6511 = vmul.f32 %v6463, %v6479
        %v6512 = vadd.f32 %v6400, %v6480
        %v6513 = vadd.f32 %v6401, %v6481
        %v6514 = vadd.f32 %v6402, %v6482
        %v6515 = vadd.f32 %v6403, %v6483
        %v6516 = vadd.f32 %v6404, %v6484
        %v6517 = vadd.f32 %v6405, %v6485
        %v6518 = vadd.f32 %v6406, %v6486
        %v6519 = vadd.f32 %v6407, %v6487
        %v6520 = vadd.f32 %v6408, %v6488
        %v6521 = vadd.f32 %v6409, %v6489
        %v6522 = vadd.f32 %v6410, %v6490
        %v6523 = vadd.f32 %v6411, %v6491
        %v6524 = vadd.f32 %v6412, %v6492
        %v6525 = vadd.f32 %v6413, %v6493
        %v6526 = vadd.f32 %v6414, %v6494
        %v6527 = vadd.f32 %v6415, %v6495
        %v6528 = vadd.f32 %v6416, %v6496
        %v6529 = vadd.f32 %v6417, %v6497
        %v6530 = vadd.f32 %v6418, %v6498
        %v6531 = vadd.f32 %v6419, %v6499
        %v6532 = vadd.f32 %v6420, %v6500
        %v6533 = vadd.f32 %v6421, %v6501
        %v6534 = vadd.f32 %v6422, %v6502
        %v6535 = vadd.f32 %v6423, %v6503
        %v6536 = vadd.f32 %v6424, %v6504
        %v6537 = vadd.f32 %v6425, %v6505
        %v6538 = vadd.f32 %v6426, %v6506
        %v6539 = vadd.f32 %v6427, %v6507
        %v6540 = vadd.f32 %v6428, %v6508
        %v6541 = vadd.f32 %v6429, %v6509
        %v6542 = vadd.f32 %v6430, %v6510
        %v6543 = vadd.f32 %v6431, %v6511
        %v6544 = vlaneseq
        %v6545 = vshrl.u32 %v6544, 7
        %v6546 = vsub.s32 3, %v6545
        %v6547 = vrot.slane %v4378, %v6546
        %v6548 = vmul.f32 %v6434, %v6547
        %v6549 = vmul.f32 %v6435, %v6547
        %v6550 = vmul.f32 %v6436, %v6547
        %v6551 = vmul.f32 %v6437, %v6547
        %v6552 = vmul.f32 %v6438, %v6547
        %v6553 = vmul.f32 %v6439, %v6547
        %v6554 = vmul.f32 %v6440, %v6547
        %v6555 = vmul.f32 %v6441, %v6547
        %v6556 = vmul.f32 %v6442, %v6547
        %v6557 = vmul.f32 %v6443, %v6547
        %v6558 = vmul.f32 %v6444, %v6547
        %v6559 = vmul.f32 %v6445, %v6547
        %v6560 = vmul.f32 %v6446, %v6547
        %v6561 = vmul.f32 %v6447, %v6547
        %v6562 = vmul.f32 %v6448, %v6547
        %v6563 = vmul.f32 %v6449, %v6547
        %v6564 = vmul.f32 %v6450, %v6547
        %v6565 = vmul.f32 %v6451, %v6547
        %v6566 = vmul.f32 %v6452, %v6547
        %v6567 = vmul.f32 %v6453, %v6547
        %v6568 = vmul.f32 %v6454, %v6547
        %v6569 = vmul.f32 %v6455, %v6547
        %v6570 = vmul.f32 %v6456, %v6547
        %v6571 = vmul.f32 %v6457, %v6547
        %v6572 = vmul.f32 %v6458, %v6547
        %v6573 = vmul.f32 %v6459, %v6547
        %v6574 = vmul.f32 %v6460, %v6547
        %v6575 = vmul.f32 %v6461, %v6547
        %v6576 = vmul.f32 %v6462, %v6547
        %v6577 = vmul.f32 %v6463, %v6547
        %v6578 = vmul.f32 %v6464, %v6547
        %v6579 = vmul.f32 %v6465, %v6547
        %v6580 = vadd.f32 %v6512, %v6548
        %v6581 = vadd.f32 %v6513, %v6549
        %v6582 = vadd.f32 %v6514, %v6550
        %v6583 = vadd.f32 %v6515, %v6551
        %v6584 = vadd.f32 %v6516, %v6552
        %v6585 = vadd.f32 %v6517, %v6553
        %v6586 = vadd.f32 %v6518, %v6554
        %v6587 = vadd.f32 %v6519, %v6555
        %v6588 = vadd.f32 %v6520, %v6556
        %v6589 = vadd.f32 %v6521, %v6557
        %v6590 = vadd.f32 %v6522, %v6558
        %v6591 = vadd.f32 %v6523, %v6559
        %v6592 = vadd.f32 %v6524, %v6560
        %v6593 = vadd.f32 %v6525, %v6561
        %v6594 = vadd.f32 %v6526, %v6562
        %v6595 = vadd.f32 %v6527, %v6563
        %v6596 = vadd.f32 %v6528, %v6564
        %v6597 = vadd.f32 %v6529, %v6565
        %v6598 = vadd.f32 %v6530, %v6566
        %v6599 = vadd.f32 %v6531, %v6567
        %v6600 = vadd.f32 %v6532, %v6568
        %v6601 = vadd.f32 %v6533, %v6569
        %v6602 = vadd.f32 %v6534, %v6570
        %v6603 = vadd.f32 %v6535, %v6571
        %v6604 = vadd.f32 %v6536, %v6572
        %v6605 = vadd.f32 %v6537, %v6573
        %v6606 = vadd.f32 %v6538, %v6574
        %v6607 = vadd.f32 %v6539, %v6575
        %v6608 = vadd.f32 %v6540, %v6576
        %v6609 = vadd.f32 %v6541, %v6577
        %v6610 = vadd.f32 %v6542, %v6578
        %v6611 = vadd.f32 %v6543, %v6579
        %v6612 = vlaneseq
        %v6613 = vshrl.u32 %v6612, 7
        %v6614 = vsub.s32 2, %v6613
        %v6615 = vrot.slane %v4379, %v6614
        %v6616 = vmul.f32 %v6436, %v6615
        %v6617 = vmul.f32 %v6437, %v6615
        %v6618 = vmul.f32 %v6438, %v6615
        %v6619 = vmul.f32 %v6439, %v6615
        %v6620 = vmul.f32 %v6440, %v6615
        %v6621 = vmul.f32 %v6441, %v6615
        %v6622 = vmul.f32 %v6442, %v6615
        %v6623 = vmul.f32 %v6443, %v6615
        %v6624 = vmul.f32 %v6444, %v6615
        %v6625 = vmul.f32 %v6445, %v6615
        %v6626 = vmul.f32 %v6446, %v6615
        %v6627 = vmul.f32 %v6447, %v6615
        %v6628 = vmul.f32 %v6448, %v6615
        %v6629 = vmul.f32 %v6449, %v6615
        %v6630 = vmul.f32 %v6450, %v6615
        %v6631 = vmul.f32 %v6451, %v6615
        %v6632 = vmul.f32 %v6452, %v6615
        %v6633 = vmul.f32 %v6453, %v6615
        %v6634 = vmul.f32 %v6454, %v6615
        %v6635 = vmul.f32 %v6455, %v6615
        %v6636 = vmul.f32 %v6456, %v6615
        %v6637 = vmul.f32 %v6457, %v6615
        %v6638 = vmul.f32 %v6458, %v6615
        %v6639 = vmul.f32 %v6459, %v6615
        %v6640 = vmul.f32 %v6460, %v6615
        %v6641 = vmul.f32 %v6461, %v6615
        %v6642 = vmul.f32 %v6462, %v6615
        %v6643 = vmul.f32 %v6463, %v6615
        %v6644 = vmul.f32 %v6464, %v6615
        %v6645 = vmul.f32 %v6465, %v6615
        %v6646 = vmul.f32 %v6466, %v6615
        %v6647 = vmul.f32 %v6467, %v6615
        %v6648 = vadd.f32 %v6580, %v6616
        %v6649 = vadd.f32 %v6581, %v6617
        %v6650 = vadd.f32 %v6582, %v6618
        %v6651 = vadd.f32 %v6583, %v6619
        %v6652 = vadd.f32 %v6584, %v6620
        %v6653 = vadd.f32 %v6585, %v6621
        %v6654 = vadd.f32 %v6586, %v6622
        %v6655 = vadd.f32 %v6587, %v6623
        %v6656 = vadd.f32 %v6588, %v6624
        %v6657 = vadd.f32 %v6589, %v6625
        %v6658 = vadd.f32 %v6590, %v6626
        %v6659 = vadd.f32 %v6591, %v6627
        %v6660 = vadd.f32 %v6592, %v6628
        %v6661 = vadd.f32 %v6593, %v6629
        %v6662 = vadd.f32 %v6594, %v6630
        %v6663 = vadd.f32 %v6595, %v6631
        %v6664 = vadd.f32 %v6596, %v6632
        %v6665 = vadd.f32 %v6597, %v6633
        %v6666 = vadd.f32 %v6598, %v6634
        %v6667 = vadd.f32 %v6599, %v6635
        %v6668 = vadd.f32 %v6600, %v6636
        %v6669 = vadd.f32 %v6601, %v6637
        %v6670 = vadd.f32 %v6602, %v6638
        %v6671 = vadd.f32 %v6603, %v6639
        %v6672 = vadd.f32 %v6604, %v6640
        %v6673 = vadd.f32 %v6605, %v6641
        %v6674 = vadd.f32 %v6606, %v6642
        %v6675 = vadd.f32 %v6607, %v6643
        %v6676 = vadd.f32 %v6608, %v6644
        %v6677 = vadd.f32 %v6609, %v6645
        %v6678 = vadd.f32 %v6610, %v6646
        %v6679 = vadd.f32 %v6611, %v6647
        %v6680 = vlaneseq
        %v6681 = vshrl.u32 %v6680, 7
        %v6682 = vsub.s32 1, %v6681
        %v6683 = vrot.slane %v4380, %v6682
        %v6684 = vmul.f32 %v6438, %v6683
        %v6685 = vmul.f32 %v6439, %v6683
        %v6686 = vmul.f32 %v6440, %v6683
        %v6687 = vmul.f32 %v6441, %v6683
        %v6688 = vmul.f32 %v6442, %v6683
        %v6689 = vmul.f32 %v6443, %v6683
        %v6690 = vmul.f32 %v6444, %v6683
        %v6691 = vmul.f32 %v6445, %v6683
        %v6692 = vmul.f32 %v6446, %v6683
        %v6693 = vmul.f32 %v6447, %v6683
        %v6694 = vmul.f32 %v6448, %v6683
        %v6695 = vmul.f32 %v6449, %v6683
        %v6696 = vmul.f32 %v6450, %v6683
        %v6697 = vmul.f32 %v6451, %v6683
        %v6698 = vmul.f32 %v6452, %v6683
        %v6699 = vmul.f32 %v6453, %v6683
        %v6700 = vmul.f32 %v6454, %v6683
        %v6701 = vmul.f32 %v6455, %v6683
        %v6702 = vmul.f32 %v6456, %v6683
        %v6703 = vmul.f32 %v6457, %v6683
        %v6704 = vmul.f32 %v6458, %v6683
        %v6705 = vmul.f32 %v6459, %v6683
        %v6706 = vmul.f32 %v6460, %v6683
        %v6707 = vmul.f32 %v6461, %v6683
        %v6708 = vmul.f32 %v6462, %v6683
        %v6709 = vmul.f32 %v6463, %v6683
        %v6710 = vmul.f32 %v6464, %v6683
        %v6711 = vmul.f32 %v6465, %v6683
        %v6712 = vmul.f32 %v6466, %v6683
        %v6713 = vmul.f32 %v6467, %v6683
        %v6714 = vmul.f32 %v6468, %v6683
        %v6715 = vmul.f32 %v6469, %v6683
        %v6716 = vadd.f32 %v6648, %v6684
        %v6717 = vadd.f32 %v6649, %v6685
        %v6718 = vadd.f32 %v6650, %v6686
        %v6719 = vadd.f32 %v6651, %v6687
        %v6720 = vadd.f32 %v6652, %v6688
        %v6721 = vadd.f32 %v6653, %v6689
        %v6722 = vadd.f32 %v6654, %v6690
        %v6723 = vadd.f32 %v6655, %v6691
        %v6724 = vadd.f32 %v6656, %v6692
        %v6725 = vadd.f32 %v6657, %v6693
        %v6726 = vadd.f32 %v6658, %v6694
        %v6727 = vadd.f32 %v6659, %v6695
        %v6728 = vadd.f32 %v6660, %v6696
        %v6729 = vadd.f32 %v6661, %v6697
        %v6730 = vadd.f32 %v6662, %v6698
        %v6731 = vadd.f32 %v6663, %v6699
        %v6732 = vadd.f32 %v6664, %v6700
        %v6733 = vadd.f32 %v6665, %v6701
        %v6734 = vadd.f32 %v6666, %v6702
        %v6735 = vadd.f32 %v6667, %v6703
        %v6736 = vadd.f32 %v6668, %v6704
        %v6737 = vadd.f32 %v6669, %v6705
        %v6738 = vadd.f32 %v6670, %v6706
        %v6739 = vadd.f32 %v6671, %v6707
        %v6740 = vadd.f32 %v6672, %v6708
        %v6741 = vadd.f32 %v6673, %v6709
        %v6742 = vadd.f32 %v6674, %v6710
        %v6743 = vadd.f32 %v6675, %v6711
        %v6744 = vadd.f32 %v6676, %v6712
        %v6745 = vadd.f32 %v6677, %v6713
        %v6746 = vadd.f32 %v6678, %v6714
        %v6747 = vadd.f32 %v6679, %v6715
        %v6748 = vlaneseq
        %v6749 = vshrl.u32 %v6748, 7
        %v6750 = vsub.s32 0, %v6749
        %v6751 = vrot.slane %v4381, %v6750
        %v6752 = vmul.f32 %v6440, %v6751
        %v6753 = vmul.f32 %v6441, %v6751
        %v6754 = vmul.f32 %v6442, %v6751
        %v6755 = vmul.f32 %v6443, %v6751
        %v6756 = vmul.f32 %v6444, %v6751
        %v6757 = vmul.f32 %v6445, %v6751
        %v6758 = vmul.f32 %v6446, %v6751
        %v6759 = vmul.f32 %v6447, %v6751
        %v6760 = vmul.f32 %v6448, %v6751
        %v6761 = vmul.f32 %v6449, %v6751
        %v6762 = vmul.f32 %v6450, %v6751
        %v6763 = vmul.f32 %v6451, %v6751
        %v6764 = vmul.f32 %v6452, %v6751
        %v6765 = vmul.f32 %v6453, %v6751
        %v6766 = vmul.f32 %v6454, %v6751
        %v6767 = vmul.f32 %v6455, %v6751
        %v6768 = vmul.f32 %v6456, %v6751
        %v6769 = vmul.f32 %v6457, %v6751
        %v6770 = vmul.f32 %v6458, %v6751
        %v6771 = vmul.f32 %v6459, %v6751
        %v6772 = vmul.f32 %v6460, %v6751
        %v6773 = vmul.f32 %v6461, %v6751
        %v6774 = vmul.f32 %v6462, %v6751
        %v6775 = vmul.f32 %v6463, %v6751
        %v6776 = vmul.f32 %v6464, %v6751
        %v6777 = vmul.f32 %v6465, %v6751
        %v6778 = vmul.f32 %v6466, %v6751
        %v6779 = vmul.f32 %v6467, %v6751
        %v6780 = vmul.f32 %v6468, %v6751
        %v6781 = vmul.f32 %v6469, %v6751
        %v6782 = vmul.f32 %v6470, %v6751
        %v6783 = vmul.f32 %v6471, %v6751
        %v6784 = vadd.f32 %v6716, %v6752
        %v6785 = vadd.f32 %v6717, %v6753
        %v6786 = vadd.f32 %v6718, %v6754
        %v6787 = vadd.f32 %v6719, %v6755
        %v6788 = vadd.f32 %v6720, %v6756
        %v6789 = vadd.f32 %v6721, %v6757
        %v6790 = vadd.f32 %v6722, %v6758
        %v6791 = vadd.f32 %v6723, %v6759
        %v6792 = vadd.f32 %v6724, %v6760
        %v6793 = vadd.f32 %v6725, %v6761
        %v6794 = vadd.f32 %v6726, %v6762
        %v6795 = vadd.f32 %v6727, %v6763
        %v6796 = vadd.f32 %v6728, %v6764
        %v6797 = vadd.f32 %v6729, %v6765
        %v6798 = vadd.f32 %v6730, %v6766
        %v6799 = vadd.f32 %v6731, %v6767
        %v6800 = vadd.f32 %v6732, %v6768
        %v6801 = vadd.f32 %v6733, %v6769
        %v6802 = vadd.f32 %v6734, %v6770
        %v6803 = vadd.f32 %v6735, %v6771
        %v6804 = vadd.f32 %v6736, %v6772
        %v6805 = vadd.f32 %v6737, %v6773
        %v6806 = vadd.f32 %v6738, %v6774
        %v6807 = vadd.f32 %v6739, %v6775
        %v6808 = vadd.f32 %v6740, %v6776
        %v6809 = vadd.f32 %v6741, %v6777
        %v6810 = vadd.f32 %v6742, %v6778
        %v6811 = vadd.f32 %v6743, %v6779
        %v6812 = vadd.f32 %v6744, %v6780
        %v6813 = vadd.f32 %v6745, %v6781
        %v6814 = vadd.f32 %v6746, %v6782
        %v6815 = vadd.f32 %v6747, %v6783
        %v6816 = vlaneseq
        %v6817 = vshrl.u32 %v6816, 7
        %v6818 = vsub.s32 7, %v6817
        %v6819 = vrot.slane %v4381, %v6818
        %v6820 = vmul.f32 %v6442, %v6819
        %v6821 = vmul.f32 %v6443, %v6819
        %v6822 = vmul.f32 %v6444, %v6819
        %v6823 = vmul.f32 %v6445, %v6819
        %v6824 = vmul.f32 %v6446, %v6819
        %v6825 = vmul.f32 %v6447, %v6819
        %v6826 = vmul.f32 %v6448, %v6819
        %v6827 = vmul.f32 %v6449, %v6819
        %v6828 = vmul.f32 %v6450, %v6819
        %v6829 = vmul.f32 %v6451, %v6819
        %v6830 = vmul.f32 %v6452, %v6819
        %v6831 = vmul.f32 %v6453, %v6819
        %v6832 = vmul.f32 %v6454, %v6819
        %v6833 = vmul.f32 %v6455, %v6819
        %v6834 = vmul.f32 %v6456, %v6819
        %v6835 = vmul.f32 %v6457, %v6819
        %v6836 = vmul.f32 %v6458, %v6819
        %v6837 = vmul.f32 %v6459, %v6819
        %v6838 = vmul.f32 %v6460, %v6819
        %v6839 = vmul.f32 %v6461, %v6819
        %v6840 = vmul.f32 %v6462, %v6819
        %v6841 = vmul.f32 %v6463, %v6819
        %v6842 = vmul.f32 %v6464, %v6819
        %v6843 = vmul.f32 %v6465, %v6819
        %v6844 = vmul.f32 %v6466, %v6819
        %v6845 = vmul.f32 %v6467, %v6819
        %v6846 = vmul.f32 %v6468, %v6819
        %v6847 = vmul.f32 %v6469, %v6819
        %v6848 = vmul.f32 %v6470, %v6819
        %v6849 = vmul.f32 %v6471, %v6819
        %v6850 = vmul.f32 %v6472, %v6819
        %v6851 = vmul.f32 %v6473, %v6819
        %v6852 = vadd.f32 %v6784, %v6820
        %v6853 = vadd.f32 %v6785, %v6821
        %v6854 = vadd.f32 %v6786, %v6822
        %v6855 = vadd.f32 %v6787, %v6823
        %v6856 = vadd.f32 %v6788, %v6824
        %v6857 = vadd.f32 %v6789, %v6825
        %v6858 = vadd.f32 %v6790, %v6826
        %v6859 = vadd.f32 %v6791, %v6827
        %v6860 = vadd.f32 %v6792, %v6828
        %v6861 = vadd.f32 %v6793, %v6829
        %v6862 = vadd.f32 %v6794, %v6830
        %v6863 = vadd.f32 %v6795, %v6831
        %v6864 = vadd.f32 %v6796, %v6832
        %v6865 = vadd.f32 %v6797, %v6833
        %v6866 = vadd.f32 %v6798, %v6834
        %v6867 = vadd.f32 %v6799, %v6835
        %v6868 = vadd.f32 %v6800, %v6836
        %v6869 = vadd.f32 %v6801, %v6837
        %v6870 = vadd.f32 %v6802, %v6838
        %v6871 = vadd.f32 %v6803, %v6839
        %v6872 = vadd.f32 %v6804, %v6840
        %v6873 = vadd.f32 %v6805, %v6841
        %v6874 = vadd.f32 %v6806, %v6842
        %v6875 = vadd.f32 %v6807, %v6843
        %v6876 = vadd.f32 %v6808, %v6844
        %v6877 = vadd.f32 %v6809, %v6845
        %v6878 = vadd.f32 %v6810, %v6846
        %v6879 = vadd.f32 %v6811, %v6847
        %v6880 = vadd.f32 %v6812, %v6848
        %v6881 = vadd.f32 %v6813, %v6849
        %v6882 = vadd.f32 %v6814, %v6850
        %v6883 = vadd.f32 %v6815, %v6851
        %v6884 = vlaneseq
        %v6885 = vshrl.u32 %v6884, 7
        %v6886 = vsub.s32 6, %v6885
        %v6887 = vrot.slane %v4382, %v6886
        %v6888 = vmul.f32 %v6444, %v6887
        %v6889 = vmul.f32 %v6445, %v6887
        %v6890 = vmul.f32 %v6446, %v6887
        %v6891 = vmul.f32 %v6447, %v6887
        %v6892 = vmul.f32 %v6448, %v6887
        %v6893 = vmul.f32 %v6449, %v6887
        %v6894 = vmul.f32 %v6450, %v6887
        %v6895 = vmul.f32 %v6451, %v6887
        %v6896 = vmul.f32 %v6452, %v6887
        %v6897 = vmul.f32 %v6453, %v6887
        %v6898 = vmul.f32 %v6454, %v6887
        %v6899 = vmul.f32 %v6455, %v6887
        %v6900 = vmul.f32 %v6456, %v6887
        %v6901 = vmul.f32 %v6457, %v6887
        %v6902 = vmul.f32 %v6458, %v6887
        %v6903 = vmul.f32 %v6459, %v6887
        %v6904 = vmul.f32 %v6460, %v6887
        %v6905 = vmul.f32 %v6461, %v6887
        %v6906 = vmul.f32 %v6462, %v6887
        %v6907 = vmul.f32 %v6463, %v6887
        %v6908 = vmul.f32 %v6464, %v6887
        %v6909 = vmul.f32 %v6465, %v6887
        %v6910 = vmul.f32 %v6466, %v6887
        %v6911 = vmul.f32 %v6467, %v6887
        %v6912 = vmul.f32 %v6468, %v6887
        %v6913 = vmul.f32 %v6469, %v6887
        %v6914 = vmul.f32 %v6470, %v6887
        %v6915 = vmul.f32 %v6471, %v6887
        %v6916 = vmul.f32 %v6472, %v6887
        %v6917 = vmul.f32 %v6473, %v6887
        %v6918 = vmul.f32 %v6474, %v6887
        %v6919 = vmul.f32 %v6475, %v6887
        %v6920 = vadd.f32 %v6852, %v6888
        %v6921 = vadd.f32 %v6853, %v6889
        %v6922 = vadd.f32 %v6854, %v6890
        %v6923 = vadd.f32 %v6855, %v6891
        %v6924 = vadd.f32 %v6856, %v6892
        %v6925 = vadd.f32 %v6857, %v6893
        %v6926 = vadd.f32 %v6858, %v6894
        %v6927 = vadd.f32 %v6859, %v6895
        %v6928 = vadd.f32 %v6860, %v6896
        %v6929 = vadd.f32 %v6861, %v6897
        %v6930 = vadd.f32 %v6862, %v6898
        %v6931 = vadd.f32 %v6863, %v6899
        %v6932 = vadd.f32 %v6864, %v6900
        %v6933 = vadd.f32 %v6865, %v6901
        %v6934 = vadd.f32 %v6866, %v6902
        %v6935 = vadd.f32 %v6867, %v6903
        %v6936 = vadd.f32 %v6868, %v6904
        %v6937 = vadd.f32 %v6869, %v6905
        %v6938 = vadd.f32 %v6870, %v6906
        %v6939 = vadd.f32 %v6871, %v6907
        %v6940 = vadd.f32 %v6872, %v6908
        %v6941 = vadd.f32 %v6873, %v6909
        %v6942 = vadd.f32 %v6874, %v6910
        %v6943 = vadd.f32 %v6875, %v6911
        %v6944 = vadd.f32 %v6876, %v6912
        %v6945 = vadd.f32 %v6877, %v6913
        %v6946 = vadd.f32 %v6878, %v6914
        %v6947 = vadd.f32 %v6879, %v6915
        %v6948 = vadd.f32 %v6880, %v6916
        %v6949 = vadd.f32 %v6881, %v6917
        %v6950 = vadd.f32 %v6882, %v6918
        %v6951 = vadd.f32 %v6883, %v6919
        %v6952 = vld [vmem:[#allocation5 + $0x5] sm:$0xff]
        %v6953 = vld [vmem:[#allocation5 + $0xd] sm:$0xff]
        %v6954 = vld [vmem:[#allocation5 + $0x1d] sm:$0xff]
        %v6955 = vld [vmem:[#allocation5 + $0x25] sm:$0xff]
        %v6956 = vld [vmem:[#allocation5 + $0x35] sm:$0xff]
        %v6957 = vld [vmem:[#allocation5 + $0x3d] sm:$0xff]
        %v6958 = vld [vmem:[#allocation5 + $0x4d] sm:$0xff]
        %v6959 = vld [vmem:[#allocation5 + $0x55] sm:$0xff]
        %v6960 = vld [vmem:[#allocation5 + $0x65] sm:$0xff]
        %v6961 = vld [vmem:[#allocation5 + $0x6d] sm:$0xff]
        %v6962 = vld [vmem:[#allocation5 + $0x7d] sm:$0xff]
        %v6963 = vld [vmem:[#allocation5 + $0x85] sm:$0xff]
        %v6964 = vld [vmem:[#allocation5 + $0x95] sm:$0xff]
        %v6965 = vld [vmem:[#allocation5 + $0x9d] sm:$0xff]
        %v6966 = vld [vmem:[#allocation5 + $0xad] sm:$0xff]
        %v6967 = vld [vmem:[#allocation5 + $0xb5] sm:$0xff]
        %v6968 = vld [vmem:[#allocation5 + $0xc5] sm:$0xff]
        %v6969 = vld [vmem:[#allocation5 + $0xcd] sm:$0xff]
        %v6970 = vld [vmem:[#allocation5 + $0xdd] sm:$0xff]
        %v6971 = vld [vmem:[#allocation5 + $0xe5] sm:$0xff]
        %v6972 = vld [vmem:[#allocation5 + $0xf5] sm:$0xff]
        %v6973 = vld [vmem:[#allocation5 + $0xfd] sm:$0xff]
        %v6974 = vld [vmem:[#allocation5 + $0x10d] sm:$0xff]
        %v6975 = vld [vmem:[#allocation5 + $0x115] sm:$0xff]
        %v6976 = vld [vmem:[#allocation5 + $0x125] sm:$0xff]
        %v6977 = vld [vmem:[#allocation5 + $0x12d] sm:$0xff]
        %v6978 = vld [vmem:[#allocation5 + $0x13d] sm:$0xff]
        %v6979 = vld [vmem:[#allocation5 + $0x145] sm:$0xff]
        %v6980 = vld [vmem:[#allocation5 + $0x155] sm:$0xff]
        %v6981 = vld [vmem:[#allocation5 + $0x15d] sm:$0xff]
        %v6982 = vld [vmem:[#allocation5 + $0x16d] sm:$0xff]
        %v6983 = vld [vmem:[#allocation5 + $0x175] sm:$0xff]
        %v6984 = vld [vmem:[#allocation5 + $0x185] sm:$0xff]
        %v6985 = vld [vmem:[#allocation5 + $0x18d] sm:$0xff]
        %v6986 = vld [vmem:[#allocation5 + $0x19d] sm:$0xff]
        %v6987 = vld [vmem:[#allocation5 + $0x1a5] sm:$0xff]
        %v6988 = vld [vmem:[#allocation5 + $0x1b5] sm:$0xff]
        %v6989 = vld [vmem:[#allocation5 + $0x1bd] sm:$0xff]
        %v6990 = vld [vmem:[#allocation5 + $0x1cd] sm:$0xff]
        %v6991 = vld [vmem:[#allocation5 + $0x1d5] sm:$0xff]
        %v6992 = vld [vmem:[#allocation5 + $0x1e5] sm:$0xff]
        %v6993 = vld [vmem:[#allocation5 + $0x1ed] sm:$0xff]
        %v6994 = vld [vmem:[#allocation5 + $0x1fd] sm:$0xff]
        %v6995 = vld [vmem:[#allocation5 + $0x205] sm:$0xff]
        %v6996 = vlaneseq
        %v6997 = vshrl.u32 %v6996, 7
        %v6998 = vsub.s32 5, %v6997
        %v6999 = vrot.slane %v4377, %v6998
        %v7000 = vmul.f32 %v6952, %v6999
        %v7001 = vmul.f32 %v6953, %v6999
        %v7002 = vmul.f32 %v6954, %v6999
        %v7003 = vmul.f32 %v6955, %v6999
        %v7004 = vmul.f32 %v6956, %v6999
        %v7005 = vmul.f32 %v6957, %v6999
        %v7006 = vmul.f32 %v6958, %v6999
        %v7007 = vmul.f32 %v6959, %v6999
        %v7008 = vmul.f32 %v6960, %v6999
        %v7009 = vmul.f32 %v6961, %v6999
        %v7010 = vmul.f32 %v6962, %v6999
        %v7011 = vmul.f32 %v6963, %v6999
        %v7012 = vmul.f32 %v6964, %v6999
        %v7013 = vmul.f32 %v6965, %v6999
        %v7014 = vmul.f32 %v6966, %v6999
        %v7015 = vmul.f32 %v6967, %v6999
        %v7016 = vmul.f32 %v6968, %v6999
        %v7017 = vmul.f32 %v6969, %v6999
        %v7018 = vmul.f32 %v6970, %v6999
        %v7019 = vmul.f32 %v6971, %v6999
        %v7020 = vmul.f32 %v6972, %v6999
        %v7021 = vmul.f32 %v6973, %v6999
        %v7022 = vmul.f32 %v6974, %v6999
        %v7023 = vmul.f32 %v6975, %v6999
        %v7024 = vmul.f32 %v6976, %v6999
        %v7025 = vmul.f32 %v6977, %v6999
        %v7026 = vmul.f32 %v6978, %v6999
        %v7027 = vmul.f32 %v6979, %v6999
        %v7028 = vmul.f32 %v6980, %v6999
        %v7029 = vmul.f32 %v6981, %v6999
        %v7030 = vmul.f32 %v6982, %v6999
        %v7031 = vmul.f32 %v6983, %v6999
        %v7032 = vadd.f32 %v6920, %v7000
        %v7033 = vadd.f32 %v6921, %v7001
        %v7034 = vadd.f32 %v6922, %v7002
        %v7035 = vadd.f32 %v6923, %v7003
        %v7036 = vadd.f32 %v6924, %v7004
        %v7037 = vadd.f32 %v6925, %v7005
        %v7038 = vadd.f32 %v6926, %v7006
        %v7039 = vadd.f32 %v6927, %v7007
        %v7040 = vadd.f32 %v6928, %v7008
        %v7041 = vadd.f32 %v6929, %v7009
        %v7042 = vadd.f32 %v6930, %v7010
        %v7043 = vadd.f32 %v6931, %v7011
        %v7044 = vadd.f32 %v6932, %v7012
        %v7045 = vadd.f32 %v6933, %v7013
        %v7046 = vadd.f32 %v6934, %v7014
        %v7047 = vadd.f32 %v6935, %v7015
        %v7048 = vadd.f32 %v6936, %v7016
        %v7049 = vadd.f32 %v6937, %v7017
        %v7050 = vadd.f32 %v6938, %v7018
        %v7051 = vadd.f32 %v6939, %v7019
        %v7052 = vadd.f32 %v6940, %v7020
        %v7053 = vadd.f32 %v6941, %v7021
        %v7054 = vadd.f32 %v6942, %v7022
        %v7055 = vadd.f32 %v6943, %v7023
        %v7056 = vadd.f32 %v6944, %v7024
        %v7057 = vadd.f32 %v6945, %v7025
        %v7058 = vadd.f32 %v6946, %v7026
        %v7059 = vadd.f32 %v6947, %v7027
        %v7060 = vadd.f32 %v6948, %v7028
        %v7061 = vadd.f32 %v6949, %v7029
        %v7062 = vadd.f32 %v6950, %v7030
        %v7063 = vadd.f32 %v6951, %v7031
        %v7064 = vlaneseq
        %v7065 = vshrl.u32 %v7064, 7
        %v7066 = vsub.s32 4, %v7065
        %v7067 = vrot.slane %v4378, %v7066
        %v7068 = vmul.f32 %v6954, %v7067
        %v7069 = vmul.f32 %v6955, %v7067
        %v7070 = vmul.f32 %v6956, %v7067
        %v7071 = vmul.f32 %v6957, %v7067
        %v7072 = vmul.f32 %v6958, %v7067
        %v7073 = vmul.f32 %v6959, %v7067
        %v7074 = vmul.f32 %v6960, %v7067
        %v7075 = vmul.f32 %v6961, %v7067
        %v7076 = vmul.f32 %v6962, %v7067
        %v7077 = vmul.f32 %v6963, %v7067
        %v7078 = vmul.f32 %v6964, %v7067
        %v7079 = vmul.f32 %v6965, %v7067
        %v7080 = vmul.f32 %v6966, %v7067
        %v7081 = vmul.f32 %v6967, %v7067
        %v7082 = vmul.f32 %v6968, %v7067
        %v7083 = vmul.f32 %v6969, %v7067
        %v7084 = vmul.f32 %v6970, %v7067
        %v7085 = vmul.f32 %v6971, %v7067
        %v7086 = vmul.f32 %v6972, %v7067
        %v7087 = vmul.f32 %v6973, %v7067
        %v7088 = vmul.f32 %v6974, %v7067
        %v7089 = vmul.f32 %v6975, %v7067
        %v7090 = vmul.f32 %v6976, %v7067
        %v7091 = vmul.f32 %v6977, %v7067
        %v7092 = vmul.f32 %v6978, %v7067
        %v7093 = vmul.f32 %v6979, %v7067
        %v7094 = vmul.f32 %v6980, %v7067
        %v7095 = vmul.f32 %v6981, %v7067
        %v7096 = vmul.f32 %v6982, %v7067
        %v7097 = vmul.f32 %v6983, %v7067
        %v7098 = vmul.f32 %v6984, %v7067
        %v7099 = vmul.f32 %v6985, %v7067
        %v7100 = vadd.f32 %v7032, %v7068
        %v7101 = vadd.f32 %v7033, %v7069
        %v7102 = vadd.f32 %v7034, %v7070
        %v7103 = vadd.f32 %v7035, %v7071
        %v7104 = vadd.f32 %v7036, %v7072
        %v7105 = vadd.f32 %v7037, %v7073
        %v7106 = vadd.f32 %v7038, %v7074
        %v7107 = vadd.f32 %v7039, %v7075
        %v7108 = vadd.f32 %v7040, %v7076
        %v7109 = vadd.f32 %v7041, %v7077
        %v7110 = vadd.f32 %v7042, %v7078
        %v7111 = vadd.f32 %v7043, %v7079
        %v7112 = vadd.f32 %v7044, %v7080
        %v7113 = vadd.f32 %v7045, %v7081
        %v7114 = vadd.f32 %v7046, %v7082
        %v7115 = vadd.f32 %v7047, %v7083
        %v7116 = vadd.f32 %v7048, %v7084
        %v7117 = vadd.f32 %v7049, %v7085
        %v7118 = vadd.f32 %v7050, %v7086
        %v7119 = vadd.f32 %v7051, %v7087
        %v7120 = vadd.f32 %v7052, %v7088
        %v7121 = vadd.f32 %v7053, %v7089
        %v7122 = vadd.f32 %v7054, %v7090
        %v7123 = vadd.f32 %v7055, %v7091
        %v7124 = vadd.f32 %v7056, %v7092
        %v7125 = vadd.f32 %v7057, %v7093
        %v7126 = vadd.f32 %v7058, %v7094
        %v7127 = vadd.f32 %v7059, %v7095
        %v7128 = vadd.f32 %v7060, %v7096
        %v7129 = vadd.f32 %v7061, %v7097
        %v7130 = vadd.f32 %v7062, %v7098
        %v7131 = vadd.f32 %v7063, %v7099
        %v7132 = vlaneseq
        %v7133 = vshrl.u32 %v7132, 7
        %v7134 = vsub.s32 3, %v7133
        %v7135 = vrot.slane %v4379, %v7134
        %v7136 = vmul.f32 %v6956, %v7135
        %v7137 = vmul.f32 %v6957, %v7135
        %v7138 = vmul.f32 %v6958, %v7135
        %v7139 = vmul.f32 %v6959, %v7135
        %v7140 = vmul.f32 %v6960, %v7135
        %v7141 = vmul.f32 %v6961, %v7135
        %v7142 = vmul.f32 %v6962, %v7135
        %v7143 = vmul.f32 %v6963, %v7135
        %v7144 = vmul.f32 %v6964, %v7135
        %v7145 = vmul.f32 %v6965, %v7135
        %v7146 = vmul.f32 %v6966, %v7135
        %v7147 = vmul.f32 %v6967, %v7135
        %v7148 = vmul.f32 %v6968, %v7135
        %v7149 = vmul.f32 %v6969, %v7135
        %v7150 = vmul.f32 %v6970, %v7135
        %v7151 = vmul.f32 %v6971, %v7135
        %v7152 = vmul.f32 %v6972, %v7135
        %v7153 = vmul.f32 %v6973, %v7135
        %v7154 = vmul.f32 %v6974, %v7135
        %v7155 = vmul.f32 %v6975, %v7135
        %v7156 = vmul.f32 %v6976, %v7135
        %v7157 = vmul.f32 %v6977, %v7135
        %v7158 = vmul.f32 %v6978, %v7135
        %v7159 = vmul.f32 %v6979, %v7135
        %v7160 = vmul.f32 %v6980, %v7135
        %v7161 = vmul.f32 %v6981, %v7135
        %v7162 = vmul.f32 %v6982, %v7135
        %v7163 = vmul.f32 %v6983, %v7135
        %v7164 = vmul.f32 %v6984, %v7135
        %v7165 = vmul.f32 %v6985, %v7135
        %v7166 = vmul.f32 %v6986, %v7135
        %v7167 = vmul.f32 %v6987, %v7135
        %v7168 = vadd.f32 %v7100, %v7136
        %v7169 = vadd.f32 %v7101, %v7137
        %v7170 = vadd.f32 %v7102, %v7138
        %v7171 = vadd.f32 %v7103, %v7139
        %v7172 = vadd.f32 %v7104, %v7140
        %v7173 = vadd.f32 %v7105, %v7141
        %v7174 = vadd.f32 %v7106, %v7142
        %v7175 = vadd.f32 %v7107, %v7143
        %v7176 = vadd.f32 %v7108, %v7144
        %v7177 = vadd.f32 %v7109, %v7145
        %v7178 = vadd.f32 %v7110, %v7146
        %v7179 = vadd.f32 %v7111, %v7147
        %v7180 = vadd.f32 %v7112, %v7148
        %v7181 = vadd.f32 %v7113, %v7149
        %v7182 = vadd.f32 %v7114, %v7150
        %v7183 = vadd.f32 %v7115, %v7151
        %v7184 = vadd.f32 %v7116, %v7152
        %v7185 = vadd.f32 %v7117, %v7153
        %v7186 = vadd.f32 %v7118, %v7154
        %v7187 = vadd.f32 %v7119, %v7155
        %v7188 = vadd.f32 %v7120, %v7156
        %v7189 = vadd.f32 %v7121, %v7157
        %v7190 = vadd.f32 %v7122, %v7158
        %v7191 = vadd.f32 %v7123, %v7159
        %v7192 = vadd.f32 %v7124, %v7160
        %v7193 = vadd.f32 %v7125, %v7161
        %v7194 = vadd.f32 %v7126, %v7162
        %v7195 = vadd.f32 %v7127, %v7163
        %v7196 = vadd.f32 %v7128, %v7164
        %v7197 = vadd.f32 %v7129, %v7165
        %v7198 = vadd.f32 %v7130, %v7166
        %v7199 = vadd.f32 %v7131, %v7167
        %v7200 = vlaneseq
        %v7201 = vshrl.u32 %v7200, 7
        %v7202 = vsub.s32 2, %v7201
        %v7203 = vrot.slane %v4380, %v7202
        %v7204 = vmul.f32 %v6958, %v7203
        %v7205 = vmul.f32 %v6959, %v7203
        %v7206 = vmul.f32 %v6960, %v7203
        %v7207 = vmul.f32 %v6961, %v7203
        %v7208 = vmul.f32 %v6962, %v7203
        %v7209 = vmul.f32 %v6963, %v7203
        %v7210 = vmul.f32 %v6964, %v7203
        %v7211 = vmul.f32 %v6965, %v7203
        %v7212 = vmul.f32 %v6966, %v7203
        %v7213 = vmul.f32 %v6967, %v7203
        %v7214 = vmul.f32 %v6968, %v7203
        %v7215 = vmul.f32 %v6969, %v7203
        %v7216 = vmul.f32 %v6970, %v7203
        %v7217 = vmul.f32 %v6971, %v7203
        %v7218 = vmul.f32 %v6972, %v7203
        %v7219 = vmul.f32 %v6973, %v7203
        %v7220 = vmul.f32 %v6974, %v7203
        %v7221 = vmul.f32 %v6975, %v7203
        %v7222 = vmul.f32 %v6976, %v7203
        %v7223 = vmul.f32 %v6977, %v7203
        %v7224 = vmul.f32 %v6978, %v7203
        %v7225 = vmul.f32 %v6979, %v7203
        %v7226 = vmul.f32 %v6980, %v7203
        %v7227 = vmul.f32 %v6981, %v7203
        %v7228 = vmul.f32 %v6982, %v7203
        %v7229 = vmul.f32 %v6983, %v7203
        %v7230 = vmul.f32 %v6984, %v7203
        %v7231 = vmul.f32 %v6985, %v7203
        %v7232 = vmul.f32 %v6986, %v7203
        %v7233 = vmul.f32 %v6987, %v7203
        %v7234 = vmul.f32 %v6988, %v7203
        %v7235 = vmul.f32 %v6989, %v7203
        %v7236 = vadd.f32 %v7168, %v7204
        %v7237 = vadd.f32 %v7169, %v7205
        %v7238 = vadd.f32 %v7170, %v7206
        %v7239 = vadd.f32 %v7171, %v7207
        %v7240 = vadd.f32 %v7172, %v7208
        %v7241 = vadd.f32 %v7173, %v7209
        %v7242 = vadd.f32 %v7174, %v7210
        %v7243 = vadd.f32 %v7175, %v7211
        %v7244 = vadd.f32 %v7176, %v7212
        %v7245 = vadd.f32 %v7177, %v7213
        %v7246 = vadd.f32 %v7178, %v7214
        %v7247 = vadd.f32 %v7179, %v7215
        %v7248 = vadd.f32 %v7180, %v7216
        %v7249 = vadd.f32 %v7181, %v7217
        %v7250 = vadd.f32 %v7182, %v7218
        %v7251 = vadd.f32 %v7183, %v7219
        %v7252 = vadd.f32 %v7184, %v7220
        %v7253 = vadd.f32 %v7185, %v7221
        %v7254 = vadd.f32 %v7186, %v7222
        %v7255 = vadd.f32 %v7187, %v7223
        %v7256 = vadd.f32 %v7188, %v7224
        %v7257 = vadd.f32 %v7189, %v7225
        %v7258 = vadd.f32 %v7190, %v7226
        %v7259 = vadd.f32 %v7191, %v7227
        %v7260 = vadd.f32 %v7192, %v7228
        %v7261 = vadd.f32 %v7193, %v7229
        %v7262 = vadd.f32 %v7194, %v7230
        %v7263 = vadd.f32 %v7195, %v7231
        %v7264 = vadd.f32 %v7196, %v7232
        %v7265 = vadd.f32 %v7197, %v7233
        %v7266 = vadd.f32 %v7198, %v7234
        %v7267 = vadd.f32 %v7199, %v7235
        %v7268 = vlaneseq
        %v7269 = vshrl.u32 %v7268, 7
        %v7270 = vsub.s32 1, %v7269
        %v7271 = vrot.slane %v4381, %v7270
        %v7272 = vmul.f32 %v6960, %v7271
        %v7273 = vmul.f32 %v6961, %v7271
        %v7274 = vmul.f32 %v6962, %v7271
        %v7275 = vmul.f32 %v6963, %v7271
        %v7276 = vmul.f32 %v6964, %v7271
        %v7277 = vmul.f32 %v6965, %v7271
        %v7278 = vmul.f32 %v6966, %v7271
        %v7279 = vmul.f32 %v6967, %v7271
        %v7280 = vmul.f32 %v6968, %v7271
        %v7281 = vmul.f32 %v6969, %v7271
        %v7282 = vmul.f32 %v6970, %v7271
        %v7283 = vmul.f32 %v6971, %v7271
        %v7284 = vmul.f32 %v6972, %v7271
        %v7285 = vmul.f32 %v6973, %v7271
        %v7286 = vmul.f32 %v6974, %v7271
        %v7287 = vmul.f32 %v6975, %v7271
        %v7288 = vmul.f32 %v6976, %v7271
        %v7289 = vmul.f32 %v6977, %v7271
        %v7290 = vmul.f32 %v6978, %v7271
        %v7291 = vmul.f32 %v6979, %v7271
        %v7292 = vmul.f32 %v6980, %v7271
        %v7293 = vmul.f32 %v6981, %v7271
        %v7294 = vmul.f32 %v6982, %v7271
        %v7295 = vmul.f32 %v6983, %v7271
        %v7296 = vmul.f32 %v6984, %v7271
        %v7297 = vmul.f32 %v6985, %v7271
        %v7298 = vmul.f32 %v6986, %v7271
        %v7299 = vmul.f32 %v6987, %v7271
        %v7300 = vmul.f32 %v6988, %v7271
        %v7301 = vmul.f32 %v6989, %v7271
        %v7302 = vmul.f32 %v6990, %v7271
        %v7303 = vmul.f32 %v6991, %v7271
        %v7304 = vadd.f32 %v7236, %v7272
        %v7305 = vadd.f32 %v7237, %v7273
        %v7306 = vadd.f32 %v7238, %v7274
        %v7307 = vadd.f32 %v7239, %v7275
        %v7308 = vadd.f32 %v7240, %v7276
        %v7309 = vadd.f32 %v7241, %v7277
        %v7310 = vadd.f32 %v7242, %v7278
        %v7311 = vadd.f32 %v7243, %v7279
        %v7312 = vadd.f32 %v7244, %v7280
        %v7313 = vadd.f32 %v7245, %v7281
        %v7314 = vadd.f32 %v7246, %v7282
        %v7315 = vadd.f32 %v7247, %v7283
        %v7316 = vadd.f32 %v7248, %v7284
        %v7317 = vadd.f32 %v7249, %v7285
        %v7318 = vadd.f32 %v7250, %v7286
        %v7319 = vadd.f32 %v7251, %v7287
        %v7320 = vadd.f32 %v7252, %v7288
        %v7321 = vadd.f32 %v7253, %v7289
        %v7322 = vadd.f32 %v7254, %v7290
        %v7323 = vadd.f32 %v7255, %v7291
        %v7324 = vadd.f32 %v7256, %v7292
        %v7325 = vadd.f32 %v7257, %v7293
        %v7326 = vadd.f32 %v7258, %v7294
        %v7327 = vadd.f32 %v7259, %v7295
        %v7328 = vadd.f32 %v7260, %v7296
        %v7329 = vadd.f32 %v7261, %v7297
        %v7330 = vadd.f32 %v7262, %v7298
        %v7331 = vadd.f32 %v7263, %v7299
        %v7332 = vadd.f32 %v7264, %v7300
        %v7333 = vadd.f32 %v7265, %v7301
        %v7334 = vadd.f32 %v7266, %v7302
        %v7335 = vadd.f32 %v7267, %v7303
        %v7336 = vlaneseq
        %v7337 = vshrl.u32 %v7336, 7
        %v7338 = vsub.s32 0, %v7337
        %v7339 = vrot.slane %v4382, %v7338
        %v7340 = vmul.f32 %v6962, %v7339
        %v7341 = vmul.f32 %v6963, %v7339
        %v7342 = vmul.f32 %v6964, %v7339
        %v7343 = vmul.f32 %v6965, %v7339
        %v7344 = vmul.f32 %v6966, %v7339
        %v7345 = vmul.f32 %v6967, %v7339
        %v7346 = vmul.f32 %v6968, %v7339
        %v7347 = vmul.f32 %v6969, %v7339
        %v7348 = vmul.f32 %v6970, %v7339
        %v7349 = vmul.f32 %v6971, %v7339
        %v7350 = vmul.f32 %v6972, %v7339
        %v7351 = vmul.f32 %v6973, %v7339
        %v7352 = vmul.f32 %v6974, %v7339
        %v7353 = vmul.f32 %v6975, %v7339
        %v7354 = vmul.f32 %v6976, %v7339
        %v7355 = vmul.f32 %v6977, %v7339
        %v7356 = vmul.f32 %v6978, %v7339
        %v7357 = vmul.f32 %v6979, %v7339
        %v7358 = vmul.f32 %v6980, %v7339
        %v7359 = vmul.f32 %v6981, %v7339
        %v7360 = vmul.f32 %v6982, %v7339
        %v7361 = vmul.f32 %v6983, %v7339
        %v7362 = vmul.f32 %v6984, %v7339
        %v7363 = vmul.f32 %v6985, %v7339
        %v7364 = vmul.f32 %v6986, %v7339
        %v7365 = vmul.f32 %v6987, %v7339
        %v7366 = vmul.f32 %v6988, %v7339
        %v7367 = vmul.f32 %v6989, %v7339
        %v7368 = vmul.f32 %v6990, %v7339
        %v7369 = vmul.f32 %v6991, %v7339
        %v7370 = vmul.f32 %v6992, %v7339
        %v7371 = vmul.f32 %v6993, %v7339
        %v7372 = vadd.f32 %v7304, %v7340
        %v7373 = vadd.f32 %v7305, %v7341
        %v7374 = vadd.f32 %v7306, %v7342
        %v7375 = vadd.f32 %v7307, %v7343
        %v7376 = vadd.f32 %v7308, %v7344
        %v7377 = vadd.f32 %v7309, %v7345
        %v7378 = vadd.f32 %v7310, %v7346
        %v7379 = vadd.f32 %v7311, %v7347
        %v7380 = vadd.f32 %v7312, %v7348
        %v7381 = vadd.f32 %v7313, %v7349
        %v7382 = vadd.f32 %v7314, %v7350
        %v7383 = vadd.f32 %v7315, %v7351
        %v7384 = vadd.f32 %v7316, %v7352
        %v7385 = vadd.f32 %v7317, %v7353
        %v7386 = vadd.f32 %v7318, %v7354
        %v7387 = vadd.f32 %v7319, %v7355
        %v7388 = vadd.f32 %v7320, %v7356
        %v7389 = vadd.f32 %v7321, %v7357
        %v7390 = vadd.f32 %v7322, %v7358
        %v7391 = vadd.f32 %v7323, %v7359
        %v7392 = vadd.f32 %v7324, %v7360
        %v7393 = vadd.f32 %v7325, %v7361
        %v7394 = vadd.f32 %v7326, %v7362
        %v7395 = vadd.f32 %v7327, %v7363
        %v7396 = vadd.f32 %v7328, %v7364
        %v7397 = vadd.f32 %v7329, %v7365
        %v7398 = vadd.f32 %v7330, %v7366
        %v7399 = vadd.f32 %v7331, %v7367
        %v7400 = vadd.f32 %v7332, %v7368
        %v7401 = vadd.f32 %v7333, %v7369
        %v7402 = vadd.f32 %v7334, %v7370
        %v7403 = vadd.f32 %v7335, %v7371
        %v7404 = vlaneseq
        %v7405 = vshrl.u32 %v7404, 7
        %v7406 = vsub.s32 7, %v7405
        %v7407 = vrot.slane %v4382, %v7406
        %v7408 = vmul.f32 %v6964, %v7407
        %v7409 = vmul.f32 %v6965, %v7407
        %v7410 = vmul.f32 %v6966, %v7407
        %v7411 = vmul.f32 %v6967, %v7407
        %v7412 = vmul.f32 %v6968, %v7407
        %v7413 = vmul.f32 %v6969, %v7407
        %v7414 = vmul.f32 %v6970, %v7407
        %v7415 = vmul.f32 %v6971, %v7407
        %v7416 = vmul.f32 %v6972, %v7407
        %v7417 = vmul.f32 %v6973, %v7407
        %v7418 = vmul.f32 %v6974, %v7407
        %v7419 = vmul.f32 %v6975, %v7407
        %v7420 = vmul.f32 %v6976, %v7407
        %v7421 = vmul.f32 %v6977, %v7407
        %v7422 = vmul.f32 %v6978, %v7407
        %v7423 = vmul.f32 %v6979, %v7407
        %v7424 = vmul.f32 %v6980, %v7407
        %v7425 = vmul.f32 %v6981, %v7407
        %v7426 = vmul.f32 %v6982, %v7407
        %v7427 = vmul.f32 %v6983, %v7407
        %v7428 = vmul.f32 %v6984, %v7407
        %v7429 = vmul.f32 %v6985, %v7407
        %v7430 = vmul.f32 %v6986, %v7407
        %v7431 = vmul.f32 %v6987, %v7407
        %v7432 = vmul.f32 %v6988, %v7407
        %v7433 = vmul.f32 %v6989, %v7407
        %v7434 = vmul.f32 %v6990, %v7407
        %v7435 = vmul.f32 %v6991, %v7407
        %v7436 = vmul.f32 %v6992, %v7407
        %v7437 = vmul.f32 %v6993, %v7407
        %v7438 = vmul.f32 %v6994, %v7407
        %v7439 = vmul.f32 %v6995, %v7407
        %v7440 = vadd.f32 %v7372, %v7408
        %v7441 = vadd.f32 %v7373, %v7409
        %v7442 = vadd.f32 %v7374, %v7410
        %v7443 = vadd.f32 %v7375, %v7411
        %v7444 = vadd.f32 %v7376, %v7412
        %v7445 = vadd.f32 %v7377, %v7413
        %v7446 = vadd.f32 %v7378, %v7414
        %v7447 = vadd.f32 %v7379, %v7415
        %v7448 = vadd.f32 %v7380, %v7416
        %v7449 = vadd.f32 %v7381, %v7417
        %v7450 = vadd.f32 %v7382, %v7418
        %v7451 = vadd.f32 %v7383, %v7419
        %v7452 = vadd.f32 %v7384, %v7420
        %v7453 = vadd.f32 %v7385, %v7421
        %v7454 = vadd.f32 %v7386, %v7422
        %v7455 = vadd.f32 %v7387, %v7423
        %v7456 = vadd.f32 %v7388, %v7424
        %v7457 = vadd.f32 %v7389, %v7425
        %v7458 = vadd.f32 %v7390, %v7426
        %v7459 = vadd.f32 %v7391, %v7427
        %v7460 = vadd.f32 %v7392, %v7428
        %v7461 = vadd.f32 %v7393, %v7429
        %v7462 = vadd.f32 %v7394, %v7430
        %v7463 = vadd.f32 %v7395, %v7431
        %v7464 = vadd.f32 %v7396, %v7432
        %v7465 = vadd.f32 %v7397, %v7433
        %v7466 = vadd.f32 %v7398, %v7434
        %v7467 = vadd.f32 %v7399, %v7435
        %v7468 = vadd.f32 %v7400, %v7436
        %v7469 = vadd.f32 %v7401, %v7437
        %v7470 = vadd.f32 %v7402, %v7438
        %v7471 = vadd.f32 %v7403, %v7439
        %v7472 = vld [vmem:[#allocation5 + $0x6] sm:$0xff]
        %v7473 = vld [vmem:[#allocation5 + $0xe] sm:$0xff]
        %v7474 = vld [vmem:[#allocation5 + $0x1e] sm:$0xff]
        %v7475 = vld [vmem:[#allocation5 + $0x26] sm:$0xff]
        %v7476 = vld [vmem:[#allocation5 + $0x36] sm:$0xff]
        %v7477 = vld [vmem:[#allocation5 + $0x3e] sm:$0xff]
        %v7478 = vld [vmem:[#allocation5 + $0x4e] sm:$0xff]
        %v7479 = vld [vmem:[#allocation5 + $0x56] sm:$0xff]
        %v7480 = vld [vmem:[#allocation5 + $0x66] sm:$0xff]
        %v7481 = vld [vmem:[#allocation5 + $0x6e] sm:$0xff]
        %v7482 = vld [vmem:[#allocation5 + $0x7e] sm:$0xff]
        %v7483 = vld [vmem:[#allocation5 + $0x86] sm:$0xff]
        %v7484 = vld [vmem:[#allocation5 + $0x96] sm:$0xff]
        %v7485 = vld [vmem:[#allocation5 + $0x9e] sm:$0xff]
        %v7486 = vld [vmem:[#allocation5 + $0xae] sm:$0xff]
        %v7487 = vld [vmem:[#allocation5 + $0xb6] sm:$0xff]
        %v7488 = vld [vmem:[#allocation5 + $0xc6] sm:$0xff]
        %v7489 = vld [vmem:[#allocation5 + $0xce] sm:$0xff]
        %v7490 = vld [vmem:[#allocation5 + $0xde] sm:$0xff]
        %v7491 = vld [vmem:[#allocation5 + $0xe6] sm:$0xff]
        %v7492 = vld [vmem:[#allocation5 + $0xf6] sm:$0xff]
        %v7493 = vld [vmem:[#allocation5 + $0xfe] sm:$0xff]
        %v7494 = vld [vmem:[#allocation5 + $0x10e] sm:$0xff]
        %v7495 = vld [vmem:[#allocation5 + $0x116] sm:$0xff]
        %v7496 = vld [vmem:[#allocation5 + $0x126] sm:$0xff]
        %v7497 = vld [vmem:[#allocation5 + $0x12e] sm:$0xff]
        %v7498 = vld [vmem:[#allocation5 + $0x13e] sm:$0xff]
        %v7499 = vld [vmem:[#allocation5 + $0x146] sm:$0xff]
        %v7500 = vld [vmem:[#allocation5 + $0x156] sm:$0xff]
        %v7501 = vld [vmem:[#allocation5 + $0x15e] sm:$0xff]
        %v7502 = vld [vmem:[#allocation5 + $0x16e] sm:$0xff]
        %v7503 = vld [vmem:[#allocation5 + $0x176] sm:$0xff]
        %v7504 = vld [vmem:[#allocation5 + $0x186] sm:$0xff]
        %v7505 = vld [vmem:[#allocation5 + $0x18e] sm:$0xff]
        %v7506 = vld [vmem:[#allocation5 + $0x19e] sm:$0xff]
        %v7507 = vld [vmem:[#allocation5 + $0x1a6] sm:$0xff]
        %v7508 = vld [vmem:[#allocation5 + $0x1b6] sm:$0xff]
        %v7509 = vld [vmem:[#allocation5 + $0x1be] sm:$0xff]
        %v7510 = vld [vmem:[#allocation5 + $0x1ce] sm:$0xff]
        %v7511 = vld [vmem:[#allocation5 + $0x1d6] sm:$0xff]
        %v7512 = vld [vmem:[#allocation5 + $0x1e6] sm:$0xff]
        %v7513 = vld [vmem:[#allocation5 + $0x1ee] sm:$0xff]
        %v7514 = vld [vmem:[#allocation5 + $0x1fe] sm:$0xff]
        %v7515 = vld [vmem:[#allocation5 + $0x206] sm:$0xff]
        %v7516 = vlaneseq
        %v7517 = vshrl.u32 %v7516, 7
        %v7518 = vsub.s32 6, %v7517
        %v7519 = vrot.slane %v4377, %v7518
        %v7520 = vmul.f32 %v7472, %v7519
        %v7521 = vmul.f32 %v7473, %v7519
        %v7522 = vmul.f32 %v7474, %v7519
        %v7523 = vmul.f32 %v7475, %v7519
        %v7524 = vmul.f32 %v7476, %v7519
        %v7525 = vmul.f32 %v7477, %v7519
        %v7526 = vmul.f32 %v7478, %v7519
        %v7527 = vmul.f32 %v7479, %v7519
        %v7528 = vmul.f32 %v7480, %v7519
        %v7529 = vmul.f32 %v7481, %v7519
        %v7530 = vmul.f32 %v7482, %v7519
        %v7531 = vmul.f32 %v7483, %v7519
        %v7532 = vmul.f32 %v7484, %v7519
        %v7533 = vmul.f32 %v7485, %v7519
        %v7534 = vmul.f32 %v7486, %v7519
        %v7535 = vmul.f32 %v7487, %v7519
        %v7536 = vmul.f32 %v7488, %v7519
        %v7537 = vmul.f32 %v7489, %v7519
        %v7538 = vmul.f32 %v7490, %v7519
        %v7539 = vmul.f32 %v7491, %v7519
        %v7540 = vmul.f32 %v7492, %v7519
        %v7541 = vmul.f32 %v7493, %v7519
        %v7542 = vmul.f32 %v7494, %v7519
        %v7543 = vmul.f32 %v7495, %v7519
        %v7544 = vmul.f32 %v7496, %v7519
        %v7545 = vmul.f32 %v7497, %v7519
        %v7546 = vmul.f32 %v7498, %v7519
        %v7547 = vmul.f32 %v7499, %v7519
        %v7548 = vmul.f32 %v7500, %v7519
        %v7549 = vmul.f32 %v7501, %v7519
        %v7550 = vmul.f32 %v7502, %v7519
        %v7551 = vmul.f32 %v7503, %v7519
        %v7552 = vadd.f32 %v7440, %v7520
        %v7553 = vadd.f32 %v7441, %v7521
        %v7554 = vadd.f32 %v7442, %v7522
        %v7555 = vadd.f32 %v7443, %v7523
        %v7556 = vadd.f32 %v7444, %v7524
        %v7557 = vadd.f32 %v7445, %v7525
        %v7558 = vadd.f32 %v7446, %v7526
        %v7559 = vadd.f32 %v7447, %v7527
        %v7560 = vadd.f32 %v7448, %v7528
        %v7561 = vadd.f32 %v7449, %v7529
        %v7562 = vadd.f32 %v7450, %v7530
        %v7563 = vadd.f32 %v7451, %v7531
        %v7564 = vadd.f32 %v7452, %v7532
        %v7565 = vadd.f32 %v7453, %v7533
        %v7566 = vadd.f32 %v7454, %v7534
        %v7567 = vadd.f32 %v7455, %v7535
        %v7568 = vadd.f32 %v7456, %v7536
        %v7569 = vadd.f32 %v7457, %v7537
        %v7570 = vadd.f32 %v7458, %v7538
        %v7571 = vadd.f32 %v7459, %v7539
        %v7572 = vadd.f32 %v7460, %v7540
        %v7573 = vadd.f32 %v7461, %v7541
        %v7574 = vadd.f32 %v7462, %v7542
        %v7575 = vadd.f32 %v7463, %v7543
        %v7576 = vadd.f32 %v7464, %v7544
        %v7577 = vadd.f32 %v7465, %v7545
        %v7578 = vadd.f32 %v7466, %v7546
        %v7579 = vadd.f32 %v7467, %v7547
        %v7580 = vadd.f32 %v7468, %v7548
        %v7581 = vadd.f32 %v7469, %v7549
        %v7582 = vadd.f32 %v7470, %v7550
        %v7583 = vadd.f32 %v7471, %v7551
        %v7584 = vlaneseq
        %v7585 = vshrl.u32 %v7584, 7
        %v7586 = vsub.s32 5, %v7585
        %v7587 = vrot.slane %v4378, %v7586
        %v7588 = vmul.f32 %v7474, %v7587
        %v7589 = vmul.f32 %v7475, %v7587
        %v7590 = vmul.f32 %v7476, %v7587
        %v7591 = vmul.f32 %v7477, %v7587
        %v7592 = vmul.f32 %v7478, %v7587
        %v7593 = vmul.f32 %v7479, %v7587
        %v7594 = vmul.f32 %v7480, %v7587
        %v7595 = vmul.f32 %v7481, %v7587
        %v7596 = vmul.f32 %v7482, %v7587
        %v7597 = vmul.f32 %v7483, %v7587
        %v7598 = vmul.f32 %v7484, %v7587
        %v7599 = vmul.f32 %v7485, %v7587
        %v7600 = vmul.f32 %v7486, %v7587
        %v7601 = vmul.f32 %v7487, %v7587
        %v7602 = vmul.f32 %v7488, %v7587
        %v7603 = vmul.f32 %v7489, %v7587
        %v7604 = vmul.f32 %v7490, %v7587
        %v7605 = vmul.f32 %v7491, %v7587
        %v7606 = vmul.f32 %v7492, %v7587
        %v7607 = vmul.f32 %v7493, %v7587
        %v7608 = vmul.f32 %v7494, %v7587
        %v7609 = vmul.f32 %v7495, %v7587
        %v7610 = vmul.f32 %v7496, %v7587
        %v7611 = vmul.f32 %v7497, %v7587
        %v7612 = vmul.f32 %v7498, %v7587
        %v7613 = vmul.f32 %v7499, %v7587
        %v7614 = vmul.f32 %v7500, %v7587
        %v7615 = vmul.f32 %v7501, %v7587
        %v7616 = vmul.f32 %v7502, %v7587
        %v7617 = vmul.f32 %v7503, %v7587
        %v7618 = vmul.f32 %v7504, %v7587
        %v7619 = vmul.f32 %v7505, %v7587
        %v7620 = vadd.f32 %v7552, %v7588
        %v7621 = vadd.f32 %v7553, %v7589
        %v7622 = vadd.f32 %v7554, %v7590
        %v7623 = vadd.f32 %v7555, %v7591
        %v7624 = vadd.f32 %v7556, %v7592
        %v7625 = vadd.f32 %v7557, %v7593
        %v7626 = vadd.f32 %v7558, %v7594
        %v7627 = vadd.f32 %v7559, %v7595
        %v7628 = vadd.f32 %v7560, %v7596
        %v7629 = vadd.f32 %v7561, %v7597
        %v7630 = vadd.f32 %v7562, %v7598
        %v7631 = vadd.f32 %v7563, %v7599
        %v7632 = vadd.f32 %v7564, %v7600
        %v7633 = vadd.f32 %v7565, %v7601
        %v7634 = vadd.f32 %v7566, %v7602
        %v7635 = vadd.f32 %v7567, %v7603
        %v7636 = vadd.f32 %v7568, %v7604
        %v7637 = vadd.f32 %v7569, %v7605
        %v7638 = vadd.f32 %v7570, %v7606
        %v7639 = vadd.f32 %v7571, %v7607
        %v7640 = vadd.f32 %v7572, %v7608
        %v7641 = vadd.f32 %v7573, %v7609
        %v7642 = vadd.f32 %v7574, %v7610
        %v7643 = vadd.f32 %v7575, %v7611
        %v7644 = vadd.f32 %v7576, %v7612
        %v7645 = vadd.f32 %v7577, %v7613
        %v7646 = vadd.f32 %v7578, %v7614
        %v7647 = vadd.f32 %v7579, %v7615
        %v7648 = vadd.f32 %v7580, %v7616
        %v7649 = vadd.f32 %v7581, %v7617
        %v7650 = vadd.f32 %v7582, %v7618
        %v7651 = vadd.f32 %v7583, %v7619
        %v7652 = vlaneseq
        %v7653 = vshrl.u32 %v7652, 7
        %v7654 = vsub.s32 4, %v7653
        %v7655 = vrot.slane %v4379, %v7654
        %v7656 = vmul.f32 %v7476, %v7655
        %v7657 = vmul.f32 %v7477, %v7655
        %v7658 = vmul.f32 %v7478, %v7655
        %v7659 = vmul.f32 %v7479, %v7655
        %v7660 = vmul.f32 %v7480, %v7655
        %v7661 = vmul.f32 %v7481, %v7655
        %v7662 = vmul.f32 %v7482, %v7655
        %v7663 = vmul.f32 %v7483, %v7655
        %v7664 = vmul.f32 %v7484, %v7655
        %v7665 = vmul.f32 %v7485, %v7655
        %v7666 = vmul.f32 %v7486, %v7655
        %v7667 = vmul.f32 %v7487, %v7655
        %v7668 = vmul.f32 %v7488, %v7655
        %v7669 = vmul.f32 %v7489, %v7655
        %v7670 = vmul.f32 %v7490, %v7655
        %v7671 = vmul.f32 %v7491, %v7655
        %v7672 = vmul.f32 %v7492, %v7655
        %v7673 = vmul.f32 %v7493, %v7655
        %v7674 = vmul.f32 %v7494, %v7655
        %v7675 = vmul.f32 %v7495, %v7655
        %v7676 = vmul.f32 %v7496, %v7655
        %v7677 = vmul.f32 %v7497, %v7655
        %v7678 = vmul.f32 %v7498, %v7655
        %v7679 = vmul.f32 %v7499, %v7655
        %v7680 = vmul.f32 %v7500, %v7655
        %v7681 = vmul.f32 %v7501, %v7655
        %v7682 = vmul.f32 %v7502, %v7655
        %v7683 = vmul.f32 %v7503, %v7655
        %v7684 = vmul.f32 %v7504, %v7655
        %v7685 = vmul.f32 %v7505, %v7655
        %v7686 = vmul.f32 %v7506, %v7655
        %v7687 = vmul.f32 %v7507, %v7655
        %v7688 = vadd.f32 %v7620, %v7656
        %v7689 = vadd.f32 %v7621, %v7657
        %v7690 = vadd.f32 %v7622, %v7658
        %v7691 = vadd.f32 %v7623, %v7659
        %v7692 = vadd.f32 %v7624, %v7660
        %v7693 = vadd.f32 %v7625, %v7661
        %v7694 = vadd.f32 %v7626, %v7662
        %v7695 = vadd.f32 %v7627, %v7663
        %v7696 = vadd.f32 %v7628, %v7664
        %v7697 = vadd.f32 %v7629, %v7665
        %v7698 = vadd.f32 %v7630, %v7666
        %v7699 = vadd.f32 %v7631, %v7667
        %v7700 = vadd.f32 %v7632, %v7668
        %v7701 = vadd.f32 %v7633, %v7669
        %v7702 = vadd.f32 %v7634, %v7670
        %v7703 = vadd.f32 %v7635, %v7671
        %v7704 = vadd.f32 %v7636, %v7672
        %v7705 = vadd.f32 %v7637, %v7673
        %v7706 = vadd.f32 %v7638, %v7674
        %v7707 = vadd.f32 %v7639, %v7675
        %v7708 = vadd.f32 %v7640, %v7676
        %v7709 = vadd.f32 %v7641, %v7677
        %v7710 = vadd.f32 %v7642, %v7678
        %v7711 = vadd.f32 %v7643, %v7679
        %v7712 = vadd.f32 %v7644, %v7680
        %v7713 = vadd.f32 %v7645, %v7681
        %v7714 = vadd.f32 %v7646, %v7682
        %v7715 = vadd.f32 %v7647, %v7683
        %v7716 = vadd.f32 %v7648, %v7684
        %v7717 = vadd.f32 %v7649, %v7685
        %v7718 = vadd.f32 %v7650, %v7686
        %v7719 = vadd.f32 %v7651, %v7687
        %v7720 = vlaneseq
        %v7721 = vshrl.u32 %v7720, 7
        %v7722 = vsub.s32 3, %v7721
        %v7723 = vrot.slane %v4380, %v7722
        %v7724 = vmul.f32 %v7478, %v7723
        %v7725 = vmul.f32 %v7479, %v7723
        %v7726 = vmul.f32 %v7480, %v7723
        %v7727 = vmul.f32 %v7481, %v7723
        %v7728 = vmul.f32 %v7482, %v7723
        %v7729 = vmul.f32 %v7483, %v7723
        %v7730 = vmul.f32 %v7484, %v7723
        %v7731 = vmul.f32 %v7485, %v7723
        %v7732 = vmul.f32 %v7486, %v7723
        %v7733 = vmul.f32 %v7487, %v7723
        %v7734 = vmul.f32 %v7488, %v7723
        %v7735 = vmul.f32 %v7489, %v7723
        %v7736 = vmul.f32 %v7490, %v7723
        %v7737 = vmul.f32 %v7491, %v7723
        %v7738 = vmul.f32 %v7492, %v7723
        %v7739 = vmul.f32 %v7493, %v7723
        %v7740 = vmul.f32 %v7494, %v7723
        %v7741 = vmul.f32 %v7495, %v7723
        %v7742 = vmul.f32 %v7496, %v7723
        %v7743 = vmul.f32 %v7497, %v7723
        %v7744 = vmul.f32 %v7498, %v7723
        %v7745 = vmul.f32 %v7499, %v7723
        %v7746 = vmul.f32 %v7500, %v7723
        %v7747 = vmul.f32 %v7501, %v7723
        %v7748 = vmul.f32 %v7502, %v7723
        %v7749 = vmul.f32 %v7503, %v7723
        %v7750 = vmul.f32 %v7504, %v7723
        %v7751 = vmul.f32 %v7505, %v7723
        %v7752 = vmul.f32 %v7506, %v7723
        %v7753 = vmul.f32 %v7507, %v7723
        %v7754 = vmul.f32 %v7508, %v7723
        %v7755 = vmul.f32 %v7509, %v7723
        %v7756 = vadd.f32 %v7688, %v7724
        %v7757 = vadd.f32 %v7689, %v7725
        %v7758 = vadd.f32 %v7690, %v7726
        %v7759 = vadd.f32 %v7691, %v7727
        %v7760 = vadd.f32 %v7692, %v7728
        %v7761 = vadd.f32 %v7693, %v7729
        %v7762 = vadd.f32 %v7694, %v7730
        %v7763 = vadd.f32 %v7695, %v7731
        %v7764 = vadd.f32 %v7696, %v7732
        %v7765 = vadd.f32 %v7697, %v7733
        %v7766 = vadd.f32 %v7698, %v7734
        %v7767 = vadd.f32 %v7699, %v7735
        %v7768 = vadd.f32 %v7700, %v7736
        %v7769 = vadd.f32 %v7701, %v7737
        %v7770 = vadd.f32 %v7702, %v7738
        %v7771 = vadd.f32 %v7703, %v7739
        %v7772 = vadd.f32 %v7704, %v7740
        %v7773 = vadd.f32 %v7705, %v7741
        %v7774 = vadd.f32 %v7706, %v7742
        %v7775 = vadd.f32 %v7707, %v7743
        %v7776 = vadd.f32 %v7708, %v7744
        %v7777 = vadd.f32 %v7709, %v7745
        %v7778 = vadd.f32 %v7710, %v7746
        %v7779 = vadd.f32 %v7711, %v7747
        %v7780 = vadd.f32 %v7712, %v7748
        %v7781 = vadd.f32 %v7713, %v7749
        %v7782 = vadd.f32 %v7714, %v7750
        %v7783 = vadd.f32 %v7715, %v7751
        %v7784 = vadd.f32 %v7716, %v7752
        %v7785 = vadd.f32 %v7717, %v7753
        %v7786 = vadd.f32 %v7718, %v7754
        %v7787 = vadd.f32 %v7719, %v7755
        %v7788 = vlaneseq
        %v7789 = vshrl.u32 %v7788, 7
        %v7790 = vsub.s32 2, %v7789
        %v7791 = vrot.slane %v4381, %v7790
        %v7792 = vmul.f32 %v7480, %v7791
        %v7793 = vmul.f32 %v7481, %v7791
        %v7794 = vmul.f32 %v7482, %v7791
        %v7795 = vmul.f32 %v7483, %v7791
        %v7796 = vmul.f32 %v7484, %v7791
        %v7797 = vmul.f32 %v7485, %v7791
        %v7798 = vmul.f32 %v7486, %v7791
        %v7799 = vmul.f32 %v7487, %v7791
        %v7800 = vmul.f32 %v7488, %v7791
        %v7801 = vmul.f32 %v7489, %v7791
        %v7802 = vmul.f32 %v7490, %v7791
        %v7803 = vmul.f32 %v7491, %v7791
        %v7804 = vmul.f32 %v7492, %v7791
        %v7805 = vmul.f32 %v7493, %v7791
        %v7806 = vmul.f32 %v7494, %v7791
        %v7807 = vmul.f32 %v7495, %v7791
        %v7808 = vmul.f32 %v7496, %v7791
        %v7809 = vmul.f32 %v7497, %v7791
        %v7810 = vmul.f32 %v7498, %v7791
        %v7811 = vmul.f32 %v7499, %v7791
        %v7812 = vmul.f32 %v7500, %v7791
        %v7813 = vmul.f32 %v7501, %v7791
        %v7814 = vmul.f32 %v7502, %v7791
        %v7815 = vmul.f32 %v7503, %v7791
        %v7816 = vmul.f32 %v7504, %v7791
        %v7817 = vmul.f32 %v7505, %v7791
        %v7818 = vmul.f32 %v7506, %v7791
        %v7819 = vmul.f32 %v7507, %v7791
        %v7820 = vmul.f32 %v7508, %v7791
        %v7821 = vmul.f32 %v7509, %v7791
        %v7822 = vmul.f32 %v7510, %v7791
        %v7823 = vmul.f32 %v7511, %v7791
        %v7824 = vadd.f32 %v7756, %v7792
        %v7825 = vadd.f32 %v7757, %v7793
        %v7826 = vadd.f32 %v7758, %v7794
        %v7827 = vadd.f32 %v7759, %v7795
        %v7828 = vadd.f32 %v7760, %v7796
        %v7829 = vadd.f32 %v7761, %v7797
        %v7830 = vadd.f32 %v7762, %v7798
        %v7831 = vadd.f32 %v7763, %v7799
        %v7832 = vadd.f32 %v7764, %v7800
        %v7833 = vadd.f32 %v7765, %v7801
        %v7834 = vadd.f32 %v7766, %v7802
        %v7835 = vadd.f32 %v7767, %v7803
        %v7836 = vadd.f32 %v7768, %v7804
        %v7837 = vadd.f32 %v7769, %v7805
        %v7838 = vadd.f32 %v7770, %v7806
        %v7839 = vadd.f32 %v7771, %v7807
        %v7840 = vadd.f32 %v7772, %v7808
        %v7841 = vadd.f32 %v7773, %v7809
        %v7842 = vadd.f32 %v7774, %v7810
        %v7843 = vadd.f32 %v7775, %v7811
        %v7844 = vadd.f32 %v7776, %v7812
        %v7845 = vadd.f32 %v7777, %v7813
        %v7846 = vadd.f32 %v7778, %v7814
        %v7847 = vadd.f32 %v7779, %v7815
        %v7848 = vadd.f32 %v7780, %v7816
        %v7849 = vadd.f32 %v7781, %v7817
        %v7850 = vadd.f32 %v7782, %v7818
        %v7851 = vadd.f32 %v7783, %v7819
        %v7852 = vadd.f32 %v7784, %v7820
        %v7853 = vadd.f32 %v7785, %v7821
        %v7854 = vadd.f32 %v7786, %v7822
        %v7855 = vadd.f32 %v7787, %v7823
        %v7856 = vlaneseq
        %v7857 = vshrl.u32 %v7856, 7
        %v7858 = vsub.s32 1, %v7857
        %v7859 = vrot.slane %v4382, %v7858
        %v7860 = vmul.f32 %v7482, %v7859
        %v7861 = vmul.f32 %v7483, %v7859
        %v7862 = vmul.f32 %v7484, %v7859
        %v7863 = vmul.f32 %v7485, %v7859
        %v7864 = vmul.f32 %v7486, %v7859
        %v7865 = vmul.f32 %v7487, %v7859
        %v7866 = vmul.f32 %v7488, %v7859
        %v7867 = vmul.f32 %v7489, %v7859
        %v7868 = vmul.f32 %v7490, %v7859
        %v7869 = vmul.f32 %v7491, %v7859
        %v7870 = vmul.f32 %v7492, %v7859
        %v7871 = vmul.f32 %v7493, %v7859
        %v7872 = vmul.f32 %v7494, %v7859
        %v7873 = vmul.f32 %v7495, %v7859
        %v7874 = vmul.f32 %v7496, %v7859
        %v7875 = vmul.f32 %v7497, %v7859
        %v7876 = vmul.f32 %v7498, %v7859
        %v7877 = vmul.f32 %v7499, %v7859
        %v7878 = vmul.f32 %v7500, %v7859
        %v7879 = vmul.f32 %v7501, %v7859
        %v7880 = vmul.f32 %v7502, %v7859
        %v7881 = vmul.f32 %v7503, %v7859
        %v7882 = vmul.f32 %v7504, %v7859
        %v7883 = vmul.f32 %v7505, %v7859
        %v7884 = vmul.f32 %v7506, %v7859
        %v7885 = vmul.f32 %v7507, %v7859
        %v7886 = vmul.f32 %v7508, %v7859
        %v7887 = vmul.f32 %v7509, %v7859
        %v7888 = vmul.f32 %v7510, %v7859
        %v7889 = vmul.f32 %v7511, %v7859
        %v7890 = vmul.f32 %v7512, %v7859
        %v7891 = vmul.f32 %v7513, %v7859
        %v7892 = vadd.f32 %v7824, %v7860
        %v7893 = vadd.f32 %v7825, %v7861
        %v7894 = vadd.f32 %v7826, %v7862
        %v7895 = vadd.f32 %v7827, %v7863
        %v7896 = vadd.f32 %v7828, %v7864
        %v7897 = vadd.f32 %v7829, %v7865
        %v7898 = vadd.f32 %v7830, %v7866
        %v7899 = vadd.f32 %v7831, %v7867
        %v7900 = vadd.f32 %v7832, %v7868
        %v7901 = vadd.f32 %v7833, %v7869
        %v7902 = vadd.f32 %v7834, %v7870
        %v7903 = vadd.f32 %v7835, %v7871
        %v7904 = vadd.f32 %v7836, %v7872
        %v7905 = vadd.f32 %v7837, %v7873
        %v7906 = vadd.f32 %v7838, %v7874
        %v7907 = vadd.f32 %v7839, %v7875
        %v7908 = vadd.f32 %v7840, %v7876
        %v7909 = vadd.f32 %v7841, %v7877
        %v7910 = vadd.f32 %v7842, %v7878
        %v7911 = vadd.f32 %v7843, %v7879
        %v7912 = vadd.f32 %v7844, %v7880
        %v7913 = vadd.f32 %v7845, %v7881
        %v7914 = vadd.f32 %v7846, %v7882
        %v7915 = vadd.f32 %v7847, %v7883
        %v7916 = vadd.f32 %v7848, %v7884
        %v7917 = vadd.f32 %v7849, %v7885
        %v7918 = vadd.f32 %v7850, %v7886
        %v7919 = vadd.f32 %v7851, %v7887
        %v7920 = vadd.f32 %v7852, %v7888
        %v7921 = vadd.f32 %v7853, %v7889
        %v7922 = vadd.f32 %v7854, %v7890
        %v7923 = vadd.f32 %v7855, %v7891
        %v7924 = vlaneseq
        %v7925 = vshrl.u32 %v7924, 7
        %v7926 = vsub.s32 0, %v7925
        %v7927 = vrot.slane %v4383, %v7926
        %v7928 = vmul.f32 %v7484, %v7927
        %v7929 = vmul.f32 %v7485, %v7927
        %v7930 = vmul.f32 %v7486, %v7927
        %v7931 = vmul.f32 %v7487, %v7927
        %v7932 = vmul.f32 %v7488, %v7927
        %v7933 = vmul.f32 %v7489, %v7927
        %v7934 = vmul.f32 %v7490, %v7927
        %v7935 = vmul.f32 %v7491, %v7927
        %v7936 = vmul.f32 %v7492, %v7927
        %v7937 = vmul.f32 %v7493, %v7927
        %v7938 = vmul.f32 %v7494, %v7927
        %v7939 = vmul.f32 %v7495, %v7927
        %v7940 = vmul.f32 %v7496, %v7927
        %v7941 = vmul.f32 %v7497, %v7927
        %v7942 = vmul.f32 %v7498, %v7927
        %v7943 = vmul.f32 %v7499, %v7927
        %v7944 = vmul.f32 %v7500, %v7927
        %v7945 = vmul.f32 %v7501, %v7927
        %v7946 = vmul.f32 %v7502, %v7927
        %v7947 = vmul.f32 %v7503, %v7927
        %v7948 = vmul.f32 %v7504, %v7927
        %v7949 = vmul.f32 %v7505, %v7927
        %v7950 = vmul.f32 %v7506, %v7927
        %v7951 = vmul.f32 %v7507, %v7927
        %v7952 = vmul.f32 %v7508, %v7927
        %v7953 = vmul.f32 %v7509, %v7927
        %v7954 = vmul.f32 %v7510, %v7927
        %v7955 = vmul.f32 %v7511, %v7927
        %v7956 = vmul.f32 %v7512, %v7927
        %v7957 = vmul.f32 %v7513, %v7927
        %v7958 = vmul.f32 %v7514, %v7927
        %v7959 = vmul.f32 %v7515, %v7927
        %v7960 = vadd.f32 %v7892, %v7928
        %v7961 = vadd.f32 %v7893, %v7929
        %v7962 = vadd.f32 %v7894, %v7930
        %v7963 = vadd.f32 %v7895, %v7931
        %v7964 = vadd.f32 %v7896, %v7932
        %v7965 = vadd.f32 %v7897, %v7933
        %v7966 = vadd.f32 %v7898, %v7934
        %v7967 = vadd.f32 %v7899, %v7935
        %v7968 = vadd.f32 %v7900, %v7936
        %v7969 = vadd.f32 %v7901, %v7937
        %v7970 = vadd.f32 %v7902, %v7938
        %v7971 = vadd.f32 %v7903, %v7939
        %v7972 = vadd.f32 %v7904, %v7940
        %v7973 = vadd.f32 %v7905, %v7941
        %v7974 = vadd.f32 %v7906, %v7942
        %v7975 = vadd.f32 %v7907, %v7943
        %v7976 = vadd.f32 %v7908, %v7944
        %v7977 = vadd.f32 %v7909, %v7945
        %v7978 = vadd.f32 %v7910, %v7946
        %v7979 = vadd.f32 %v7911, %v7947
        %v7980 = vadd.f32 %v7912, %v7948
        %v7981 = vadd.f32 %v7913, %v7949
        %v7982 = vadd.f32 %v7914, %v7950
        %v7983 = vadd.f32 %v7915, %v7951
        %v7984 = vadd.f32 %v7916, %v7952
        %v7985 = vadd.f32 %v7917, %v7953
        %v7986 = vadd.f32 %v7918, %v7954
        %v7987 = vadd.f32 %v7919, %v7955
        %v7988 = vadd.f32 %v7920, %v7956
        %v7989 = vadd.f32 %v7921, %v7957
        %v7990 = vadd.f32 %v7922, %v7958
        %v7991 = vadd.f32 %v7923, %v7959
        %v7992 = vsel %vm3895, %v7960, 0.0
        %7993 = vadd.xlane.f32.xlu0 %v7992
        %v7994 = vpop.xlane.xlu0 %7993
        %v7995 = vsel %vm3895, %v7961, 0.0
        %7996 = vadd.xlane.f32.xlu0 %v7995
        %v7997 = vpop.xlane.xlu0 %7996
        %v7998 = vsel %vm3895, %v7962, 0.0
        %7999 = vadd.xlane.f32.xlu0 %v7998
        %v8000 = vpop.xlane.xlu0 %7999
        %v8001 = vsel %vm3895, %v7963, 0.0
        %8002 = vadd.xlane.f32.xlu0 %v8001
        %v8003 = vpop.xlane.xlu0 %8002
        %v8004 = vsel %vm3895, %v7964, 0.0
        %8005 = vadd.xlane.f32.xlu0 %v8004
        %v8006 = vpop.xlane.xlu0 %8005
        %v8007 = vsel %vm3895, %v7965, 0.0
        %8008 = vadd.xlane.f32.xlu0 %v8007
        %v8009 = vpop.xlane.xlu0 %8008
        %v8010 = vsel %vm3895, %v7966, 0.0
        %8011 = vadd.xlane.f32.xlu0 %v8010
        %v8012 = vpop.xlane.xlu0 %8011
        %v8013 = vsel %vm3895, %v7967, 0.0
        %8014 = vadd.xlane.f32.xlu0 %v8013
        %v8015 = vpop.xlane.xlu0 %8014
        %v8016 = vsel %vm3895, %v7968, 0.0
        %8017 = vadd.xlane.f32.xlu0 %v8016
        %v8018 = vpop.xlane.xlu0 %8017
        %v8019 = vsel %vm3895, %v7969, 0.0
        %8020 = vadd.xlane.f32.xlu0 %v8019
        %v8021 = vpop.xlane.xlu0 %8020
        %v8022 = vsel %vm3895, %v7970, 0.0
        %8023 = vadd.xlane.f32.xlu0 %v8022
        %v8024 = vpop.xlane.xlu0 %8023
        %v8025 = vsel %vm3895, %v7971, 0.0
        %8026 = vadd.xlane.f32.xlu0 %v8025
        %v8027 = vpop.xlane.xlu0 %8026
        %v8028 = vsel %vm3895, %v7972, 0.0
        %8029 = vadd.xlane.f32.xlu0 %v8028
        %v8030 = vpop.xlane.xlu0 %8029
        %v8031 = vsel %vm3895, %v7973, 0.0
        %8032 = vadd.xlane.f32.xlu0 %v8031
        %v8033 = vpop.xlane.xlu0 %8032
        %v8034 = vsel %vm3895, %v7974, 0.0
        %8035 = vadd.xlane.f32.xlu0 %v8034
        %v8036 = vpop.xlane.xlu0 %8035
        %v8037 = vsel %vm3895, %v7975, 0.0
        %8038 = vadd.xlane.f32.xlu0 %v8037
        %v8039 = vpop.xlane.xlu0 %8038
        %v8040 = vsel %vm3895, %v7976, 0.0
        %8041 = vadd.xlane.f32.xlu0 %v8040
        %v8042 = vpop.xlane.xlu0 %8041
        %v8043 = vsel %vm3895, %v7977, 0.0
        %8044 = vadd.xlane.f32.xlu0 %v8043
        %v8045 = vpop.xlane.xlu0 %8044
        %v8046 = vsel %vm3895, %v7978, 0.0
        %8047 = vadd.xlane.f32.xlu0 %v8046
        %v8048 = vpop.xlane.xlu0 %8047
        %v8049 = vsel %vm3895, %v7979, 0.0
        %8050 = vadd.xlane.f32.xlu0 %v8049
        %v8051 = vpop.xlane.xlu0 %8050
        %v8052 = vsel %vm3895, %v7980, 0.0
        %8053 = vadd.xlane.f32.xlu0 %v8052
        %v8054 = vpop.xlane.xlu0 %8053
        %v8055 = vsel %vm3895, %v7981, 0.0
        %8056 = vadd.xlane.f32.xlu0 %v8055
        %v8057 = vpop.xlane.xlu0 %8056
        %v8058 = vsel %vm3895, %v7982, 0.0
        %8059 = vadd.xlane.f32.xlu0 %v8058
        %v8060 = vpop.xlane.xlu0 %8059
        %v8061 = vsel %vm3895, %v7983, 0.0
        %8062 = vadd.xlane.f32.xlu0 %v8061
        %v8063 = vpop.xlane.xlu0 %8062
        %v8064 = vsel %vm3895, %v7984, 0.0
        %8065 = vadd.xlane.f32.xlu0 %v8064
        %v8066 = vpop.xlane.xlu0 %8065
        %v8067 = vsel %vm3895, %v7985, 0.0
        %8068 = vadd.xlane.f32.xlu0 %v8067
        %v8069 = vpop.xlane.xlu0 %8068
        %v8070 = vsel %vm3895, %v7986, 0.0
        %8071 = vadd.xlane.f32.xlu0 %v8070
        %v8072 = vpop.xlane.xlu0 %8071
        %v8073 = vsel %vm3895, %v7987, 0.0
        %8074 = vadd.xlane.f32.xlu0 %v8073
        %v8075 = vpop.xlane.xlu0 %8074
        %v8076 = vsel %vm3895, %v7988, 0.0
        %8077 = vadd.xlane.f32.xlu0 %v8076
        %v8078 = vpop.xlane.xlu0 %8077
        %v8079 = vsel %vm3895, %v7989, 0.0
        %8080 = vadd.xlane.f32.xlu0 %v8079
        %v8081 = vpop.xlane.xlu0 %8080
        %v8082 = vsel %vm3895, %v7990, 0.0
        %8083 = vadd.xlane.f32.xlu0 %v8082
        %v8084 = vpop.xlane.xlu0 %8083
        %v8085 = vsel %vm3895, %v7991, 0.0
        %8086 = vadd.xlane.f32.xlu0 %v8085
        %v8087 = vpop.xlane.xlu0 %8086
        %v8088 = vxor.u32 %v7994, 2147483648
        %v8089 = vxor.u32 %v7997, 2147483648
        %v8090 = vxor.u32 %v8000, 2147483648
        %v8091 = vxor.u32 %v8003, 2147483648
        %v8092 = vxor.u32 %v8006, 2147483648
        %v8093 = vxor.u32 %v8009, 2147483648
        %v8094 = vxor.u32 %v8012, 2147483648
        %v8095 = vxor.u32 %v8015, 2147483648
        %v8096 = vxor.u32 %v8018, 2147483648
        %v8097 = vxor.u32 %v8021, 2147483648
        %v8098 = vxor.u32 %v8024, 2147483648
        %v8099 = vxor.u32 %v8027, 2147483648
        %v8100 = vxor.u32 %v8030, 2147483648
        %v8101 = vxor.u32 %v8033, 2147483648
        %v8102 = vxor.u32 %v8036, 2147483648
        %v8103 = vxor.u32 %v8039, 2147483648
        %v8104 = vxor.u32 %v8042, 2147483648
        %v8105 = vxor.u32 %v8045, 2147483648
        %v8106 = vxor.u32 %v8048, 2147483648
        %v8107 = vxor.u32 %v8051, 2147483648
        %v8108 = vxor.u32 %v8054, 2147483648
        %v8109 = vxor.u32 %v8057, 2147483648
        %v8110 = vxor.u32 %v8060, 2147483648
        %v8111 = vxor.u32 %v8063, 2147483648
        %v8112 = vxor.u32 %v8066, 2147483648
        %v8113 = vxor.u32 %v8069, 2147483648
        %v8114 = vxor.u32 %v8072, 2147483648
        %v8115 = vxor.u32 %v8075, 2147483648
        %v8116 = vxor.u32 %v8078, 2147483648
        %v8117 = vxor.u32 %v8081, 2147483648
        %v8118 = vxor.u32 %v8084, 2147483648
        %v8119 = vxor.u32 %v8087, 2147483648
        %v8120 = vmul.f32 %v8088, 1.442695
        %v8121 = vpow.pop %v8120
        %v8122 = vmul.f32 %v8089, 1.442695
        %v8123 = vpow.pop %v8122
        %v8124 = vmul.f32 %v8090, 1.442695
        %v8125 = vpow.pop %v8124
        %v8126 = vmul.f32 %v8091, 1.442695
        %v8127 = vpow.pop %v8126
        %v8128 = vmul.f32 %v8092, 1.442695
        %v8129 = vpow.pop %v8128
        %v8130 = vmul.f32 %v8093, 1.442695
        %v8131 = vpow.pop %v8130
        %v8132 = vmul.f32 %v8094, 1.442695
        %v8133 = vpow.pop %v8132
        %v8134 = vmul.f32 %v8095, 1.442695
        %v8135 = vpow.pop %v8134
        %v8136 = vmul.f32 %v8096, 1.442695
        %v8137 = vpow.pop %v8136
        %v8138 = vmul.f32 %v8097, 1.442695
        %v8139 = vpow.pop %v8138
        %v8140 = vmul.f32 %v8098, 1.442695
        %v8141 = vpow.pop %v8140
        %v8142 = vmul.f32 %v8099, 1.442695
        %v8143 = vpow.pop %v8142
        %v8144 = vmul.f32 %v8100, 1.442695
        %v8145 = vpow.pop %v8144
        %v8146 = vmul.f32 %v8101, 1.442695
        %v8147 = vpow.pop %v8146
        %v8148 = vmul.f32 %v8102, 1.442695
        %v8149 = vpow.pop %v8148
        %v8150 = vmul.f32 %v8103, 1.442695
        %v8151 = vpow.pop %v8150
        %v8152 = vmul.f32 %v8104, 1.442695
        %v8153 = vpow.pop %v8152
        %v8154 = vmul.f32 %v8105, 1.442695
        %v8155 = vpow.pop %v8154
        %v8156 = vmul.f32 %v8106, 1.442695
        %v8157 = vpow.pop %v8156
        %v8158 = vmul.f32 %v8107, 1.442695
        %v8159 = vpow.pop %v8158
        %v8160 = vmul.f32 %v8108, 1.442695
        %v8161 = vpow.pop %v8160
        %v8162 = vmul.f32 %v8109, 1.442695
        %v8163 = vpow.pop %v8162
        %v8164 = vmul.f32 %v8110, 1.442695
        %v8165 = vpow.pop %v8164
        %v8166 = vmul.f32 %v8111, 1.442695
        %v8167 = vpow.pop %v8166
        %v8168 = vmul.f32 %v8112, 1.442695
        %v8169 = vpow.pop %v8168
        %v8170 = vmul.f32 %v8113, 1.442695
        %v8171 = vpow.pop %v8170
        %v8172 = vmul.f32 %v8114, 1.442695
        %v8173 = vpow.pop %v8172
        %v8174 = vmul.f32 %v8115, 1.442695
        %v8175 = vpow.pop %v8174
        %v8176 = vmul.f32 %v8116, 1.442695
        %v8177 = vpow.pop %v8176
        %v8178 = vmul.f32 %v8117, 1.442695
        %v8179 = vpow.pop %v8178
        %v8180 = vmul.f32 %v8118, 1.442695
        %v8181 = vpow.pop %v8180
        %v8182 = vmul.f32 %v8119, 1.442695
        %v8183 = vpow.pop %v8182
        %v8184 = vadd.f32 %v8121, 1.0
        %v8185 = vadd.f32 %v8123, 1.0
        %v8186 = vadd.f32 %v8125, 1.0
        %v8187 = vadd.f32 %v8127, 1.0
        %v8188 = vadd.f32 %v8129, 1.0
        %v8189 = vadd.f32 %v8131, 1.0
        %v8190 = vadd.f32 %v8133, 1.0
        %v8191 = vadd.f32 %v8135, 1.0
        %v8192 = vadd.f32 %v8137, 1.0
        %v8193 = vadd.f32 %v8139, 1.0
        %v8194 = vadd.f32 %v8141, 1.0
        %v8195 = vadd.f32 %v8143, 1.0
        %v8196 = vadd.f32 %v8145, 1.0
        %v8197 = vadd.f32 %v8147, 1.0
        %v8198 = vadd.f32 %v8149, 1.0
        %v8199 = vadd.f32 %v8151, 1.0
        %v8200 = vadd.f32 %v8153, 1.0
        %v8201 = vadd.f32 %v8155, 1.0
        %v8202 = vadd.f32 %v8157, 1.0
        %v8203 = vadd.f32 %v8159, 1.0
        %v8204 = vadd.f32 %v8161, 1.0
        %v8205 = vadd.f32 %v8163, 1.0
        %v8206 = vadd.f32 %v8165, 1.0
        %v8207 = vadd.f32 %v8167, 1.0
        %v8208 = vadd.f32 %v8169, 1.0
        %v8209 = vadd.f32 %v8171, 1.0
        %v8210 = vadd.f32 %v8173, 1.0
        %v8211 = vadd.f32 %v8175, 1.0
        %v8212 = vadd.f32 %v8177, 1.0
        %v8213 = vadd.f32 %v8179, 1.0
        %v8214 = vadd.f32 %v8181, 1.0
        %v8215 = vadd.f32 %v8183, 1.0
        %v8216 = vrcp.pop %v8184
        %v8217 = vmul.f32 1.0, %v8216
        %v8218 = vrcp.pop %v8185
        %v8219 = vmul.f32 1.0, %v8218
        %v8220 = vrcp.pop %v8186
        %v8221 = vmul.f32 1.0, %v8220
        %v8222 = vrcp.pop %v8187
        %v8223 = vmul.f32 1.0, %v8222
        %v8224 = vrcp.pop %v8188
        %v8225 = vmul.f32 1.0, %v8224
        %v8226 = vrcp.pop %v8189
        %v8227 = vmul.f32 1.0, %v8226
        %v8228 = vrcp.pop %v8190
        %v8229 = vmul.f32 1.0, %v8228
        %v8230 = vrcp.pop %v8191
        %v8231 = vmul.f32 1.0, %v8230
        %v8232 = vrcp.pop %v8192
        %v8233 = vmul.f32 1.0, %v8232
        %v8234 = vrcp.pop %v8193
        %v8235 = vmul.f32 1.0, %v8234
        %v8236 = vrcp.pop %v8194
        %v8237 = vmul.f32 1.0, %v8236
        %v8238 = vrcp.pop %v8195
        %v8239 = vmul.f32 1.0, %v8238
        %v8240 = vrcp.pop %v8196
        %v8241 = vmul.f32 1.0, %v8240
        %v8242 = vrcp.pop %v8197
        %v8243 = vmul.f32 1.0, %v8242
        %v8244 = vrcp.pop %v8198
        %v8245 = vmul.f32 1.0, %v8244
        %v8246 = vrcp.pop %v8199
        %v8247 = vmul.f32 1.0, %v8246
        %v8248 = vrcp.pop %v8200
        %v8249 = vmul.f32 1.0, %v8248
        %v8250 = vrcp.pop %v8201
        %v8251 = vmul.f32 1.0, %v8250
        %v8252 = vrcp.pop %v8202
        %v8253 = vmul.f32 1.0, %v8252
        %v8254 = vrcp.pop %v8203
        %v8255 = vmul.f32 1.0, %v8254
        %v8256 = vrcp.pop %v8204
        %v8257 = vmul.f32 1.0, %v8256
        %v8258 = vrcp.pop %v8205
        %v8259 = vmul.f32 1.0, %v8258
        %v8260 = vrcp.pop %v8206
        %v8261 = vmul.f32 1.0, %v8260
        %v8262 = vrcp.pop %v8207
        %v8263 = vmul.f32 1.0, %v8262
        %v8264 = vrcp.pop %v8208
        %v8265 = vmul.f32 1.0, %v8264
        %v8266 = vrcp.pop %v8209
        %v8267 = vmul.f32 1.0, %v8266
        %v8268 = vrcp.pop %v8210
        %v8269 = vmul.f32 1.0, %v8268
        %v8270 = vrcp.pop %v8211
        %v8271 = vmul.f32 1.0, %v8270
        %v8272 = vrcp.pop %v8212
        %v8273 = vmul.f32 1.0, %v8272
        %v8274 = vrcp.pop %v8213
        %v8275 = vmul.f32 1.0, %v8274
        %v8276 = vrcp.pop %v8214
        %v8277 = vmul.f32 1.0, %v8276
        %v8278 = vrcp.pop %v8215
        %v8279 = vmul.f32 1.0, %v8278
        %v8280 = vld [vmem:[%s438] sm:$0xff]
        %v8281 = vld [vmem:[%s438 + $0x8] sm:$0xff]
        %v8282 = vld [vmem:[%s438 + $0x10] sm:$0xff]
        %v8283 = vld [vmem:[%s438 + $0x18] sm:$0xff]
        %v8284 = vld [vmem:[%s438 + $0x20] sm:$0xff]
        %v8285 = vld [vmem:[%s438 + $0x28] sm:$0xff]
        %v8286 = vld [vmem:[%s438 + $0x30] sm:$0xff]
        %v8287 = vld [vmem:[%s438 + $0x38] sm:$0xff]
        %v8288 = vld [vmem:[%s438 + $0x40] sm:$0xff]
        %v8289 = vld [vmem:[%s438 + $0x48] sm:$0xff]
        %v8290 = vld [vmem:[%s438 + $0x50] sm:$0xff]
        %v8291 = vld [vmem:[%s438 + $0x58] sm:$0xff]
        %v8292 = vld [vmem:[%s438 + $0x60] sm:$0xff]
        %v8293 = vld [vmem:[%s438 + $0x68] sm:$0xff]
        %v8294 = vld [vmem:[%s438 + $0x70] sm:$0xff]
        %v8295 = vld [vmem:[%s438 + $0x78] sm:$0xff]
        %v8296 = vld [vmem:[%s438 + $0x80] sm:$0xff]
        %v8297 = vld [vmem:[%s438 + $0x88] sm:$0xff]
        %v8298 = vld [vmem:[%s438 + $0x90] sm:$0xff]
        %v8299 = vld [vmem:[%s438 + $0x98] sm:$0xff]
        %v8300 = vld [vmem:[%s438 + $0xa0] sm:$0xff]
        %v8301 = vld [vmem:[%s438 + $0xa8] sm:$0xff]
        %v8302 = vld [vmem:[%s438 + $0xb0] sm:$0xff]
        %v8303 = vld [vmem:[%s438 + $0xb8] sm:$0xff]
        %v8304 = vld [vmem:[%s438 + $0xc0] sm:$0xff]
        %v8305 = vld [vmem:[%s438 + $0xc8] sm:$0xff]
        %v8306 = vld [vmem:[%s438 + $0xd0] sm:$0xff]
        %v8307 = vld [vmem:[%s438 + $0xd8] sm:$0xff]
        %v8308 = vld [vmem:[%s438 + $0xe0] sm:$0xff]
        %v8309 = vld [vmem:[%s438 + $0xe8] sm:$0xff]
        %v8310 = vld [vmem:[%s438 + $0xf0] sm:$0xff]
        %v8311 = vld [vmem:[%s438 + $0xf8] sm:$0xff]
        %v8312 = vmul.f32 %v3987, %v8217
        %v8313 = vmul.f32 %v3988, %v8219
        %v8314 = vmul.f32 %v3989, %v8221
        %v8315 = vmul.f32 %v3990, %v8223
        %v8316 = vmul.f32 %v3991, %v8225
        %v8317 = vmul.f32 %v3992, %v8227
        %v8318 = vmul.f32 %v3993, %v8229
        %v8319 = vmul.f32 %v3994, %v8231
        %v8320 = vmul.f32 %v3995, %v8233
        %v8321 = vmul.f32 %v3996, %v8235
        %v8322 = vmul.f32 %v3997, %v8237
        %v8323 = vmul.f32 %v3998, %v8239
        %v8324 = vmul.f32 %v3999, %v8241
        %v8325 = vmul.f32 %v4000, %v8243
        %v8326 = vmul.f32 %v4001, %v8245
        %v8327 = vmul.f32 %v4002, %v8247
        %v8328 = vmul.f32 %v4003, %v8249
        %v8329 = vmul.f32 %v4004, %v8251
        %v8330 = vmul.f32 %v4005, %v8253
        %v8331 = vmul.f32 %v4006, %v8255
        %v8332 = vmul.f32 %v4007, %v8257
        %v8333 = vmul.f32 %v4008, %v8259
        %v8334 = vmul.f32 %v4009, %v8261
        %v8335 = vmul.f32 %v4010, %v8263
        %v8336 = vmul.f32 %v4011, %v8265
        %v8337 = vmul.f32 %v4012, %v8267
        %v8338 = vmul.f32 %v4013, %v8269
        %v8339 = vmul.f32 %v4014, %v8271
        %v8340 = vmul.f32 %v4015, %v8273
        %v8341 = vmul.f32 %v4016, %v8275
        %v8342 = vmul.f32 %v4017, %v8277
        %v8343 = vmul.f32 %v4018, %v8279
        %v8344 = vadd.f32 %v8312, %v8280
        %v8345 = vadd.f32 %v8313, %v8281
        %v8346 = vadd.f32 %v8314, %v8282
        %v8347 = vadd.f32 %v8315, %v8283
        %v8348 = vadd.f32 %v8316, %v8284
        %v8349 = vadd.f32 %v8317, %v8285
        %v8350 = vadd.f32 %v8318, %v8286
        %v8351 = vadd.f32 %v8319, %v8287
        %v8352 = vadd.f32 %v8320, %v8288
        %v8353 = vadd.f32 %v8321, %v8289
        %v8354 = vadd.f32 %v8322, %v8290
        %v8355 = vadd.f32 %v8323, %v8291
        %v8356 = vadd.f32 %v8324, %v8292
        %v8357 = vadd.f32 %v8325, %v8293
        %v8358 = vadd.f32 %v8326, %v8294
        %v8359 = vadd.f32 %v8327, %v8295
        %v8360 = vadd.f32 %v8328, %v8296
        %v8361 = vadd.f32 %v8329, %v8297
        %v8362 = vadd.f32 %v8330, %v8298
        %v8363 = vadd.f32 %v8331, %v8299
        %v8364 = vadd.f32 %v8332, %v8300
        %v8365 = vadd.f32 %v8333, %v8301
        %v8366 = vadd.f32 %v8334, %v8302
        %v8367 = vadd.f32 %v8335, %v8303
        %v8368 = vadd.f32 %v8336, %v8304
        %v8369 = vadd.f32 %v8337, %v8305
        %v8370 = vadd.f32 %v8338, %v8306
        %v8371 = vadd.f32 %v8339, %v8307
        %v8372 = vadd.f32 %v8340, %v8308
        %v8373 = vadd.f32 %v8341, %v8309
        %v8374 = vadd.f32 %v8342, %v8310
        %v8375 = vadd.f32 %v8343, %v8311
        %8376 = vst.msk [vmem:[%s433] sm:$0xff] %vm439, %v8344
        %8377 = vst.msk [vmem:[%s433 + $0x8] sm:$0xff] %vm439, %v8345
        %8378 = vst.msk [vmem:[%s433 + $0x10] sm:$0xff] %vm439, %v8346
        %8379 = vst.msk [vmem:[%s433 + $0x18] sm:$0xff] %vm439, %v8347
        %8380 = vst.msk [vmem:[%s433 + $0x20] sm:$0xff] %vm439, %v8348
        %8381 = vst.msk [vmem:[%s433 + $0x28] sm:$0xff] %vm439, %v8349
        %8382 = vst.msk [vmem:[%s433 + $0x30] sm:$0xff] %vm439, %v8350
        %8383 = vst.msk [vmem:[%s433 + $0x38] sm:$0xff] %vm439, %v8351
        %8384 = vst.msk [vmem:[%s433 + $0x40] sm:$0xff] %vm439, %v8352
        %8385 = vst.msk [vmem:[%s433 + $0x48] sm:$0xff] %vm439, %v8353
        %8386 = vst.msk [vmem:[%s433 + $0x50] sm:$0xff] %vm439, %v8354
        %8387 = vst.msk [vmem:[%s433 + $0x58] sm:$0xff] %vm439, %v8355
        %8388 = vst.msk [vmem:[%s433 + $0x60] sm:$0xff] %vm439, %v8356
        %8389 = vst.msk [vmem:[%s433 + $0x68] sm:$0xff] %vm439, %v8357
        %8390 = vst.msk [vmem:[%s433 + $0x70] sm:$0xff] %vm439, %v8358
        %8391 = vst.msk [vmem:[%s433 + $0x78] sm:$0xff] %vm439, %v8359
        %8392 = vst.msk [vmem:[%s433 + $0x80] sm:$0xff] %vm439, %v8360
        %8393 = vst.msk [vmem:[%s433 + $0x88] sm:$0xff] %vm439, %v8361
        %8394 = vst.msk [vmem:[%s433 + $0x90] sm:$0xff] %vm439, %v8362
        %8395 = vst.msk [vmem:[%s433 + $0x98] sm:$0xff] %vm439, %v8363
        %8396 = vst.msk [vmem:[%s433 + $0xa0] sm:$0xff] %vm439, %v8364
        %8397 = vst.msk [vmem:[%s433 + $0xa8] sm:$0xff] %vm439, %v8365
        %8398 = vst.msk [vmem:[%s433 + $0xb0] sm:$0xff] %vm439, %v8366
        %8399 = vst.msk [vmem:[%s433 + $0xb8] sm:$0xff] %vm439, %v8367
        %8400 = vst.msk [vmem:[%s433 + $0xc0] sm:$0xff] %vm439, %v8368
        %8401 = vst.msk [vmem:[%s433 + $0xc8] sm:$0xff] %vm439, %v8369
        %8402 = vst.msk [vmem:[%s433 + $0xd0] sm:$0xff] %vm439, %v8370
        %8403 = vst.msk [vmem:[%s433 + $0xd8] sm:$0xff] %vm439, %v8371
        %8404 = vst.msk [vmem:[%s433 + $0xe0] sm:$0xff] %vm439, %v8372
        %8405 = vst.msk [vmem:[%s433 + $0xe8] sm:$0xff] %vm439, %v8373
        %8406 = vst.msk [vmem:[%s433 + $0xf0] sm:$0xff] %vm439, %v8374
        %8407 = vst.msk [vmem:[%s433 + $0xf8] sm:$0xff] %vm439, %v8375
        %s8408 = sand.u32 %s313, 1
        %s8409 = scalar_lea.sflag [#allocation7], %s8408
        %s8410 = sand.u32 %s313, 1
        %s8411 = smul.addr %s8410, 256
        %s8412 = scalar_lea.vmem [#allocation6], %s8411
        // Predicated region
        $region73: #{res_block_with_cbam.1} parent=71 // pred_check
          %p8413 = pneg %p323
        $region74: #{res_block_with_cbam.1} parent=71 // pred_check_branch
          %8415 = sbr.rel (%p8413) target = $region76
        $region75: #{res_block_with_cbam.1} parent=71 // pred_region
          %s8417 = ssub.s32 4096, 4096
          %8418 = vsyncadd %s8409, %s8417
          %s8419 = smul.addr %s27, 32
          %s8420 = smul.addr %s8419, 128
          %s8421 = scalar_lea.hbm %s13, %s8420
          %s8422 = sshll.u32 %s8412, 4
          %s8423 = int_to_ptr.vmem [resolvable:$true] %s8422
          %8428 = dma.vmem_to_hbm [thread:$0]  %s8423, 4096, %s8421, %s8409, 128, 128, 8
        $region76: #{res_block_with_cbam.1} parent=71 // pred_fallthru
          _
      $region72: #{res_block_with_cbam.1} parent=5 // pred_fallthru
        _
      %p8429 = scmp.le.s32.totalorder 2, %s22
      // Predicated region
      $region77: #{res_block_with_cbam.1} parent=5 // pred_check
        %p8430 = pneg %p8429
      $region78: #{res_block_with_cbam.1} parent=5 // pred_check_branch
        %8432 = sbr.rel (%p8430) target = $region80
      $region79: #{res_block_with_cbam.1} parent=5 // pred_region
        %s8433 = ssub.s32 %s22, 2
        // Predicated region
        $region81: #{res_block_with_cbam.1} parent=79 // pred_check
          %p8434 = pneg %p329
        $region82: #{res_block_with_cbam.1} parent=79 // pred_check_branch
          %8436 = sbr.rel (%p8434) target = $region84
        $region83: #{res_block_with_cbam.1} parent=79 // pred_region
          %s8437 = sand.u32 %s314, 1
          %s8438 = scalar_lea.sflag [#allocation7], %s8437
          %s8439 = sand.u32 %s314, 1
          %s8440 = smul.addr %s8439, 256
          %s8441 = scalar_lea.vmem [#allocation6], %s8440
          %8442 = dma.done %s8438, 4096
        $region84: #{res_block_with_cbam.1} parent=79 // pred_fallthru
          _
      $region80: #{res_block_with_cbam.1} parent=5 // pred_fallthru
        _
    $region6: #{res_block_with_cbam.1} parent=1 // loop_footer
      %s26 = sadd.s32 1, %s22
    $region7: #{res_block_with_cbam.1} parent=1 // loop_footer_branch
      %21 = sbr.rel target = $region3
    $region8: #{res_block_with_cbam.1} parent=1 // loop_exit
      _
    %8443 = vsyncpa [#allocation7], 1
    %s8444 = scalar_lea.sflag [#allocation7], 1
    %8445 = vsyncpa %s8444, 1

</llo_original>
